<compile_context>
chip_gen: v7x
topology: tpu7x:2x2x1
jax: 0.10.0
libtpu: 0.0.40
codegen_flags: <defaults>
</compile_context>

<pallas_src>
import functools

import jax
import jax.numpy as jnp
from jax.experimental import pallas as pl
from jax.experimental.pallas import tpu as pltpu

ACTION_DIM = 32


# ------------------------------ Pallas kernel ------------------------------ #

def _critic_kernel(x_ref, act_ref,
                   w1_ref, b1_ref, w2_ref, b2_ref, w3_ref, b3_ref,
                   wf1_ref, bf1_ref, w2h_ref, w2a_ref, bf2_ref,
                   wf3_ref, bf3_ref,
                   q_ref,
                   a1_s):
    """One batch tile (Bt samples) per grid step; everything stays in VMEM.

    Row order of the packed input / conv1 / conv2 activations is
        row = q2 * (16*Bt) + r3 * Bt + s
    (q2 = conv2-pixel position inside its conv3 parent, r3 = conv3 pixel,
     s = sample within the tile), so conv3 / fc1 consume contiguous,
    8-aligned row blocks and fc1..fc3 end up with rows == samples.
    """
    f32 = jnp.float32
    Bt = act_ref.shape[0]

    w1 = w1_ref[...]                      # (512, 128) bf16, kron(I8, w1_conv)
    b1 = b1_ref[...]                      # (1, 128) f32 (b1 tiled x8)

    # ---- conv1: two block-diagonal matmuls -> lane-dense (64*Bt, 256) scratch.
    # Input lanes are ordered (p1, a0, b0); output lanes (p1, c1) are exactly
    # the conv2 im2col column order, written straight into aligned 128-lane
    # halves of the scratch (no concat, no relayout).
    xa = x_ref[0, :, 0:512]               # (64*Bt, 512) bf16, p1 in [0, 8)
    xb = x_ref[0, :, 512:1024]            # (64*Bt, 512) bf16, p1 in [8, 16)
    a1_s[:, 0:128] = jnp.maximum(
        jnp.dot(xa, w1, preferred_element_type=f32) + b1, 0.0)
    a1_s[:, 128:256] = jnp.maximum(
        jnp.dot(xb, w1, preferred_element_type=f32) + b1, 0.0)

    # ---- conv2: a single K=256 contraction (matches the 256-deep MXU). ----
    a2 = jnp.maximum(
        jnp.dot(a1_s[...], w2_ref[...], preferred_element_type=f32)
        + b2_ref[...], 0.0)               # (64*Bt, 32), rows (q2, r3, s)

    # ---- conv3: accumulate over the 4 patch positions q2; each q2 block is a
    # contiguous (16*Bt, 32) row slice (offsets are multiples of 16*Bt). ----
    blk = 16 * Bt
    acc3 = jnp.dot(a2[0:blk, :], w3_ref[0], preferred_element_type=f32)
    for q2 in range(1, 4):
        acc3 = acc3 + jnp.dot(a2[q2 * blk:(q2 + 1) * blk, :], w3_ref[q2],
                              preferred_element_type=f32)
    a3 = jnp.maximum(acc3 + b3_ref[...], 0.0)     # (16*Bt, 32), rows (r3, s)

    # ---- fc1: accumulate over the 16 spatial positions r3; each term is a
    # contiguous (Bt, 32) row slice @ (32, 256) -> rows become samples. ----
    acc_h = jnp.dot(a3[0:Bt, :], wf1_ref[0], preferred_element_type=f32)
    for j in range(1, 16):
        acc_h = acc_h + jnp.dot(a3[j * Bt:(j + 1) * Bt, :], wf1_ref[j],
                                preferred_element_type=f32)
    h = jnp.maximum(acc_h + bf1_ref[...], 0.0)    # (Bt, 256)

    # ---- fc2: concat([h, action]) @ W == h @ W[:256] + action @ W[256:]. ----
    a = act_ref[...]                              # (Bt, 32)
    z = jnp.maximum(
        jnp.dot(h, w2h_ref[...], preferred_element_type=f32)
        + jnp.dot(a, w2a_ref[...], preferred_element_type=f32)
        + bf2_ref[...], 0.0)                      # (Bt, 256)

    # ---- fc3: contraction over lanes (keeps the weight lane-dense). ----
    q = jnp.sum(z * wf3_ref[...], axis=-1, keepdims=True) + bf3_ref[...]
    q_ref[...] = q.astype(q_ref.dtype)            # (Bt, 1)


# --------------------------------- glue ------------------------------------ #

def _pack_im2col(x_nchw, Bt):
    """(B,1,256,256) -> (B//Bt, 64*Bt, 1024) bf16 conv1-im2col blocks.

    Image coords decompose as
        h = ((oh3*2 + a2)*4 + a1)*8 + a0,   w = ((ow3*2 + b2)*4 + b1)*8 + b0
    Row  = (a2*2+b2) * 16*Bt + (oh3*4+ow3) * Bt + s    (q2-major, r3, sample)
    Lane = (a1*4+b1) * 64 + a0*8 + b0                  (conv2 patch pos, conv1 kh,kw)
    """
    B = x_nchw.shape[0]
    nB = B // Bt
    x = x_nchw.astype(jnp.bfloat16).reshape(nB, Bt, 4, 2, 4, 8, 4, 2, 4, 8)
    #                    dims: (nB, s, oh3, a2, a1, a0, ow3, b2, b1, b0)
    x = jnp.transpose(x, (0, 3, 7, 2, 6, 1, 4, 8, 5, 9))
    #                    -> (nB, a2, b2, oh3, ow3, s, a1, b1, a0, b0)
    return x.reshape(nB, 64 * Bt, 1024)


def init_params(key, action_dim=ACTION_DIM):
    """Deterministic synthetic parameters (Kaiming-ish scaling)."""
    def dense(k, fan_in, fan_out):
        kw, kb = jax.random.split(k)
        w = jax.random.normal(kw, (fan_in, fan_out), jnp.float32) / jnp.sqrt(
            jnp.float32(fan_in))
        b = 0.01 * jax.random.normal(kb, (fan_out,), jnp.float32)
        return w, b

    ks = jax.random.split(key, 6)
    return {
        # conv weights stored in im2col layout (kh*kw*Cin, Cout),
        # patch element order (kh, kw, Cin).
        "conv1": dense(ks[0], 8 * 8 * 1, 16),
        "conv2": dense(ks[1], 4 * 4 * 16, 32),
        "conv3": dense(ks[2], 2 * 2 * 32, 32),
        "fc1":   dense(ks[3], 4 * 4 * 32, 256),
        "fc2":   dense(ks[4], 256 + action_dim, 256),
        "fc3":   dense(ks[5], 256, 1),
    }


def critic_forward(params, x_nchw, action, batch_tile=16):
    """x_nchw: (B, 1, 256, 256), action: (B, 32) -> (B, 1) Q-values.

    batch_tile (Bt): samples per grid step. Default 16 fits all of v5e/v6e/v7x
    comfortably (~9 MiB VMEM); on v6e it can be raised to 32-64 for extra
    per-step amortization.
    """
    B = x_nchw.shape[0]
    Bt = int(min(batch_tile, B))
    nB = -(-B // Bt)
    B_pad = nB * Bt
    if B_pad != B:
        x_nchw = jnp.pad(x_nchw, ((0, B_pad - B), (0, 0), (0, 0), (0, 0)))
        action = jnp.pad(action, ((0, B_pad - B), (0, 0)))

    # Host-side packing pre-pass (one fused XLA transpose), emitted in bf16 so
    # the kernel's HBM read is half-width.
    x_cols = _pack_im2col(x_nchw.astype(jnp.float32), Bt)     # (nB, 64*Bt, 1024)
    act = action.astype(jnp.float32)                          # (B_pad, 32)

    w1, b1 = params["conv1"]
    w2, b2 = params["conv2"]
    w3, b3 = params["conv3"]
    wf1, bf1 = params["fc1"]
    wf2, bf2 = params["fc2"]
    wf3, bf3 = params["fc3"]

    # Kernel-friendly weight views (built once by XLA, resident in VMEM).
    w1_blk = jnp.kron(jnp.eye(8, dtype=jnp.float32), w1).astype(jnp.bfloat16)
    b1_t = jnp.tile(b1, 8).reshape(1, 128)         # bias per (p1, c1) lane half
    b2_2 = b2.reshape(1, -1)
    w3r = w3.reshape(4, 32, 32)                    # [q2 = a2*2+b2, Cin, Cout]
    b3_2 = b3.reshape(1, -1)
    wf1r = wf1.reshape(16, 32, 256)                # [r3 = oh3*4+ow3, C, out]
    bf1_2 = bf1.reshape(1, -1)
    w2h, w2a = wf2[:256], wf2[256:]                # split the concat weight
    bf2_2 = bf2.reshape(1, -1)
    wf3_row = wf3.reshape(1, 256)
    bf3_2 = bf3.reshape(1, 1)

    def _full(arr):
        zeros = (0,) * arr.ndim
        return pl.BlockSpec(arr.shape, lambda b, _z=zeros: _z)

    R = 64 * Bt
    flops_per_sample = 2 * (2 * 64 * 512 * 128      # conv1 (block-diag form)
                            + 64 * 256 * 32         # conv2
                            + 4 * 16 * 32 * 32      # conv3
                            + 512 * 256             # fc1
                            + (256 + ACTION_DIM) * 256   # fc2
                            + 256)                  # fc3
    bytes_per_sample = 64 * 1024 * 2 + ACTION_DIM * 4 + 4
    cost = pl.CostEstimate(flops=flops_per_sample * B_pad,
                           transcendentals=0,
                           bytes_accessed=bytes_per_sample * B_pad + 2 * 1024 * 1024)

    q = pl.pallas_call(
        _critic_kernel,
        out_shape=jax.ShapeDtypeStruct((B_pad, 1), jnp.float32),
        grid=(nB,),
        in_specs=[
            pl.BlockSpec((1, R, 1024), lambda b: (b, 0, 0)),     # packed images
            pl.BlockSpec((Bt, ACTION_DIM), lambda b: (b, 0)),    # actions
            _full(w1_blk), _full(b1_t),
            _full(w2), _full(b2_2),
            _full(w3r), _full(b3_2),
            _full(wf1r), _full(bf1_2),
            _full(w2h), _full(w2a), _full(bf2_2),
            _full(wf3_row), _full(bf3_2),
        ],
        out_specs=pl.BlockSpec((Bt, 1), lambda b: (b, 0)),
        scratch_shapes=[
            pltpu.VMEM((R, 256), jnp.float32),   # lane-dense conv1 activations
        ],
        compiler_params=pltpu.CompilerParams(
            dimension_semantics=("parallel",),
            vmem_limit_bytes=40 * 1024 * 1024),
        cost_estimate=cost,
    )(x_cols, act, w1_blk, b1_t, w2, b2_2, w3r, b3_2,
      wf1r, bf1_2, w2h, w2a, bf2_2, wf3_row, bf3_2)

    return q[:B]


# ---------------------------- pure-jnp reference ---------------------------- #

def _patchify_ref(x, k):
    B, H, W, C = x.shape
    Ho, Wo = H // k, W // k
    x = x.reshape(B, Ho, k, Wo, k, C).transpose(0, 1, 3, 2, 4, 5)
    return x.reshape(B * Ho * Wo, k * k * C), (B, Ho, Wo)


def critic_reference(params, x_nchw, action):
    """Straightforward f32 im2col + matmul reference used to validate the kernel."""
    hp = jax.lax.Precision.HIGHEST
    B = x_nchw.shape[0]
    x = x_nchw.astype(jnp.float32).reshape(B, 256, 256, 1)   # C=1: NCHW->NHWC
    for name, k in (("conv1", 8), ("conv2", 4), ("conv3", 2)):
        w, b = params[name]
        cols, (Bp, Ho, Wo) = _patchify_ref(x, k)
        y = jnp.maximum(jnp.dot(cols, w, precision=hp) + b, 0.0)
        x = y.reshape(Bp, Ho, Wo, w.shape[1])
    feat = x.reshape(B, -1)                                   # (B, 512)
    w, b = params["fc1"]
    h = jnp.maximum(jnp.dot(feat, w, precision=hp) + b, 0.0)
    h = jnp.concatenate([h, action.astype(jnp.float32)], axis=-1)
    w, b = params["fc2"]
    h = jnp.maximum(jnp.dot(h, w, precision=hp) + b, 0.0)
    w, b = params["fc3"]
    return jnp.dot(h, w, precision=hp) + b


# ----------------------------------- main ----------------------------------- #

if __name__ == "__main__":
    key = jax.random.PRNGKey(0)
    k_params, k_x, k_a = jax.random.split(key, 3)

    params = init_params(k_params, action_dim=ACTION_DIM)

    batch = 32   # -> 2 grid steps of Bt=16 (both v7x TensorCores busy)
    x = jax.random.uniform(k_x, (batch, 1, 256, 256), jnp.float32)   # bitmap obs
    action = jax.random.normal(k_a, (batch, ACTION_DIM), jnp.float32)

    fwd = jax.jit(functools.partial(critic_forward, batch_tile=16))
    q = fwd(params, x, action)
    q = jax.block_until_ready(q)
    assert q.shape == (batch, 1), q.shape
    assert q.dtype == jnp.float32

    q_ref = critic_reference(params, x, action)
    # bf16 input/conv1-weight stream + default-precision f32 MXU passes vs. a
    # HIGHEST-precision f32 reference -> allow ~2e-2.
    assert bool(jnp.allclose(q, q_ref, rtol=2e-2, atol=2e-2)), (q, q_ref)

    print("KERNEL_OK")
</pallas_src>

<mosaic_0001>
module attributes {stable_mosaic.version = 11 : i64} {
  func.func @_critic_kernel(%arg0: i32, %arg1: memref<1x1024x1024xbf16, #tpu.memory_space<vmem>>, %arg2: memref<16x32xf32, #tpu.memory_space<vmem>>, %arg3: memref<512x128xbf16, #tpu.memory_space<vmem>>, %arg4: memref<1x128xf32, #tpu.memory_space<vmem>>, %arg5: memref<256x32xf32, #tpu.memory_space<vmem>>, %arg6: memref<1x32xf32, #tpu.memory_space<vmem>>, %arg7: memref<4x32x32xf32, #tpu.memory_space<vmem>>, %arg8: memref<1x32xf32, #tpu.memory_space<vmem>>, %arg9: memref<16x32x256xf32, #tpu.memory_space<vmem>>, %arg10: memref<1x256xf32, #tpu.memory_space<vmem>>, %arg11: memref<256x256xf32, #tpu.memory_space<vmem>>, %arg12: memref<32x256xf32, #tpu.memory_space<vmem>>, %arg13: memref<1x256xf32, #tpu.memory_space<vmem>>, %arg14: memref<1x256xf32, #tpu.memory_space<vmem>>, %arg15: memref<1x1xf32, #tpu.memory_space<vmem>>, %arg16: memref<16x1xf32, #tpu.memory_space<vmem>>, %arg17: memref<1024x256xf32, #tpu.memory_space<vmem>>) attributes {dimension_semantics = [#tpu.dimension_semantics<parallel>], iteration_bounds = array<i64: 2>, scalar_prefetch = 0 : i64, scratch_operands = 1 : i64, tpu.core_type = #tpu.core_type<tc>, window_params = [{transform_indices = @transform_0, window_bounds = array<i64: 1, 1024, 1024>}, {transform_indices = @transform_1, window_bounds = array<i64: 16, 32>}, {pipeline_mode = #tpu.pipeline_mode<synchronous>, transform_indices = @transform_2, window_bounds = array<i64: 512, 128>}, {pipeline_mode = #tpu.pipeline_mode<synchronous>, transform_indices = @transform_3, window_bounds = array<i64: 1, 128>}, {pipeline_mode = #tpu.pipeline_mode<synchronous>, transform_indices = @transform_4, window_bounds = array<i64: 256, 32>}, {pipeline_mode = #tpu.pipeline_mode<synchronous>, transform_indices = @transform_5, window_bounds = array<i64: 1, 32>}, {pipeline_mode = #tpu.pipeline_mode<synchronous>, transform_indices = @transform_6, window_bounds = array<i64: 4, 32, 32>}, {pipeline_mode = #tpu.pipeline_mode<synchronous>, transform_indices = @transform_7, window_bounds = array<i64: 1, 32>}, {pipeline_mode = #tpu.pipeline_mode<synchronous>, transform_indices = @transform_8, window_bounds = array<i64: 16, 32, 256>}, {pipeline_mode = #tpu.pipeline_mode<synchronous>, transform_indices = @transform_9, window_bounds = array<i64: 1, 256>}, {pipeline_mode = #tpu.pipeline_mode<synchronous>, transform_indices = @transform_10, window_bounds = array<i64: 256, 256>}, {pipeline_mode = #tpu.pipeline_mode<synchronous>, transform_indices = @transform_11, window_bounds = array<i64: 32, 256>}, {pipeline_mode = #tpu.pipeline_mode<synchronous>, transform_indices = @transform_12, window_bounds = array<i64: 1, 256>}, {pipeline_mode = #tpu.pipeline_mode<synchronous>, transform_indices = @transform_13, window_bounds = array<i64: 1, 256>}, {pipeline_mode = #tpu.pipeline_mode<synchronous>, transform_indices = @transform_14, window_bounds = array<i64: 1, 1>}, {transform_indices = @transform_15, window_bounds = array<i64: 16, 1>}]} {
    %c0 = arith.constant 0 : index
    %c0_0 = arith.constant 0 : index
    %0 = vector.load %arg3[%c0, %c0_0] : memref<512x128xbf16, #tpu.memory_space<vmem>>, vector<512x128xbf16>
    %c0_1 = arith.constant 0 : index
    %c0_2 = arith.constant 0 : index
    %1 = vector.load %arg4[%c0_1, %c0_2] : memref<1x128xf32, #tpu.memory_space<vmem>>, vector<1x128xf32>
    %c0_3 = arith.constant 0 : index
    %c0_4 = arith.constant 0 : index
    %c0_5 = arith.constant 0 : index
    %2 = vector.load %arg1[%c0_3, %c0_4, %c0_5] : memref<1x1024x1024xbf16, #tpu.memory_space<vmem>>, vector<1x1024x512xbf16>
    %3 = vector.shape_cast %2 : vector<1x1024x512xbf16> to vector<1024x512xbf16>
    %c0_6 = arith.constant 0 : index
    %c0_7 = arith.constant 0 : index
    %c512 = arith.constant 512 : index
    %4 = vector.load %arg1[%c0_6, %c0_7, %c512] : memref<1x1024x1024xbf16, #tpu.memory_space<vmem>>, vector<1x1024x512xbf16>
    %5 = vector.shape_cast %4 : vector<1x1024x512xbf16> to vector<1024x512xbf16>
    %cst = arith.constant dense<0.000000e+00> : vector<1024x128xf32>
    %6 = tpu.matmul %3, %0, %cst {dimension_numbers = #tpu.dot_dimension_numbers<[1], [0], [0], [1], [0, 0, 1, 1], [], []>} : vector<1024x512xbf16>, vector<512x128xbf16>, vector<1024x128xf32> -> vector<1024x128xf32>
    %7 = vector.broadcast %1 : vector<1x128xf32> to vector<1024x128xf32>
    %8 = arith.addf %6, %7 : vector<1024x128xf32>
    %cst_8 = arith.constant 0.000000e+00 : f32
    %9 = vector.broadcast %cst_8 : f32 to vector<1024x128xf32>
    %10 = arith.maximumf %8, %9 : vector<1024x128xf32>
    %c0_9 = arith.constant 0 : index
    %c0_10 = arith.constant 0 : index
    %11 = vector.load %arg17[%c0_9, %c0_10] : memref<1024x256xf32, #tpu.memory_space<vmem>>, vector<1024x128xf32>
    tpu.vector_store %arg17[%c0_9, %c0_10], %10 {strides = array<i32>} : memref<1024x256xf32, #tpu.memory_space<vmem>>, vector<1024x128xf32>,
    %cst_11 = arith.constant dense<0.000000e+00> : vector<1024x128xf32>
    %12 = tpu.matmul %5, %0, %cst_11 {dimension_numbers = #tpu.dot_dimension_numbers<[1], [0], [0], [1], [0, 0, 1, 1], [], []>} : vector<1024x512xbf16>, vector<512x128xbf16>, vector<1024x128xf32> -> vector<1024x128xf32>
    %13 = vector.broadcast %1 : vector<1x128xf32> to vector<1024x128xf32>
    %14 = arith.addf %12, %13 : vector<1024x128xf32>
    %cst_12 = arith.constant 0.000000e+00 : f32
    %15 = vector.broadcast %cst_12 : f32 to vector<1024x128xf32>
    %16 = arith.maximumf %14, %15 : vector<1024x128xf32>
    %c0_13 = arith.constant 0 : index
    %c128 = arith.constant 128 : index
    %17 = vector.load %arg17[%c0_13, %c128] : memref<1024x256xf32, #tpu.memory_space<vmem>>, vector<1024x128xf32>
    tpu.vector_store %arg17[%c0_13, %c128], %16 {strides = array<i32>} : memref<1024x256xf32, #tpu.memory_space<vmem>>, vector<1024x128xf32>,
    %c0_14 = arith.constant 0 : index
    %c0_15 = arith.constant 0 : index
    %18 = vector.load %arg17[%c0_14, %c0_15] : memref<1024x256xf32, #tpu.memory_space<vmem>>, vector<1024x256xf32>
    %c0_16 = arith.constant 0 : index
    %c0_17 = arith.constant 0 : index
    %19 = vector.load %arg5[%c0_16, %c0_17] : memref<256x32xf32, #tpu.memory_space<vmem>>, vector<256x32xf32>
    %cst_18 = arith.constant dense<0.000000e+00> : vector<1024x32xf32>
    %20 = tpu.matmul %18, %19, %cst_18 {dimension_numbers = #tpu.dot_dimension_numbers<[1], [0], [0], [1], [0, 0, 1, 1], [], []>} : vector<1024x256xf32>, vector<256x32xf32>, vector<1024x32xf32> -> vector<1024x32xf32>
    %c0_19 = arith.constant 0 : index
    %c0_20 = arith.constant 0 : index
    %21 = vector.load %arg6[%c0_19, %c0_20] : memref<1x32xf32, #tpu.memory_space<vmem>>, vector<1x32xf32>
    %22 = vector.broadcast %21 : vector<1x32xf32> to vector<1024x32xf32>
    %23 = arith.addf %20, %22 : vector<1024x32xf32>
    %cst_21 = arith.constant 0.000000e+00 : f32
    %24 = vector.broadcast %cst_21 : f32 to vector<1024x32xf32>
    %25 = arith.maximumf %23, %24 : vector<1024x32xf32>
    %26 = vector.extract_strided_slice %25 {offsets = [0, 0], sizes = [256, 32], strides = [1, 1]} : vector<1024x32xf32> to vector<256x32xf32>
    %c0_22 = arith.constant 0 : index
    %c0_23 = arith.constant 0 : index
    %c0_24 = arith.constant 0 : index
    %27 = vector.load %arg7[%c0_22, %c0_23, %c0_24] : memref<4x32x32xf32, #tpu.memory_space<vmem>>, vector<1x32x32xf32>
    %28 = vector.shape_cast %27 : vector<1x32x32xf32> to vector<32x32xf32>
    %cst_25 = arith.constant dense<0.000000e+00> : vector<256x32xf32>
    %29 = tpu.matmul %26, %28, %cst_25 {dimension_numbers = #tpu.dot_dimension_numbers<[1], [0], [0], [1], [0, 0, 1, 1], [], []>} : vector<256x32xf32>, vector<32x32xf32>, vector<256x32xf32> -> vector<256x32xf32>
    %30 = vector.extract_strided_slice %25 {offsets = [256, 0], sizes = [256, 32], strides = [1, 1]} : vector<1024x32xf32> to vector<256x32xf32>
    %c1 = arith.constant 1 : index
    %c0_26 = arith.constant 0 : index
    %c0_27 = arith.constant 0 : index
    %31 = vector.load %arg7[%c1, %c0_26, %c0_27] : memref<4x32x32xf32, #tpu.memory_space<vmem>>, vector<1x32x32xf32>
    %32 = vector.shape_cast %31 : vector<1x32x32xf32> to vector<32x32xf32>
    %cst_28 = arith.constant dense<0.000000e+00> : vector<256x32xf32>
    %33 = tpu.matmul %30, %32, %cst_28 {dimension_numbers = #tpu.dot_dimension_numbers<[1], [0], [0], [1], [0, 0, 1, 1], [], []>} : vector<256x32xf32>, vector<32x32xf32>, vector<256x32xf32> -> vector<256x32xf32>
    %34 = arith.addf %29, %33 : vector<256x32xf32>
    %35 = vector.extract_strided_slice %25 {offsets = [512, 0], sizes = [256, 32], strides = [1, 1]} : vector<1024x32xf32> to vector<256x32xf32>
    %c2 = arith.constant 2 : index
    %c0_29 = arith.constant 0 : index
    %c0_30 = arith.constant 0 : index
    %36 = vector.load %arg7[%c2, %c0_29, %c0_30] : memref<4x32x32xf32, #tpu.memory_space<vmem>>, vector<1x32x32xf32>
    %37 = vector.shape_cast %36 : vector<1x32x32xf32> to vector<32x32xf32>
    %cst_31 = arith.constant dense<0.000000e+00> : vector<256x32xf32>
    %38 = tpu.matmul %35, %37, %cst_31 {dimension_numbers = #tpu.dot_dimension_numbers<[1], [0], [0], [1], [0, 0, 1, 1], [], []>} : vector<256x32xf32>, vector<32x32xf32>, vector<256x32xf32> -> vector<256x32xf32>
    %39 = arith.addf %34, %38 : vector<256x32xf32>
    %40 = vector.extract_strided_slice %25 {offsets = [768, 0], sizes = [256, 32], strides = [1, 1]} : vector<1024x32xf32> to vector<256x32xf32>
    %c3 = arith.constant 3 : index
    %c0_32 = arith.constant 0 : index
    %c0_33 = arith.constant 0 : index
    %41 = vector.load %arg7[%c3, %c0_32, %c0_33] : memref<4x32x32xf32, #tpu.memory_space<vmem>>, vector<1x32x32xf32>
    %42 = vector.shape_cast %41 : vector<1x32x32xf32> to vector<32x32xf32>
    %cst_34 = arith.constant dense<0.000000e+00> : vector<256x32xf32>
    %43 = tpu.matmul %40, %42, %cst_34 {dimension_numbers = #tpu.dot_dimension_numbers<[1], [0], [0], [1], [0, 0, 1, 1], [], []>} : vector<256x32xf32>, vector<32x32xf32>, vector<256x32xf32> -> vector<256x32xf32>
    %44 = arith.addf %39, %43 : vector<256x32xf32>
    %c0_35 = arith.constant 0 : index
    %c0_36 = arith.constant 0 : index
    %45 = vector.load %arg8[%c0_35, %c0_36] : memref<1x32xf32, #tpu.memory_space<vmem>>, vector<1x32xf32>
    %46 = vector.broadcast %45 : vector<1x32xf32> to vector<256x32xf32>
    %47 = arith.addf %44, %46 : vector<256x32xf32>
    %cst_37 = arith.constant 0.000000e+00 : f32
    %48 = vector.broadcast %cst_37 : f32 to vector<256x32xf32>
    %49 = arith.maximumf %47, %48 : vector<256x32xf32>
    %50 = vector.extract_strided_slice %49 {offsets = [0, 0], sizes = [16, 32], strides = [1, 1]} : vector<256x32xf32> to vector<16x32xf32>
    %c0_38 = arith.constant 0 : index
    %c0_39 = arith.constant 0 : index
    %c0_40 = arith.constant 0 : index
    %51 = vector.load %arg9[%c0_38, %c0_39, %c0_40] : memref<16x32x256xf32, #tpu.memory_space<vmem>>, vector<1x32x256xf32>
    %52 = vector.shape_cast %51 : vector<1x32x256xf32> to vector<32x256xf32>
    %cst_41 = arith.constant dense<0.000000e+00> : vector<16x256xf32>
    %53 = tpu.matmul %50, %52, %cst_41 {dimension_numbers = #tpu.dot_dimension_numbers<[1], [0], [0], [1], [0, 0, 1, 1], [], []>} : vector<16x32xf32>, vector<32x256xf32>, vector<16x256xf32> -> vector<16x256xf32>
    %54 = vector.extract_strided_slice %49 {offsets = [16, 0], sizes = [16, 32], strides = [1, 1]} : vector<256x32xf32> to vector<16x32xf32>
    %c1_42 = arith.constant 1 : index
    %c0_43 = arith.constant 0 : index
    %c0_44 = arith.constant 0 : index
    %55 = vector.load %arg9[%c1_42, %c0_43, %c0_44] : memref<16x32x256xf32, #tpu.memory_space<vmem>>, vector<1x32x256xf32>
    %56 = vector.shape_cast %55 : vector<1x32x256xf32> to vector<32x256xf32>
    %cst_45 = arith.constant dense<0.000000e+00> : vector<16x256xf32>
    %57 = tpu.matmul %54, %56, %cst_45 {dimension_numbers = #tpu.dot_dimension_numbers<[1], [0], [0], [1], [0, 0, 1, 1], [], []>} : vector<16x32xf32>, vector<32x256xf32>, vector<16x256xf32> -> vector<16x256xf32>
    %58 = arith.addf %53, %57 : vector<16x256xf32>
    %59 = vector.extract_strided_slice %49 {offsets = [32, 0], sizes = [16, 32], strides = [1, 1]} : vector<256x32xf32> to vector<16x32xf32>
    %c2_46 = arith.constant 2 : index
    %c0_47 = arith.constant 0 : index
    %c0_48 = arith.constant 0 : index
    %60 = vector.load %arg9[%c2_46, %c0_47, %c0_48] : memref<16x32x256xf32, #tpu.memory_space<vmem>>, vector<1x32x256xf32>
    %61 = vector.shape_cast %60 : vector<1x32x256xf32> to vector<32x256xf32>
    %cst_49 = arith.constant dense<0.000000e+00> : vector<16x256xf32>
    %62 = tpu.matmul %59, %61, %cst_49 {dimension_numbers = #tpu.dot_dimension_numbers<[1], [0], [0], [1], [0, 0, 1, 1], [], []>} : vector<16x32xf32>, vector<32x256xf32>, vector<16x256xf32> -> vector<16x256xf32>
    %63 = arith.addf %58, %62 : vector<16x256xf32>
    %64 = vector.extract_strided_slice %49 {offsets = [48, 0], sizes = [16, 32], strides = [1, 1]} : vector<256x32xf32> to vector<16x32xf32>
    %c3_50 = arith.constant 3 : index
    %c0_51 = arith.constant 0 : index
    %c0_52 = arith.constant 0 : index
    %65 = vector.load %arg9[%c3_50, %c0_51, %c0_52] : memref<16x32x256xf32, #tpu.memory_space<vmem>>, vector<1x32x256xf32>
    %66 = vector.shape_cast %65 : vector<1x32x256xf32> to vector<32x256xf32>
    %cst_53 = arith.constant dense<0.000000e+00> : vector<16x256xf32>
    %67 = tpu.matmul %64, %66, %cst_53 {dimension_numbers = #tpu.dot_dimension_numbers<[1], [0], [0], [1], [0, 0, 1, 1], [], []>} : vector<16x32xf32>, vector<32x256xf32>, vector<16x256xf32> -> vector<16x256xf32>
    %68 = arith.addf %63, %67 : vector<16x256xf32>
    %69 = vector.extract_strided_slice %49 {offsets = [64, 0], sizes = [16, 32], strides = [1, 1]} : vector<256x32xf32> to vector<16x32xf32>
    %c4 = arith.constant 4 : index
    %c0_54 = arith.constant 0 : index
    %c0_55 = arith.constant 0 : index
    %70 = vector.load %arg9[%c4, %c0_54, %c0_55] : memref<16x32x256xf32, #tpu.memory_space<vmem>>, vector<1x32x256xf32>
    %71 = vector.shape_cast %70 : vector<1x32x256xf32> to vector<32x256xf32>
    %cst_56 = arith.constant dense<0.000000e+00> : vector<16x256xf32>
    %72 = tpu.matmul %69, %71, %cst_56 {dimension_numbers = #tpu.dot_dimension_numbers<[1], [0], [0], [1], [0, 0, 1, 1], [], []>} : vector<16x32xf32>, vector<32x256xf32>, vector<16x256xf32> -> vector<16x256xf32>
    %73 = arith.addf %68, %72 : vector<16x256xf32>
    %74 = vector.extract_strided_slice %49 {offsets = [80, 0], sizes = [16, 32], strides = [1, 1]} : vector<256x32xf32> to vector<16x32xf32>
    %c5 = arith.constant 5 : index
    %c0_57 = arith.constant 0 : index
    %c0_58 = arith.constant 0 : index
    %75 = vector.load %arg9[%c5, %c0_57, %c0_58] : memref<16x32x256xf32, #tpu.memory_space<vmem>>, vector<1x32x256xf32>
    %76 = vector.shape_cast %75 : vector<1x32x256xf32> to vector<32x256xf32>
    %cst_59 = arith.constant dense<0.000000e+00> : vector<16x256xf32>
    %77 = tpu.matmul %74, %76, %cst_59 {dimension_numbers = #tpu.dot_dimension_numbers<[1], [0], [0], [1], [0, 0, 1, 1], [], []>} : vector<16x32xf32>, vector<32x256xf32>, vector<16x256xf32> -> vector<16x256xf32>
    %78 = arith.addf %73, %77 : vector<16x256xf32>
    %79 = vector.extract_strided_slice %49 {offsets = [96, 0], sizes = [16, 32], strides = [1, 1]} : vector<256x32xf32> to vector<16x32xf32>
    %c6 = arith.constant 6 : index
    %c0_60 = arith.constant 0 : index
    %c0_61 = arith.constant 0 : index
    %80 = vector.load %arg9[%c6, %c0_60, %c0_61] : memref<16x32x256xf32, #tpu.memory_space<vmem>>, vector<1x32x256xf32>
    %81 = vector.shape_cast %80 : vector<1x32x256xf32> to vector<32x256xf32>
    %cst_62 = arith.constant dense<0.000000e+00> : vector<16x256xf32>
    %82 = tpu.matmul %79, %81, %cst_62 {dimension_numbers = #tpu.dot_dimension_numbers<[1], [0], [0], [1], [0, 0, 1, 1], [], []>} : vector<16x32xf32>, vector<32x256xf32>, vector<16x256xf32> -> vector<16x256xf32>
    %83 = arith.addf %78, %82 : vector<16x256xf32>
    %84 = vector.extract_strided_slice %49 {offsets = [112, 0], sizes = [16, 32], strides = [1, 1]} : vector<256x32xf32> to vector<16x32xf32>
    %c7 = arith.constant 7 : index
    %c0_63 = arith.constant 0 : index
    %c0_64 = arith.constant 0 : index
    %85 = vector.load %arg9[%c7, %c0_63, %c0_64] : memref<16x32x256xf32, #tpu.memory_space<vmem>>, vector<1x32x256xf32>
    %86 = vector.shape_cast %85 : vector<1x32x256xf32> to vector<32x256xf32>
    %cst_65 = arith.constant dense<0.000000e+00> : vector<16x256xf32>
    %87 = tpu.matmul %84, %86, %cst_65 {dimension_numbers = #tpu.dot_dimension_numbers<[1], [0], [0], [1], [0, 0, 1, 1], [], []>} : vector<16x32xf32>, vector<32x256xf32>, vector<16x256xf32> -> vector<16x256xf32>
    %88 = arith.addf %83, %87 : vector<16x256xf32>
    %89 = vector.extract_strided_slice %49 {offsets = [128, 0], sizes = [16, 32], strides = [1, 1]} : vector<256x32xf32> to vector<16x32xf32>
    %c8 = arith.constant 8 : index
    %c0_66 = arith.constant 0 : index
    %c0_67 = arith.constant 0 : index
    %90 = vector.load %arg9[%c8, %c0_66, %c0_67] : memref<16x32x256xf32, #tpu.memory_space<vmem>>, vector<1x32x256xf32>
    %91 = vector.shape_cast %90 : vector<1x32x256xf32> to vector<32x256xf32>
    %cst_68 = arith.constant dense<0.000000e+00> : vector<16x256xf32>
    %92 = tpu.matmul %89, %91, %cst_68 {dimension_numbers = #tpu.dot_dimension_numbers<[1], [0], [0], [1], [0, 0, 1, 1], [], []>} : vector<16x32xf32>, vector<32x256xf32>, vector<16x256xf32> -> vector<16x256xf32>
    %93 = arith.addf %88, %92 : vector<16x256xf32>
    %94 = vector.extract_strided_slice %49 {offsets = [144, 0], sizes = [16, 32], strides = [1, 1]} : vector<256x32xf32> to vector<16x32xf32>
    %c9 = arith.constant 9 : index
    %c0_69 = arith.constant 0 : index
    %c0_70 = arith.constant 0 : index
    %95 = vector.load %arg9[%c9, %c0_69, %c0_70] : memref<16x32x256xf32, #tpu.memory_space<vmem>>, vector<1x32x256xf32>
    %96 = vector.shape_cast %95 : vector<1x32x256xf32> to vector<32x256xf32>
    %cst_71 = arith.constant dense<0.000000e+00> : vector<16x256xf32>
    %97 = tpu.matmul %94, %96, %cst_71 {dimension_numbers = #tpu.dot_dimension_numbers<[1], [0], [0], [1], [0, 0, 1, 1], [], []>} : vector<16x32xf32>, vector<32x256xf32>, vector<16x256xf32> -> vector<16x256xf32>
    %98 = arith.addf %93, %97 : vector<16x256xf32>
    %99 = vector.extract_strided_slice %49 {offsets = [160, 0], sizes = [16, 32], strides = [1, 1]} : vector<256x32xf32> to vector<16x32xf32>
    %c10 = arith.constant 10 : index
    %c0_72 = arith.constant 0 : index
    %c0_73 = arith.constant 0 : index
    %100 = vector.load %arg9[%c10, %c0_72, %c0_73] : memref<16x32x256xf32, #tpu.memory_space<vmem>>, vector<1x32x256xf32>
    %101 = vector.shape_cast %100 : vector<1x32x256xf32> to vector<32x256xf32>
    %cst_74 = arith.constant dense<0.000000e+00> : vector<16x256xf32>
    %102 = tpu.matmul %99, %101, %cst_74 {dimension_numbers = #tpu.dot_dimension_numbers<[1], [0], [0], [1], [0, 0, 1, 1], [], []>} : vector<16x32xf32>, vector<32x256xf32>, vector<16x256xf32> -> vector<16x256xf32>
    %103 = arith.addf %98, %102 : vector<16x256xf32>
    %104 = vector.extract_strided_slice %49 {offsets = [176, 0], sizes = [16, 32], strides = [1, 1]} : vector<256x32xf32> to vector<16x32xf32>
    %c11 = arith.constant 11 : index
    %c0_75 = arith.constant 0 : index
    %c0_76 = arith.constant 0 : index
    %105 = vector.load %arg9[%c11, %c0_75, %c0_76] : memref<16x32x256xf32, #tpu.memory_space<vmem>>, vector<1x32x256xf32>
    %106 = vector.shape_cast %105 : vector<1x32x256xf32> to vector<32x256xf32>
    %cst_77 = arith.constant dense<0.000000e+00> : vector<16x256xf32>
    %107 = tpu.matmul %104, %106, %cst_77 {dimension_numbers = #tpu.dot_dimension_numbers<[1], [0], [0], [1], [0, 0, 1, 1], [], []>} : vector<16x32xf32>, vector<32x256xf32>, vector<16x256xf32> -> vector<16x256xf32>
    %108 = arith.addf %103, %107 : vector<16x256xf32>
    %109 = vector.extract_strided_slice %49 {offsets = [192, 0], sizes = [16, 32], strides = [1, 1]} : vector<256x32xf32> to vector<16x32xf32>
    %c12 = arith.constant 12 : index
    %c0_78 = arith.constant 0 : index
    %c0_79 = arith.constant 0 : index
    %110 = vector.load %arg9[%c12, %c0_78, %c0_79] : memref<16x32x256xf32, #tpu.memory_space<vmem>>, vector<1x32x256xf32>
    %111 = vector.shape_cast %110 : vector<1x32x256xf32> to vector<32x256xf32>
    %cst_80 = arith.constant dense<0.000000e+00> : vector<16x256xf32>
    %112 = tpu.matmul %109, %111, %cst_80 {dimension_numbers = #tpu.dot_dimension_numbers<[1], [0], [0], [1], [0, 0, 1, 1], [], []>} : vector<16x32xf32>, vector<32x256xf32>, vector<16x256xf32> -> vector<16x256xf32>
    %113 = arith.addf %108, %112 : vector<16x256xf32>
    %114 = vector.extract_strided_slice %49 {offsets = [208, 0], sizes = [16, 32], strides = [1, 1]} : vector<256x32xf32> to vector<16x32xf32>
    %c13 = arith.constant 13 : index
    %c0_81 = arith.constant 0 : index
    %c0_82 = arith.constant 0 : index
    %115 = vector.load %arg9[%c13, %c0_81, %c0_82] : memref<16x32x256xf32, #tpu.memory_space<vmem>>, vector<1x32x256xf32>
    %116 = vector.shape_cast %115 : vector<1x32x256xf32> to vector<32x256xf32>
    %cst_83 = arith.constant dense<0.000000e+00> : vector<16x256xf32>
    %117 = tpu.matmul %114, %116, %cst_83 {dimension_numbers = #tpu.dot_dimension_numbers<[1], [0], [0], [1], [0, 0, 1, 1], [], []>} : vector<16x32xf32>, vector<32x256xf32>, vector<16x256xf32> -> vector<16x256xf32>
    %118 = arith.addf %113, %117 : vector<16x256xf32>
    %119 = vector.extract_strided_slice %49 {offsets = [224, 0], sizes = [16, 32], strides = [1, 1]} : vector<256x32xf32> to vector<16x32xf32>
    %c14 = arith.constant 14 : index
    %c0_84 = arith.constant 0 : index
    %c0_85 = arith.constant 0 : index
    %120 = vector.load %arg9[%c14, %c0_84, %c0_85] : memref<16x32x256xf32, #tpu.memory_space<vmem>>, vector<1x32x256xf32>
    %121 = vector.shape_cast %120 : vector<1x32x256xf32> to vector<32x256xf32>
    %cst_86 = arith.constant dense<0.000000e+00> : vector<16x256xf32>
    %122 = tpu.matmul %119, %121, %cst_86 {dimension_numbers = #tpu.dot_dimension_numbers<[1], [0], [0], [1], [0, 0, 1, 1], [], []>} : vector<16x32xf32>, vector<32x256xf32>, vector<16x256xf32> -> vector<16x256xf32>
    %123 = arith.addf %118, %122 : vector<16x256xf32>
    %124 = vector.extract_strided_slice %49 {offsets = [240, 0], sizes = [16, 32], strides = [1, 1]} : vector<256x32xf32> to vector<16x32xf32>
    %c15 = arith.constant 15 : index
    %c0_87 = arith.constant 0 : index
    %c0_88 = arith.constant 0 : index
    %125 = vector.load %arg9[%c15, %c0_87, %c0_88] : memref<16x32x256xf32, #tpu.memory_space<vmem>>, vector<1x32x256xf32>
    %126 = vector.shape_cast %125 : vector<1x32x256xf32> to vector<32x256xf32>
    %cst_89 = arith.constant dense<0.000000e+00> : vector<16x256xf32>
    %127 = tpu.matmul %124, %126, %cst_89 {dimension_numbers = #tpu.dot_dimension_numbers<[1], [0], [0], [1], [0, 0, 1, 1], [], []>} : vector<16x32xf32>, vector<32x256xf32>, vector<16x256xf32> -> vector<16x256xf32>
    %128 = arith.addf %123, %127 : vector<16x256xf32>
    %c0_90 = arith.constant 0 : index
    %c0_91 = arith.constant 0 : index
    %129 = vector.load %arg10[%c0_90, %c0_91] : memref<1x256xf32, #tpu.memory_space<vmem>>, vector<1x256xf32>
    %130 = vector.broadcast %129 : vector<1x256xf32> to vector<16x256xf32>
    %131 = arith.addf %128, %130 : vector<16x256xf32>
    %cst_92 = arith.constant 0.000000e+00 : f32
    %132 = vector.broadcast %cst_92 : f32 to vector<16x256xf32>
    %133 = arith.maximumf %131, %132 : vector<16x256xf32>
    %c0_93 = arith.constant 0 : index
    %c0_94 = arith.constant 0 : index
    %134 = vector.load %arg2[%c0_93, %c0_94] : memref<16x32xf32, #tpu.memory_space<vmem>>, vector<16x32xf32>
    %c0_95 = arith.constant 0 : index
    %c0_96 = arith.constant 0 : index
    %135 = vector.load %arg11[%c0_95, %c0_96] : memref<256x256xf32, #tpu.memory_space<vmem>>, vector<256x256xf32>
    %cst_97 = arith.constant dense<0.000000e+00> : vector<16x256xf32>
    %136 = tpu.matmul %133, %135, %cst_97 {dimension_numbers = #tpu.dot_dimension_numbers<[1], [0], [0], [1], [0, 0, 1, 1], [], []>} : vector<16x256xf32>, vector<256x256xf32>, vector<16x256xf32> -> vector<16x256xf32>
    %c0_98 = arith.constant 0 : index
    %c0_99 = arith.constant 0 : index
    %137 = vector.load %arg12[%c0_98, %c0_99] : memref<32x256xf32, #tpu.memory_space<vmem>>, vector<32x256xf32>
    %cst_100 = arith.constant dense<0.000000e+00> : vector<16x256xf32>
    %138 = tpu.matmul %134, %137, %cst_100 {dimension_numbers = #tpu.dot_dimension_numbers<[1], [0], [0], [1], [0, 0, 1, 1], [], []>} : vector<16x32xf32>, vector<32x256xf32>, vector<16x256xf32> -> vector<16x256xf32>
    %139 = arith.addf %136, %138 : vector<16x256xf32>
    %c0_101 = arith.constant 0 : index
    %c0_102 = arith.constant 0 : index
    %140 = vector.load %arg13[%c0_101, %c0_102] : memref<1x256xf32, #tpu.memory_space<vmem>>, vector<1x256xf32>
    %141 = vector.broadcast %140 : vector<1x256xf32> to vector<16x256xf32>
    %142 = arith.addf %139, %141 : vector<16x256xf32>
    %cst_103 = arith.constant 0.000000e+00 : f32
    %143 = vector.broadcast %cst_103 : f32 to vector<16x256xf32>
    %144 = arith.maximumf %142, %143 : vector<16x256xf32>
    %c0_104 = arith.constant 0 : index
    %c0_105 = arith.constant 0 : index
    %145 = vector.load %arg14[%c0_104, %c0_105] : memref<1x256xf32, #tpu.memory_space<vmem>>, vector<1x256xf32>
    %146 = vector.broadcast %145 : vector<1x256xf32> to vector<16x256xf32>
    %147 = arith.mulf %144, %146 : vector<16x256xf32>
    %cst_106 = arith.constant dense<0.000000e+00> : vector<16xf32>
    %148 = vector.multi_reduction <add>, %147, %cst_106 [1] : vector<16x256xf32> to vector<16xf32>
    %149 = vector.shape_cast %148 : vector<16xf32> to vector<16x1xf32>
    %c0_107 = arith.constant 0 : index
    %c0_108 = arith.constant 0 : index
    %150 = vector.load %arg15[%c0_107, %c0_108] : memref<1x1xf32, #tpu.memory_space<vmem>>, vector<1x1xf32>
    %151 = vector.broadcast %150 : vector<1x1xf32> to vector<16x1xf32>
    %152 = arith.addf %149, %151 : vector<16x1xf32>
    %c0_109 = arith.constant 0 : index
    %c0_110 = arith.constant 0 : index
    %153 = vector.load %arg16[%c0_109, %c0_110] : memref<16x1xf32, #tpu.memory_space<vmem>>, vector<16x1xf32>
    tpu.vector_store %arg16[%c0_109, %c0_110], %152 {strides = array<i32>} : memref<16x1xf32, #tpu.memory_space<vmem>>, vector<16x1xf32>,
    return
  }
  func.func @transform_0(%arg0: i32) -> (i32, i32, i32) {
    %c0_i32 = arith.constant 0 : i32
    %c0_i32_0 = arith.constant 0 : i32
    %c0_i32_1 = arith.constant 0 : i32
    return %arg0, %c0_i32, %c0_i32_0 : i32, i32, i32
  }
  func.func @transform_1(%arg0: i32) -> (i32, i32) {
    %c0_i32 = arith.constant 0 : i32
    %c0_i32_0 = arith.constant 0 : i32
    return %arg0, %c0_i32 : i32, i32
  }
  func.func @transform_2(%arg0: i32) -> (i32, i32) {
    %c0_i32 = arith.constant 0 : i32
    %c0_i32_0 = arith.constant 0 : i32
    %c0_i32_1 = arith.constant 0 : i32
    return %c0_i32, %c0_i32_0 : i32, i32
  }
  func.func @transform_3(%arg0: i32) -> (i32, i32) {
    %c0_i32 = arith.constant 0 : i32
    %c0_i32_0 = arith.constant 0 : i32
    %c0_i32_1 = arith.constant 0 : i32
    return %c0_i32, %c0_i32_0 : i32, i32
  }
  func.func @transform_4(%arg0: i32) -> (i32, i32) {
    %c0_i32 = arith.constant 0 : i32
    %c0_i32_0 = arith.constant 0 : i32
    %c0_i32_1 = arith.constant 0 : i32
    return %c0_i32, %c0_i32_0 : i32, i32
  }
  func.func @transform_5(%arg0: i32) -> (i32, i32) {
    %c0_i32 = arith.constant 0 : i32
    %c0_i32_0 = arith.constant 0 : i32
    %c0_i32_1 = arith.constant 0 : i32
    return %c0_i32, %c0_i32_0 : i32, i32
  }
  func.func @transform_6(%arg0: i32) -> (i32, i32, i32) {
    %c0_i32 = arith.constant 0 : i32
    %c0_i32_0 = arith.constant 0 : i32
    %c0_i32_1 = arith.constant 0 : i32
    %c0_i32_2 = arith.constant 0 : i32
    return %c0_i32, %c0_i32_0, %c0_i32_1 : i32, i32, i32
  }
  func.func @transform_7(%arg0: i32) -> (i32, i32) {
    %c0_i32 = arith.constant 0 : i32
    %c0_i32_0 = arith.constant 0 : i32
    %c0_i32_1 = arith.constant 0 : i32
    return %c0_i32, %c0_i32_0 : i32, i32
  }
  func.func @transform_8(%arg0: i32) -> (i32, i32, i32) {
    %c0_i32 = arith.constant 0 : i32
    %c0_i32_0 = arith.constant 0 : i32
    %c0_i32_1 = arith.constant 0 : i32
    %c0_i32_2 = arith.constant 0 : i32
    return %c0_i32, %c0_i32_0, %c0_i32_1 : i32, i32, i32
  }
  func.func @transform_9(%arg0: i32) -> (i32, i32) {
    %c0_i32 = arith.constant 0 : i32
    %c0_i32_0 = arith.constant 0 : i32
    %c0_i32_1 = arith.constant 0 : i32
    return %c0_i32, %c0_i32_0 : i32, i32
  }
  func.func @transform_10(%arg0: i32) -> (i32, i32) {
    %c0_i32 = arith.constant 0 : i32
    %c0_i32_0 = arith.constant 0 : i32
    %c0_i32_1 = arith.constant 0 : i32
    return %c0_i32, %c0_i32_0 : i32, i32
  }
  func.func @transform_11(%arg0: i32) -> (i32, i32) {
    %c0_i32 = arith.constant 0 : i32
    %c0_i32_0 = arith.constant 0 : i32
    %c0_i32_1 = arith.constant 0 : i32
    return %c0_i32, %c0_i32_0 : i32, i32
  }
  func.func @transform_12(%arg0: i32) -> (i32, i32) {
    %c0_i32 = arith.constant 0 : i32
    %c0_i32_0 = arith.constant 0 : i32
    %c0_i32_1 = arith.constant 0 : i32
    return %c0_i32, %c0_i32_0 : i32, i32
  }
  func.func @transform_13(%arg0: i32) -> (i32, i32) {
    %c0_i32 = arith.constant 0 : i32
    %c0_i32_0 = arith.constant 0 : i32
    %c0_i32_1 = arith.constant 0 : i32
    return %c0_i32, %c0_i32_0 : i32, i32
  }
  func.func @transform_14(%arg0: i32) -> (i32, i32) {
    %c0_i32 = arith.constant 0 : i32
    %c0_i32_0 = arith.constant 0 : i32
    %c0_i32_1 = arith.constant 0 : i32
    return %c0_i32, %c0_i32_0 : i32, i32
  }
  func.func @transform_15(%arg0: i32) -> (i32, i32) {
    %c0_i32 = arith.constant 0 : i32
    %c0_i32_0 = arith.constant 0 : i32
    return %arg0, %c0_i32 : i32, i32
  }
}

</mosaic_0001>

<llo_original>
// kernel: tile.8
$region0: #{tile.8}
  #allocation0 [shape = 's32[1]{0}', space=sflag, size = 0x4, scoped, tag = 'scoped memory for tile.8']
  %s0 = inlined_call_operand.vmem [shape: f32[16], index: 0, kind: input, shape index: {}]
  %s1 = inlined_call_operand.vmem [shape: f32[8,16], index: 1, kind: output, shape index: {}]
  // Predicated region
  $region2: #{tile.8} parent=0 // pred_check
    _
  $region3: #{tile.8} parent=0 // pred_check_branch
    %3 = sbr.rel (0) target = $region5
  $region4: #{tile.8} parent=0 // pred_region
    _
  $region5: #{tile.8} parent=0 // pred_fallthru
    _
  %v4 = vld [vmem:[%s0] ss:$0 sm:$0xff]
  %5 = vst [vmem:[%s1] sm:$0xff] %v4

// kernel: tile.9
$region0: #{tile.9}
  %s0 = inlined_call_operand.vmem [shape: f32[8,16], index: 0, kind: input, shape index: {}]
  %s1 = inlined_call_operand.vmem [shape: f32[1,128], index: 1, kind: output, shape index: {}]
  $region1: #{tile.9} parent=0
    #allocation0 [shape = 'u8[4096]{0}', space=vmem, size = 0x1000, scoped, tag = 'scoped mem for output reshape']
    %v2 = vld [vmem:[%s0] sm:$0x1]
    %vm3 = vcmask 130048
    %4 = vst.msk [vmem:[#allocation0] sm:$0x1] %vm3, %v2
    %s5 = scalar_lea.vmem %s0, 7
    %v6 = vld [vmem:[%s5] sm:$0x1]
    %7 = vrot.lane.b32.xlu0 %v6, 112
    %v8 = vpop.permute.xlu0 %7
    %vm9 = vcmask 1048448
    %10 = vst.msk [vmem:[#allocation0] sm:$0x1] %vm9, %v8
    %s11 = scalar_lea.vmem %s0, 6
    %v12 = vld [vmem:[%s11] sm:$0x1]
    %13 = vrot.lane.b32.xlu0 %v12, 96
    %v14 = vpop.permute.xlu0 %13
    %vm15 = vcmask 917248
    %16 = vst.msk [vmem:[#allocation0] sm:$0x1] %vm15, %v14
    %s17 = scalar_lea.vmem %s0, 5
    %v18 = vld [vmem:[%s17] sm:$0x1]
    %19 = vrot.lane.b32.xlu0 %v18, 80
    %v20 = vpop.permute.xlu0 %19
    %vm21 = vcmask 786048
    %22 = vst.msk [vmem:[#allocation0] sm:$0x1] %vm21, %v20
    %s23 = scalar_lea.vmem %s0, 4
    %v24 = vld [vmem:[%s23] sm:$0x1]
    %25 = vrot.lane.b32.xlu0 %v24, 64
    %v26 = vpop.permute.xlu0 %25
    %vm27 = vcmask 654848
    %28 = vst.msk [vmem:[#allocation0] sm:$0x1] %vm27, %v26
    %s29 = scalar_lea.vmem %s0, 3
    %v30 = vld [vmem:[%s29] sm:$0x1]
    %31 = vrot.lane.b32.xlu0 %v30, 48
    %v32 = vpop.permute.xlu0 %31
    %vm33 = vcmask 523648
    %34 = vst.msk [vmem:[#allocation0] sm:$0x1] %vm33, %v32
    %s35 = scalar_lea.vmem %s0, 2
    %v36 = vld [vmem:[%s35] sm:$0x1]
    %37 = vrot.lane.b32.xlu0 %v36, 32
    %v38 = vpop.permute.xlu0 %37
    %vm39 = vcmask 392448
    %40 = vst.msk [vmem:[#allocation0] sm:$0x1] %vm39, %v38
    %s41 = scalar_lea.vmem %s0, 1
    %v42 = vld [vmem:[%s41] sm:$0x1]
    %43 = vrot.lane.b32.xlu0 %v42, 16
    %v44 = vpop.permute.xlu0 %43
    %vm45 = vcmask 261248
    %46 = vst.msk [vmem:[#allocation0] sm:$0x1] %vm45, %v44
    %s48 = sshllo.u32 0, 1
    %v50 = vld [vmem:[#allocation0] sm:%s48]
    %s51 = sshllo.u32 0, 1
    %52 = vst [vmem:[%s1] sm:%s51] %v50

// kernel: critic_forward.1
$region0: #{critic_forward.1}
  #allocation0 [shape = 'u32[]', space=smem, size = 0x4, offset = 0x4, fixed_abs, tag = 'smem constant byte address 0x4 - core index']
  #allocation1 [shape = 'u32[144,128]{1,0:T(1,128)}', space=vmem, size = 0x12000, scoped, tag = 'internal scratch']
  #allocation2 [shape = 'f32[1024,256]{1,0:T(8,128)}', space=vmem, size = 0x100000, scoped, tag = 'scratch operand']
  #allocation3 [shape = 'f32[1,1]{1,0:T(1,128)S(1)}', space=vmem, size = 0x200, scoped, tag = 'scoped memory for critic_forward.1']
  %s0 = inlined_call_operand.vmem [shape: bf16[2,1024,1024], index: 0, kind: input, shape index: {}]
  %s1 = inlined_call_operand.vmem [shape: f32[32,32], index: 1, kind: input, shape index: {}]
  %s2 = inlined_call_operand.vmem [shape: bf16[512,128], index: 2, kind: input, shape index: {}]
  %s3 = inlined_call_operand.vmem [shape: f32[1,128], index: 3, kind: input, shape index: {}]
  %s4 = inlined_call_operand.vmem [shape: f32[256,32], index: 4, kind: input, shape index: {}]
  %s5 = inlined_call_operand.vmem [shape: f32[1,32], index: 5, kind: input, shape index: {}]
  %s6 = inlined_call_operand.vmem [shape: f32[4,32,32], index: 6, kind: input, shape index: {}]
  %s7 = inlined_call_operand.vmem [shape: f32[1,32], index: 7, kind: input, shape index: {}]
  %s8 = inlined_call_operand.vmem [shape: f32[16,32,256], index: 8, kind: input, shape index: {}]
  %s9 = inlined_call_operand.vmem [shape: f32[1,256], index: 9, kind: input, shape index: {}]
  %s10 = inlined_call_operand.vmem [shape: f32[256,256], index: 10, kind: input, shape index: {}]
  %s11 = inlined_call_operand.vmem [shape: f32[32,256], index: 11, kind: input, shape index: {}]
  %s12 = inlined_call_operand.vmem [shape: f32[1,256], index: 12, kind: input, shape index: {}]
  %s13 = inlined_call_operand.vmem [shape: f32[1,256], index: 13, kind: input, shape index: {}]
  %s14 = inlined_call_operand.<no memory space> [shape: f32[1,1], index: 14, kind: input, shape index: {}]
  %s15 = inlined_call_operand.vmem [shape: f32[32,1], index: 15, kind: output, shape index: {}]
  %s16 = sld [smem:[#allocation0]]
  $region93: #{critic_forward.1} parent=0
    _
  %s18 = ssub.s32 1, %s16
  %s19 = scalar_select 0, %s18, %s16
  %v20 = vstv %s14
  %21 = vst [vmem:[#allocation3] sm:$0x1] %v20
  loop: start=0, step=1, limit=4
  $region2: #{critic_forward.1} parent=0 // loop_pre_header
    _
  $region3: #{critic_forward.1} parent=0 // loop_header
    %s23 = sphi 0, %s27
    %p24 = scmp.ge.s32.totalorder %s23, 4
    %s33 = sphi 0, %s35
    %s36 = sphi 0, %s33
    %s37 = sphi 0, %s36
    %s53 = sphi 0, %s37
    %s59 = sphi 0, %s61
    %s62 = sphi 0, %s59
    %s63 = sphi 0, %s62
    %s79 = sphi 0, %s63
    %s83 = sphi 0, %s83
    %s85 = sphi 0, %s83
    %s86 = sphi 0, %s85
    %s100 = sphi 0, %s86
    %s104 = sphi 0, %s104
    %s106 = sphi 0, %s104
    %s107 = sphi 0, %s106
    %s121 = sphi 0, %s107
    %s125 = sphi 0, %s125
    %s127 = sphi 0, %s125
    %s128 = sphi 0, %s127
    %s142 = sphi 0, %s128
    %s146 = sphi 0, %s146
    %s148 = sphi 0, %s146
    %s149 = sphi 0, %s148
    %s163 = sphi 0, %s149
    %s167 = sphi 0, %s167
    %s169 = sphi 0, %s167
    %s170 = sphi 0, %s169
    %s184 = sphi 0, %s170
    %s188 = sphi 0, %s188
    %s190 = sphi 0, %s188
    %s191 = sphi 0, %s190
    %s205 = sphi 0, %s191
    %s209 = sphi 0, %s209
    %s211 = sphi 0, %s209
    %s212 = sphi 0, %s211
    %s226 = sphi 0, %s212
    %s230 = sphi 0, %s230
    %s232 = sphi 0, %s230
    %s233 = sphi 0, %s232
    %s247 = sphi 0, %s233
    %s251 = sphi 0, %s251
    %s253 = sphi 0, %s251
    %s254 = sphi 0, %s253
    %s268 = sphi 0, %s254
    %s272 = sphi 0, %s272
    %s274 = sphi 0, %s272
    %s275 = sphi 0, %s274
    %s289 = sphi 0, %s275
    %s293 = sphi 0, %s293
    %s295 = sphi 0, %s293
    %s296 = sphi 0, %s295
    %s310 = sphi 0, %s296
    %s314 = sphi 0, %s314
    %s316 = sphi 0, %s314
    %s317 = sphi 0, %s316
    %s331 = sphi 0, %s317
    %s335 = sphi 0, %s335
    %s337 = sphi 0, %s335
    %s338 = sphi 0, %s337
    %s352 = sphi 0, %s338
    %s358 = sphi 0, %s360
    %s361 = sphi 0, %s358
    %s362 = sphi 0, %s361
    %s378 = sphi 0, %s362
  $region4: #{critic_forward.1} parent=0 // loop_header_branch
    %26 = sbr.rel (%p24) target = $region8
  $region5: #{critic_forward.1} parent=0 // loop_body
    %s28 = ssub.s32 %s23, 1
    %s29 = ssub.s32 %s23, 2
    %s30 = sadd.s32 %s23, 1
    %s31 = ssub.s32 %s23, %s30
    %p32 = scmp.eq.s32.totalorder %s31, 0
    %s34 = sadd.s32 %s33, 1
    %s35 = scalar_select %p32, %s33, %s34
    %p38 = pneg %p32
    %p39 = scmp.eq.s32.totalorder %s23, 1
    %p40 = por %p38, %p39
    %p41 = scmp.ne.s32.totalorder %s33, %s36
    %p42 = scmp.eq.s32.totalorder %s23, 0
    %p43 = por %p41, %p42
    %p44 = scmp.ne.s32.totalorder %s33, %s36
    %p45 = scmp.eq.s32.totalorder %s28, 1
    %p46 = por %p44, %p45
    %p47 = scmp.ne.s32.totalorder %s36, %s37
    %p48 = scmp.eq.s32.totalorder %s28, 0
    %p49 = por %p47, %p48
    %p50 = scmp.ne.s32.totalorder %s36, %s37
    %p51 = scmp.eq.s32.totalorder %s29, 1
    %p52 = por %p50, %p51
    %p54 = scmp.ne.s32.totalorder %s37, %s53
    %p55 = scmp.eq.s32.totalorder %s29, 0
    %p56 = por %p54, %p55
    %s57 = ssub.s32 %s23, %s30
    %p58 = scmp.eq.s32.totalorder %s57, 0
    %s60 = sadd.s32 %s59, 1
    %s61 = scalar_select %p58, %s59, %s60
    %p64 = pneg %p58
    %p65 = scmp.eq.s32.totalorder %s23, 1
    %p66 = por %p64, %p65
    %p67 = scmp.ne.s32.totalorder %s59, %s62
    %p68 = scmp.eq.s32.totalorder %s23, 0
    %p69 = por %p67, %p68
    %p70 = scmp.ne.s32.totalorder %s59, %s62
    %p71 = scmp.eq.s32.totalorder %s28, 1
    %p72 = por %p70, %p71
    %p73 = scmp.ne.s32.totalorder %s62, %s63
    %p74 = scmp.eq.s32.totalorder %s28, 0
    %p75 = por %p73, %p74
    %p76 = scmp.ne.s32.totalorder %s62, %s63
    %p77 = scmp.eq.s32.totalorder %s29, 1
    %p78 = por %p76, %p77
    %p80 = scmp.ne.s32.totalorder %s63, %s79
    %p81 = scmp.eq.s32.totalorder %s29, 0
    %p82 = por %p80, %p81
    %s84 = sadd.s32 %s83, 1
    %p87 = scmp.eq.s32.totalorder %s23, 1
    %p88 = scmp.ne.s32.totalorder %s83, %s85
    %p89 = scmp.eq.s32.totalorder %s23, 0
    %p90 = por %p88, %p89
    %p91 = scmp.ne.s32.totalorder %s83, %s85
    %p92 = scmp.eq.s32.totalorder %s28, 1
    %p93 = por %p91, %p92
    %p94 = scmp.ne.s32.totalorder %s85, %s86
    %p95 = scmp.eq.s32.totalorder %s28, 0
    %p96 = por %p94, %p95
    %p97 = scmp.ne.s32.totalorder %s85, %s86
    %p98 = scmp.eq.s32.totalorder %s29, 1
    %p99 = por %p97, %p98
    %p101 = scmp.ne.s32.totalorder %s86, %s100
    %p102 = scmp.eq.s32.totalorder %s29, 0
    %p103 = por %p101, %p102
    %s105 = sadd.s32 %s104, 1
    %p108 = scmp.eq.s32.totalorder %s23, 1
    %p109 = scmp.ne.s32.totalorder %s104, %s106
    %p110 = scmp.eq.s32.totalorder %s23, 0
    %p111 = por %p109, %p110
    %p112 = scmp.ne.s32.totalorder %s104, %s106
    %p113 = scmp.eq.s32.totalorder %s28, 1
    %p114 = por %p112, %p113
    %p115 = scmp.ne.s32.totalorder %s106, %s107
    %p116 = scmp.eq.s32.totalorder %s28, 0
    %p117 = por %p115, %p116
    %p118 = scmp.ne.s32.totalorder %s106, %s107
    %p119 = scmp.eq.s32.totalorder %s29, 1
    %p120 = por %p118, %p119
    %p122 = scmp.ne.s32.totalorder %s107, %s121
    %p123 = scmp.eq.s32.totalorder %s29, 0
    %p124 = por %p122, %p123
    %s126 = sadd.s32 %s125, 1
    %p129 = scmp.eq.s32.totalorder %s23, 1
    %p130 = scmp.ne.s32.totalorder %s125, %s127
    %p131 = scmp.eq.s32.totalorder %s23, 0
    %p132 = por %p130, %p131
    %p133 = scmp.ne.s32.totalorder %s125, %s127
    %p134 = scmp.eq.s32.totalorder %s28, 1
    %p135 = por %p133, %p134
    %p136 = scmp.ne.s32.totalorder %s127, %s128
    %p137 = scmp.eq.s32.totalorder %s28, 0
    %p138 = por %p136, %p137
    %p139 = scmp.ne.s32.totalorder %s127, %s128
    %p140 = scmp.eq.s32.totalorder %s29, 1
    %p141 = por %p139, %p140
    %p143 = scmp.ne.s32.totalorder %s128, %s142
    %p144 = scmp.eq.s32.totalorder %s29, 0
    %p145 = por %p143, %p144
    %s147 = sadd.s32 %s146, 1
    %p150 = scmp.eq.s32.totalorder %s23, 1
    %p151 = scmp.ne.s32.totalorder %s146, %s148
    %p152 = scmp.eq.s32.totalorder %s23, 0
    %p153 = por %p151, %p152
    %p154 = scmp.ne.s32.totalorder %s146, %s148
    %p155 = scmp.eq.s32.totalorder %s28, 1
    %p156 = por %p154, %p155
    %p157 = scmp.ne.s32.totalorder %s148, %s149
    %p158 = scmp.eq.s32.totalorder %s28, 0
    %p159 = por %p157, %p158
    %p160 = scmp.ne.s32.totalorder %s148, %s149
    %p161 = scmp.eq.s32.totalorder %s29, 1
    %p162 = por %p160, %p161
    %p164 = scmp.ne.s32.totalorder %s149, %s163
    %p165 = scmp.eq.s32.totalorder %s29, 0
    %p166 = por %p164, %p165
    %s168 = sadd.s32 %s167, 1
    %p171 = scmp.eq.s32.totalorder %s23, 1
    %p172 = scmp.ne.s32.totalorder %s167, %s169
    %p173 = scmp.eq.s32.totalorder %s23, 0
    %p174 = por %p172, %p173
    %p175 = scmp.ne.s32.totalorder %s167, %s169
    %p176 = scmp.eq.s32.totalorder %s28, 1
    %p177 = por %p175, %p176
    %p178 = scmp.ne.s32.totalorder %s169, %s170
    %p179 = scmp.eq.s32.totalorder %s28, 0
    %p180 = por %p178, %p179
    %p181 = scmp.ne.s32.totalorder %s169, %s170
    %p182 = scmp.eq.s32.totalorder %s29, 1
    %p183 = por %p181, %p182
    %p185 = scmp.ne.s32.totalorder %s170, %s184
    %p186 = scmp.eq.s32.totalorder %s29, 0
    %p187 = por %p185, %p186
    %s189 = sadd.s32 %s188, 1
    %p192 = scmp.eq.s32.totalorder %s23, 1
    %p193 = scmp.ne.s32.totalorder %s188, %s190
    %p194 = scmp.eq.s32.totalorder %s23, 0
    %p195 = por %p193, %p194
    %p196 = scmp.ne.s32.totalorder %s188, %s190
    %p197 = scmp.eq.s32.totalorder %s28, 1
    %p198 = por %p196, %p197
    %p199 = scmp.ne.s32.totalorder %s190, %s191
    %p200 = scmp.eq.s32.totalorder %s28, 0
    %p201 = por %p199, %p200
    %p202 = scmp.ne.s32.totalorder %s190, %s191
    %p203 = scmp.eq.s32.totalorder %s29, 1
    %p204 = por %p202, %p203
    %p206 = scmp.ne.s32.totalorder %s191, %s205
    %p207 = scmp.eq.s32.totalorder %s29, 0
    %p208 = por %p206, %p207
    %s210 = sadd.s32 %s209, 1
    %p213 = scmp.eq.s32.totalorder %s23, 1
    %p214 = scmp.ne.s32.totalorder %s209, %s211
    %p215 = scmp.eq.s32.totalorder %s23, 0
    %p216 = por %p214, %p215
    %p217 = scmp.ne.s32.totalorder %s209, %s211
    %p218 = scmp.eq.s32.totalorder %s28, 1
    %p219 = por %p217, %p218
    %p220 = scmp.ne.s32.totalorder %s211, %s212
    %p221 = scmp.eq.s32.totalorder %s28, 0
    %p222 = por %p220, %p221
    %p223 = scmp.ne.s32.totalorder %s211, %s212
    %p224 = scmp.eq.s32.totalorder %s29, 1
    %p225 = por %p223, %p224
    %p227 = scmp.ne.s32.totalorder %s212, %s226
    %p228 = scmp.eq.s32.totalorder %s29, 0
    %p229 = por %p227, %p228
    %s231 = sadd.s32 %s230, 1
    %p234 = scmp.eq.s32.totalorder %s23, 1
    %p235 = scmp.ne.s32.totalorder %s230, %s232
    %p236 = scmp.eq.s32.totalorder %s23, 0
    %p237 = por %p235, %p236
    %p238 = scmp.ne.s32.totalorder %s230, %s232
    %p239 = scmp.eq.s32.totalorder %s28, 1
    %p240 = por %p238, %p239
    %p241 = scmp.ne.s32.totalorder %s232, %s233
    %p242 = scmp.eq.s32.totalorder %s28, 0
    %p243 = por %p241, %p242
    %p244 = scmp.ne.s32.totalorder %s232, %s233
    %p245 = scmp.eq.s32.totalorder %s29, 1
    %p246 = por %p244, %p245
    %p248 = scmp.ne.s32.totalorder %s233, %s247
    %p249 = scmp.eq.s32.totalorder %s29, 0
    %p250 = por %p248, %p249
    %s252 = sadd.s32 %s251, 1
    %p255 = scmp.eq.s32.totalorder %s23, 1
    %p256 = scmp.ne.s32.totalorder %s251, %s253
    %p257 = scmp.eq.s32.totalorder %s23, 0
    %p258 = por %p256, %p257
    %p259 = scmp.ne.s32.totalorder %s251, %s253
    %p260 = scmp.eq.s32.totalorder %s28, 1
    %p261 = por %p259, %p260
    %p262 = scmp.ne.s32.totalorder %s253, %s254
    %p263 = scmp.eq.s32.totalorder %s28, 0
    %p264 = por %p262, %p263
    %p265 = scmp.ne.s32.totalorder %s253, %s254
    %p266 = scmp.eq.s32.totalorder %s29, 1
    %p267 = por %p265, %p266
    %p269 = scmp.ne.s32.totalorder %s254, %s268
    %p270 = scmp.eq.s32.totalorder %s29, 0
    %p271 = por %p269, %p270
    %s273 = sadd.s32 %s272, 1
    %p276 = scmp.eq.s32.totalorder %s23, 1
    %p277 = scmp.ne.s32.totalorder %s272, %s274
    %p278 = scmp.eq.s32.totalorder %s23, 0
    %p279 = por %p277, %p278
    %p280 = scmp.ne.s32.totalorder %s272, %s274
    %p281 = scmp.eq.s32.totalorder %s28, 1
    %p282 = por %p280, %p281
    %p283 = scmp.ne.s32.totalorder %s274, %s275
    %p284 = scmp.eq.s32.totalorder %s28, 0
    %p285 = por %p283, %p284
    %p286 = scmp.ne.s32.totalorder %s274, %s275
    %p287 = scmp.eq.s32.totalorder %s29, 1
    %p288 = por %p286, %p287
    %p290 = scmp.ne.s32.totalorder %s275, %s289
    %p291 = scmp.eq.s32.totalorder %s29, 0
    %p292 = por %p290, %p291
    %s294 = sadd.s32 %s293, 1
    %p297 = scmp.eq.s32.totalorder %s23, 1
    %p298 = scmp.ne.s32.totalorder %s293, %s295
    %p299 = scmp.eq.s32.totalorder %s23, 0
    %p300 = por %p298, %p299
    %p301 = scmp.ne.s32.totalorder %s293, %s295
    %p302 = scmp.eq.s32.totalorder %s28, 1
    %p303 = por %p301, %p302
    %p304 = scmp.ne.s32.totalorder %s295, %s296
    %p305 = scmp.eq.s32.totalorder %s28, 0
    %p306 = por %p304, %p305
    %p307 = scmp.ne.s32.totalorder %s295, %s296
    %p308 = scmp.eq.s32.totalorder %s29, 1
    %p309 = por %p307, %p308
    %p311 = scmp.ne.s32.totalorder %s296, %s310
    %p312 = scmp.eq.s32.totalorder %s29, 0
    %p313 = por %p311, %p312
    %s315 = sadd.s32 %s314, 1
    %p318 = scmp.eq.s32.totalorder %s23, 1
    %p319 = scmp.ne.s32.totalorder %s314, %s316
    %p320 = scmp.eq.s32.totalorder %s23, 0
    %p321 = por %p319, %p320
    %p322 = scmp.ne.s32.totalorder %s314, %s316
    %p323 = scmp.eq.s32.totalorder %s28, 1
    %p324 = por %p322, %p323
    %p325 = scmp.ne.s32.totalorder %s316, %s317
    %p326 = scmp.eq.s32.totalorder %s28, 0
    %p327 = por %p325, %p326
    %p328 = scmp.ne.s32.totalorder %s316, %s317
    %p329 = scmp.eq.s32.totalorder %s29, 1
    %p330 = por %p328, %p329
    %p332 = scmp.ne.s32.totalorder %s317, %s331
    %p333 = scmp.eq.s32.totalorder %s29, 0
    %p334 = por %p332, %p333
    %s336 = sadd.s32 %s335, 1
    %p339 = scmp.eq.s32.totalorder %s23, 1
    %p340 = scmp.ne.s32.totalorder %s335, %s337
    %p341 = scmp.eq.s32.totalorder %s23, 0
    %p342 = por %p340, %p341
    %p343 = scmp.ne.s32.totalorder %s335, %s337
    %p344 = scmp.eq.s32.totalorder %s28, 1
    %p345 = por %p343, %p344
    %p346 = scmp.ne.s32.totalorder %s337, %s338
    %p347 = scmp.eq.s32.totalorder %s28, 0
    %p348 = por %p346, %p347
    %p349 = scmp.ne.s32.totalorder %s337, %s338
    %p350 = scmp.eq.s32.totalorder %s29, 1
    %p351 = por %p349, %p350
    %p353 = scmp.ne.s32.totalorder %s338, %s352
    %p354 = scmp.eq.s32.totalorder %s29, 0
    %p355 = por %p353, %p354
    %s356 = ssub.s32 %s23, %s30
    %p357 = scmp.eq.s32.totalorder %s356, 0
    %s359 = sadd.s32 %s358, 1
    %s360 = scalar_select %p357, %s358, %s359
    %p363 = pneg %p357
    %p364 = scmp.eq.s32.totalorder %s23, 1
    %p365 = por %p363, %p364
    %p366 = scmp.ne.s32.totalorder %s358, %s361
    %p367 = scmp.eq.s32.totalorder %s23, 0
    %p368 = por %p366, %p367
    %p369 = scmp.ne.s32.totalorder %s358, %s361
    %p370 = scmp.eq.s32.totalorder %s28, 1
    %p371 = por %p369, %p370
    %p372 = scmp.ne.s32.totalorder %s361, %s362
    %p373 = scmp.eq.s32.totalorder %s28, 0
    %p374 = por %p372, %p373
    %p375 = scmp.ne.s32.totalorder %s361, %s362
    %p376 = scmp.eq.s32.totalorder %s29, 1
    %p377 = por %p375, %p376
    %p379 = scmp.ne.s32.totalorder %s362, %s378
    %p380 = scmp.eq.s32.totalorder %s29, 0
    %p381 = por %p379, %p380
    %p382 = scmp.le.s32.totalorder 1, %s23
    %p383 = scmp.lt.s32.totalorder %s23, 3
    %p384 = pnand %p382, %p383
    %p385 = pneg %p384
    // Predicated region
    $region9: #{critic_forward.1} parent=5 // pred_check
      _
    $region10: #{critic_forward.1} parent=5 // pred_check_branch
      %387 = sbr.rel (%p384) target = $region12
    $region11: #{critic_forward.1} parent=5 // pred_region
      %s388 = ssub.s32 %s23, 1
      // Predicated region
      $region13: #{critic_forward.1} parent=11 // pred_check
        %p389 = pneg %p96
      $region14: #{critic_forward.1} parent=11 // pred_check_branch
        %391 = sbr.rel (%p389) target = $region16
      $region15: #{critic_forward.1} parent=11 // pred_region
        _
      $region16: #{critic_forward.1} parent=11 // pred_fallthru
        _
      // Predicated region
      $region17: #{critic_forward.1} parent=11 // pred_check
        %p392 = pneg %p117
      $region18: #{critic_forward.1} parent=11 // pred_check_branch
        %394 = sbr.rel (%p392) target = $region20
      $region19: #{critic_forward.1} parent=11 // pred_region
        _
      $region20: #{critic_forward.1} parent=11 // pred_fallthru
        _
      // Predicated region
      $region21: #{critic_forward.1} parent=11 // pred_check
        %p395 = pneg %p138
      $region22: #{critic_forward.1} parent=11 // pred_check_branch
        %397 = sbr.rel (%p395) target = $region24
      $region23: #{critic_forward.1} parent=11 // pred_region
        _
      $region24: #{critic_forward.1} parent=11 // pred_fallthru
        _
      // Predicated region
      $region25: #{critic_forward.1} parent=11 // pred_check
        %p398 = pneg %p159
      $region26: #{critic_forward.1} parent=11 // pred_check_branch
        %400 = sbr.rel (%p398) target = $region28
      $region27: #{critic_forward.1} parent=11 // pred_region
        _
      $region28: #{critic_forward.1} parent=11 // pred_fallthru
        _
      // Predicated region
      $region29: #{critic_forward.1} parent=11 // pred_check
        %p401 = pneg %p180
      $region30: #{critic_forward.1} parent=11 // pred_check_branch
        %403 = sbr.rel (%p401) target = $region32
      $region31: #{critic_forward.1} parent=11 // pred_region
        _
      $region32: #{critic_forward.1} parent=11 // pred_fallthru
        _
      // Predicated region
      $region33: #{critic_forward.1} parent=11 // pred_check
        %p404 = pneg %p201
      $region34: #{critic_forward.1} parent=11 // pred_check_branch
        %406 = sbr.rel (%p404) target = $region36
      $region35: #{critic_forward.1} parent=11 // pred_region
        _
      $region36: #{critic_forward.1} parent=11 // pred_fallthru
        _
      // Predicated region
      $region37: #{critic_forward.1} parent=11 // pred_check
        %p407 = pneg %p222
      $region38: #{critic_forward.1} parent=11 // pred_check_branch
        %409 = sbr.rel (%p407) target = $region40
      $region39: #{critic_forward.1} parent=11 // pred_region
        _
      $region40: #{critic_forward.1} parent=11 // pred_fallthru
        _
      // Predicated region
      $region41: #{critic_forward.1} parent=11 // pred_check
        %p410 = pneg %p243
      $region42: #{critic_forward.1} parent=11 // pred_check_branch
        %412 = sbr.rel (%p410) target = $region44
      $region43: #{critic_forward.1} parent=11 // pred_region
        _
      $region44: #{critic_forward.1} parent=11 // pred_fallthru
        _
      // Predicated region
      $region45: #{critic_forward.1} parent=11 // pred_check
        %p413 = pneg %p264
      $region46: #{critic_forward.1} parent=11 // pred_check_branch
        %415 = sbr.rel (%p413) target = $region48
      $region47: #{critic_forward.1} parent=11 // pred_region
        _
      $region48: #{critic_forward.1} parent=11 // pred_fallthru
        _
      // Predicated region
      $region49: #{critic_forward.1} parent=11 // pred_check
        %p416 = pneg %p285
      $region50: #{critic_forward.1} parent=11 // pred_check_branch
        %418 = sbr.rel (%p416) target = $region52
      $region51: #{critic_forward.1} parent=11 // pred_region
        _
      $region52: #{critic_forward.1} parent=11 // pred_fallthru
        _
      // Predicated region
      $region53: #{critic_forward.1} parent=11 // pred_check
        %p419 = pneg %p306
      $region54: #{critic_forward.1} parent=11 // pred_check_branch
        %421 = sbr.rel (%p419) target = $region56
      $region55: #{critic_forward.1} parent=11 // pred_region
        _
      $region56: #{critic_forward.1} parent=11 // pred_fallthru
        _
      // Predicated region
      $region57: #{critic_forward.1} parent=11 // pred_check
        %p422 = pneg %p327
      $region58: #{critic_forward.1} parent=11 // pred_check_branch
        %424 = sbr.rel (%p422) target = $region60
      $region59: #{critic_forward.1} parent=11 // pred_region
        _
      $region60: #{critic_forward.1} parent=11 // pred_fallthru
        _
      // Predicated region
      $region61: #{critic_forward.1} parent=11 // pred_check
        %p425 = pneg %p348
      $region62: #{critic_forward.1} parent=11 // pred_check_branch
        %427 = sbr.rel (%p425) target = $region64
      $region63: #{critic_forward.1} parent=11 // pred_region
        _
      $region64: #{critic_forward.1} parent=11 // pred_fallthru
        _
    $region12: #{critic_forward.1} parent=5 // pred_fallthru
      _
    %p428 = scmp.lt.s32.totalorder %s23, 2
    // Predicated region
    $region65: #{critic_forward.1} parent=5 // pred_check
      %p429 = pneg %p428
    $region66: #{critic_forward.1} parent=5 // pred_check_branch
      %431 = sbr.rel (%p429) target = $region68
    $region67: #{critic_forward.1} parent=5 // pred_region
      // Predicated region
      $region69: #{critic_forward.1} parent=67 // pred_check
        %p432 = pneg %p43
      $region70: #{critic_forward.1} parent=67 // pred_check_branch
        %434 = sbr.rel (%p432) target = $region72
      $region71: #{critic_forward.1} parent=67 // pred_region
        %p435 = scmp.lt.s32.totalorder %s23, 1
        %s436 = scalar_select %p435, %s23, 1
        %s437 = smul.addr %s436, 1024
        %s438 = smul.addr %s437, 4
        %s439 = scalar_lea.vmem %s0, %s438
      $region72: #{critic_forward.1} parent=67 // pred_fallthru
        _
      // Predicated region
      $region73: #{critic_forward.1} parent=67 // pred_check
        %p440 = pneg %p69
      $region74: #{critic_forward.1} parent=67 // pred_check_branch
        %442 = sbr.rel (%p440) target = $region76
      $region75: #{critic_forward.1} parent=67 // pred_region
        %s443 = smul.u32 2, %s23
        %p444 = scmp.lt.s32.totalorder %s443, 3
        %s445 = scalar_select %p444, %s443, 3
        %s446 = smul.addr %s445, 8
        %s447 = scalar_lea.vmem %s1, %s446
        %s448 = smul.u32 2, %s23
      $region76: #{critic_forward.1} parent=67 // pred_fallthru
        _
    $region68: #{critic_forward.1} parent=5 // pred_fallthru
      _
    %p449 = scmp.le.s32.totalorder 1, %s23
    %p450 = scmp.lt.s32.totalorder %s23, 3
    %p451 = pnand %p449, %p450
    %p452 = pneg %p451
    // Predicated region
    $region77: #{critic_forward.1} parent=5 // pred_check
      _
    $region78: #{critic_forward.1} parent=5 // pred_check_branch
      %454 = sbr.rel (%p451) target = $region80
    $region79: #{critic_forward.1} parent=5 // pred_region
      %s455 = ssub.s32 %s23, 1
      %p456 = scmp.lt.s32.totalorder %s28, 1
      %s457 = scalar_select %p456, %s28, 1
      %s458 = smul.addr %s457, 1024
      %s459 = smul.addr %s458, 4
      %s460 = scalar_lea.vmem %s0, %s459
      %p461 = pneg %p49
      %p462 = pneg %p46
      %s463 = smul.u32 2, %s28
      %p464 = scmp.lt.s32.totalorder %s463, 3
      %s465 = scalar_select %p464, %s463, 3
      %s466 = smul.addr %s465, 8
      %s467 = scalar_lea.vmem %s1, %s466
      %p468 = pneg %p75
      %p469 = pneg %p72
      %p470 = pneg %p96
      %p471 = pneg %p93
      %p472 = pneg %p117
      %p473 = pneg %p114
      %p474 = pneg %p138
      %p475 = pneg %p135
      %p476 = pneg %p159
      %p477 = pneg %p156
      %p478 = pneg %p180
      %p479 = pneg %p177
      %p480 = pneg %p201
      %p481 = pneg %p198
      %p482 = pneg %p222
      %p483 = pneg %p219
      %p484 = pneg %p243
      %p485 = pneg %p240
      %p486 = pneg %p264
      %p487 = pneg %p261
      %p488 = pneg %p285
      %p489 = pneg %p282
      %p490 = pneg %p306
      %p491 = pneg %p303
      %p492 = pneg %p327
      %p493 = pneg %p324
      %p494 = pneg %p348
      %p495 = pneg %p345
      %p496 = pneg %p374
      %p497 = pneg %p371
      %s498 = smul.u32 2, %s28
      %p499 = scmp.lt.s32.totalorder %s498, 3
      %s500 = scalar_select %p499, %s498, 3
      %s501 = smul.addr %s500, 8
      %s502 = scalar_lea.vmem %s15, %s501
      %p503 = scmp.lt.s32.totalorder %s28, 1
      %s504 = scalar_select %p503, %s28, 1
      %s505 = smul.addr %s504, 1024
      %s506 = smul.addr %s505, 4
      %s507 = scalar_lea.vmem %s0, %s506
      %s508 = smul.u32 2, %s28
      %p509 = scmp.lt.s32.totalorder %s508, 3
      %s510 = scalar_select %p509, %s508, 3
      %s511 = smul.addr %s510, 8
      %s512 = scalar_lea.vmem %s1, %s511
      %s513 = smul.u32 2, %s28
      %s514 = smul.u32 2, %s28
      %p515 = scmp.lt.s32.totalorder %s514, 3
      %s516 = scalar_select %p515, %s514, 3
      %s517 = smul.addr %s516, 8
      %s518 = scalar_lea.vmem %s15, %s517
      %s519 = smul.u32 2, %s28
      %v521 = vld [vmem:[%s2] sm:$0xf]
      %v522 = vld [vmem:[%s2 + $0x4] sm:$0xf]
      %v523 = vld [vmem:[%s2 + $0x8] sm:$0xf]
      %v524 = vld [vmem:[%s2 + $0xc] sm:$0xf]
      %v525 = vld [vmem:[%s2 + $0x10] sm:$0xf]
      %v526 = vld [vmem:[%s2 + $0x14] sm:$0xf]
      %v527 = vld [vmem:[%s2 + $0x18] sm:$0xf]
      %v528 = vld [vmem:[%s2 + $0x1c] sm:$0xf]
      %v529 = vld [vmem:[%s2 + $0x20] sm:$0xf]
      %v530 = vld [vmem:[%s2 + $0x24] sm:$0xf]
      %v531 = vld [vmem:[%s2 + $0x28] sm:$0xf]
      %v532 = vld [vmem:[%s2 + $0x2c] sm:$0xf]
      %v533 = vld [vmem:[%s2 + $0x30] sm:$0xf]
      %v534 = vld [vmem:[%s2 + $0x34] sm:$0xf]
      %v535 = vld [vmem:[%s2 + $0x38] sm:$0xf]
      %v536 = vld [vmem:[%s2 + $0x3c] sm:$0xf]
      %v537 = vld [vmem:[%s2 + $0x40] sm:$0xf]
      %v538 = vld [vmem:[%s2 + $0x44] sm:$0xf]
      %v539 = vld [vmem:[%s2 + $0x48] sm:$0xf]
      %v540 = vld [vmem:[%s2 + $0x4c] sm:$0xf]
      %v541 = vld [vmem:[%s2 + $0x50] sm:$0xf]
      %v542 = vld [vmem:[%s2 + $0x54] sm:$0xf]
      %v543 = vld [vmem:[%s2 + $0x58] sm:$0xf]
      %v544 = vld [vmem:[%s2 + $0x5c] sm:$0xf]
      %v545 = vld [vmem:[%s2 + $0x60] sm:$0xf]
      %v546 = vld [vmem:[%s2 + $0x64] sm:$0xf]
      %v547 = vld [vmem:[%s2 + $0x68] sm:$0xf]
      %v548 = vld [vmem:[%s2 + $0x6c] sm:$0xf]
      %v549 = vld [vmem:[%s2 + $0x70] sm:$0xf]
      %v550 = vld [vmem:[%s2 + $0x74] sm:$0xf]
      %v551 = vld [vmem:[%s2 + $0x78] sm:$0xf]
      %v552 = vld [vmem:[%s2 + $0x7c] sm:$0xf]
      %v553 = vld [vmem:[%s2 + $0x80] sm:$0xf]
      %v554 = vld [vmem:[%s2 + $0x84] sm:$0xf]
      %v555 = vld [vmem:[%s2 + $0x88] sm:$0xf]
      %v556 = vld [vmem:[%s2 + $0x8c] sm:$0xf]
      %v557 = vld [vmem:[%s2 + $0x90] sm:$0xf]
      %v558 = vld [vmem:[%s2 + $0x94] sm:$0xf]
      %v559 = vld [vmem:[%s2 + $0x98] sm:$0xf]
      %v560 = vld [vmem:[%s2 + $0x9c] sm:$0xf]
      %v561 = vld [vmem:[%s2 + $0xa0] sm:$0xf]
      %v562 = vld [vmem:[%s2 + $0xa4] sm:$0xf]
      %v563 = vld [vmem:[%s2 + $0xa8] sm:$0xf]
      %v564 = vld [vmem:[%s2 + $0xac] sm:$0xf]
      %v565 = vld [vmem:[%s2 + $0xb0] sm:$0xf]
      %v566 = vld [vmem:[%s2 + $0xb4] sm:$0xf]
      %v567 = vld [vmem:[%s2 + $0xb8] sm:$0xf]
      %v568 = vld [vmem:[%s2 + $0xbc] sm:$0xf]
      %v569 = vld [vmem:[%s2 + $0xc0] sm:$0xf]
      %v570 = vld [vmem:[%s2 + $0xc4] sm:$0xf]
      %v571 = vld [vmem:[%s2 + $0xc8] sm:$0xf]
      %v572 = vld [vmem:[%s2 + $0xcc] sm:$0xf]
      %v573 = vld [vmem:[%s2 + $0xd0] sm:$0xf]
      %v574 = vld [vmem:[%s2 + $0xd4] sm:$0xf]
      %v575 = vld [vmem:[%s2 + $0xd8] sm:$0xf]
      %v576 = vld [vmem:[%s2 + $0xdc] sm:$0xf]
      %v577 = vld [vmem:[%s2 + $0xe0] sm:$0xf]
      %v578 = vld [vmem:[%s2 + $0xe4] sm:$0xf]
      %v579 = vld [vmem:[%s2 + $0xe8] sm:$0xf]
      %v580 = vld [vmem:[%s2 + $0xec] sm:$0xf]
      %v581 = vld [vmem:[%s2 + $0xf0] sm:$0xf]
      %v582 = vld [vmem:[%s2 + $0xf4] sm:$0xf]
      %v583 = vld [vmem:[%s2 + $0xf8] sm:$0xf]
      %v584 = vld [vmem:[%s2 + $0xfc] sm:$0xf]
      %v585 = vld [vmem:[%s3] sm:$0x1]
      %v586 = vld [vmem:[%s507] sm:$0xff]
      %v587 = vld [vmem:[%s507 + $0x8] sm:$0xff]
      %v588 = vld [vmem:[%s507 + $0x20] sm:$0xff]
      %v589 = vld [vmem:[%s507 + $0x28] sm:$0xff]
      %v590 = vld [vmem:[%s507 + $0x40] sm:$0xff]
      %v591 = vld [vmem:[%s507 + $0x48] sm:$0xff]
      %v592 = vld [vmem:[%s507 + $0x60] sm:$0xff]
      %v593 = vld [vmem:[%s507 + $0x68] sm:$0xff]
      %v594 = vld [vmem:[%s507 + $0x80] sm:$0xff]
      %v595 = vld [vmem:[%s507 + $0x88] sm:$0xff]
      %v596 = vld [vmem:[%s507 + $0xa0] sm:$0xff]
      %v597 = vld [vmem:[%s507 + $0xa8] sm:$0xff]
      %v598 = vld [vmem:[%s507 + $0xc0] sm:$0xff]
      %v599 = vld [vmem:[%s507 + $0xc8] sm:$0xff]
      %v600 = vld [vmem:[%s507 + $0xe0] sm:$0xff]
      %v601 = vld [vmem:[%s507 + $0xe8] sm:$0xff]
      %v602 = vld [vmem:[%s507 + $0x100] sm:$0xff]
      %v603 = vld [vmem:[%s507 + $0x108] sm:$0xff]
      %v604 = vld [vmem:[%s507 + $0x120] sm:$0xff]
      %v605 = vld [vmem:[%s507 + $0x128] sm:$0xff]
      %v606 = vld [vmem:[%s507 + $0x140] sm:$0xff]
      %v607 = vld [vmem:[%s507 + $0x148] sm:$0xff]
      %v608 = vld [vmem:[%s507 + $0x160] sm:$0xff]
      %v609 = vld [vmem:[%s507 + $0x168] sm:$0xff]
      %v610 = vld [vmem:[%s507 + $0x180] sm:$0xff]
      %v611 = vld [vmem:[%s507 + $0x188] sm:$0xff]
      %v612 = vld [vmem:[%s507 + $0x1a0] sm:$0xff]
      %v613 = vld [vmem:[%s507 + $0x1a8] sm:$0xff]
      %v614 = vld [vmem:[%s507 + $0x1c0] sm:$0xff]
      %v615 = vld [vmem:[%s507 + $0x1c8] sm:$0xff]
      %v616 = vld [vmem:[%s507 + $0x1e0] sm:$0xff]
      %v617 = vld [vmem:[%s507 + $0x1e8] sm:$0xff]
      %v618 = vld [vmem:[%s507 + $0x200] sm:$0xff]
      %v619 = vld [vmem:[%s507 + $0x208] sm:$0xff]
      %v620 = vld [vmem:[%s507 + $0x220] sm:$0xff]
      %v621 = vld [vmem:[%s507 + $0x228] sm:$0xff]
      %v622 = vld [vmem:[%s507 + $0x240] sm:$0xff]
      %v623 = vld [vmem:[%s507 + $0x248] sm:$0xff]
      %v624 = vld [vmem:[%s507 + $0x260] sm:$0xff]
      %v625 = vld [vmem:[%s507 + $0x268] sm:$0xff]
      %v626 = vld [vmem:[%s507 + $0x280] sm:$0xff]
      %v627 = vld [vmem:[%s507 + $0x288] sm:$0xff]
      %v628 = vld [vmem:[%s507 + $0x2a0] sm:$0xff]
      %v629 = vld [vmem:[%s507 + $0x2a8] sm:$0xff]
      %v630 = vld [vmem:[%s507 + $0x2c0] sm:$0xff]
      %v631 = vld [vmem:[%s507 + $0x2c8] sm:$0xff]
      %v632 = vld [vmem:[%s507 + $0x2e0] sm:$0xff]
      %v633 = vld [vmem:[%s507 + $0x2e8] sm:$0xff]
      %v634 = vld [vmem:[%s507 + $0x300] sm:$0xff]
      %v635 = vld [vmem:[%s507 + $0x308] sm:$0xff]
      %v636 = vld [vmem:[%s507 + $0x320] sm:$0xff]
      %v637 = vld [vmem:[%s507 + $0x328] sm:$0xff]
      %v638 = vld [vmem:[%s507 + $0x340] sm:$0xff]
      %v639 = vld [vmem:[%s507 + $0x348] sm:$0xff]
      %v640 = vld [vmem:[%s507 + $0x360] sm:$0xff]
      %v641 = vld [vmem:[%s507 + $0x368] sm:$0xff]
      %v642 = vld [vmem:[%s507 + $0x380] sm:$0xff]
      %v643 = vld [vmem:[%s507 + $0x388] sm:$0xff]
      %v644 = vld [vmem:[%s507 + $0x3a0] sm:$0xff]
      %v645 = vld [vmem:[%s507 + $0x3a8] sm:$0xff]
      %v646 = vld [vmem:[%s507 + $0x3c0] sm:$0xff]
      %v647 = vld [vmem:[%s507 + $0x3c8] sm:$0xff]
      %v648 = vld [vmem:[%s507 + $0x3e0] sm:$0xff]
      %v649 = vld [vmem:[%s507 + $0x3e8] sm:$0xff]
      %v650 = vld [vmem:[%s507 + $0x400] sm:$0xff]
      %v651 = vld [vmem:[%s507 + $0x408] sm:$0xff]
      %v652 = vld [vmem:[%s507 + $0x420] sm:$0xff]
      %v653 = vld [vmem:[%s507 + $0x428] sm:$0xff]
      %v654 = vld [vmem:[%s507 + $0x440] sm:$0xff]
      %v655 = vld [vmem:[%s507 + $0x448] sm:$0xff]
      %v656 = vld [vmem:[%s507 + $0x460] sm:$0xff]
      %v657 = vld [vmem:[%s507 + $0x468] sm:$0xff]
      %v658 = vld [vmem:[%s507 + $0x480] sm:$0xff]
      %v659 = vld [vmem:[%s507 + $0x488] sm:$0xff]
      %v660 = vld [vmem:[%s507 + $0x4a0] sm:$0xff]
      %v661 = vld [vmem:[%s507 + $0x4a8] sm:$0xff]
      %v662 = vld [vmem:[%s507 + $0x4c0] sm:$0xff]
      %v663 = vld [vmem:[%s507 + $0x4c8] sm:$0xff]
      %v664 = vld [vmem:[%s507 + $0x4e0] sm:$0xff]
      %v665 = vld [vmem:[%s507 + $0x4e8] sm:$0xff]
      %v666 = vld [vmem:[%s507 + $0x500] sm:$0xff]
      %v667 = vld [vmem:[%s507 + $0x508] sm:$0xff]
      %v668 = vld [vmem:[%s507 + $0x520] sm:$0xff]
      %v669 = vld [vmem:[%s507 + $0x528] sm:$0xff]
      %v670 = vld [vmem:[%s507 + $0x540] sm:$0xff]
      %v671 = vld [vmem:[%s507 + $0x548] sm:$0xff]
      %v672 = vld [vmem:[%s507 + $0x560] sm:$0xff]
      %v673 = vld [vmem:[%s507 + $0x568] sm:$0xff]
      %v674 = vld [vmem:[%s507 + $0x580] sm:$0xff]
      %v675 = vld [vmem:[%s507 + $0x588] sm:$0xff]
      %v676 = vld [vmem:[%s507 + $0x5a0] sm:$0xff]
      %v677 = vld [vmem:[%s507 + $0x5a8] sm:$0xff]
      %v678 = vld [vmem:[%s507 + $0x5c0] sm:$0xff]
      %v679 = vld [vmem:[%s507 + $0x5c8] sm:$0xff]
      %v680 = vld [vmem:[%s507 + $0x5e0] sm:$0xff]
      %v681 = vld [vmem:[%s507 + $0x5e8] sm:$0xff]
      %v682 = vld [vmem:[%s507 + $0x600] sm:$0xff]
      %v683 = vld [vmem:[%s507 + $0x608] sm:$0xff]
      %v684 = vld [vmem:[%s507 + $0x620] sm:$0xff]
      %v685 = vld [vmem:[%s507 + $0x628] sm:$0xff]
      %v686 = vld [vmem:[%s507 + $0x640] sm:$0xff]
      %v687 = vld [vmem:[%s507 + $0x648] sm:$0xff]
      %v688 = vld [vmem:[%s507 + $0x660] sm:$0xff]
      %v689 = vld [vmem:[%s507 + $0x668] sm:$0xff]
      %v690 = vld [vmem:[%s507 + $0x680] sm:$0xff]
      %v691 = vld [vmem:[%s507 + $0x688] sm:$0xff]
      %v692 = vld [vmem:[%s507 + $0x6a0] sm:$0xff]
      %v693 = vld [vmem:[%s507 + $0x6a8] sm:$0xff]
      %v694 = vld [vmem:[%s507 + $0x6c0] sm:$0xff]
      %v695 = vld [vmem:[%s507 + $0x6c8] sm:$0xff]
      %v696 = vld [vmem:[%s507 + $0x6e0] sm:$0xff]
      %v697 = vld [vmem:[%s507 + $0x6e8] sm:$0xff]
      %v698 = vld [vmem:[%s507 + $0x700] sm:$0xff]
      %v699 = vld [vmem:[%s507 + $0x708] sm:$0xff]
      %v700 = vld [vmem:[%s507 + $0x720] sm:$0xff]
      %v701 = vld [vmem:[%s507 + $0x728] sm:$0xff]
      %v702 = vld [vmem:[%s507 + $0x740] sm:$0xff]
      %v703 = vld [vmem:[%s507 + $0x748] sm:$0xff]
      %v704 = vld [vmem:[%s507 + $0x760] sm:$0xff]
      %v705 = vld [vmem:[%s507 + $0x768] sm:$0xff]
      %v706 = vld [vmem:[%s507 + $0x780] sm:$0xff]
      %v707 = vld [vmem:[%s507 + $0x788] sm:$0xff]
      %v708 = vld [vmem:[%s507 + $0x7a0] sm:$0xff]
      %v709 = vld [vmem:[%s507 + $0x7a8] sm:$0xff]
      %v710 = vld [vmem:[%s507 + $0x7c0] sm:$0xff]
      %v711 = vld [vmem:[%s507 + $0x7c8] sm:$0xff]
      %v712 = vld [vmem:[%s507 + $0x7e0] sm:$0xff]
      %v713 = vld [vmem:[%s507 + $0x7e8] sm:$0xff]
      %v714 = vld [vmem:[%s507 + $0x800] sm:$0xff]
      %v715 = vld [vmem:[%s507 + $0x808] sm:$0xff]
      %v716 = vld [vmem:[%s507 + $0x820] sm:$0xff]
      %v717 = vld [vmem:[%s507 + $0x828] sm:$0xff]
      %v718 = vld [vmem:[%s507 + $0x840] sm:$0xff]
      %v719 = vld [vmem:[%s507 + $0x848] sm:$0xff]
      %v720 = vld [vmem:[%s507 + $0x860] sm:$0xff]
      %v721 = vld [vmem:[%s507 + $0x868] sm:$0xff]
      %v722 = vld [vmem:[%s507 + $0x880] sm:$0xff]
      %v723 = vld [vmem:[%s507 + $0x888] sm:$0xff]
      %v724 = vld [vmem:[%s507 + $0x8a0] sm:$0xff]
      %v725 = vld [vmem:[%s507 + $0x8a8] sm:$0xff]
      %v726 = vld [vmem:[%s507 + $0x8c0] sm:$0xff]
      %v727 = vld [vmem:[%s507 + $0x8c8] sm:$0xff]
      %v728 = vld [vmem:[%s507 + $0x8e0] sm:$0xff]
      %v729 = vld [vmem:[%s507 + $0x8e8] sm:$0xff]
      %v730 = vld [vmem:[%s507 + $0x900] sm:$0xff]
      %v731 = vld [vmem:[%s507 + $0x908] sm:$0xff]
      %v732 = vld [vmem:[%s507 + $0x920] sm:$0xff]
      %v733 = vld [vmem:[%s507 + $0x928] sm:$0xff]
      %v734 = vld [vmem:[%s507 + $0x940] sm:$0xff]
      %v735 = vld [vmem:[%s507 + $0x948] sm:$0xff]
      %v736 = vld [vmem:[%s507 + $0x960] sm:$0xff]
      %v737 = vld [vmem:[%s507 + $0x968] sm:$0xff]
      %v738 = vld [vmem:[%s507 + $0x980] sm:$0xff]
      %v739 = vld [vmem:[%s507 + $0x988] sm:$0xff]
      %v740 = vld [vmem:[%s507 + $0x9a0] sm:$0xff]
      %v741 = vld [vmem:[%s507 + $0x9a8] sm:$0xff]
      %v742 = vld [vmem:[%s507 + $0x9c0] sm:$0xff]
      %v743 = vld [vmem:[%s507 + $0x9c8] sm:$0xff]
      %v744 = vld [vmem:[%s507 + $0x9e0] sm:$0xff]
      %v745 = vld [vmem:[%s507 + $0x9e8] sm:$0xff]
      %v746 = vld [vmem:[%s507 + $0xa00] sm:$0xff]
      %v747 = vld [vmem:[%s507 + $0xa08] sm:$0xff]
      %v748 = vld [vmem:[%s507 + $0xa20] sm:$0xff]
      %v749 = vld [vmem:[%s507 + $0xa28] sm:$0xff]
      %v750 = vld [vmem:[%s507 + $0xa40] sm:$0xff]
      %v751 = vld [vmem:[%s507 + $0xa48] sm:$0xff]
      %v752 = vld [vmem:[%s507 + $0xa60] sm:$0xff]
      %v753 = vld [vmem:[%s507 + $0xa68] sm:$0xff]
      %v754 = vld [vmem:[%s507 + $0xa80] sm:$0xff]
      %v755 = vld [vmem:[%s507 + $0xa88] sm:$0xff]
      %v756 = vld [vmem:[%s507 + $0xaa0] sm:$0xff]
      %v757 = vld [vmem:[%s507 + $0xaa8] sm:$0xff]
      %v758 = vld [vmem:[%s507 + $0xac0] sm:$0xff]
      %v759 = vld [vmem:[%s507 + $0xac8] sm:$0xff]
      %v760 = vld [vmem:[%s507 + $0xae0] sm:$0xff]
      %v761 = vld [vmem:[%s507 + $0xae8] sm:$0xff]
      %v762 = vld [vmem:[%s507 + $0xb00] sm:$0xff]
      %v763 = vld [vmem:[%s507 + $0xb08] sm:$0xff]
      %v764 = vld [vmem:[%s507 + $0xb20] sm:$0xff]
      %v765 = vld [vmem:[%s507 + $0xb28] sm:$0xff]
      %v766 = vld [vmem:[%s507 + $0xb40] sm:$0xff]
      %v767 = vld [vmem:[%s507 + $0xb48] sm:$0xff]
      %v768 = vld [vmem:[%s507 + $0xb60] sm:$0xff]
      %v769 = vld [vmem:[%s507 + $0xb68] sm:$0xff]
      %v770 = vld [vmem:[%s507 + $0xb80] sm:$0xff]
      %v771 = vld [vmem:[%s507 + $0xb88] sm:$0xff]
      %v772 = vld [vmem:[%s507 + $0xba0] sm:$0xff]
      %v773 = vld [vmem:[%s507 + $0xba8] sm:$0xff]
      %v774 = vld [vmem:[%s507 + $0xbc0] sm:$0xff]
      %v775 = vld [vmem:[%s507 + $0xbc8] sm:$0xff]
      %v776 = vld [vmem:[%s507 + $0xbe0] sm:$0xff]
      %v777 = vld [vmem:[%s507 + $0xbe8] sm:$0xff]
      %v778 = vld [vmem:[%s507 + $0xc00] sm:$0xff]
      %v779 = vld [vmem:[%s507 + $0xc08] sm:$0xff]
      %v780 = vld [vmem:[%s507 + $0xc20] sm:$0xff]
      %v781 = vld [vmem:[%s507 + $0xc28] sm:$0xff]
      %v782 = vld [vmem:[%s507 + $0xc40] sm:$0xff]
      %v783 = vld [vmem:[%s507 + $0xc48] sm:$0xff]
      %v784 = vld [vmem:[%s507 + $0xc60] sm:$0xff]
      %v785 = vld [vmem:[%s507 + $0xc68] sm:$0xff]
      %v786 = vld [vmem:[%s507 + $0xc80] sm:$0xff]
      %v787 = vld [vmem:[%s507 + $0xc88] sm:$0xff]
      %v788 = vld [vmem:[%s507 + $0xca0] sm:$0xff]
      %v789 = vld [vmem:[%s507 + $0xca8] sm:$0xff]
      %v790 = vld [vmem:[%s507 + $0xcc0] sm:$0xff]
      %v791 = vld [vmem:[%s507 + $0xcc8] sm:$0xff]
      %v792 = vld [vmem:[%s507 + $0xce0] sm:$0xff]
      %v793 = vld [vmem:[%s507 + $0xce8] sm:$0xff]
      %v794 = vld [vmem:[%s507 + $0xd00] sm:$0xff]
      %v795 = vld [vmem:[%s507 + $0xd08] sm:$0xff]
      %v796 = vld [vmem:[%s507 + $0xd20] sm:$0xff]
      %v797 = vld [vmem:[%s507 + $0xd28] sm:$0xff]
      %v798 = vld [vmem:[%s507 + $0xd40] sm:$0xff]
      %v799 = vld [vmem:[%s507 + $0xd48] sm:$0xff]
      %v800 = vld [vmem:[%s507 + $0xd60] sm:$0xff]
      %v801 = vld [vmem:[%s507 + $0xd68] sm:$0xff]
      %v802 = vld [vmem:[%s507 + $0xd80] sm:$0xff]
      %v803 = vld [vmem:[%s507 + $0xd88] sm:$0xff]
      %v804 = vld [vmem:[%s507 + $0xda0] sm:$0xff]
      %v805 = vld [vmem:[%s507 + $0xda8] sm:$0xff]
      %v806 = vld [vmem:[%s507 + $0xdc0] sm:$0xff]
      %v807 = vld [vmem:[%s507 + $0xdc8] sm:$0xff]
      %v808 = vld [vmem:[%s507 + $0xde0] sm:$0xff]
      %v809 = vld [vmem:[%s507 + $0xde8] sm:$0xff]
      %v810 = vld [vmem:[%s507 + $0xe00] sm:$0xff]
      %v811 = vld [vmem:[%s507 + $0xe08] sm:$0xff]
      %v812 = vld [vmem:[%s507 + $0xe20] sm:$0xff]
      %v813 = vld [vmem:[%s507 + $0xe28] sm:$0xff]
      %v814 = vld [vmem:[%s507 + $0xe40] sm:$0xff]
      %v815 = vld [vmem:[%s507 + $0xe48] sm:$0xff]
      %v816 = vld [vmem:[%s507 + $0xe60] sm:$0xff]
      %v817 = vld [vmem:[%s507 + $0xe68] sm:$0xff]
      %v818 = vld [vmem:[%s507 + $0xe80] sm:$0xff]
      %v819 = vld [vmem:[%s507 + $0xe88] sm:$0xff]
      %v820 = vld [vmem:[%s507 + $0xea0] sm:$0xff]
      %v821 = vld [vmem:[%s507 + $0xea8] sm:$0xff]
      %v822 = vld [vmem:[%s507 + $0xec0] sm:$0xff]
      %v823 = vld [vmem:[%s507 + $0xec8] sm:$0xff]
      %v824 = vld [vmem:[%s507 + $0xee0] sm:$0xff]
      %v825 = vld [vmem:[%s507 + $0xee8] sm:$0xff]
      %v826 = vld [vmem:[%s507 + $0xf00] sm:$0xff]
      %v827 = vld [vmem:[%s507 + $0xf08] sm:$0xff]
      %v828 = vld [vmem:[%s507 + $0xf20] sm:$0xff]
      %v829 = vld [vmem:[%s507 + $0xf28] sm:$0xff]
      %v830 = vld [vmem:[%s507 + $0xf40] sm:$0xff]
      %v831 = vld [vmem:[%s507 + $0xf48] sm:$0xff]
      %v832 = vld [vmem:[%s507 + $0xf60] sm:$0xff]
      %v833 = vld [vmem:[%s507 + $0xf68] sm:$0xff]
      %v834 = vld [vmem:[%s507 + $0xf80] sm:$0xff]
      %v835 = vld [vmem:[%s507 + $0xf88] sm:$0xff]
      %v836 = vld [vmem:[%s507 + $0xfa0] sm:$0xff]
      %v837 = vld [vmem:[%s507 + $0xfa8] sm:$0xff]
      %v838 = vld [vmem:[%s507 + $0xfc0] sm:$0xff]
      %v839 = vld [vmem:[%s507 + $0xfc8] sm:$0xff]
      %v840 = vld [vmem:[%s507 + $0xfe0] sm:$0xff]
      %v841 = vld [vmem:[%s507 + $0xfe8] sm:$0xff]
      %v842 = vld [vmem:[%s507 + $0x10] sm:$0xff]
      %v843 = vld [vmem:[%s507 + $0x18] sm:$0xff]
      %v844 = vld [vmem:[%s507 + $0x30] sm:$0xff]
      %v845 = vld [vmem:[%s507 + $0x38] sm:$0xff]
      %v846 = vld [vmem:[%s507 + $0x50] sm:$0xff]
      %v847 = vld [vmem:[%s507 + $0x58] sm:$0xff]
      %v848 = vld [vmem:[%s507 + $0x70] sm:$0xff]
      %v849 = vld [vmem:[%s507 + $0x78] sm:$0xff]
      %v850 = vld [vmem:[%s507 + $0x90] sm:$0xff]
      %v851 = vld [vmem:[%s507 + $0x98] sm:$0xff]
      %v852 = vld [vmem:[%s507 + $0xb0] sm:$0xff]
      %v853 = vld [vmem:[%s507 + $0xb8] sm:$0xff]
      %v854 = vld [vmem:[%s507 + $0xd0] sm:$0xff]
      %v855 = vld [vmem:[%s507 + $0xd8] sm:$0xff]
      %v856 = vld [vmem:[%s507 + $0xf0] sm:$0xff]
      %v857 = vld [vmem:[%s507 + $0xf8] sm:$0xff]
      %v858 = vld [vmem:[%s507 + $0x110] sm:$0xff]
      %v859 = vld [vmem:[%s507 + $0x118] sm:$0xff]
      %v860 = vld [vmem:[%s507 + $0x130] sm:$0xff]
      %v861 = vld [vmem:[%s507 + $0x138] sm:$0xff]
      %v862 = vld [vmem:[%s507 + $0x150] sm:$0xff]
      %v863 = vld [vmem:[%s507 + $0x158] sm:$0xff]
      %v864 = vld [vmem:[%s507 + $0x170] sm:$0xff]
      %v865 = vld [vmem:[%s507 + $0x178] sm:$0xff]
      %v866 = vld [vmem:[%s507 + $0x190] sm:$0xff]
      %v867 = vld [vmem:[%s507 + $0x198] sm:$0xff]
      %v868 = vld [vmem:[%s507 + $0x1b0] sm:$0xff]
      %v869 = vld [vmem:[%s507 + $0x1b8] sm:$0xff]
      %v870 = vld [vmem:[%s507 + $0x1d0] sm:$0xff]
      %v871 = vld [vmem:[%s507 + $0x1d8] sm:$0xff]
      %v872 = vld [vmem:[%s507 + $0x1f0] sm:$0xff]
      %v873 = vld [vmem:[%s507 + $0x1f8] sm:$0xff]
      %v874 = vld [vmem:[%s507 + $0x210] sm:$0xff]
      %v875 = vld [vmem:[%s507 + $0x218] sm:$0xff]
      %v876 = vld [vmem:[%s507 + $0x230] sm:$0xff]
      %v877 = vld [vmem:[%s507 + $0x238] sm:$0xff]
      %v878 = vld [vmem:[%s507 + $0x250] sm:$0xff]
      %v879 = vld [vmem:[%s507 + $0x258] sm:$0xff]
      %v880 = vld [vmem:[%s507 + $0x270] sm:$0xff]
      %v881 = vld [vmem:[%s507 + $0x278] sm:$0xff]
      %v882 = vld [vmem:[%s507 + $0x290] sm:$0xff]
      %v883 = vld [vmem:[%s507 + $0x298] sm:$0xff]
      %v884 = vld [vmem:[%s507 + $0x2b0] sm:$0xff]
      %v885 = vld [vmem:[%s507 + $0x2b8] sm:$0xff]
      %v886 = vld [vmem:[%s507 + $0x2d0] sm:$0xff]
      %v887 = vld [vmem:[%s507 + $0x2d8] sm:$0xff]
      %v888 = vld [vmem:[%s507 + $0x2f0] sm:$0xff]
      %v889 = vld [vmem:[%s507 + $0x2f8] sm:$0xff]
      %v890 = vld [vmem:[%s507 + $0x310] sm:$0xff]
      %v891 = vld [vmem:[%s507 + $0x318] sm:$0xff]
      %v892 = vld [vmem:[%s507 + $0x330] sm:$0xff]
      %v893 = vld [vmem:[%s507 + $0x338] sm:$0xff]
      %v894 = vld [vmem:[%s507 + $0x350] sm:$0xff]
      %v895 = vld [vmem:[%s507 + $0x358] sm:$0xff]
      %v896 = vld [vmem:[%s507 + $0x370] sm:$0xff]
      %v897 = vld [vmem:[%s507 + $0x378] sm:$0xff]
      %v898 = vld [vmem:[%s507 + $0x390] sm:$0xff]
      %v899 = vld [vmem:[%s507 + $0x398] sm:$0xff]
      %v900 = vld [vmem:[%s507 + $0x3b0] sm:$0xff]
      %v901 = vld [vmem:[%s507 + $0x3b8] sm:$0xff]
      %v902 = vld [vmem:[%s507 + $0x3d0] sm:$0xff]
      %v903 = vld [vmem:[%s507 + $0x3d8] sm:$0xff]
      %v904 = vld [vmem:[%s507 + $0x3f0] sm:$0xff]
      %v905 = vld [vmem:[%s507 + $0x3f8] sm:$0xff]
      %v906 = vld [vmem:[%s507 + $0x410] sm:$0xff]
      %v907 = vld [vmem:[%s507 + $0x418] sm:$0xff]
      %v908 = vld [vmem:[%s507 + $0x430] sm:$0xff]
      %v909 = vld [vmem:[%s507 + $0x438] sm:$0xff]
      %v910 = vld [vmem:[%s507 + $0x450] sm:$0xff]
      %v911 = vld [vmem:[%s507 + $0x458] sm:$0xff]
      %v912 = vld [vmem:[%s507 + $0x470] sm:$0xff]
      %v913 = vld [vmem:[%s507 + $0x478] sm:$0xff]
      %v914 = vld [vmem:[%s507 + $0x490] sm:$0xff]
      %v915 = vld [vmem:[%s507 + $0x498] sm:$0xff]
      %v916 = vld [vmem:[%s507 + $0x4b0] sm:$0xff]
      %v917 = vld [vmem:[%s507 + $0x4b8] sm:$0xff]
      %v918 = vld [vmem:[%s507 + $0x4d0] sm:$0xff]
      %v919 = vld [vmem:[%s507 + $0x4d8] sm:$0xff]
      %v920 = vld [vmem:[%s507 + $0x4f0] sm:$0xff]
      %v921 = vld [vmem:[%s507 + $0x4f8] sm:$0xff]
      %v922 = vld [vmem:[%s507 + $0x510] sm:$0xff]
      %v923 = vld [vmem:[%s507 + $0x518] sm:$0xff]
      %v924 = vld [vmem:[%s507 + $0x530] sm:$0xff]
      %v925 = vld [vmem:[%s507 + $0x538] sm:$0xff]
      %v926 = vld [vmem:[%s507 + $0x550] sm:$0xff]
      %v927 = vld [vmem:[%s507 + $0x558] sm:$0xff]
      %v928 = vld [vmem:[%s507 + $0x570] sm:$0xff]
      %v929 = vld [vmem:[%s507 + $0x578] sm:$0xff]
      %v930 = vld [vmem:[%s507 + $0x590] sm:$0xff]
      %v931 = vld [vmem:[%s507 + $0x598] sm:$0xff]
      %v932 = vld [vmem:[%s507 + $0x5b0] sm:$0xff]
      %v933 = vld [vmem:[%s507 + $0x5b8] sm:$0xff]
      %v934 = vld [vmem:[%s507 + $0x5d0] sm:$0xff]
      %v935 = vld [vmem:[%s507 + $0x5d8] sm:$0xff]
      %v936 = vld [vmem:[%s507 + $0x5f0] sm:$0xff]
      %v937 = vld [vmem:[%s507 + $0x5f8] sm:$0xff]
      %v938 = vld [vmem:[%s507 + $0x610] sm:$0xff]
      %v939 = vld [vmem:[%s507 + $0x618] sm:$0xff]
      %v940 = vld [vmem:[%s507 + $0x630] sm:$0xff]
      %v941 = vld [vmem:[%s507 + $0x638] sm:$0xff]
      %v942 = vld [vmem:[%s507 + $0x650] sm:$0xff]
      %v943 = vld [vmem:[%s507 + $0x658] sm:$0xff]
      %v944 = vld [vmem:[%s507 + $0x670] sm:$0xff]
      %v945 = vld [vmem:[%s507 + $0x678] sm:$0xff]
      %v946 = vld [vmem:[%s507 + $0x690] sm:$0xff]
      %v947 = vld [vmem:[%s507 + $0x698] sm:$0xff]
      %v948 = vld [vmem:[%s507 + $0x6b0] sm:$0xff]
      %v949 = vld [vmem:[%s507 + $0x6b8] sm:$0xff]
      %v950 = vld [vmem:[%s507 + $0x6d0] sm:$0xff]
      %v951 = vld [vmem:[%s507 + $0x6d8] sm:$0xff]
      %v952 = vld [vmem:[%s507 + $0x6f0] sm:$0xff]
      %v953 = vld [vmem:[%s507 + $0x6f8] sm:$0xff]
      %v954 = vld [vmem:[%s507 + $0x710] sm:$0xff]
      %v955 = vld [vmem:[%s507 + $0x718] sm:$0xff]
      %v956 = vld [vmem:[%s507 + $0x730] sm:$0xff]
      %v957 = vld [vmem:[%s507 + $0x738] sm:$0xff]
      %v958 = vld [vmem:[%s507 + $0x750] sm:$0xff]
      %v959 = vld [vmem:[%s507 + $0x758] sm:$0xff]
      %v960 = vld [vmem:[%s507 + $0x770] sm:$0xff]
      %v961 = vld [vmem:[%s507 + $0x778] sm:$0xff]
      %v962 = vld [vmem:[%s507 + $0x790] sm:$0xff]
      %v963 = vld [vmem:[%s507 + $0x798] sm:$0xff]
      %v964 = vld [vmem:[%s507 + $0x7b0] sm:$0xff]
      %v965 = vld [vmem:[%s507 + $0x7b8] sm:$0xff]
      %v966 = vld [vmem:[%s507 + $0x7d0] sm:$0xff]
      %v967 = vld [vmem:[%s507 + $0x7d8] sm:$0xff]
      %v968 = vld [vmem:[%s507 + $0x7f0] sm:$0xff]
      %v969 = vld [vmem:[%s507 + $0x7f8] sm:$0xff]
      %v970 = vld [vmem:[%s507 + $0x810] sm:$0xff]
      %v971 = vld [vmem:[%s507 + $0x818] sm:$0xff]
      %v972 = vld [vmem:[%s507 + $0x830] sm:$0xff]
      %v973 = vld [vmem:[%s507 + $0x838] sm:$0xff]
      %v974 = vld [vmem:[%s507 + $0x850] sm:$0xff]
      %v975 = vld [vmem:[%s507 + $0x858] sm:$0xff]
      %v976 = vld [vmem:[%s507 + $0x870] sm:$0xff]
      %v977 = vld [vmem:[%s507 + $0x878] sm:$0xff]
      %v978 = vld [vmem:[%s507 + $0x890] sm:$0xff]
      %v979 = vld [vmem:[%s507 + $0x898] sm:$0xff]
      %v980 = vld [vmem:[%s507 + $0x8b0] sm:$0xff]
      %v981 = vld [vmem:[%s507 + $0x8b8] sm:$0xff]
      %v982 = vld [vmem:[%s507 + $0x8d0] sm:$0xff]
      %v983 = vld [vmem:[%s507 + $0x8d8] sm:$0xff]
      %v984 = vld [vmem:[%s507 + $0x8f0] sm:$0xff]
      %v985 = vld [vmem:[%s507 + $0x8f8] sm:$0xff]
      %v986 = vld [vmem:[%s507 + $0x910] sm:$0xff]
      %v987 = vld [vmem:[%s507 + $0x918] sm:$0xff]
      %v988 = vld [vmem:[%s507 + $0x930] sm:$0xff]
      %v989 = vld [vmem:[%s507 + $0x938] sm:$0xff]
      %v990 = vld [vmem:[%s507 + $0x950] sm:$0xff]
      %v991 = vld [vmem:[%s507 + $0x958] sm:$0xff]
      %v992 = vld [vmem:[%s507 + $0x970] sm:$0xff]
      %v993 = vld [vmem:[%s507 + $0x978] sm:$0xff]
      %v994 = vld [vmem:[%s507 + $0x990] sm:$0xff]
      %v995 = vld [vmem:[%s507 + $0x998] sm:$0xff]
      %v996 = vld [vmem:[%s507 + $0x9b0] sm:$0xff]
      %v997 = vld [vmem:[%s507 + $0x9b8] sm:$0xff]
      %v998 = vld [vmem:[%s507 + $0x9d0] sm:$0xff]
      %v999 = vld [vmem:[%s507 + $0x9d8] sm:$0xff]
      %v1000 = vld [vmem:[%s507 + $0x9f0] sm:$0xff]
      %v1001 = vld [vmem:[%s507 + $0x9f8] sm:$0xff]
      %v1002 = vld [vmem:[%s507 + $0xa10] sm:$0xff]
      %v1003 = vld [vmem:[%s507 + $0xa18] sm:$0xff]
      %v1004 = vld [vmem:[%s507 + $0xa30] sm:$0xff]
      %v1005 = vld [vmem:[%s507 + $0xa38] sm:$0xff]
      %v1006 = vld [vmem:[%s507 + $0xa50] sm:$0xff]
      %v1007 = vld [vmem:[%s507 + $0xa58] sm:$0xff]
      %v1008 = vld [vmem:[%s507 + $0xa70] sm:$0xff]
      %v1009 = vld [vmem:[%s507 + $0xa78] sm:$0xff]
      %v1010 = vld [vmem:[%s507 + $0xa90] sm:$0xff]
      %v1011 = vld [vmem:[%s507 + $0xa98] sm:$0xff]
      %v1012 = vld [vmem:[%s507 + $0xab0] sm:$0xff]
      %v1013 = vld [vmem:[%s507 + $0xab8] sm:$0xff]
      %v1014 = vld [vmem:[%s507 + $0xad0] sm:$0xff]
      %v1015 = vld [vmem:[%s507 + $0xad8] sm:$0xff]
      %v1016 = vld [vmem:[%s507 + $0xaf0] sm:$0xff]
      %v1017 = vld [vmem:[%s507 + $0xaf8] sm:$0xff]
      %v1018 = vld [vmem:[%s507 + $0xb10] sm:$0xff]
      %v1019 = vld [vmem:[%s507 + $0xb18] sm:$0xff]
      %v1020 = vld [vmem:[%s507 + $0xb30] sm:$0xff]
      %v1021 = vld [vmem:[%s507 + $0xb38] sm:$0xff]
      %v1022 = vld [vmem:[%s507 + $0xb50] sm:$0xff]
      %v1023 = vld [vmem:[%s507 + $0xb58] sm:$0xff]
      %v1024 = vld [vmem:[%s507 + $0xb70] sm:$0xff]
      %v1025 = vld [vmem:[%s507 + $0xb78] sm:$0xff]
      %v1026 = vld [vmem:[%s507 + $0xb90] sm:$0xff]
      %v1027 = vld [vmem:[%s507 + $0xb98] sm:$0xff]
      %v1028 = vld [vmem:[%s507 + $0xbb0] sm:$0xff]
      %v1029 = vld [vmem:[%s507 + $0xbb8] sm:$0xff]
      %v1030 = vld [vmem:[%s507 + $0xbd0] sm:$0xff]
      %v1031 = vld [vmem:[%s507 + $0xbd8] sm:$0xff]
      %v1032 = vld [vmem:[%s507 + $0xbf0] sm:$0xff]
      %v1033 = vld [vmem:[%s507 + $0xbf8] sm:$0xff]
      %v1034 = vld [vmem:[%s507 + $0xc10] sm:$0xff]
      %v1035 = vld [vmem:[%s507 + $0xc18] sm:$0xff]
      %v1036 = vld [vmem:[%s507 + $0xc30] sm:$0xff]
      %v1037 = vld [vmem:[%s507 + $0xc38] sm:$0xff]
      %v1038 = vld [vmem:[%s507 + $0xc50] sm:$0xff]
      %v1039 = vld [vmem:[%s507 + $0xc58] sm:$0xff]
      %v1040 = vld [vmem:[%s507 + $0xc70] sm:$0xff]
      %v1041 = vld [vmem:[%s507 + $0xc78] sm:$0xff]
      %v1042 = vld [vmem:[%s507 + $0xc90] sm:$0xff]
      %v1043 = vld [vmem:[%s507 + $0xc98] sm:$0xff]
      %v1044 = vld [vmem:[%s507 + $0xcb0] sm:$0xff]
      %v1045 = vld [vmem:[%s507 + $0xcb8] sm:$0xff]
      %v1046 = vld [vmem:[%s507 + $0xcd0] sm:$0xff]
      %v1047 = vld [vmem:[%s507 + $0xcd8] sm:$0xff]
      %v1048 = vld [vmem:[%s507 + $0xcf0] sm:$0xff]
      %v1049 = vld [vmem:[%s507 + $0xcf8] sm:$0xff]
      %v1050 = vld [vmem:[%s507 + $0xd10] sm:$0xff]
      %v1051 = vld [vmem:[%s507 + $0xd18] sm:$0xff]
      %v1052 = vld [vmem:[%s507 + $0xd30] sm:$0xff]
      %v1053 = vld [vmem:[%s507 + $0xd38] sm:$0xff]
      %v1054 = vld [vmem:[%s507 + $0xd50] sm:$0xff]
      %v1055 = vld [vmem:[%s507 + $0xd58] sm:$0xff]
      %v1056 = vld [vmem:[%s507 + $0xd70] sm:$0xff]
      %v1057 = vld [vmem:[%s507 + $0xd78] sm:$0xff]
      %v1058 = vld [vmem:[%s507 + $0xd90] sm:$0xff]
      %v1059 = vld [vmem:[%s507 + $0xd98] sm:$0xff]
      %v1060 = vld [vmem:[%s507 + $0xdb0] sm:$0xff]
      %v1061 = vld [vmem:[%s507 + $0xdb8] sm:$0xff]
      %v1062 = vld [vmem:[%s507 + $0xdd0] sm:$0xff]
      %v1063 = vld [vmem:[%s507 + $0xdd8] sm:$0xff]
      %v1064 = vld [vmem:[%s507 + $0xdf0] sm:$0xff]
      %v1065 = vld [vmem:[%s507 + $0xdf8] sm:$0xff]
      %v1066 = vld [vmem:[%s507 + $0xe10] sm:$0xff]
      %v1067 = vld [vmem:[%s507 + $0xe18] sm:$0xff]
      %v1068 = vld [vmem:[%s507 + $0xe30] sm:$0xff]
      %v1069 = vld [vmem:[%s507 + $0xe38] sm:$0xff]
      %v1070 = vld [vmem:[%s507 + $0xe50] sm:$0xff]
      %v1071 = vld [vmem:[%s507 + $0xe58] sm:$0xff]
      %v1072 = vld [vmem:[%s507 + $0xe70] sm:$0xff]
      %v1073 = vld [vmem:[%s507 + $0xe78] sm:$0xff]
      %v1074 = vld [vmem:[%s507 + $0xe90] sm:$0xff]
      %v1075 = vld [vmem:[%s507 + $0xe98] sm:$0xff]
      %v1076 = vld [vmem:[%s507 + $0xeb0] sm:$0xff]
      %v1077 = vld [vmem:[%s507 + $0xeb8] sm:$0xff]
      %v1078 = vld [vmem:[%s507 + $0xed0] sm:$0xff]
      %v1079 = vld [vmem:[%s507 + $0xed8] sm:$0xff]
      %v1080 = vld [vmem:[%s507 + $0xef0] sm:$0xff]
      %v1081 = vld [vmem:[%s507 + $0xef8] sm:$0xff]
      %v1082 = vld [vmem:[%s507 + $0xf10] sm:$0xff]
      %v1083 = vld [vmem:[%s507 + $0xf18] sm:$0xff]
      %v1084 = vld [vmem:[%s507 + $0xf30] sm:$0xff]
      %v1085 = vld [vmem:[%s507 + $0xf38] sm:$0xff]
      %v1086 = vld [vmem:[%s507 + $0xf50] sm:$0xff]
      %v1087 = vld [vmem:[%s507 + $0xf58] sm:$0xff]
      %v1088 = vld [vmem:[%s507 + $0xf70] sm:$0xff]
      %v1089 = vld [vmem:[%s507 + $0xf78] sm:$0xff]
      %v1090 = vld [vmem:[%s507 + $0xf90] sm:$0xff]
      %v1091 = vld [vmem:[%s507 + $0xf98] sm:$0xff]
      %v1092 = vld [vmem:[%s507 + $0xfb0] sm:$0xff]
      %v1093 = vld [vmem:[%s507 + $0xfb8] sm:$0xff]
      %v1094 = vld [vmem:[%s507 + $0xfd0] sm:$0xff]
      %v1095 = vld [vmem:[%s507 + $0xfd8] sm:$0xff]
      %v1096 = vld [vmem:[%s507 + $0xff0] sm:$0xff]
      %v1097 = vld [vmem:[%s507 + $0xff8] sm:$0xff]
      %v1099 = vlaneseq
      %v1100 = vshrl.u32 %v1099, 7
      %v1101 = vsub.s32 0, %v1100
      %v1102 = vrot.slane %v585, %v1101
      %v1360 = vunpack.c.l.b16 %v586
      %v1361 = vunpack.c.h.b16 %v586
      %v1362 = vunpack.c.l.b16 %v587
      %v1363 = vunpack.c.h.b16 %v587
      %v1364 = vunpack.c.l.b16 %v588
      %v1365 = vunpack.c.h.b16 %v588
      %v1366 = vunpack.c.l.b16 %v589
      %v1367 = vunpack.c.h.b16 %v589
      %v1368 = vunpack.c.l.b16 %v590
      %v1369 = vunpack.c.h.b16 %v590
      %v1370 = vunpack.c.l.b16 %v591
      %v1371 = vunpack.c.h.b16 %v591
      %v1372 = vunpack.c.l.b16 %v592
      %v1373 = vunpack.c.h.b16 %v592
      %v1374 = vunpack.c.l.b16 %v593
      %v1375 = vunpack.c.h.b16 %v593
      %v1376 = vunpack.c.l.b16 %v594
      %v1377 = vunpack.c.h.b16 %v594
      %v1378 = vunpack.c.l.b16 %v595
      %v1379 = vunpack.c.h.b16 %v595
      %v1380 = vunpack.c.l.b16 %v596
      %v1381 = vunpack.c.h.b16 %v596
      %v1382 = vunpack.c.l.b16 %v597
      %v1383 = vunpack.c.h.b16 %v597
      %v1384 = vunpack.c.l.b16 %v598
      %v1385 = vunpack.c.h.b16 %v598
      %v1386 = vunpack.c.l.b16 %v599
      %v1387 = vunpack.c.h.b16 %v599
      %v1388 = vunpack.c.l.b16 %v600
      %v1389 = vunpack.c.h.b16 %v600
      %v1390 = vunpack.c.l.b16 %v601
      %v1391 = vunpack.c.h.b16 %v601
      %v1392 = vunpack.c.l.b16 %v602
      %v1393 = vunpack.c.h.b16 %v602
      %v1394 = vunpack.c.l.b16 %v603
      %v1395 = vunpack.c.h.b16 %v603
      %v1396 = vunpack.c.l.b16 %v604
      %v1397 = vunpack.c.h.b16 %v604
      %v1398 = vunpack.c.l.b16 %v605
      %v1399 = vunpack.c.h.b16 %v605
      %v1400 = vunpack.c.l.b16 %v606
      %v1401 = vunpack.c.h.b16 %v606
      %v1402 = vunpack.c.l.b16 %v607
      %v1403 = vunpack.c.h.b16 %v607
      %v1404 = vunpack.c.l.b16 %v608
      %v1405 = vunpack.c.h.b16 %v608
      %v1406 = vunpack.c.l.b16 %v609
      %v1407 = vunpack.c.h.b16 %v609
      %v1408 = vunpack.c.l.b16 %v610
      %v1409 = vunpack.c.h.b16 %v610
      %v1410 = vunpack.c.l.b16 %v611
      %v1411 = vunpack.c.h.b16 %v611
      %v1412 = vunpack.c.l.b16 %v612
      %v1413 = vunpack.c.h.b16 %v612
      %v1414 = vunpack.c.l.b16 %v613
      %v1415 = vunpack.c.h.b16 %v613
      %v1416 = vunpack.c.l.b16 %v614
      %v1417 = vunpack.c.h.b16 %v614
      %v1418 = vunpack.c.l.b16 %v615
      %v1419 = vunpack.c.h.b16 %v615
      %v1420 = vunpack.c.l.b16 %v616
      %v1421 = vunpack.c.h.b16 %v616
      %v1422 = vunpack.c.l.b16 %v617
      %v1423 = vunpack.c.h.b16 %v617
      %v1424 = vunpack.c.l.b16 %v618
      %v1425 = vunpack.c.h.b16 %v618
      %v1426 = vunpack.c.l.b16 %v619
      %v1427 = vunpack.c.h.b16 %v619
      %v1428 = vunpack.c.l.b16 %v620
      %v1429 = vunpack.c.h.b16 %v620
      %v1430 = vunpack.c.l.b16 %v621
      %v1431 = vunpack.c.h.b16 %v621
      %v1432 = vunpack.c.l.b16 %v622
      %v1433 = vunpack.c.h.b16 %v622
      %v1434 = vunpack.c.l.b16 %v623
      %v1435 = vunpack.c.h.b16 %v623
      %v1436 = vunpack.c.l.b16 %v624
      %v1437 = vunpack.c.h.b16 %v624
      %v1438 = vunpack.c.l.b16 %v625
      %v1439 = vunpack.c.h.b16 %v625
      %v1440 = vunpack.c.l.b16 %v626
      %v1441 = vunpack.c.h.b16 %v626
      %v1442 = vunpack.c.l.b16 %v627
      %v1443 = vunpack.c.h.b16 %v627
      %v1444 = vunpack.c.l.b16 %v628
      %v1445 = vunpack.c.h.b16 %v628
      %v1446 = vunpack.c.l.b16 %v629
      %v1447 = vunpack.c.h.b16 %v629
      %v1448 = vunpack.c.l.b16 %v630
      %v1449 = vunpack.c.h.b16 %v630
      %v1450 = vunpack.c.l.b16 %v631
      %v1451 = vunpack.c.h.b16 %v631
      %v1452 = vunpack.c.l.b16 %v632
      %v1453 = vunpack.c.h.b16 %v632
      %v1454 = vunpack.c.l.b16 %v633
      %v1455 = vunpack.c.h.b16 %v633
      %v1456 = vunpack.c.l.b16 %v634
      %v1457 = vunpack.c.h.b16 %v634
      %v1458 = vunpack.c.l.b16 %v635
      %v1459 = vunpack.c.h.b16 %v635
      %v1460 = vunpack.c.l.b16 %v636
      %v1461 = vunpack.c.h.b16 %v636
      %v1462 = vunpack.c.l.b16 %v637
      %v1463 = vunpack.c.h.b16 %v637
      %v1464 = vunpack.c.l.b16 %v638
      %v1465 = vunpack.c.h.b16 %v638
      %v1466 = vunpack.c.l.b16 %v639
      %v1467 = vunpack.c.h.b16 %v639
      %v1468 = vunpack.c.l.b16 %v640
      %v1469 = vunpack.c.h.b16 %v640
      %v1470 = vunpack.c.l.b16 %v641
      %v1471 = vunpack.c.h.b16 %v641
      %v1472 = vunpack.c.l.b16 %v642
      %v1473 = vunpack.c.h.b16 %v642
      %v1474 = vunpack.c.l.b16 %v643
      %v1475 = vunpack.c.h.b16 %v643
      %v1476 = vunpack.c.l.b16 %v644
      %v1477 = vunpack.c.h.b16 %v644
      %v1478 = vunpack.c.l.b16 %v645
      %v1479 = vunpack.c.h.b16 %v645
      %v1480 = vunpack.c.l.b16 %v646
      %v1481 = vunpack.c.h.b16 %v646
      %v1482 = vunpack.c.l.b16 %v647
      %v1483 = vunpack.c.h.b16 %v647
      %v1484 = vunpack.c.l.b16 %v648
      %v1485 = vunpack.c.h.b16 %v648
      %v1486 = vunpack.c.l.b16 %v649
      %v1487 = vunpack.c.h.b16 %v649
      %v1488 = vunpack.c.l.b16 %v650
      %v1489 = vunpack.c.h.b16 %v650
      %v1490 = vunpack.c.l.b16 %v651
      %v1491 = vunpack.c.h.b16 %v651
      %v1492 = vunpack.c.l.b16 %v652
      %v1493 = vunpack.c.h.b16 %v652
      %v1494 = vunpack.c.l.b16 %v653
      %v1495 = vunpack.c.h.b16 %v653
      %v1496 = vunpack.c.l.b16 %v654
      %v1497 = vunpack.c.h.b16 %v654
      %v1498 = vunpack.c.l.b16 %v655
      %v1499 = vunpack.c.h.b16 %v655
      %v1500 = vunpack.c.l.b16 %v656
      %v1501 = vunpack.c.h.b16 %v656
      %v1502 = vunpack.c.l.b16 %v657
      %v1503 = vunpack.c.h.b16 %v657
      %v1504 = vunpack.c.l.b16 %v658
      %v1505 = vunpack.c.h.b16 %v658
      %v1506 = vunpack.c.l.b16 %v659
      %v1507 = vunpack.c.h.b16 %v659
      %v1508 = vunpack.c.l.b16 %v660
      %v1509 = vunpack.c.h.b16 %v660
      %v1510 = vunpack.c.l.b16 %v661
      %v1511 = vunpack.c.h.b16 %v661
      %v1512 = vunpack.c.l.b16 %v662
      %v1513 = vunpack.c.h.b16 %v662
      %v1514 = vunpack.c.l.b16 %v663
      %v1515 = vunpack.c.h.b16 %v663
      %v1516 = vunpack.c.l.b16 %v664
      %v1517 = vunpack.c.h.b16 %v664
      %v1518 = vunpack.c.l.b16 %v665
      %v1519 = vunpack.c.h.b16 %v665
      %v1520 = vunpack.c.l.b16 %v666
      %v1521 = vunpack.c.h.b16 %v666
      %v1522 = vunpack.c.l.b16 %v667
      %v1523 = vunpack.c.h.b16 %v667
      %v1524 = vunpack.c.l.b16 %v668
      %v1525 = vunpack.c.h.b16 %v668
      %v1526 = vunpack.c.l.b16 %v669
      %v1527 = vunpack.c.h.b16 %v669
      %v1528 = vunpack.c.l.b16 %v670
      %v1529 = vunpack.c.h.b16 %v670
      %v1530 = vunpack.c.l.b16 %v671
      %v1531 = vunpack.c.h.b16 %v671
      %v1532 = vunpack.c.l.b16 %v672
      %v1533 = vunpack.c.h.b16 %v672
      %v1534 = vunpack.c.l.b16 %v673
      %v1535 = vunpack.c.h.b16 %v673
      %v1536 = vunpack.c.l.b16 %v674
      %v1537 = vunpack.c.h.b16 %v674
      %v1538 = vunpack.c.l.b16 %v675
      %v1539 = vunpack.c.h.b16 %v675
      %v1540 = vunpack.c.l.b16 %v676
      %v1541 = vunpack.c.h.b16 %v676
      %v1542 = vunpack.c.l.b16 %v677
      %v1543 = vunpack.c.h.b16 %v677
      %v1544 = vunpack.c.l.b16 %v678
      %v1545 = vunpack.c.h.b16 %v678
      %v1546 = vunpack.c.l.b16 %v679
      %v1547 = vunpack.c.h.b16 %v679
      %v1548 = vunpack.c.l.b16 %v680
      %v1549 = vunpack.c.h.b16 %v680
      %v1550 = vunpack.c.l.b16 %v681
      %v1551 = vunpack.c.h.b16 %v681
      %v1552 = vunpack.c.l.b16 %v682
      %v1553 = vunpack.c.h.b16 %v682
      %v1554 = vunpack.c.l.b16 %v683
      %v1555 = vunpack.c.h.b16 %v683
      %v1556 = vunpack.c.l.b16 %v684
      %v1557 = vunpack.c.h.b16 %v684
      %v1558 = vunpack.c.l.b16 %v685
      %v1559 = vunpack.c.h.b16 %v685
      %v1560 = vunpack.c.l.b16 %v686
      %v1561 = vunpack.c.h.b16 %v686
      %v1562 = vunpack.c.l.b16 %v687
      %v1563 = vunpack.c.h.b16 %v687
      %v1564 = vunpack.c.l.b16 %v688
      %v1565 = vunpack.c.h.b16 %v688
      %v1566 = vunpack.c.l.b16 %v689
      %v1567 = vunpack.c.h.b16 %v689
      %v1568 = vunpack.c.l.b16 %v690
      %v1569 = vunpack.c.h.b16 %v690
      %v1570 = vunpack.c.l.b16 %v691
      %v1571 = vunpack.c.h.b16 %v691
      %v1572 = vunpack.c.l.b16 %v692
      %v1573 = vunpack.c.h.b16 %v692
      %v1574 = vunpack.c.l.b16 %v693
      %v1575 = vunpack.c.h.b16 %v693
      %v1576 = vunpack.c.l.b16 %v694
      %v1577 = vunpack.c.h.b16 %v694
      %v1578 = vunpack.c.l.b16 %v695
      %v1579 = vunpack.c.h.b16 %v695
      %v1580 = vunpack.c.l.b16 %v696
      %v1581 = vunpack.c.h.b16 %v696
      %v1582 = vunpack.c.l.b16 %v697
      %v1583 = vunpack.c.h.b16 %v697
      %v1584 = vunpack.c.l.b16 %v698
      %v1585 = vunpack.c.h.b16 %v698
      %v1586 = vunpack.c.l.b16 %v699
      %v1587 = vunpack.c.h.b16 %v699
      %v1588 = vunpack.c.l.b16 %v700
      %v1589 = vunpack.c.h.b16 %v700
      %v1590 = vunpack.c.l.b16 %v701
      %v1591 = vunpack.c.h.b16 %v701
      %v1592 = vunpack.c.l.b16 %v702
      %v1593 = vunpack.c.h.b16 %v702
      %v1594 = vunpack.c.l.b16 %v703
      %v1595 = vunpack.c.h.b16 %v703
      %v1596 = vunpack.c.l.b16 %v704
      %v1597 = vunpack.c.h.b16 %v704
      %v1598 = vunpack.c.l.b16 %v705
      %v1599 = vunpack.c.h.b16 %v705
      %v1600 = vunpack.c.l.b16 %v706
      %v1601 = vunpack.c.h.b16 %v706
      %v1602 = vunpack.c.l.b16 %v707
      %v1603 = vunpack.c.h.b16 %v707
      %v1604 = vunpack.c.l.b16 %v708
      %v1605 = vunpack.c.h.b16 %v708
      %v1606 = vunpack.c.l.b16 %v709
      %v1607 = vunpack.c.h.b16 %v709
      %v1608 = vunpack.c.l.b16 %v710
      %v1609 = vunpack.c.h.b16 %v710
      %v1610 = vunpack.c.l.b16 %v711
      %v1611 = vunpack.c.h.b16 %v711
      %v1612 = vunpack.c.l.b16 %v712
      %v1613 = vunpack.c.h.b16 %v712
      %v1614 = vunpack.c.l.b16 %v713
      %v1615 = vunpack.c.h.b16 %v713
      %v1616 = vunpack.c.l.b16 %v714
      %v1617 = vunpack.c.h.b16 %v714
      %v1618 = vunpack.c.l.b16 %v715
      %v1619 = vunpack.c.h.b16 %v715
      %v1620 = vunpack.c.l.b16 %v716
      %v1621 = vunpack.c.h.b16 %v716
      %v1622 = vunpack.c.l.b16 %v717
      %v1623 = vunpack.c.h.b16 %v717
      %v1624 = vunpack.c.l.b16 %v718
      %v1625 = vunpack.c.h.b16 %v718
      %v1626 = vunpack.c.l.b16 %v719
      %v1627 = vunpack.c.h.b16 %v719
      %v1628 = vunpack.c.l.b16 %v720
      %v1629 = vunpack.c.h.b16 %v720
      %v1630 = vunpack.c.l.b16 %v721
      %v1631 = vunpack.c.h.b16 %v721
      %v1632 = vunpack.c.l.b16 %v722
      %v1633 = vunpack.c.h.b16 %v722
      %v1634 = vunpack.c.l.b16 %v723
      %v1635 = vunpack.c.h.b16 %v723
      %v1636 = vunpack.c.l.b16 %v724
      %v1637 = vunpack.c.h.b16 %v724
      %v1638 = vunpack.c.l.b16 %v725
      %v1639 = vunpack.c.h.b16 %v725
      %v1640 = vunpack.c.l.b16 %v726
      %v1641 = vunpack.c.h.b16 %v726
      %v1642 = vunpack.c.l.b16 %v727
      %v1643 = vunpack.c.h.b16 %v727
      %v1644 = vunpack.c.l.b16 %v728
      %v1645 = vunpack.c.h.b16 %v728
      %v1646 = vunpack.c.l.b16 %v729
      %v1647 = vunpack.c.h.b16 %v729
      %v1648 = vunpack.c.l.b16 %v730
      %v1649 = vunpack.c.h.b16 %v730
      %v1650 = vunpack.c.l.b16 %v731
      %v1651 = vunpack.c.h.b16 %v731
      %v1652 = vunpack.c.l.b16 %v732
      %v1653 = vunpack.c.h.b16 %v732
      %v1654 = vunpack.c.l.b16 %v733
      %v1655 = vunpack.c.h.b16 %v733
      %v1656 = vunpack.c.l.b16 %v734
      %v1657 = vunpack.c.h.b16 %v734
      %v1658 = vunpack.c.l.b16 %v735
      %v1659 = vunpack.c.h.b16 %v735
      %v1660 = vunpack.c.l.b16 %v736
      %v1661 = vunpack.c.h.b16 %v736
      %v1662 = vunpack.c.l.b16 %v737
      %v1663 = vunpack.c.h.b16 %v737
      %v1664 = vunpack.c.l.b16 %v738
      %v1665 = vunpack.c.h.b16 %v738
      %v1666 = vunpack.c.l.b16 %v739
      %v1667 = vunpack.c.h.b16 %v739
      %v1668 = vunpack.c.l.b16 %v740
      %v1669 = vunpack.c.h.b16 %v740
      %v1670 = vunpack.c.l.b16 %v741
      %v1671 = vunpack.c.h.b16 %v741
      %v1672 = vunpack.c.l.b16 %v742
      %v1673 = vunpack.c.h.b16 %v742
      %v1674 = vunpack.c.l.b16 %v743
      %v1675 = vunpack.c.h.b16 %v743
      %v1676 = vunpack.c.l.b16 %v744
      %v1677 = vunpack.c.h.b16 %v744
      %v1678 = vunpack.c.l.b16 %v745
      %v1679 = vunpack.c.h.b16 %v745
      %v1680 = vunpack.c.l.b16 %v746
      %v1681 = vunpack.c.h.b16 %v746
      %v1682 = vunpack.c.l.b16 %v747
      %v1683 = vunpack.c.h.b16 %v747
      %v1684 = vunpack.c.l.b16 %v748
      %v1685 = vunpack.c.h.b16 %v748
      %v1686 = vunpack.c.l.b16 %v749
      %v1687 = vunpack.c.h.b16 %v749
      %v1688 = vunpack.c.l.b16 %v750
      %v1689 = vunpack.c.h.b16 %v750
      %v1690 = vunpack.c.l.b16 %v751
      %v1691 = vunpack.c.h.b16 %v751
      %v1692 = vunpack.c.l.b16 %v752
      %v1693 = vunpack.c.h.b16 %v752
      %v1694 = vunpack.c.l.b16 %v753
      %v1695 = vunpack.c.h.b16 %v753
      %v1696 = vunpack.c.l.b16 %v754
      %v1697 = vunpack.c.h.b16 %v754
      %v1698 = vunpack.c.l.b16 %v755
      %v1699 = vunpack.c.h.b16 %v755
      %v1700 = vunpack.c.l.b16 %v756
      %v1701 = vunpack.c.h.b16 %v756
      %v1702 = vunpack.c.l.b16 %v757
      %v1703 = vunpack.c.h.b16 %v757
      %v1704 = vunpack.c.l.b16 %v758
      %v1705 = vunpack.c.h.b16 %v758
      %v1706 = vunpack.c.l.b16 %v759
      %v1707 = vunpack.c.h.b16 %v759
      %v1708 = vunpack.c.l.b16 %v760
      %v1709 = vunpack.c.h.b16 %v760
      %v1710 = vunpack.c.l.b16 %v761
      %v1711 = vunpack.c.h.b16 %v761
      %v1712 = vunpack.c.l.b16 %v762
      %v1713 = vunpack.c.h.b16 %v762
      %v1714 = vunpack.c.l.b16 %v763
      %v1715 = vunpack.c.h.b16 %v763
      %v1716 = vunpack.c.l.b16 %v764
      %v1717 = vunpack.c.h.b16 %v764
      %v1718 = vunpack.c.l.b16 %v765
      %v1719 = vunpack.c.h.b16 %v765
      %v1720 = vunpack.c.l.b16 %v766
      %v1721 = vunpack.c.h.b16 %v766
      %v1722 = vunpack.c.l.b16 %v767
      %v1723 = vunpack.c.h.b16 %v767
      %v1724 = vunpack.c.l.b16 %v768
      %v1725 = vunpack.c.h.b16 %v768
      %v1726 = vunpack.c.l.b16 %v769
      %v1727 = vunpack.c.h.b16 %v769
      %v1728 = vunpack.c.l.b16 %v770
      %v1729 = vunpack.c.h.b16 %v770
      %v1730 = vunpack.c.l.b16 %v771
      %v1731 = vunpack.c.h.b16 %v771
      %v1732 = vunpack.c.l.b16 %v772
      %v1733 = vunpack.c.h.b16 %v772
      %v1734 = vunpack.c.l.b16 %v773
      %v1735 = vunpack.c.h.b16 %v773
      %v1736 = vunpack.c.l.b16 %v774
      %v1737 = vunpack.c.h.b16 %v774
      %v1738 = vunpack.c.l.b16 %v775
      %v1739 = vunpack.c.h.b16 %v775
      %v1740 = vunpack.c.l.b16 %v776
      %v1741 = vunpack.c.h.b16 %v776
      %v1742 = vunpack.c.l.b16 %v777
      %v1743 = vunpack.c.h.b16 %v777
      %v1744 = vunpack.c.l.b16 %v778
      %v1745 = vunpack.c.h.b16 %v778
      %v1746 = vunpack.c.l.b16 %v779
      %v1747 = vunpack.c.h.b16 %v779
      %v1748 = vunpack.c.l.b16 %v780
      %v1749 = vunpack.c.h.b16 %v780
      %v1750 = vunpack.c.l.b16 %v781
      %v1751 = vunpack.c.h.b16 %v781
      %v1752 = vunpack.c.l.b16 %v782
      %v1753 = vunpack.c.h.b16 %v782
      %v1754 = vunpack.c.l.b16 %v783
      %v1755 = vunpack.c.h.b16 %v783
      %v1756 = vunpack.c.l.b16 %v784
      %v1757 = vunpack.c.h.b16 %v784
      %v1758 = vunpack.c.l.b16 %v785
      %v1759 = vunpack.c.h.b16 %v785
      %v1760 = vunpack.c.l.b16 %v786
      %v1761 = vunpack.c.h.b16 %v786
      %v1762 = vunpack.c.l.b16 %v787
      %v1763 = vunpack.c.h.b16 %v787
      %v1764 = vunpack.c.l.b16 %v788
      %v1765 = vunpack.c.h.b16 %v788
      %v1766 = vunpack.c.l.b16 %v789
      %v1767 = vunpack.c.h.b16 %v789
      %v1768 = vunpack.c.l.b16 %v790
      %v1769 = vunpack.c.h.b16 %v790
      %v1770 = vunpack.c.l.b16 %v791
      %v1771 = vunpack.c.h.b16 %v791
      %v1772 = vunpack.c.l.b16 %v792
      %v1773 = vunpack.c.h.b16 %v792
      %v1774 = vunpack.c.l.b16 %v793
      %v1775 = vunpack.c.h.b16 %v793
      %v1776 = vunpack.c.l.b16 %v794
      %v1777 = vunpack.c.h.b16 %v794
      %v1778 = vunpack.c.l.b16 %v795
      %v1779 = vunpack.c.h.b16 %v795
      %v1780 = vunpack.c.l.b16 %v796
      %v1781 = vunpack.c.h.b16 %v796
      %v1782 = vunpack.c.l.b16 %v797
      %v1783 = vunpack.c.h.b16 %v797
      %v1784 = vunpack.c.l.b16 %v798
      %v1785 = vunpack.c.h.b16 %v798
      %v1786 = vunpack.c.l.b16 %v799
      %v1787 = vunpack.c.h.b16 %v799
      %v1788 = vunpack.c.l.b16 %v800
      %v1789 = vunpack.c.h.b16 %v800
      %v1790 = vunpack.c.l.b16 %v801
      %v1791 = vunpack.c.h.b16 %v801
      %v1792 = vunpack.c.l.b16 %v802
      %v1793 = vunpack.c.h.b16 %v802
      %v1794 = vunpack.c.l.b16 %v803
      %v1795 = vunpack.c.h.b16 %v803
      %v1796 = vunpack.c.l.b16 %v804
      %v1797 = vunpack.c.h.b16 %v804
      %v1798 = vunpack.c.l.b16 %v805
      %v1799 = vunpack.c.h.b16 %v805
      %v1800 = vunpack.c.l.b16 %v806
      %v1801 = vunpack.c.h.b16 %v806
      %v1802 = vunpack.c.l.b16 %v807
      %v1803 = vunpack.c.h.b16 %v807
      %v1804 = vunpack.c.l.b16 %v808
      %v1805 = vunpack.c.h.b16 %v808
      %v1806 = vunpack.c.l.b16 %v809
      %v1807 = vunpack.c.h.b16 %v809
      %v1808 = vunpack.c.l.b16 %v810
      %v1809 = vunpack.c.h.b16 %v810
      %v1810 = vunpack.c.l.b16 %v811
      %v1811 = vunpack.c.h.b16 %v811
      %v1812 = vunpack.c.l.b16 %v812
      %v1813 = vunpack.c.h.b16 %v812
      %v1814 = vunpack.c.l.b16 %v813
      %v1815 = vunpack.c.h.b16 %v813
      %v1816 = vunpack.c.l.b16 %v814
      %v1817 = vunpack.c.h.b16 %v814
      %v1818 = vunpack.c.l.b16 %v815
      %v1819 = vunpack.c.h.b16 %v815
      %v1820 = vunpack.c.l.b16 %v816
      %v1821 = vunpack.c.h.b16 %v816
      %v1822 = vunpack.c.l.b16 %v817
      %v1823 = vunpack.c.h.b16 %v817
      %v1824 = vunpack.c.l.b16 %v818
      %v1825 = vunpack.c.h.b16 %v818
      %v1826 = vunpack.c.l.b16 %v819
      %v1827 = vunpack.c.h.b16 %v819
      %v1828 = vunpack.c.l.b16 %v820
      %v1829 = vunpack.c.h.b16 %v820
      %v1830 = vunpack.c.l.b16 %v821
      %v1831 = vunpack.c.h.b16 %v821
      %v1832 = vunpack.c.l.b16 %v822
      %v1833 = vunpack.c.h.b16 %v822
      %v1834 = vunpack.c.l.b16 %v823
      %v1835 = vunpack.c.h.b16 %v823
      %v1836 = vunpack.c.l.b16 %v824
      %v1837 = vunpack.c.h.b16 %v824
      %v1838 = vunpack.c.l.b16 %v825
      %v1839 = vunpack.c.h.b16 %v825
      %v1840 = vunpack.c.l.b16 %v826
      %v1841 = vunpack.c.h.b16 %v826
      %v1842 = vunpack.c.l.b16 %v827
      %v1843 = vunpack.c.h.b16 %v827
      %v1844 = vunpack.c.l.b16 %v828
      %v1845 = vunpack.c.h.b16 %v828
      %v1846 = vunpack.c.l.b16 %v829
      %v1847 = vunpack.c.h.b16 %v829
      %v1848 = vunpack.c.l.b16 %v830
      %v1849 = vunpack.c.h.b16 %v830
      %v1850 = vunpack.c.l.b16 %v831
      %v1851 = vunpack.c.h.b16 %v831
      %v1852 = vunpack.c.l.b16 %v832
      %v1853 = vunpack.c.h.b16 %v832
      %v1854 = vunpack.c.l.b16 %v833
      %v1855 = vunpack.c.h.b16 %v833
      %v1856 = vunpack.c.l.b16 %v834
      %v1857 = vunpack.c.h.b16 %v834
      %v1858 = vunpack.c.l.b16 %v835
      %v1859 = vunpack.c.h.b16 %v835
      %v1860 = vunpack.c.l.b16 %v836
      %v1861 = vunpack.c.h.b16 %v836
      %v1862 = vunpack.c.l.b16 %v837
      %v1863 = vunpack.c.h.b16 %v837
      %v1864 = vunpack.c.l.b16 %v838
      %v1865 = vunpack.c.h.b16 %v838
      %v1866 = vunpack.c.l.b16 %v839
      %v1867 = vunpack.c.h.b16 %v839
      %v1868 = vunpack.c.l.b16 %v840
      %v1869 = vunpack.c.h.b16 %v840
      %v1870 = vunpack.c.l.b16 %v841
      %v1871 = vunpack.c.h.b16 %v841
      %v1872 = vpack.c.b16 %v1364, %v1360
      %v1873 = vpack.c.b16 %v1365, %v1361
      %v1874 = vpack.c.b16 %v1366, %v1362
      %v1875 = vpack.c.b16 %v1367, %v1363
      %v1876 = vpack.c.b16 %v1372, %v1368
      %v1877 = vpack.c.b16 %v1373, %v1369
      %v1878 = vpack.c.b16 %v1374, %v1370
      %v1879 = vpack.c.b16 %v1375, %v1371
      %v1880 = vpack.c.b16 %v1380, %v1376
      %v1881 = vpack.c.b16 %v1381, %v1377
      %v1882 = vpack.c.b16 %v1382, %v1378
      %v1883 = vpack.c.b16 %v1383, %v1379
      %v1884 = vpack.c.b16 %v1388, %v1384
      %v1885 = vpack.c.b16 %v1389, %v1385
      %v1886 = vpack.c.b16 %v1390, %v1386
      %v1887 = vpack.c.b16 %v1391, %v1387
      %v1888 = vpack.c.b16 %v1396, %v1392
      %v1889 = vpack.c.b16 %v1397, %v1393
      %v1890 = vpack.c.b16 %v1398, %v1394
      %v1891 = vpack.c.b16 %v1399, %v1395
      %v1892 = vpack.c.b16 %v1404, %v1400
      %v1893 = vpack.c.b16 %v1405, %v1401
      %v1894 = vpack.c.b16 %v1406, %v1402
      %v1895 = vpack.c.b16 %v1407, %v1403
      %v1896 = vpack.c.b16 %v1412, %v1408
      %v1897 = vpack.c.b16 %v1413, %v1409
      %v1898 = vpack.c.b16 %v1414, %v1410
      %v1899 = vpack.c.b16 %v1415, %v1411
      %v1900 = vpack.c.b16 %v1420, %v1416
      %v1901 = vpack.c.b16 %v1421, %v1417
      %v1902 = vpack.c.b16 %v1422, %v1418
      %v1903 = vpack.c.b16 %v1423, %v1419
      %v1904 = vpack.c.b16 %v1428, %v1424
      %v1905 = vpack.c.b16 %v1429, %v1425
      %v1906 = vpack.c.b16 %v1430, %v1426
      %v1907 = vpack.c.b16 %v1431, %v1427
      %v1908 = vpack.c.b16 %v1436, %v1432
      %v1909 = vpack.c.b16 %v1437, %v1433
      %v1910 = vpack.c.b16 %v1438, %v1434
      %v1911 = vpack.c.b16 %v1439, %v1435
      %v1912 = vpack.c.b16 %v1444, %v1440
      %v1913 = vpack.c.b16 %v1445, %v1441
      %v1914 = vpack.c.b16 %v1446, %v1442
      %v1915 = vpack.c.b16 %v1447, %v1443
      %v1916 = vpack.c.b16 %v1452, %v1448
      %v1917 = vpack.c.b16 %v1453, %v1449
      %v1918 = vpack.c.b16 %v1454, %v1450
      %v1919 = vpack.c.b16 %v1455, %v1451
      %v1920 = vpack.c.b16 %v1460, %v1456
      %v1921 = vpack.c.b16 %v1461, %v1457
      %v1922 = vpack.c.b16 %v1462, %v1458
      %v1923 = vpack.c.b16 %v1463, %v1459
      %v1924 = vpack.c.b16 %v1468, %v1464
      %v1925 = vpack.c.b16 %v1469, %v1465
      %v1926 = vpack.c.b16 %v1470, %v1466
      %v1927 = vpack.c.b16 %v1471, %v1467
      %v1928 = vpack.c.b16 %v1476, %v1472
      %v1929 = vpack.c.b16 %v1477, %v1473
      %v1930 = vpack.c.b16 %v1478, %v1474
      %v1931 = vpack.c.b16 %v1479, %v1475
      %v1932 = vpack.c.b16 %v1484, %v1480
      %v1933 = vpack.c.b16 %v1485, %v1481
      %v1934 = vpack.c.b16 %v1486, %v1482
      %v1935 = vpack.c.b16 %v1487, %v1483
      %v1936 = vpack.c.b16 %v1492, %v1488
      %v1937 = vpack.c.b16 %v1493, %v1489
      %v1938 = vpack.c.b16 %v1494, %v1490
      %v1939 = vpack.c.b16 %v1495, %v1491
      %v1940 = vpack.c.b16 %v1500, %v1496
      %v1941 = vpack.c.b16 %v1501, %v1497
      %v1942 = vpack.c.b16 %v1502, %v1498
      %v1943 = vpack.c.b16 %v1503, %v1499
      %v1944 = vpack.c.b16 %v1508, %v1504
      %v1945 = vpack.c.b16 %v1509, %v1505
      %v1946 = vpack.c.b16 %v1510, %v1506
      %v1947 = vpack.c.b16 %v1511, %v1507
      %v1948 = vpack.c.b16 %v1516, %v1512
      %v1949 = vpack.c.b16 %v1517, %v1513
      %v1950 = vpack.c.b16 %v1518, %v1514
      %v1951 = vpack.c.b16 %v1519, %v1515
      %v1952 = vpack.c.b16 %v1524, %v1520
      %v1953 = vpack.c.b16 %v1525, %v1521
      %v1954 = vpack.c.b16 %v1526, %v1522
      %v1955 = vpack.c.b16 %v1527, %v1523
      %v1956 = vpack.c.b16 %v1532, %v1528
      %v1957 = vpack.c.b16 %v1533, %v1529
      %v1958 = vpack.c.b16 %v1534, %v1530
      %v1959 = vpack.c.b16 %v1535, %v1531
      %v1960 = vpack.c.b16 %v1540, %v1536
      %v1961 = vpack.c.b16 %v1541, %v1537
      %v1962 = vpack.c.b16 %v1542, %v1538
      %v1963 = vpack.c.b16 %v1543, %v1539
      %v1964 = vpack.c.b16 %v1548, %v1544
      %v1965 = vpack.c.b16 %v1549, %v1545
      %v1966 = vpack.c.b16 %v1550, %v1546
      %v1967 = vpack.c.b16 %v1551, %v1547
      %v1968 = vpack.c.b16 %v1556, %v1552
      %v1969 = vpack.c.b16 %v1557, %v1553
      %v1970 = vpack.c.b16 %v1558, %v1554
      %v1971 = vpack.c.b16 %v1559, %v1555
      %v1972 = vpack.c.b16 %v1564, %v1560
      %v1973 = vpack.c.b16 %v1565, %v1561
      %v1974 = vpack.c.b16 %v1566, %v1562
      %v1975 = vpack.c.b16 %v1567, %v1563
      %v1976 = vpack.c.b16 %v1572, %v1568
      %v1977 = vpack.c.b16 %v1573, %v1569
      %v1978 = vpack.c.b16 %v1574, %v1570
      %v1979 = vpack.c.b16 %v1575, %v1571
      %v1980 = vpack.c.b16 %v1580, %v1576
      %v1981 = vpack.c.b16 %v1581, %v1577
      %v1982 = vpack.c.b16 %v1582, %v1578
      %v1983 = vpack.c.b16 %v1583, %v1579
      %v1984 = vpack.c.b16 %v1588, %v1584
      %v1985 = vpack.c.b16 %v1589, %v1585
      %v1986 = vpack.c.b16 %v1590, %v1586
      %v1987 = vpack.c.b16 %v1591, %v1587
      %v1988 = vpack.c.b16 %v1596, %v1592
      %v1989 = vpack.c.b16 %v1597, %v1593
      %v1990 = vpack.c.b16 %v1598, %v1594
      %v1991 = vpack.c.b16 %v1599, %v1595
      %v1992 = vpack.c.b16 %v1604, %v1600
      %v1993 = vpack.c.b16 %v1605, %v1601
      %v1994 = vpack.c.b16 %v1606, %v1602
      %v1995 = vpack.c.b16 %v1607, %v1603
      %v1996 = vpack.c.b16 %v1612, %v1608
      %v1997 = vpack.c.b16 %v1613, %v1609
      %v1998 = vpack.c.b16 %v1614, %v1610
      %v1999 = vpack.c.b16 %v1615, %v1611
      %v2000 = vpack.c.b16 %v1620, %v1616
      %v2001 = vpack.c.b16 %v1621, %v1617
      %v2002 = vpack.c.b16 %v1622, %v1618
      %v2003 = vpack.c.b16 %v1623, %v1619
      %v2004 = vpack.c.b16 %v1628, %v1624
      %v2005 = vpack.c.b16 %v1629, %v1625
      %v2006 = vpack.c.b16 %v1630, %v1626
      %v2007 = vpack.c.b16 %v1631, %v1627
      %v2008 = vpack.c.b16 %v1636, %v1632
      %v2009 = vpack.c.b16 %v1637, %v1633
      %v2010 = vpack.c.b16 %v1638, %v1634
      %v2011 = vpack.c.b16 %v1639, %v1635
      %v2012 = vpack.c.b16 %v1644, %v1640
      %v2013 = vpack.c.b16 %v1645, %v1641
      %v2014 = vpack.c.b16 %v1646, %v1642
      %v2015 = vpack.c.b16 %v1647, %v1643
      %v2016 = vpack.c.b16 %v1652, %v1648
      %v2017 = vpack.c.b16 %v1653, %v1649
      %v2018 = vpack.c.b16 %v1654, %v1650
      %v2019 = vpack.c.b16 %v1655, %v1651
      %v2020 = vpack.c.b16 %v1660, %v1656
      %v2021 = vpack.c.b16 %v1661, %v1657
      %v2022 = vpack.c.b16 %v1662, %v1658
      %v2023 = vpack.c.b16 %v1663, %v1659
      %v2024 = vpack.c.b16 %v1668, %v1664
      %v2025 = vpack.c.b16 %v1669, %v1665
      %v2026 = vpack.c.b16 %v1670, %v1666
      %v2027 = vpack.c.b16 %v1671, %v1667
      %v2028 = vpack.c.b16 %v1676, %v1672
      %v2029 = vpack.c.b16 %v1677, %v1673
      %v2030 = vpack.c.b16 %v1678, %v1674
      %v2031 = vpack.c.b16 %v1679, %v1675
      %v2032 = vpack.c.b16 %v1684, %v1680
      %v2033 = vpack.c.b16 %v1685, %v1681
      %v2034 = vpack.c.b16 %v1686, %v1682
      %v2035 = vpack.c.b16 %v1687, %v1683
      %v2036 = vpack.c.b16 %v1692, %v1688
      %v2037 = vpack.c.b16 %v1693, %v1689
      %v2038 = vpack.c.b16 %v1694, %v1690
      %v2039 = vpack.c.b16 %v1695, %v1691
      %v2040 = vpack.c.b16 %v1700, %v1696
      %v2041 = vpack.c.b16 %v1701, %v1697
      %v2042 = vpack.c.b16 %v1702, %v1698
      %v2043 = vpack.c.b16 %v1703, %v1699
      %v2044 = vpack.c.b16 %v1708, %v1704
      %v2045 = vpack.c.b16 %v1709, %v1705
      %v2046 = vpack.c.b16 %v1710, %v1706
      %v2047 = vpack.c.b16 %v1711, %v1707
      %v2048 = vpack.c.b16 %v1716, %v1712
      %v2049 = vpack.c.b16 %v1717, %v1713
      %v2050 = vpack.c.b16 %v1718, %v1714
      %v2051 = vpack.c.b16 %v1719, %v1715
      %v2052 = vpack.c.b16 %v1724, %v1720
      %v2053 = vpack.c.b16 %v1725, %v1721
      %v2054 = vpack.c.b16 %v1726, %v1722
      %v2055 = vpack.c.b16 %v1727, %v1723
      %v2056 = vpack.c.b16 %v1732, %v1728
      %v2057 = vpack.c.b16 %v1733, %v1729
      %v2058 = vpack.c.b16 %v1734, %v1730
      %v2059 = vpack.c.b16 %v1735, %v1731
      %v2060 = vpack.c.b16 %v1740, %v1736
      %v2061 = vpack.c.b16 %v1741, %v1737
      %v2062 = vpack.c.b16 %v1742, %v1738
      %v2063 = vpack.c.b16 %v1743, %v1739
      %v2064 = vpack.c.b16 %v1748, %v1744
      %v2065 = vpack.c.b16 %v1749, %v1745
      %v2066 = vpack.c.b16 %v1750, %v1746
      %v2067 = vpack.c.b16 %v1751, %v1747
      %v2068 = vpack.c.b16 %v1756, %v1752
      %v2069 = vpack.c.b16 %v1757, %v1753
      %v2070 = vpack.c.b16 %v1758, %v1754
      %v2071 = vpack.c.b16 %v1759, %v1755
      %v2072 = vpack.c.b16 %v1764, %v1760
      %v2073 = vpack.c.b16 %v1765, %v1761
      %v2074 = vpack.c.b16 %v1766, %v1762
      %v2075 = vpack.c.b16 %v1767, %v1763
      %v2076 = vpack.c.b16 %v1772, %v1768
      %v2077 = vpack.c.b16 %v1773, %v1769
      %v2078 = vpack.c.b16 %v1774, %v1770
      %v2079 = vpack.c.b16 %v1775, %v1771
      %v2080 = vpack.c.b16 %v1780, %v1776
      %v2081 = vpack.c.b16 %v1781, %v1777
      %v2082 = vpack.c.b16 %v1782, %v1778
      %v2083 = vpack.c.b16 %v1783, %v1779
      %v2084 = vpack.c.b16 %v1788, %v1784
      %v2085 = vpack.c.b16 %v1789, %v1785
      %v2086 = vpack.c.b16 %v1790, %v1786
      %v2087 = vpack.c.b16 %v1791, %v1787
      %v2088 = vpack.c.b16 %v1796, %v1792
      %v2089 = vpack.c.b16 %v1797, %v1793
      %v2090 = vpack.c.b16 %v1798, %v1794
      %v2091 = vpack.c.b16 %v1799, %v1795
      %v2092 = vpack.c.b16 %v1804, %v1800
      %v2093 = vpack.c.b16 %v1805, %v1801
      %v2094 = vpack.c.b16 %v1806, %v1802
      %v2095 = vpack.c.b16 %v1807, %v1803
      %v2096 = vpack.c.b16 %v1812, %v1808
      %v2097 = vpack.c.b16 %v1813, %v1809
      %v2098 = vpack.c.b16 %v1814, %v1810
      %v2099 = vpack.c.b16 %v1815, %v1811
      %v2100 = vpack.c.b16 %v1820, %v1816
      %v2101 = vpack.c.b16 %v1821, %v1817
      %v2102 = vpack.c.b16 %v1822, %v1818
      %v2103 = vpack.c.b16 %v1823, %v1819
      %v2104 = vpack.c.b16 %v1828, %v1824
      %v2105 = vpack.c.b16 %v1829, %v1825
      %v2106 = vpack.c.b16 %v1830, %v1826
      %v2107 = vpack.c.b16 %v1831, %v1827
      %v2108 = vpack.c.b16 %v1836, %v1832
      %v2109 = vpack.c.b16 %v1837, %v1833
      %v2110 = vpack.c.b16 %v1838, %v1834
      %v2111 = vpack.c.b16 %v1839, %v1835
      %v2112 = vpack.c.b16 %v1844, %v1840
      %v2113 = vpack.c.b16 %v1845, %v1841
      %v2114 = vpack.c.b16 %v1846, %v1842
      %v2115 = vpack.c.b16 %v1847, %v1843
      %v2116 = vpack.c.b16 %v1852, %v1848
      %v2117 = vpack.c.b16 %v1853, %v1849
      %v2118 = vpack.c.b16 %v1854, %v1850
      %v2119 = vpack.c.b16 %v1855, %v1851
      %v2120 = vpack.c.b16 %v1860, %v1856
      %v2121 = vpack.c.b16 %v1861, %v1857
      %v2122 = vpack.c.b16 %v1862, %v1858
      %v2123 = vpack.c.b16 %v1863, %v1859
      %v2124 = vpack.c.b16 %v1868, %v1864
      %v2125 = vpack.c.b16 %v1869, %v1865
      %v2126 = vpack.c.b16 %v1870, %v1866
      %v2127 = vpack.c.b16 %v1871, %v1867
      %v2448 = vunpack.c.l.b16 %v521
      %v2449 = vunpack.c.l.b16 %v522
      %v2450 = vunpack.c.l.b16 %v523
      %v2451 = vunpack.c.l.b16 %v524
      %v2452 = vunpack.c.l.b16 %v525
      %v2453 = vunpack.c.l.b16 %v526
      %v2454 = vunpack.c.l.b16 %v527
      %v2455 = vunpack.c.l.b16 %v528
      %v2456 = vunpack.c.l.b16 %v529
      %v2457 = vunpack.c.l.b16 %v530
      %v2458 = vunpack.c.l.b16 %v531
      %v2459 = vunpack.c.l.b16 %v532
      %v2460 = vunpack.c.l.b16 %v533
      %v2461 = vunpack.c.l.b16 %v534
      %v2462 = vunpack.c.l.b16 %v535
      %v2463 = vunpack.c.l.b16 %v536
      %v2464 = vunpack.c.l.b16 %v537
      %v2465 = vunpack.c.l.b16 %v538
      %v2466 = vunpack.c.l.b16 %v539
      %v2467 = vunpack.c.l.b16 %v540
      %v2468 = vunpack.c.l.b16 %v541
      %v2469 = vunpack.c.l.b16 %v542
      %v2470 = vunpack.c.l.b16 %v543
      %v2471 = vunpack.c.l.b16 %v544
      %v2472 = vunpack.c.l.b16 %v545
      %v2473 = vunpack.c.l.b16 %v546
      %v2474 = vunpack.c.l.b16 %v547
      %v2475 = vunpack.c.l.b16 %v548
      %v2476 = vunpack.c.l.b16 %v549
      %v2477 = vunpack.c.l.b16 %v550
      %v2478 = vunpack.c.l.b16 %v551
      %v2479 = vunpack.c.l.b16 %v552
      %v2480 = vunpack.c.l.b16 %v553
      %v2481 = vunpack.c.l.b16 %v554
      %v2482 = vunpack.c.l.b16 %v555
      %v2483 = vunpack.c.l.b16 %v556
      %v2484 = vunpack.c.l.b16 %v557
      %v2485 = vunpack.c.l.b16 %v558
      %v2486 = vunpack.c.l.b16 %v559
      %v2487 = vunpack.c.l.b16 %v560
      %v2488 = vunpack.c.l.b16 %v561
      %v2489 = vunpack.c.l.b16 %v562
      %v2490 = vunpack.c.l.b16 %v563
      %v2491 = vunpack.c.l.b16 %v564
      %v2492 = vunpack.c.l.b16 %v565
      %v2493 = vunpack.c.l.b16 %v566
      %v2494 = vunpack.c.l.b16 %v567
      %v2495 = vunpack.c.l.b16 %v568
      %v2496 = vunpack.c.l.b16 %v569
      %v2497 = vunpack.c.l.b16 %v570
      %v2498 = vunpack.c.l.b16 %v571
      %v2499 = vunpack.c.l.b16 %v572
      %v2500 = vunpack.c.l.b16 %v573
      %v2501 = vunpack.c.l.b16 %v574
      %v2502 = vunpack.c.l.b16 %v575
      %v2503 = vunpack.c.l.b16 %v576
      %v2504 = vunpack.c.l.b16 %v577
      %v2505 = vunpack.c.l.b16 %v578
      %v2506 = vunpack.c.l.b16 %v579
      %v2507 = vunpack.c.l.b16 %v580
      %v2508 = vunpack.c.l.b16 %v581
      %v2509 = vunpack.c.l.b16 %v582
      %v2510 = vunpack.c.l.b16 %v583
      %v2511 = vunpack.c.l.b16 %v584
      %v2512 = vpack.c.b16 %v2449, %v2448
      %v2513 = vpack.c.b16 %v2451, %v2450
      %v2514 = vpack.c.b16 %v2453, %v2452
      %v2515 = vpack.c.b16 %v2455, %v2454
      %v2516 = vpack.c.b16 %v2457, %v2456
      %v2517 = vpack.c.b16 %v2459, %v2458
      %v2518 = vpack.c.b16 %v2461, %v2460
      %v2519 = vpack.c.b16 %v2463, %v2462
      %v2520 = vpack.c.b16 %v2465, %v2464
      %v2521 = vpack.c.b16 %v2467, %v2466
      %v2522 = vpack.c.b16 %v2469, %v2468
      %v2523 = vpack.c.b16 %v2471, %v2470
      %v2524 = vpack.c.b16 %v2473, %v2472
      %v2525 = vpack.c.b16 %v2475, %v2474
      %v2526 = vpack.c.b16 %v2477, %v2476
      %v2527 = vpack.c.b16 %v2479, %v2478
      %v2528 = vpack.c.b16 %v2481, %v2480
      %v2529 = vpack.c.b16 %v2483, %v2482
      %v2530 = vpack.c.b16 %v2485, %v2484
      %v2531 = vpack.c.b16 %v2487, %v2486
      %v2532 = vpack.c.b16 %v2489, %v2488
      %v2533 = vpack.c.b16 %v2491, %v2490
      %v2534 = vpack.c.b16 %v2493, %v2492
      %v2535 = vpack.c.b16 %v2495, %v2494
      %v2536 = vpack.c.b16 %v2497, %v2496
      %v2537 = vpack.c.b16 %v2499, %v2498
      %v2538 = vpack.c.b16 %v2501, %v2500
      %v2539 = vpack.c.b16 %v2503, %v2502
      %v2540 = vpack.c.b16 %v2505, %v2504
      %v2541 = vpack.c.b16 %v2507, %v2506
      %v2542 = vpack.c.b16 %v2509, %v2508
      %v2543 = vpack.c.b16 %v2511, %v2510
      %2576 = vmatprep.subr.bf16.mxu0 0
      %2577 = vmatpush1.bf16.msra.mxu0 %v2512
      %2578 = vmatprep.subr.bf16.mxu0 0
      %2579 = vmatpush1.bf16.msra.mxu0 %v2513
      %2580 = vmatprep.subr.bf16.mxu0 0
      %2581 = vmatpush1.bf16.msra.mxu0 %v2514
      %2582 = vmatprep.subr.bf16.mxu0 0
      %2583 = vmatpush1.bf16.msra.mxu0 %v2515
      %2584 = vmatprep.subr.bf16.mxu0 0
      %2585 = vmatpush1.bf16.msra.mxu0 %v2516
      %2586 = vmatprep.subr.bf16.mxu0 0
      %2587 = vmatpush1.bf16.msra.mxu0 %v2517
      %2588 = vmatprep.subr.bf16.mxu0 0
      %2589 = vmatpush1.bf16.msra.mxu0 %v2518
      %2590 = vmatprep.subr.bf16.mxu0 0
      %2591 = vmatpush1.bf16.msra.mxu0 %v2519
      %2592 = vmatprep.subr.bf16.mxu0 0
      %2593 = vmatpush1.bf16.msra.mxu0 %v2520
      %2594 = vmatprep.subr.bf16.mxu0 0
      %2595 = vmatpush1.bf16.msra.mxu0 %v2521
      %2596 = vmatprep.subr.bf16.mxu0 0
      %2597 = vmatpush1.bf16.msra.mxu0 %v2522
      %2598 = vmatprep.subr.bf16.mxu0 0
      %2599 = vmatpush1.bf16.msra.mxu0 %v2523
      %2600 = vmatprep.subr.bf16.mxu0 0
      %2601 = vmatpush1.bf16.msra.mxu0 %v2524
      %2602 = vmatprep.subr.bf16.mxu0 0
      %2603 = vmatpush1.bf16.msra.mxu0 %v2525
      %2604 = vmatprep.subr.bf16.mxu0 0
      %2605 = vmatpush1.bf16.msra.mxu0 %v2526
      %2606 = vmatprep.subr.bf16.mxu0 0
      %2607 = vmatpush1.bf16.msra.mxu0 %v2527
      %2608 = vmatprep.mubr.bf16.mxu0 %v1873
      %2609 = vmatmul.mubr.bf16.gmra.mrb[0].mxu0 %v1872
      %v2610 = vpop.f32.mrb[0].mxu0
      %v2611 = vadd.f32 %v1102, %v2610
      %v2612 = vpop.f32.mrb[0].mxu0
      %v2613 = vpop.f32.mrb[0].mxu0
      %v2614 = vadd.f32 %v1102, %v2613
      %v2615 = vpop.f32.mrb[0].mxu0
      %2616 = vmatprep.mubr.bf16.mxu0 %v1877
      %2617 = vmatmul.mubr.bf16.gmra.mrb[0].mxu0 %v1876
      %v2618 = vpop.f32.mrb[0].mxu0
      %v2619 = vadd.f32 %v1102, %v2618
      %v2620 = vpop.f32.mrb[0].mxu0
      %v2621 = vpop.f32.mrb[0].mxu0
      %v2622 = vadd.f32 %v1102, %v2621
      %v2623 = vpop.f32.mrb[0].mxu0
      %2624 = vmatprep.mubr.bf16.mxu0 %v1881
      %2625 = vmatmul.mubr.bf16.gmra.mrb[0].mxu0 %v1880
      %v2626 = vpop.f32.mrb[0].mxu0
      %v2627 = vadd.f32 %v1102, %v2626
      %v2628 = vpop.f32.mrb[0].mxu0
      %v2629 = vpop.f32.mrb[0].mxu0
      %v2630 = vadd.f32 %v1102, %v2629
      %v2631 = vpop.f32.mrb[0].mxu0
      %2632 = vmatprep.mubr.bf16.mxu0 %v1885
      %2633 = vmatmul.mubr.bf16.gmra.mrb[0].mxu0 %v1884
      %v2634 = vpop.f32.mrb[0].mxu0
      %v2635 = vadd.f32 %v1102, %v2634
      %v2636 = vpop.f32.mrb[0].mxu0
      %v2637 = vpop.f32.mrb[0].mxu0
      %v2638 = vadd.f32 %v1102, %v2637
      %v2639 = vpop.f32.mrb[0].mxu0
      %2640 = vmatprep.mubr.bf16.mxu0 %v1889
      %2641 = vmatmul.mubr.bf16.gmra.mrb[0].mxu0 %v1888
      %v2642 = vpop.f32.mrb[0].mxu0
      %v2643 = vadd.f32 %v1102, %v2642
      %v2644 = vpop.f32.mrb[0].mxu0
      %v2645 = vpop.f32.mrb[0].mxu0
      %v2646 = vadd.f32 %v1102, %v2645
      %v2647 = vpop.f32.mrb[0].mxu0
      %2648 = vmatprep.mubr.bf16.mxu0 %v1893
      %2649 = vmatmul.mubr.bf16.gmra.mrb[0].mxu0 %v1892
      %v2650 = vpop.f32.mrb[0].mxu0
      %v2651 = vadd.f32 %v1102, %v2650
      %v2652 = vpop.f32.mrb[0].mxu0
      %v2653 = vpop.f32.mrb[0].mxu0
      %v2654 = vadd.f32 %v1102, %v2653
      %v2655 = vpop.f32.mrb[0].mxu0
      %2656 = vmatprep.mubr.bf16.mxu0 %v1897
      %2657 = vmatmul.mubr.bf16.gmra.mrb[0].mxu0 %v1896
      %v2658 = vpop.f32.mrb[0].mxu0
      %v2659 = vadd.f32 %v1102, %v2658
      %v2660 = vpop.f32.mrb[0].mxu0
      %v2661 = vpop.f32.mrb[0].mxu0
      %v2662 = vadd.f32 %v1102, %v2661
      %v2663 = vpop.f32.mrb[0].mxu0
      %2664 = vmatprep.mubr.bf16.mxu0 %v1901
      %2665 = vmatmul.mubr.bf16.gmra.mrb[0].mxu0 %v1900
      %v2666 = vpop.f32.mrb[0].mxu0
      %v2667 = vadd.f32 %v1102, %v2666
      %v2668 = vpop.f32.mrb[0].mxu0
      %v2669 = vpop.f32.mrb[0].mxu0
      %v2670 = vadd.f32 %v1102, %v2669
      %v2671 = vpop.f32.mrb[0].mxu0
      %2672 = vmatprep.mubr.bf16.mxu0 %v1905
      %2673 = vmatmul.mubr.bf16.gmra.mrb[0].mxu0 %v1904
      %v2674 = vpop.f32.mrb[0].mxu0
      %v2675 = vadd.f32 %v1102, %v2674
      %v2676 = vpop.f32.mrb[0].mxu0
      %v2677 = vpop.f32.mrb[0].mxu0
      %v2678 = vadd.f32 %v1102, %v2677
      %v2679 = vpop.f32.mrb[0].mxu0
      %2680 = vmatprep.mubr.bf16.mxu0 %v1909
      %2681 = vmatmul.mubr.bf16.gmra.mrb[0].mxu0 %v1908
      %v2682 = vpop.f32.mrb[0].mxu0
      %v2683 = vadd.f32 %v1102, %v2682
      %v2684 = vpop.f32.mrb[0].mxu0
      %v2685 = vpop.f32.mrb[0].mxu0
      %v2686 = vadd.f32 %v1102, %v2685
      %v2687 = vpop.f32.mrb[0].mxu0
      %2688 = vmatprep.mubr.bf16.mxu0 %v1913
      %2689 = vmatmul.mubr.bf16.gmra.mrb[0].mxu0 %v1912
      %v2690 = vpop.f32.mrb[0].mxu0
      %v2691 = vadd.f32 %v1102, %v2690
      %v2692 = vpop.f32.mrb[0].mxu0
      %v2693 = vpop.f32.mrb[0].mxu0
      %v2694 = vadd.f32 %v1102, %v2693
      %v2695 = vpop.f32.mrb[0].mxu0
      %2696 = vmatprep.mubr.bf16.mxu0 %v1917
      %2697 = vmatmul.mubr.bf16.gmra.mrb[0].mxu0 %v1916
      %v2698 = vpop.f32.mrb[0].mxu0
      %v2699 = vadd.f32 %v1102, %v2698
      %v2700 = vpop.f32.mrb[0].mxu0
      %v2701 = vpop.f32.mrb[0].mxu0
      %v2702 = vadd.f32 %v1102, %v2701
      %v2703 = vpop.f32.mrb[0].mxu0
      %2704 = vmatprep.mubr.bf16.mxu0 %v1921
      %2705 = vmatmul.mubr.bf16.gmra.mrb[0].mxu0 %v1920
      %v2706 = vpop.f32.mrb[0].mxu0
      %v2707 = vadd.f32 %v1102, %v2706
      %v2708 = vpop.f32.mrb[0].mxu0
      %v2709 = vpop.f32.mrb[0].mxu0
      %v2710 = vadd.f32 %v1102, %v2709
      %v2711 = vpop.f32.mrb[0].mxu0
      %2712 = vmatprep.mubr.bf16.mxu0 %v1925
      %2713 = vmatmul.mubr.bf16.gmra.mrb[0].mxu0 %v1924
      %v2714 = vpop.f32.mrb[0].mxu0
      %v2715 = vadd.f32 %v1102, %v2714
      %v2716 = vpop.f32.mrb[0].mxu0
      %v2717 = vpop.f32.mrb[0].mxu0
      %v2718 = vadd.f32 %v1102, %v2717
      %v2719 = vpop.f32.mrb[0].mxu0
      %2720 = vmatprep.mubr.bf16.mxu0 %v1929
      %2721 = vmatmul.mubr.bf16.gmra.mrb[0].mxu0 %v1928
      %v2722 = vpop.f32.mrb[0].mxu0
      %v2723 = vadd.f32 %v1102, %v2722
      %v2724 = vpop.f32.mrb[0].mxu0
      %v2725 = vpop.f32.mrb[0].mxu0
      %v2726 = vadd.f32 %v1102, %v2725
      %v2727 = vpop.f32.mrb[0].mxu0
      %2728 = vmatprep.mubr.bf16.mxu0 %v1933
      %2729 = vmatmul.mubr.bf16.gmra.mrb[0].mxu0 %v1932
      %v2730 = vpop.f32.mrb[0].mxu0
      %v2731 = vadd.f32 %v1102, %v2730
      %v2732 = vpop.f32.mrb[0].mxu0
      %v2733 = vpop.f32.mrb[0].mxu0
      %v2734 = vadd.f32 %v1102, %v2733
      %v2735 = vpop.f32.mrb[0].mxu0
      %2736 = vmatprep.mubr.bf16.mxu0 %v1937
      %2737 = vmatmul.mubr.bf16.gmra.mrb[0].mxu0 %v1936
      %v2738 = vpop.f32.mrb[0].mxu0
      %v2739 = vadd.f32 %v1102, %v2738
      %v2740 = vpop.f32.mrb[0].mxu0
      %v2741 = vpop.f32.mrb[0].mxu0
      %v2742 = vadd.f32 %v1102, %v2741
      %v2743 = vpop.f32.mrb[0].mxu0
      %2744 = vmatprep.mubr.bf16.mxu0 %v1941
      %2745 = vmatmul.mubr.bf16.gmra.mrb[0].mxu0 %v1940
      %v2746 = vpop.f32.mrb[0].mxu0
      %v2747 = vadd.f32 %v1102, %v2746
      %v2748 = vpop.f32.mrb[0].mxu0
      %v2749 = vpop.f32.mrb[0].mxu0
      %v2750 = vadd.f32 %v1102, %v2749
      %v2751 = vpop.f32.mrb[0].mxu0
      %2752 = vmatprep.mubr.bf16.mxu0 %v1945
      %2753 = vmatmul.mubr.bf16.gmra.mrb[0].mxu0 %v1944
      %v2754 = vpop.f32.mrb[0].mxu0
      %v2755 = vadd.f32 %v1102, %v2754
      %v2756 = vpop.f32.mrb[0].mxu0
      %v2757 = vpop.f32.mrb[0].mxu0
      %v2758 = vadd.f32 %v1102, %v2757
      %v2759 = vpop.f32.mrb[0].mxu0
      %2760 = vmatprep.mubr.bf16.mxu0 %v1949
      %2761 = vmatmul.mubr.bf16.gmra.mrb[0].mxu0 %v1948
      %v2762 = vpop.f32.mrb[0].mxu0
      %v2763 = vadd.f32 %v1102, %v2762
      %v2764 = vpop.f32.mrb[0].mxu0
      %v2765 = vpop.f32.mrb[0].mxu0
      %v2766 = vadd.f32 %v1102, %v2765
      %v2767 = vpop.f32.mrb[0].mxu0
      %2768 = vmatprep.mubr.bf16.mxu0 %v1953
      %2769 = vmatmul.mubr.bf16.gmra.mrb[0].mxu0 %v1952
      %v2770 = vpop.f32.mrb[0].mxu0
      %v2771 = vadd.f32 %v1102, %v2770
      %v2772 = vpop.f32.mrb[0].mxu0
      %v2773 = vpop.f32.mrb[0].mxu0
      %v2774 = vadd.f32 %v1102, %v2773
      %v2775 = vpop.f32.mrb[0].mxu0
      %2776 = vmatprep.mubr.bf16.mxu0 %v1957
      %2777 = vmatmul.mubr.bf16.gmra.mrb[0].mxu0 %v1956
      %v2778 = vpop.f32.mrb[0].mxu0
      %v2779 = vadd.f32 %v1102, %v2778
      %v2780 = vpop.f32.mrb[0].mxu0
      %v2781 = vpop.f32.mrb[0].mxu0
      %v2782 = vadd.f32 %v1102, %v2781
      %v2783 = vpop.f32.mrb[0].mxu0
      %2784 = vmatprep.mubr.bf16.mxu0 %v1961
      %2785 = vmatmul.mubr.bf16.gmra.mrb[0].mxu0 %v1960
      %v2786 = vpop.f32.mrb[0].mxu0
      %v2787 = vadd.f32 %v1102, %v2786
      %v2788 = vpop.f32.mrb[0].mxu0
      %v2789 = vpop.f32.mrb[0].mxu0
      %v2790 = vadd.f32 %v1102, %v2789
      %v2791 = vpop.f32.mrb[0].mxu0
      %2792 = vmatprep.mubr.bf16.mxu0 %v1965
      %2793 = vmatmul.mubr.bf16.gmra.mrb[0].mxu0 %v1964
      %v2794 = vpop.f32.mrb[0].mxu0
      %v2795 = vadd.f32 %v1102, %v2794
      %v2796 = vpop.f32.mrb[0].mxu0
      %v2797 = vpop.f32.mrb[0].mxu0
      %v2798 = vadd.f32 %v1102, %v2797
      %v2799 = vpop.f32.mrb[0].mxu0
      %2800 = vmatprep.mubr.bf16.mxu0 %v1969
      %2801 = vmatmul.mubr.bf16.gmra.mrb[0].mxu0 %v1968
      %v2802 = vpop.f32.mrb[0].mxu0
      %v2803 = vadd.f32 %v1102, %v2802
      %v2804 = vpop.f32.mrb[0].mxu0
      %v2805 = vpop.f32.mrb[0].mxu0
      %v2806 = vadd.f32 %v1102, %v2805
      %v2807 = vpop.f32.mrb[0].mxu0
      %2808 = vmatprep.mubr.bf16.mxu0 %v1973
      %2809 = vmatmul.mubr.bf16.gmra.mrb[0].mxu0 %v1972
      %v2810 = vpop.f32.mrb[0].mxu0
      %v2811 = vadd.f32 %v1102, %v2810
      %v2812 = vpop.f32.mrb[0].mxu0
      %v2813 = vpop.f32.mrb[0].mxu0
      %v2814 = vadd.f32 %v1102, %v2813
      %v2815 = vpop.f32.mrb[0].mxu0
      %2816 = vmatprep.mubr.bf16.mxu0 %v1977
      %2817 = vmatmul.mubr.bf16.gmra.mrb[0].mxu0 %v1976
      %v2818 = vpop.f32.mrb[0].mxu0
      %v2819 = vadd.f32 %v1102, %v2818
      %v2820 = vpop.f32.mrb[0].mxu0
      %v2821 = vpop.f32.mrb[0].mxu0
      %v2822 = vadd.f32 %v1102, %v2821
      %v2823 = vpop.f32.mrb[0].mxu0
      %2824 = vmatprep.mubr.bf16.mxu0 %v1981
      %2825 = vmatmul.mubr.bf16.gmra.mrb[0].mxu0 %v1980
      %v2826 = vpop.f32.mrb[0].mxu0
      %v2827 = vadd.f32 %v1102, %v2826
      %v2828 = vpop.f32.mrb[0].mxu0
      %v2829 = vpop.f32.mrb[0].mxu0
      %v2830 = vadd.f32 %v1102, %v2829
      %v2831 = vpop.f32.mrb[0].mxu0
      %2832 = vmatprep.mubr.bf16.mxu0 %v1985
      %2833 = vmatmul.mubr.bf16.gmra.mrb[0].mxu0 %v1984
      %v2834 = vpop.f32.mrb[0].mxu0
      %v2835 = vadd.f32 %v1102, %v2834
      %v2836 = vpop.f32.mrb[0].mxu0
      %v2837 = vpop.f32.mrb[0].mxu0
      %v2838 = vadd.f32 %v1102, %v2837
      %v2839 = vpop.f32.mrb[0].mxu0
      %2840 = vmatprep.mubr.bf16.mxu0 %v1989
      %2841 = vmatmul.mubr.bf16.gmra.mrb[0].mxu0 %v1988
      %v2842 = vpop.f32.mrb[0].mxu0
      %v2843 = vadd.f32 %v1102, %v2842
      %v2844 = vpop.f32.mrb[0].mxu0
      %v2845 = vpop.f32.mrb[0].mxu0
      %v2846 = vadd.f32 %v1102, %v2845
      %v2847 = vpop.f32.mrb[0].mxu0
      %2848 = vmatprep.mubr.bf16.mxu0 %v1993
      %2849 = vmatmul.mubr.bf16.gmra.mrb[0].mxu0 %v1992
      %v2850 = vpop.f32.mrb[0].mxu0
      %v2851 = vadd.f32 %v1102, %v2850
      %v2852 = vpop.f32.mrb[0].mxu0
      %v2853 = vpop.f32.mrb[0].mxu0
      %v2854 = vadd.f32 %v1102, %v2853
      %v2855 = vpop.f32.mrb[0].mxu0
      %2856 = vmatprep.mubr.bf16.mxu0 %v1997
      %2857 = vmatmul.mubr.bf16.gmra.mrb[0].mxu0 %v1996
      %v2858 = vpop.f32.mrb[0].mxu0
      %v2859 = vadd.f32 %v1102, %v2858
      %v2860 = vpop.f32.mrb[0].mxu0
      %v2861 = vpop.f32.mrb[0].mxu0
      %v2862 = vadd.f32 %v1102, %v2861
      %v2863 = vpop.f32.mrb[0].mxu0
      %2864 = vmatprep.mubr.bf16.mxu0 %v2001
      %2865 = vmatmul.mubr.bf16.gmra.mrb[0].mxu0 %v2000
      %v2866 = vpop.f32.mrb[0].mxu0
      %v2867 = vadd.f32 %v1102, %v2866
      %v2868 = vpop.f32.mrb[0].mxu0
      %v2869 = vpop.f32.mrb[0].mxu0
      %v2870 = vadd.f32 %v1102, %v2869
      %v2871 = vpop.f32.mrb[0].mxu0
      %2872 = vmatprep.mubr.bf16.mxu0 %v2005
      %2873 = vmatmul.mubr.bf16.gmra.mrb[0].mxu0 %v2004
      %v2874 = vpop.f32.mrb[0].mxu0
      %v2875 = vadd.f32 %v1102, %v2874
      %v2876 = vpop.f32.mrb[0].mxu0
      %v2877 = vpop.f32.mrb[0].mxu0
      %v2878 = vadd.f32 %v1102, %v2877
      %v2879 = vpop.f32.mrb[0].mxu0
      %2880 = vmatprep.mubr.bf16.mxu0 %v2009
      %2881 = vmatmul.mubr.bf16.gmra.mrb[0].mxu0 %v2008
      %v2882 = vpop.f32.mrb[0].mxu0
      %v2883 = vadd.f32 %v1102, %v2882
      %v2884 = vpop.f32.mrb[0].mxu0
      %v2885 = vpop.f32.mrb[0].mxu0
      %v2886 = vadd.f32 %v1102, %v2885
      %v2887 = vpop.f32.mrb[0].mxu0
      %2888 = vmatprep.mubr.bf16.mxu0 %v2013
      %2889 = vmatmul.mubr.bf16.gmra.mrb[0].mxu0 %v2012
      %v2890 = vpop.f32.mrb[0].mxu0
      %v2891 = vadd.f32 %v1102, %v2890
      %v2892 = vpop.f32.mrb[0].mxu0
      %v2893 = vpop.f32.mrb[0].mxu0
      %v2894 = vadd.f32 %v1102, %v2893
      %v2895 = vpop.f32.mrb[0].mxu0
      %2896 = vmatprep.mubr.bf16.mxu0 %v2017
      %2897 = vmatmul.mubr.bf16.gmra.mrb[0].mxu0 %v2016
      %v2898 = vpop.f32.mrb[0].mxu0
      %v2899 = vadd.f32 %v1102, %v2898
      %v2900 = vpop.f32.mrb[0].mxu0
      %v2901 = vpop.f32.mrb[0].mxu0
      %v2902 = vadd.f32 %v1102, %v2901
      %v2903 = vpop.f32.mrb[0].mxu0
      %2904 = vmatprep.mubr.bf16.mxu0 %v2021
      %2905 = vmatmul.mubr.bf16.gmra.mrb[0].mxu0 %v2020
      %v2906 = vpop.f32.mrb[0].mxu0
      %v2907 = vadd.f32 %v1102, %v2906
      %v2908 = vpop.f32.mrb[0].mxu0
      %v2909 = vpop.f32.mrb[0].mxu0
      %v2910 = vadd.f32 %v1102, %v2909
      %v2911 = vpop.f32.mrb[0].mxu0
      %2912 = vmatprep.mubr.bf16.mxu0 %v2025
      %2913 = vmatmul.mubr.bf16.gmra.mrb[0].mxu0 %v2024
      %v2914 = vpop.f32.mrb[0].mxu0
      %v2915 = vadd.f32 %v1102, %v2914
      %v2916 = vpop.f32.mrb[0].mxu0
      %v2917 = vpop.f32.mrb[0].mxu0
      %v2918 = vadd.f32 %v1102, %v2917
      %v2919 = vpop.f32.mrb[0].mxu0
      %2920 = vmatprep.mubr.bf16.mxu0 %v2029
      %2921 = vmatmul.mubr.bf16.gmra.mrb[0].mxu0 %v2028
      %v2922 = vpop.f32.mrb[0].mxu0
      %v2923 = vadd.f32 %v1102, %v2922
      %v2924 = vpop.f32.mrb[0].mxu0
      %v2925 = vpop.f32.mrb[0].mxu0
      %v2926 = vadd.f32 %v1102, %v2925
      %v2927 = vpop.f32.mrb[0].mxu0
      %2928 = vmatprep.mubr.bf16.mxu0 %v2033
      %2929 = vmatmul.mubr.bf16.gmra.mrb[0].mxu0 %v2032
      %v2930 = vpop.f32.mrb[0].mxu0
      %v2931 = vadd.f32 %v1102, %v2930
      %v2932 = vpop.f32.mrb[0].mxu0
      %v2933 = vpop.f32.mrb[0].mxu0
      %v2934 = vadd.f32 %v1102, %v2933
      %v2935 = vpop.f32.mrb[0].mxu0
      %2936 = vmatprep.mubr.bf16.mxu0 %v2037
      %2937 = vmatmul.mubr.bf16.gmra.mrb[0].mxu0 %v2036
      %v2938 = vpop.f32.mrb[0].mxu0
      %v2939 = vadd.f32 %v1102, %v2938
      %v2940 = vpop.f32.mrb[0].mxu0
      %v2941 = vpop.f32.mrb[0].mxu0
      %v2942 = vadd.f32 %v1102, %v2941
      %v2943 = vpop.f32.mrb[0].mxu0
      %2944 = vmatprep.mubr.bf16.mxu0 %v2041
      %2945 = vmatmul.mubr.bf16.gmra.mrb[0].mxu0 %v2040
      %v2946 = vpop.f32.mrb[0].mxu0
      %v2947 = vadd.f32 %v1102, %v2946
      %v2948 = vpop.f32.mrb[0].mxu0
      %v2949 = vpop.f32.mrb[0].mxu0
      %v2950 = vadd.f32 %v1102, %v2949
      %v2951 = vpop.f32.mrb[0].mxu0
      %2952 = vmatprep.mubr.bf16.mxu0 %v2045
      %2953 = vmatmul.mubr.bf16.gmra.mrb[0].mxu0 %v2044
      %v2954 = vpop.f32.mrb[0].mxu0
      %v2955 = vadd.f32 %v1102, %v2954
      %v2956 = vpop.f32.mrb[0].mxu0
      %v2957 = vpop.f32.mrb[0].mxu0
      %v2958 = vadd.f32 %v1102, %v2957
      %v2959 = vpop.f32.mrb[0].mxu0
      %2960 = vmatprep.mubr.bf16.mxu0 %v2049
      %2961 = vmatmul.mubr.bf16.gmra.mrb[0].mxu0 %v2048
      %v2962 = vpop.f32.mrb[0].mxu0
      %v2963 = vadd.f32 %v1102, %v2962
      %v2964 = vpop.f32.mrb[0].mxu0
      %v2965 = vpop.f32.mrb[0].mxu0
      %v2966 = vadd.f32 %v1102, %v2965
      %v2967 = vpop.f32.mrb[0].mxu0
      %2968 = vmatprep.mubr.bf16.mxu0 %v2053
      %2969 = vmatmul.mubr.bf16.gmra.mrb[0].mxu0 %v2052
      %v2970 = vpop.f32.mrb[0].mxu0
      %v2971 = vadd.f32 %v1102, %v2970
      %v2972 = vpop.f32.mrb[0].mxu0
      %v2973 = vpop.f32.mrb[0].mxu0
      %v2974 = vadd.f32 %v1102, %v2973
      %v2975 = vpop.f32.mrb[0].mxu0
      %2976 = vmatprep.mubr.bf16.mxu0 %v2057
      %2977 = vmatmul.mubr.bf16.gmra.mrb[0].mxu0 %v2056
      %v2978 = vpop.f32.mrb[0].mxu0
      %v2979 = vadd.f32 %v1102, %v2978
      %v2980 = vpop.f32.mrb[0].mxu0
      %v2981 = vpop.f32.mrb[0].mxu0
      %v2982 = vadd.f32 %v1102, %v2981
      %v2983 = vpop.f32.mrb[0].mxu0
      %2984 = vmatprep.mubr.bf16.mxu0 %v2061
      %2985 = vmatmul.mubr.bf16.gmra.mrb[0].mxu0 %v2060
      %v2986 = vpop.f32.mrb[0].mxu0
      %v2987 = vadd.f32 %v1102, %v2986
      %v2988 = vpop.f32.mrb[0].mxu0
      %v2989 = vpop.f32.mrb[0].mxu0
      %v2990 = vadd.f32 %v1102, %v2989
      %v2991 = vpop.f32.mrb[0].mxu0
      %2992 = vmatprep.mubr.bf16.mxu0 %v2065
      %2993 = vmatmul.mubr.bf16.gmra.mrb[0].mxu0 %v2064
      %v2994 = vpop.f32.mrb[0].mxu0
      %v2995 = vadd.f32 %v1102, %v2994
      %v2996 = vpop.f32.mrb[0].mxu0
      %v2997 = vpop.f32.mrb[0].mxu0
      %v2998 = vadd.f32 %v1102, %v2997
      %v2999 = vpop.f32.mrb[0].mxu0
      %3000 = vmatprep.mubr.bf16.mxu0 %v2069
      %3001 = vmatmul.mubr.bf16.gmra.mrb[0].mxu0 %v2068
      %v3002 = vpop.f32.mrb[0].mxu0
      %v3003 = vadd.f32 %v1102, %v3002
      %v3004 = vpop.f32.mrb[0].mxu0
      %v3005 = vpop.f32.mrb[0].mxu0
      %v3006 = vadd.f32 %v1102, %v3005
      %v3007 = vpop.f32.mrb[0].mxu0
      %3008 = vmatprep.mubr.bf16.mxu0 %v2073
      %3009 = vmatmul.mubr.bf16.gmra.mrb[0].mxu0 %v2072
      %v3010 = vpop.f32.mrb[0].mxu0
      %v3011 = vadd.f32 %v1102, %v3010
      %v3012 = vpop.f32.mrb[0].mxu0
      %v3013 = vpop.f32.mrb[0].mxu0
      %v3014 = vadd.f32 %v1102, %v3013
      %v3015 = vpop.f32.mrb[0].mxu0
      %3016 = vmatprep.mubr.bf16.mxu0 %v2077
      %3017 = vmatmul.mubr.bf16.gmra.mrb[0].mxu0 %v2076
      %v3018 = vpop.f32.mrb[0].mxu0
      %v3019 = vadd.f32 %v1102, %v3018
      %v3020 = vpop.f32.mrb[0].mxu0
      %v3021 = vpop.f32.mrb[0].mxu0
      %v3022 = vadd.f32 %v1102, %v3021
      %v3023 = vpop.f32.mrb[0].mxu0
      %3024 = vmatprep.mubr.bf16.mxu0 %v2081
      %3025 = vmatmul.mubr.bf16.gmra.mrb[0].mxu0 %v2080
      %v3026 = vpop.f32.mrb[0].mxu0
      %v3027 = vadd.f32 %v1102, %v3026
      %v3028 = vpop.f32.mrb[0].mxu0
      %v3029 = vpop.f32.mrb[0].mxu0
      %v3030 = vadd.f32 %v1102, %v3029
      %v3031 = vpop.f32.mrb[0].mxu0
      %3032 = vmatprep.mubr.bf16.mxu0 %v2085
      %3033 = vmatmul.mubr.bf16.gmra.mrb[0].mxu0 %v2084
      %v3034 = vpop.f32.mrb[0].mxu0
      %v3035 = vadd.f32 %v1102, %v3034
      %v3036 = vpop.f32.mrb[0].mxu0
      %v3037 = vpop.f32.mrb[0].mxu0
      %v3038 = vadd.f32 %v1102, %v3037
      %v3039 = vpop.f32.mrb[0].mxu0
      %3040 = vmatprep.mubr.bf16.mxu0 %v2089
      %3041 = vmatmul.mubr.bf16.gmra.mrb[0].mxu0 %v2088
      %v3042 = vpop.f32.mrb[0].mxu0
      %v3043 = vadd.f32 %v1102, %v3042
      %v3044 = vpop.f32.mrb[0].mxu0
      %v3045 = vpop.f32.mrb[0].mxu0
      %v3046 = vadd.f32 %v1102, %v3045
      %v3047 = vpop.f32.mrb[0].mxu0
      %3048 = vmatprep.mubr.bf16.mxu0 %v2093
      %3049 = vmatmul.mubr.bf16.gmra.mrb[0].mxu0 %v2092
      %v3050 = vpop.f32.mrb[0].mxu0
      %v3051 = vadd.f32 %v1102, %v3050
      %v3052 = vpop.f32.mrb[0].mxu0
      %v3053 = vpop.f32.mrb[0].mxu0
      %v3054 = vadd.f32 %v1102, %v3053
      %v3055 = vpop.f32.mrb[0].mxu0
      %3056 = vmatprep.mubr.bf16.mxu0 %v2097
      %3057 = vmatmul.mubr.bf16.gmra.mrb[0].mxu0 %v2096
      %v3058 = vpop.f32.mrb[0].mxu0
      %v3059 = vadd.f32 %v1102, %v3058
      %v3060 = vpop.f32.mrb[0].mxu0
      %v3061 = vpop.f32.mrb[0].mxu0
      %v3062 = vadd.f32 %v1102, %v3061
      %v3063 = vpop.f32.mrb[0].mxu0
      %3064 = vmatprep.mubr.bf16.mxu0 %v2101
      %3065 = vmatmul.mubr.bf16.gmra.mrb[0].mxu0 %v2100
      %v3066 = vpop.f32.mrb[0].mxu0
      %v3067 = vadd.f32 %v1102, %v3066
      %v3068 = vpop.f32.mrb[0].mxu0
      %v3069 = vpop.f32.mrb[0].mxu0
      %v3070 = vadd.f32 %v1102, %v3069
      %v3071 = vpop.f32.mrb[0].mxu0
      %3072 = vmatprep.mubr.bf16.mxu0 %v2105
      %3073 = vmatmul.mubr.bf16.gmra.mrb[0].mxu0 %v2104
      %v3074 = vpop.f32.mrb[0].mxu0
      %v3075 = vadd.f32 %v1102, %v3074
      %v3076 = vpop.f32.mrb[0].mxu0
      %v3077 = vpop.f32.mrb[0].mxu0
      %v3078 = vadd.f32 %v1102, %v3077
      %v3079 = vpop.f32.mrb[0].mxu0
      %3080 = vmatprep.mubr.bf16.mxu0 %v2109
      %3081 = vmatmul.mubr.bf16.gmra.mrb[0].mxu0 %v2108
      %v3082 = vpop.f32.mrb[0].mxu0
      %v3083 = vadd.f32 %v1102, %v3082
      %v3084 = vpop.f32.mrb[0].mxu0
      %v3085 = vpop.f32.mrb[0].mxu0
      %v3086 = vadd.f32 %v1102, %v3085
      %v3087 = vpop.f32.mrb[0].mxu0
      %3088 = vmatprep.mubr.bf16.mxu0 %v2113
      %3089 = vmatmul.mubr.bf16.gmra.mrb[0].mxu0 %v2112
      %v3090 = vpop.f32.mrb[0].mxu0
      %v3091 = vadd.f32 %v1102, %v3090
      %v3092 = vpop.f32.mrb[0].mxu0
      %v3093 = vpop.f32.mrb[0].mxu0
      %v3094 = vadd.f32 %v1102, %v3093
      %v3095 = vpop.f32.mrb[0].mxu0
      %3096 = vmatprep.mubr.bf16.mxu0 %v2117
      %3097 = vmatmul.mubr.bf16.gmra.mrb[0].mxu0 %v2116
      %v3098 = vpop.f32.mrb[0].mxu0
      %v3099 = vadd.f32 %v1102, %v3098
      %v3100 = vpop.f32.mrb[0].mxu0
      %v3101 = vpop.f32.mrb[0].mxu0
      %v3102 = vadd.f32 %v1102, %v3101
      %v3103 = vpop.f32.mrb[0].mxu0
      %3104 = vmatprep.mubr.bf16.mxu0 %v2121
      %3105 = vmatmul.mubr.bf16.gmra.mrb[0].mxu0 %v2120
      %v3106 = vpop.f32.mrb[0].mxu0
      %v3107 = vadd.f32 %v1102, %v3106
      %v3108 = vpop.f32.mrb[0].mxu0
      %v3109 = vpop.f32.mrb[0].mxu0
      %v3110 = vadd.f32 %v1102, %v3109
      %v3111 = vpop.f32.mrb[0].mxu0
      %3112 = vmatprep.mubr.bf16.mxu0 %v2125
      %3113 = vmatmul.mubr.bf16.gmra.mrb[0].mxu0 %v2124
      %v3114 = vpop.f32.mrb[0].mxu0
      %v3115 = vadd.f32 %v1102, %v3114
      %v3116 = vpop.f32.mrb[0].mxu0
      %v3117 = vpop.f32.mrb[0].mxu0
      %v3118 = vadd.f32 %v1102, %v3117
      %v3119 = vpop.f32.mrb[0].mxu0
      %3120 = vdwg.mxu0
      %3121 = vmatprep.subr.bf16.mxu0 0
      %3122 = vmatpush1.bf16.msra.mxu0 %v2528
      %3123 = vmatprep.subr.bf16.mxu0 0
      %3124 = vmatpush1.bf16.msra.mxu0 %v2529
      %3125 = vmatprep.subr.bf16.mxu0 0
      %3126 = vmatpush1.bf16.msra.mxu0 %v2530
      %3127 = vmatprep.subr.bf16.mxu0 0
      %3128 = vmatpush1.bf16.msra.mxu0 %v2531
      %3129 = vmatprep.subr.bf16.mxu0 0
      %3130 = vmatpush1.bf16.msra.mxu0 %v2532
      %3131 = vmatprep.subr.bf16.mxu0 0
      %3132 = vmatpush1.bf16.msra.mxu0 %v2533
      %3133 = vmatprep.subr.bf16.mxu0 0
      %3134 = vmatpush1.bf16.msra.mxu0 %v2534
      %3135 = vmatprep.subr.bf16.mxu0 0
      %3136 = vmatpush1.bf16.msra.mxu0 %v2535
      %3137 = vmatprep.subr.bf16.mxu0 0
      %3138 = vmatpush1.bf16.msra.mxu0 %v2536
      %3139 = vmatprep.subr.bf16.mxu0 0
      %3140 = vmatpush1.bf16.msra.mxu0 %v2537
      %3141 = vmatprep.subr.bf16.mxu0 0
      %3142 = vmatpush1.bf16.msra.mxu0 %v2538
      %3143 = vmatprep.subr.bf16.mxu0 0
      %3144 = vmatpush1.bf16.msra.mxu0 %v2539
      %3145 = vmatprep.subr.bf16.mxu0 0
      %3146 = vmatpush1.bf16.msra.mxu0 %v2540
      %3147 = vmatprep.subr.bf16.mxu0 0
      %3148 = vmatpush1.bf16.msra.mxu0 %v2541
      %3149 = vmatprep.subr.bf16.mxu0 0
      %3150 = vmatpush1.bf16.msra.mxu0 %v2542
      %3151 = vmatprep.subr.bf16.mxu0 0
      %3152 = vmatpush1.bf16.msra.mxu0 %v2543
      %3153 = vmatprep.mubr.bf16.mxu0 %v1875
      %3154 = vmatmul.mubr.bf16.gmra.mrb[0].mxu0 %v1874
      %v3155 = vpop.f32.mrb[0].mxu0
      %v3156 = vadd.f32 %v2611, %v3155
      %v3157 = vpop.f32.mrb[0].mxu0
      %v3158 = vpop.f32.mrb[0].mxu0
      %v3159 = vadd.f32 %v2614, %v3158
      %v3160 = vpop.f32.mrb[0].mxu0
      %3161 = vmatprep.mubr.bf16.mxu0 %v1879
      %3162 = vmatmul.mubr.bf16.gmra.mrb[0].mxu0 %v1878
      %v3163 = vpop.f32.mrb[0].mxu0
      %v3164 = vadd.f32 %v2619, %v3163
      %v3165 = vpop.f32.mrb[0].mxu0
      %v3166 = vpop.f32.mrb[0].mxu0
      %v3167 = vadd.f32 %v2622, %v3166
      %v3168 = vpop.f32.mrb[0].mxu0
      %3169 = vmatprep.mubr.bf16.mxu0 %v1883
      %3170 = vmatmul.mubr.bf16.gmra.mrb[0].mxu0 %v1882
      %v3171 = vpop.f32.mrb[0].mxu0
      %v3172 = vadd.f32 %v2627, %v3171
      %v3173 = vpop.f32.mrb[0].mxu0
      %v3174 = vpop.f32.mrb[0].mxu0
      %v3175 = vadd.f32 %v2630, %v3174
      %v3176 = vpop.f32.mrb[0].mxu0
      %3177 = vmatprep.mubr.bf16.mxu0 %v1887
      %3178 = vmatmul.mubr.bf16.gmra.mrb[0].mxu0 %v1886
      %v3179 = vpop.f32.mrb[0].mxu0
      %v3180 = vadd.f32 %v2635, %v3179
      %v3181 = vpop.f32.mrb[0].mxu0
      %v3182 = vpop.f32.mrb[0].mxu0
      %v3183 = vadd.f32 %v2638, %v3182
      %v3184 = vpop.f32.mrb[0].mxu0
      %3185 = vmatprep.mubr.bf16.mxu0 %v1891
      %3186 = vmatmul.mubr.bf16.gmra.mrb[0].mxu0 %v1890
      %v3187 = vpop.f32.mrb[0].mxu0
      %v3188 = vadd.f32 %v2643, %v3187
      %v3189 = vpop.f32.mrb[0].mxu0
      %v3190 = vpop.f32.mrb[0].mxu0
      %v3191 = vadd.f32 %v2646, %v3190
      %v3192 = vpop.f32.mrb[0].mxu0
      %3193 = vmatprep.mubr.bf16.mxu0 %v1895
      %3194 = vmatmul.mubr.bf16.gmra.mrb[0].mxu0 %v1894
      %v3195 = vpop.f32.mrb[0].mxu0
      %v3196 = vadd.f32 %v2651, %v3195
      %v3197 = vpop.f32.mrb[0].mxu0
      %v3198 = vpop.f32.mrb[0].mxu0
      %v3199 = vadd.f32 %v2654, %v3198
      %v3200 = vpop.f32.mrb[0].mxu0
      %3201 = vmatprep.mubr.bf16.mxu0 %v1899
      %3202 = vmatmul.mubr.bf16.gmra.mrb[0].mxu0 %v1898
      %v3203 = vpop.f32.mrb[0].mxu0
      %v3204 = vadd.f32 %v2659, %v3203
      %v3205 = vpop.f32.mrb[0].mxu0
      %v3206 = vpop.f32.mrb[0].mxu0
      %v3207 = vadd.f32 %v2662, %v3206
      %v3208 = vpop.f32.mrb[0].mxu0
      %3209 = vmatprep.mubr.bf16.mxu0 %v1903
      %3210 = vmatmul.mubr.bf16.gmra.mrb[0].mxu0 %v1902
      %v3211 = vpop.f32.mrb[0].mxu0
      %v3212 = vadd.f32 %v2667, %v3211
      %v3213 = vpop.f32.mrb[0].mxu0
      %v3214 = vpop.f32.mrb[0].mxu0
      %v3215 = vadd.f32 %v2670, %v3214
      %v3216 = vpop.f32.mrb[0].mxu0
      %3217 = vmatprep.mubr.bf16.mxu0 %v1907
      %3218 = vmatmul.mubr.bf16.gmra.mrb[0].mxu0 %v1906
      %v3219 = vpop.f32.mrb[0].mxu0
      %v3220 = vadd.f32 %v2675, %v3219
      %v3221 = vpop.f32.mrb[0].mxu0
      %v3222 = vpop.f32.mrb[0].mxu0
      %v3223 = vadd.f32 %v2678, %v3222
      %v3224 = vpop.f32.mrb[0].mxu0
      %3225 = vmatprep.mubr.bf16.mxu0 %v1911
      %3226 = vmatmul.mubr.bf16.gmra.mrb[0].mxu0 %v1910
      %v3227 = vpop.f32.mrb[0].mxu0
      %v3228 = vadd.f32 %v2683, %v3227
      %v3229 = vpop.f32.mrb[0].mxu0
      %v3230 = vpop.f32.mrb[0].mxu0
      %v3231 = vadd.f32 %v2686, %v3230
      %v3232 = vpop.f32.mrb[0].mxu0
      %3233 = vmatprep.mubr.bf16.mxu0 %v1915
      %3234 = vmatmul.mubr.bf16.gmra.mrb[0].mxu0 %v1914
      %v3235 = vpop.f32.mrb[0].mxu0
      %v3236 = vadd.f32 %v2691, %v3235
      %v3237 = vpop.f32.mrb[0].mxu0
      %v3238 = vpop.f32.mrb[0].mxu0
      %v3239 = vadd.f32 %v2694, %v3238
      %v3240 = vpop.f32.mrb[0].mxu0
      %3241 = vmatprep.mubr.bf16.mxu0 %v1919
      %3242 = vmatmul.mubr.bf16.gmra.mrb[0].mxu0 %v1918
      %v3243 = vpop.f32.mrb[0].mxu0
      %v3244 = vadd.f32 %v2699, %v3243
      %v3245 = vpop.f32.mrb[0].mxu0
      %v3246 = vpop.f32.mrb[0].mxu0
      %v3247 = vadd.f32 %v2702, %v3246
      %v3248 = vpop.f32.mrb[0].mxu0
      %3249 = vmatprep.mubr.bf16.mxu0 %v1923
      %3250 = vmatmul.mubr.bf16.gmra.mrb[0].mxu0 %v1922
      %v3251 = vpop.f32.mrb[0].mxu0
      %v3252 = vadd.f32 %v2707, %v3251
      %v3253 = vpop.f32.mrb[0].mxu0
      %v3254 = vpop.f32.mrb[0].mxu0
      %v3255 = vadd.f32 %v2710, %v3254
      %v3256 = vpop.f32.mrb[0].mxu0
      %3257 = vmatprep.mubr.bf16.mxu0 %v1927
      %3258 = vmatmul.mubr.bf16.gmra.mrb[0].mxu0 %v1926
      %v3259 = vpop.f32.mrb[0].mxu0
      %v3260 = vadd.f32 %v2715, %v3259
      %v3261 = vpop.f32.mrb[0].mxu0
      %v3262 = vpop.f32.mrb[0].mxu0
      %v3263 = vadd.f32 %v2718, %v3262
      %v3264 = vpop.f32.mrb[0].mxu0
      %3265 = vmatprep.mubr.bf16.mxu0 %v1931
      %3266 = vmatmul.mubr.bf16.gmra.mrb[0].mxu0 %v1930
      %v3267 = vpop.f32.mrb[0].mxu0
      %v3268 = vadd.f32 %v2723, %v3267
      %v3269 = vpop.f32.mrb[0].mxu0
      %v3270 = vpop.f32.mrb[0].mxu0
      %v3271 = vadd.f32 %v2726, %v3270
      %v3272 = vpop.f32.mrb[0].mxu0
      %3273 = vmatprep.mubr.bf16.mxu0 %v1935
      %3274 = vmatmul.mubr.bf16.gmra.mrb[0].mxu0 %v1934
      %v3275 = vpop.f32.mrb[0].mxu0
      %v3276 = vadd.f32 %v2731, %v3275
      %v3277 = vpop.f32.mrb[0].mxu0
      %v3278 = vpop.f32.mrb[0].mxu0
      %v3279 = vadd.f32 %v2734, %v3278
      %v3280 = vpop.f32.mrb[0].mxu0
      %3281 = vmatprep.mubr.bf16.mxu0 %v1939
      %3282 = vmatmul.mubr.bf16.gmra.mrb[0].mxu0 %v1938
      %v3283 = vpop.f32.mrb[0].mxu0
      %v3284 = vadd.f32 %v2739, %v3283
      %v3285 = vpop.f32.mrb[0].mxu0
      %v3286 = vpop.f32.mrb[0].mxu0
      %v3287 = vadd.f32 %v2742, %v3286
      %v3288 = vpop.f32.mrb[0].mxu0
      %3289 = vmatprep.mubr.bf16.mxu0 %v1943
      %3290 = vmatmul.mubr.bf16.gmra.mrb[0].mxu0 %v1942
      %v3291 = vpop.f32.mrb[0].mxu0
      %v3292 = vadd.f32 %v2747, %v3291
      %v3293 = vpop.f32.mrb[0].mxu0
      %v3294 = vpop.f32.mrb[0].mxu0
      %v3295 = vadd.f32 %v2750, %v3294
      %v3296 = vpop.f32.mrb[0].mxu0
      %3297 = vmatprep.mubr.bf16.mxu0 %v1947
      %3298 = vmatmul.mubr.bf16.gmra.mrb[0].mxu0 %v1946
      %v3299 = vpop.f32.mrb[0].mxu0
      %v3300 = vadd.f32 %v2755, %v3299
      %v3301 = vpop.f32.mrb[0].mxu0
      %v3302 = vpop.f32.mrb[0].mxu0
      %v3303 = vadd.f32 %v2758, %v3302
      %v3304 = vpop.f32.mrb[0].mxu0
      %3305 = vmatprep.mubr.bf16.mxu0 %v1951
      %3306 = vmatmul.mubr.bf16.gmra.mrb[0].mxu0 %v1950
      %v3307 = vpop.f32.mrb[0].mxu0
      %v3308 = vadd.f32 %v2763, %v3307
      %v3309 = vpop.f32.mrb[0].mxu0
      %v3310 = vpop.f32.mrb[0].mxu0
      %v3311 = vadd.f32 %v2766, %v3310
      %v3312 = vpop.f32.mrb[0].mxu0
      %3313 = vmatprep.mubr.bf16.mxu0 %v1955
      %3314 = vmatmul.mubr.bf16.gmra.mrb[0].mxu0 %v1954
      %v3315 = vpop.f32.mrb[0].mxu0
      %v3316 = vadd.f32 %v2771, %v3315
      %v3317 = vpop.f32.mrb[0].mxu0
      %v3318 = vpop.f32.mrb[0].mxu0
      %v3319 = vadd.f32 %v2774, %v3318
      %v3320 = vpop.f32.mrb[0].mxu0
      %3321 = vmatprep.mubr.bf16.mxu0 %v1959
      %3322 = vmatmul.mubr.bf16.gmra.mrb[0].mxu0 %v1958
      %v3323 = vpop.f32.mrb[0].mxu0
      %v3324 = vadd.f32 %v2779, %v3323
      %v3325 = vpop.f32.mrb[0].mxu0
      %v3326 = vpop.f32.mrb[0].mxu0
      %v3327 = vadd.f32 %v2782, %v3326
      %v3328 = vpop.f32.mrb[0].mxu0
      %3329 = vmatprep.mubr.bf16.mxu0 %v1963
      %3330 = vmatmul.mubr.bf16.gmra.mrb[0].mxu0 %v1962
      %v3331 = vpop.f32.mrb[0].mxu0
      %v3332 = vadd.f32 %v2787, %v3331
      %v3333 = vpop.f32.mrb[0].mxu0
      %v3334 = vpop.f32.mrb[0].mxu0
      %v3335 = vadd.f32 %v2790, %v3334
      %v3336 = vpop.f32.mrb[0].mxu0
      %3337 = vmatprep.mubr.bf16.mxu0 %v1967
      %3338 = vmatmul.mubr.bf16.gmra.mrb[0].mxu0 %v1966
      %v3339 = vpop.f32.mrb[0].mxu0
      %v3340 = vadd.f32 %v2795, %v3339
      %v3341 = vpop.f32.mrb[0].mxu0
      %v3342 = vpop.f32.mrb[0].mxu0
      %v3343 = vadd.f32 %v2798, %v3342
      %v3344 = vpop.f32.mrb[0].mxu0
      %3345 = vmatprep.mubr.bf16.mxu0 %v1971
      %3346 = vmatmul.mubr.bf16.gmra.mrb[0].mxu0 %v1970
      %v3347 = vpop.f32.mrb[0].mxu0
      %v3348 = vadd.f32 %v2803, %v3347
      %v3349 = vpop.f32.mrb[0].mxu0
      %v3350 = vpop.f32.mrb[0].mxu0
      %v3351 = vadd.f32 %v2806, %v3350
      %v3352 = vpop.f32.mrb[0].mxu0
      %3353 = vmatprep.mubr.bf16.mxu0 %v1975
      %3354 = vmatmul.mubr.bf16.gmra.mrb[0].mxu0 %v1974
      %v3355 = vpop.f32.mrb[0].mxu0
      %v3356 = vadd.f32 %v2811, %v3355
      %v3357 = vpop.f32.mrb[0].mxu0
      %v3358 = vpop.f32.mrb[0].mxu0
      %v3359 = vadd.f32 %v2814, %v3358
      %v3360 = vpop.f32.mrb[0].mxu0
      %3361 = vmatprep.mubr.bf16.mxu0 %v1979
      %3362 = vmatmul.mubr.bf16.gmra.mrb[0].mxu0 %v1978
      %v3363 = vpop.f32.mrb[0].mxu0
      %v3364 = vadd.f32 %v2819, %v3363
      %v3365 = vpop.f32.mrb[0].mxu0
      %v3366 = vpop.f32.mrb[0].mxu0
      %v3367 = vadd.f32 %v2822, %v3366
      %v3368 = vpop.f32.mrb[0].mxu0
      %3369 = vmatprep.mubr.bf16.mxu0 %v1983
      %3370 = vmatmul.mubr.bf16.gmra.mrb[0].mxu0 %v1982
      %v3371 = vpop.f32.mrb[0].mxu0
      %v3372 = vadd.f32 %v2827, %v3371
      %v3373 = vpop.f32.mrb[0].mxu0
      %v3374 = vpop.f32.mrb[0].mxu0
      %v3375 = vadd.f32 %v2830, %v3374
      %v3376 = vpop.f32.mrb[0].mxu0
      %3377 = vmatprep.mubr.bf16.mxu0 %v1987
      %3378 = vmatmul.mubr.bf16.gmra.mrb[0].mxu0 %v1986
      %v3379 = vpop.f32.mrb[0].mxu0
      %v3380 = vadd.f32 %v2835, %v3379
      %v3381 = vpop.f32.mrb[0].mxu0
      %v3382 = vpop.f32.mrb[0].mxu0
      %v3383 = vadd.f32 %v2838, %v3382
      %v3384 = vpop.f32.mrb[0].mxu0
      %3385 = vmatprep.mubr.bf16.mxu0 %v1991
      %3386 = vmatmul.mubr.bf16.gmra.mrb[0].mxu0 %v1990
      %v3387 = vpop.f32.mrb[0].mxu0
      %v3388 = vadd.f32 %v2843, %v3387
      %v3389 = vpop.f32.mrb[0].mxu0
      %v3390 = vpop.f32.mrb[0].mxu0
      %v3391 = vadd.f32 %v2846, %v3390
      %v3392 = vpop.f32.mrb[0].mxu0
      %3393 = vmatprep.mubr.bf16.mxu0 %v1995
      %3394 = vmatmul.mubr.bf16.gmra.mrb[0].mxu0 %v1994
      %v3395 = vpop.f32.mrb[0].mxu0
      %v3396 = vadd.f32 %v2851, %v3395
      %v3397 = vpop.f32.mrb[0].mxu0
      %v3398 = vpop.f32.mrb[0].mxu0
      %v3399 = vadd.f32 %v2854, %v3398
      %v3400 = vpop.f32.mrb[0].mxu0
      %3401 = vmatprep.mubr.bf16.mxu0 %v1999
      %3402 = vmatmul.mubr.bf16.gmra.mrb[0].mxu0 %v1998
      %v3403 = vpop.f32.mrb[0].mxu0
      %v3404 = vadd.f32 %v2859, %v3403
      %v3405 = vpop.f32.mrb[0].mxu0
      %v3406 = vpop.f32.mrb[0].mxu0
      %v3407 = vadd.f32 %v2862, %v3406
      %v3408 = vpop.f32.mrb[0].mxu0
      %3409 = vmatprep.mubr.bf16.mxu0 %v2003
      %3410 = vmatmul.mubr.bf16.gmra.mrb[0].mxu0 %v2002
      %v3411 = vpop.f32.mrb[0].mxu0
      %v3412 = vadd.f32 %v2867, %v3411
      %v3413 = vpop.f32.mrb[0].mxu0
      %v3414 = vpop.f32.mrb[0].mxu0
      %v3415 = vadd.f32 %v2870, %v3414
      %v3416 = vpop.f32.mrb[0].mxu0
      %3417 = vmatprep.mubr.bf16.mxu0 %v2007
      %3418 = vmatmul.mubr.bf16.gmra.mrb[0].mxu0 %v2006
      %v3419 = vpop.f32.mrb[0].mxu0
      %v3420 = vadd.f32 %v2875, %v3419
      %v3421 = vpop.f32.mrb[0].mxu0
      %v3422 = vpop.f32.mrb[0].mxu0
      %v3423 = vadd.f32 %v2878, %v3422
      %v3424 = vpop.f32.mrb[0].mxu0
      %3425 = vmatprep.mubr.bf16.mxu0 %v2011
      %3426 = vmatmul.mubr.bf16.gmra.mrb[0].mxu0 %v2010
      %v3427 = vpop.f32.mrb[0].mxu0
      %v3428 = vadd.f32 %v2883, %v3427
      %v3429 = vpop.f32.mrb[0].mxu0
      %v3430 = vpop.f32.mrb[0].mxu0
      %v3431 = vadd.f32 %v2886, %v3430
      %v3432 = vpop.f32.mrb[0].mxu0
      %3433 = vmatprep.mubr.bf16.mxu0 %v2015
      %3434 = vmatmul.mubr.bf16.gmra.mrb[0].mxu0 %v2014
      %v3435 = vpop.f32.mrb[0].mxu0
      %v3436 = vadd.f32 %v2891, %v3435
      %v3437 = vpop.f32.mrb[0].mxu0
      %v3438 = vpop.f32.mrb[0].mxu0
      %v3439 = vadd.f32 %v2894, %v3438
      %v3440 = vpop.f32.mrb[0].mxu0
      %3441 = vmatprep.mubr.bf16.mxu0 %v2019
      %3442 = vmatmul.mubr.bf16.gmra.mrb[0].mxu0 %v2018
      %v3443 = vpop.f32.mrb[0].mxu0
      %v3444 = vadd.f32 %v2899, %v3443
      %v3445 = vpop.f32.mrb[0].mxu0
      %v3446 = vpop.f32.mrb[0].mxu0
      %v3447 = vadd.f32 %v2902, %v3446
      %v3448 = vpop.f32.mrb[0].mxu0
      %3449 = vmatprep.mubr.bf16.mxu0 %v2023
      %3450 = vmatmul.mubr.bf16.gmra.mrb[0].mxu0 %v2022
      %v3451 = vpop.f32.mrb[0].mxu0
      %v3452 = vadd.f32 %v2907, %v3451
      %v3453 = vpop.f32.mrb[0].mxu0
      %v3454 = vpop.f32.mrb[0].mxu0
      %v3455 = vadd.f32 %v2910, %v3454
      %v3456 = vpop.f32.mrb[0].mxu0
      %3457 = vmatprep.mubr.bf16.mxu0 %v2027
      %3458 = vmatmul.mubr.bf16.gmra.mrb[0].mxu0 %v2026
      %v3459 = vpop.f32.mrb[0].mxu0
      %v3460 = vadd.f32 %v2915, %v3459
      %v3461 = vpop.f32.mrb[0].mxu0
      %v3462 = vpop.f32.mrb[0].mxu0
      %v3463 = vadd.f32 %v2918, %v3462
      %v3464 = vpop.f32.mrb[0].mxu0
      %3465 = vmatprep.mubr.bf16.mxu0 %v2031
      %3466 = vmatmul.mubr.bf16.gmra.mrb[0].mxu0 %v2030
      %v3467 = vpop.f32.mrb[0].mxu0
      %v3468 = vadd.f32 %v2923, %v3467
      %v3469 = vpop.f32.mrb[0].mxu0
      %v3470 = vpop.f32.mrb[0].mxu0
      %v3471 = vadd.f32 %v2926, %v3470
      %v3472 = vpop.f32.mrb[0].mxu0
      %3473 = vmatprep.mubr.bf16.mxu0 %v2035
      %3474 = vmatmul.mubr.bf16.gmra.mrb[0].mxu0 %v2034
      %v3475 = vpop.f32.mrb[0].mxu0
      %v3476 = vadd.f32 %v2931, %v3475
      %v3477 = vpop.f32.mrb[0].mxu0
      %v3478 = vpop.f32.mrb[0].mxu0
      %v3479 = vadd.f32 %v2934, %v3478
      %v3480 = vpop.f32.mrb[0].mxu0
      %3481 = vmatprep.mubr.bf16.mxu0 %v2039
      %3482 = vmatmul.mubr.bf16.gmra.mrb[0].mxu0 %v2038
      %v3483 = vpop.f32.mrb[0].mxu0
      %v3484 = vadd.f32 %v2939, %v3483
      %v3485 = vpop.f32.mrb[0].mxu0
      %v3486 = vpop.f32.mrb[0].mxu0
      %v3487 = vadd.f32 %v2942, %v3486
      %v3488 = vpop.f32.mrb[0].mxu0
      %3489 = vmatprep.mubr.bf16.mxu0 %v2043
      %3490 = vmatmul.mubr.bf16.gmra.mrb[0].mxu0 %v2042
      %v3491 = vpop.f32.mrb[0].mxu0
      %v3492 = vadd.f32 %v2947, %v3491
      %v3493 = vpop.f32.mrb[0].mxu0
      %v3494 = vpop.f32.mrb[0].mxu0
      %v3495 = vadd.f32 %v2950, %v3494
      %v3496 = vpop.f32.mrb[0].mxu0
      %3497 = vmatprep.mubr.bf16.mxu0 %v2047
      %3498 = vmatmul.mubr.bf16.gmra.mrb[0].mxu0 %v2046
      %v3499 = vpop.f32.mrb[0].mxu0
      %v3500 = vadd.f32 %v2955, %v3499
      %v3501 = vpop.f32.mrb[0].mxu0
      %v3502 = vpop.f32.mrb[0].mxu0
      %v3503 = vadd.f32 %v2958, %v3502
      %v3504 = vpop.f32.mrb[0].mxu0
      %3505 = vmatprep.mubr.bf16.mxu0 %v2051
      %3506 = vmatmul.mubr.bf16.gmra.mrb[0].mxu0 %v2050
      %v3507 = vpop.f32.mrb[0].mxu0
      %v3508 = vadd.f32 %v2963, %v3507
      %v3509 = vpop.f32.mrb[0].mxu0
      %v3510 = vpop.f32.mrb[0].mxu0
      %v3511 = vadd.f32 %v2966, %v3510
      %v3512 = vpop.f32.mrb[0].mxu0
      %3513 = vmatprep.mubr.bf16.mxu0 %v2055
      %3514 = vmatmul.mubr.bf16.gmra.mrb[0].mxu0 %v2054
      %v3515 = vpop.f32.mrb[0].mxu0
      %v3516 = vadd.f32 %v2971, %v3515
      %v3517 = vpop.f32.mrb[0].mxu0
      %v3518 = vpop.f32.mrb[0].mxu0
      %v3519 = vadd.f32 %v2974, %v3518
      %v3520 = vpop.f32.mrb[0].mxu0
      %3521 = vmatprep.mubr.bf16.mxu0 %v2059
      %3522 = vmatmul.mubr.bf16.gmra.mrb[0].mxu0 %v2058
      %v3523 = vpop.f32.mrb[0].mxu0
      %v3524 = vadd.f32 %v2979, %v3523
      %v3525 = vpop.f32.mrb[0].mxu0
      %v3526 = vpop.f32.mrb[0].mxu0
      %v3527 = vadd.f32 %v2982, %v3526
      %v3528 = vpop.f32.mrb[0].mxu0
      %3529 = vmatprep.mubr.bf16.mxu0 %v2063
      %3530 = vmatmul.mubr.bf16.gmra.mrb[0].mxu0 %v2062
      %v3531 = vpop.f32.mrb[0].mxu0
      %v3532 = vadd.f32 %v2987, %v3531
      %v3533 = vpop.f32.mrb[0].mxu0
      %v3534 = vpop.f32.mrb[0].mxu0
      %v3535 = vadd.f32 %v2990, %v3534
      %v3536 = vpop.f32.mrb[0].mxu0
      %3537 = vmatprep.mubr.bf16.mxu0 %v2067
      %3538 = vmatmul.mubr.bf16.gmra.mrb[0].mxu0 %v2066
      %v3539 = vpop.f32.mrb[0].mxu0
      %v3540 = vadd.f32 %v2995, %v3539
      %v3541 = vpop.f32.mrb[0].mxu0
      %v3542 = vpop.f32.mrb[0].mxu0
      %v3543 = vadd.f32 %v2998, %v3542
      %v3544 = vpop.f32.mrb[0].mxu0
      %3545 = vmatprep.mubr.bf16.mxu0 %v2071
      %3546 = vmatmul.mubr.bf16.gmra.mrb[0].mxu0 %v2070
      %v3547 = vpop.f32.mrb[0].mxu0
      %v3548 = vadd.f32 %v3003, %v3547
      %v3549 = vpop.f32.mrb[0].mxu0
      %v3550 = vpop.f32.mrb[0].mxu0
      %v3551 = vadd.f32 %v3006, %v3550
      %v3552 = vpop.f32.mrb[0].mxu0
      %3553 = vmatprep.mubr.bf16.mxu0 %v2075
      %3554 = vmatmul.mubr.bf16.gmra.mrb[0].mxu0 %v2074
      %v3555 = vpop.f32.mrb[0].mxu0
      %v3556 = vadd.f32 %v3011, %v3555
      %v3557 = vpop.f32.mrb[0].mxu0
      %v3558 = vpop.f32.mrb[0].mxu0
      %v3559 = vadd.f32 %v3014, %v3558
      %v3560 = vpop.f32.mrb[0].mxu0
      %3561 = vmatprep.mubr.bf16.mxu0 %v2079
      %3562 = vmatmul.mubr.bf16.gmra.mrb[0].mxu0 %v2078
      %v3563 = vpop.f32.mrb[0].mxu0
      %v3564 = vadd.f32 %v3019, %v3563
      %v3565 = vpop.f32.mrb[0].mxu0
      %v3566 = vpop.f32.mrb[0].mxu0
      %v3567 = vadd.f32 %v3022, %v3566
      %v3568 = vpop.f32.mrb[0].mxu0
      %3569 = vmatprep.mubr.bf16.mxu0 %v2083
      %3570 = vmatmul.mubr.bf16.gmra.mrb[0].mxu0 %v2082
      %v3571 = vpop.f32.mrb[0].mxu0
      %v3572 = vadd.f32 %v3027, %v3571
      %v3573 = vpop.f32.mrb[0].mxu0
      %v3574 = vpop.f32.mrb[0].mxu0
      %v3575 = vadd.f32 %v3030, %v3574
      %v3576 = vpop.f32.mrb[0].mxu0
      %3577 = vmatprep.mubr.bf16.mxu0 %v2087
      %3578 = vmatmul.mubr.bf16.gmra.mrb[0].mxu0 %v2086
      %v3579 = vpop.f32.mrb[0].mxu0
      %v3580 = vadd.f32 %v3035, %v3579
      %v3581 = vpop.f32.mrb[0].mxu0
      %v3582 = vpop.f32.mrb[0].mxu0
      %v3583 = vadd.f32 %v3038, %v3582
      %v3584 = vpop.f32.mrb[0].mxu0
      %3585 = vmatprep.mubr.bf16.mxu0 %v2091
      %3586 = vmatmul.mubr.bf16.gmra.mrb[0].mxu0 %v2090
      %v3587 = vpop.f32.mrb[0].mxu0
      %v3588 = vadd.f32 %v3043, %v3587
      %v3589 = vpop.f32.mrb[0].mxu0
      %v3590 = vpop.f32.mrb[0].mxu0
      %v3591 = vadd.f32 %v3046, %v3590
      %v3592 = vpop.f32.mrb[0].mxu0
      %3593 = vmatprep.mubr.bf16.mxu0 %v2095
      %3594 = vmatmul.mubr.bf16.gmra.mrb[0].mxu0 %v2094
      %v3595 = vpop.f32.mrb[0].mxu0
      %v3596 = vadd.f32 %v3051, %v3595
      %v3597 = vpop.f32.mrb[0].mxu0
      %v3598 = vpop.f32.mrb[0].mxu0
      %v3599 = vadd.f32 %v3054, %v3598
      %v3600 = vpop.f32.mrb[0].mxu0
      %3601 = vmatprep.mubr.bf16.mxu0 %v2099
      %3602 = vmatmul.mubr.bf16.gmra.mrb[0].mxu0 %v2098
      %v3603 = vpop.f32.mrb[0].mxu0
      %v3604 = vadd.f32 %v3059, %v3603
      %v3605 = vpop.f32.mrb[0].mxu0
      %v3606 = vpop.f32.mrb[0].mxu0
      %v3607 = vadd.f32 %v3062, %v3606
      %v3608 = vpop.f32.mrb[0].mxu0
      %3609 = vmatprep.mubr.bf16.mxu0 %v2103
      %3610 = vmatmul.mubr.bf16.gmra.mrb[0].mxu0 %v2102
      %v3611 = vpop.f32.mrb[0].mxu0
      %v3612 = vadd.f32 %v3067, %v3611
      %v3613 = vpop.f32.mrb[0].mxu0
      %v3614 = vpop.f32.mrb[0].mxu0
      %v3615 = vadd.f32 %v3070, %v3614
      %v3616 = vpop.f32.mrb[0].mxu0
      %3617 = vmatprep.mubr.bf16.mxu0 %v2107
      %3618 = vmatmul.mubr.bf16.gmra.mrb[0].mxu0 %v2106
      %v3619 = vpop.f32.mrb[0].mxu0
      %v3620 = vadd.f32 %v3075, %v3619
      %v3621 = vpop.f32.mrb[0].mxu0
      %v3622 = vpop.f32.mrb[0].mxu0
      %v3623 = vadd.f32 %v3078, %v3622
      %v3624 = vpop.f32.mrb[0].mxu0
      %3625 = vmatprep.mubr.bf16.mxu0 %v2111
      %3626 = vmatmul.mubr.bf16.gmra.mrb[0].mxu0 %v2110
      %v3627 = vpop.f32.mrb[0].mxu0
      %v3628 = vadd.f32 %v3083, %v3627
      %v3629 = vpop.f32.mrb[0].mxu0
      %v3630 = vpop.f32.mrb[0].mxu0
      %v3631 = vadd.f32 %v3086, %v3630
      %v3632 = vpop.f32.mrb[0].mxu0
      %3633 = vmatprep.mubr.bf16.mxu0 %v2115
      %3634 = vmatmul.mubr.bf16.gmra.mrb[0].mxu0 %v2114
      %v3635 = vpop.f32.mrb[0].mxu0
      %v3636 = vadd.f32 %v3091, %v3635
      %v3637 = vpop.f32.mrb[0].mxu0
      %v3638 = vpop.f32.mrb[0].mxu0
      %v3639 = vadd.f32 %v3094, %v3638
      %v3640 = vpop.f32.mrb[0].mxu0
      %3641 = vmatprep.mubr.bf16.mxu0 %v2119
      %3642 = vmatmul.mubr.bf16.gmra.mrb[0].mxu0 %v2118
      %v3643 = vpop.f32.mrb[0].mxu0
      %v3644 = vadd.f32 %v3099, %v3643
      %v3645 = vpop.f32.mrb[0].mxu0
      %v3646 = vpop.f32.mrb[0].mxu0
      %v3647 = vadd.f32 %v3102, %v3646
      %v3648 = vpop.f32.mrb[0].mxu0
      %3649 = vmatprep.mubr.bf16.mxu0 %v2123
      %3650 = vmatmul.mubr.bf16.gmra.mrb[0].mxu0 %v2122
      %v3651 = vpop.f32.mrb[0].mxu0
      %v3652 = vadd.f32 %v3107, %v3651
      %v3653 = vpop.f32.mrb[0].mxu0
      %v3654 = vpop.f32.mrb[0].mxu0
      %v3655 = vadd.f32 %v3110, %v3654
      %v3656 = vpop.f32.mrb[0].mxu0
      %3657 = vmatprep.mubr.bf16.mxu0 %v2127
      %3658 = vmatmul.mubr.bf16.gmra.mrb[0].mxu0 %v2126
      %v3659 = vpop.f32.mrb[0].mxu0
      %v3660 = vadd.f32 %v3115, %v3659
      %v3661 = vpop.f32.mrb[0].mxu0
      %v3662 = vpop.f32.mrb[0].mxu0
      %v3663 = vadd.f32 %v3118, %v3662
      %v3664 = vpop.f32.mrb[0].mxu0
      %3665 = vdwg.mxu0
      %v3666 = vmax.f32 %v3156, 0.0
      %v3667 = vmax.f32 %v3159, 0.0
      %v3668 = vmax.f32 %v3164, 0.0
      %v3669 = vmax.f32 %v3167, 0.0
      %v3670 = vmax.f32 %v3172, 0.0
      %v3671 = vmax.f32 %v3175, 0.0
      %v3672 = vmax.f32 %v3180, 0.0
      %v3673 = vmax.f32 %v3183, 0.0
      %v3674 = vmax.f32 %v3188, 0.0
      %v3675 = vmax.f32 %v3191, 0.0
      %v3676 = vmax.f32 %v3196, 0.0
      %v3677 = vmax.f32 %v3199, 0.0
      %v3678 = vmax.f32 %v3204, 0.0
      %v3679 = vmax.f32 %v3207, 0.0
      %v3680 = vmax.f32 %v3212, 0.0
      %v3681 = vmax.f32 %v3215, 0.0
      %v3682 = vmax.f32 %v3220, 0.0
      %v3683 = vmax.f32 %v3223, 0.0
      %v3684 = vmax.f32 %v3228, 0.0
      %v3685 = vmax.f32 %v3231, 0.0
      %v3686 = vmax.f32 %v3236, 0.0
      %v3687 = vmax.f32 %v3239, 0.0
      %v3688 = vmax.f32 %v3244, 0.0
      %v3689 = vmax.f32 %v3247, 0.0
      %v3690 = vmax.f32 %v3252, 0.0
      %v3691 = vmax.f32 %v3255, 0.0
      %v3692 = vmax.f32 %v3260, 0.0
      %v3693 = vmax.f32 %v3263, 0.0
      %v3694 = vmax.f32 %v3268, 0.0
      %v3695 = vmax.f32 %v3271, 0.0
      %v3696 = vmax.f32 %v3276, 0.0
      %v3697 = vmax.f32 %v3279, 0.0
      %v3698 = vmax.f32 %v3284, 0.0
      %v3699 = vmax.f32 %v3287, 0.0
      %v3700 = vmax.f32 %v3292, 0.0
      %v3701 = vmax.f32 %v3295, 0.0
      %v3702 = vmax.f32 %v3300, 0.0
      %v3703 = vmax.f32 %v3303, 0.0
      %v3704 = vmax.f32 %v3308, 0.0
      %v3705 = vmax.f32 %v3311, 0.0
      %v3706 = vmax.f32 %v3316, 0.0
      %v3707 = vmax.f32 %v3319, 0.0
      %v3708 = vmax.f32 %v3324, 0.0
      %v3709 = vmax.f32 %v3327, 0.0
      %v3710 = vmax.f32 %v3332, 0.0
      %v3711 = vmax.f32 %v3335, 0.0
      %v3712 = vmax.f32 %v3340, 0.0
      %v3713 = vmax.f32 %v3343, 0.0
      %v3714 = vmax.f32 %v3348, 0.0
      %v3715 = vmax.f32 %v3351, 0.0
      %v3716 = vmax.f32 %v3356, 0.0
      %v3717 = vmax.f32 %v3359, 0.0
      %v3718 = vmax.f32 %v3364, 0.0
      %v3719 = vmax.f32 %v3367, 0.0
      %v3720 = vmax.f32 %v3372, 0.0
      %v3721 = vmax.f32 %v3375, 0.0
      %v3722 = vmax.f32 %v3380, 0.0
      %v3723 = vmax.f32 %v3383, 0.0
      %v3724 = vmax.f32 %v3388, 0.0
      %v3725 = vmax.f32 %v3391, 0.0
      %v3726 = vmax.f32 %v3396, 0.0
      %v3727 = vmax.f32 %v3399, 0.0
      %v3728 = vmax.f32 %v3404, 0.0
      %v3729 = vmax.f32 %v3407, 0.0
      %v3730 = vmax.f32 %v3412, 0.0
      %v3731 = vmax.f32 %v3415, 0.0
      %v3732 = vmax.f32 %v3420, 0.0
      %v3733 = vmax.f32 %v3423, 0.0
      %v3734 = vmax.f32 %v3428, 0.0
      %v3735 = vmax.f32 %v3431, 0.0
      %v3736 = vmax.f32 %v3436, 0.0
      %v3737 = vmax.f32 %v3439, 0.0
      %v3738 = vmax.f32 %v3444, 0.0
      %v3739 = vmax.f32 %v3447, 0.0
      %v3740 = vmax.f32 %v3452, 0.0
      %v3741 = vmax.f32 %v3455, 0.0
      %v3742 = vmax.f32 %v3460, 0.0
      %v3743 = vmax.f32 %v3463, 0.0
      %v3744 = vmax.f32 %v3468, 0.0
      %v3745 = vmax.f32 %v3471, 0.0
      %v3746 = vmax.f32 %v3476, 0.0
      %v3747 = vmax.f32 %v3479, 0.0
      %v3748 = vmax.f32 %v3484, 0.0
      %v3749 = vmax.f32 %v3487, 0.0
      %v3750 = vmax.f32 %v3492, 0.0
      %v3751 = vmax.f32 %v3495, 0.0
      %v3752 = vmax.f32 %v3500, 0.0
      %v3753 = vmax.f32 %v3503, 0.0
      %v3754 = vmax.f32 %v3508, 0.0
      %v3755 = vmax.f32 %v3511, 0.0
      %v3756 = vmax.f32 %v3516, 0.0
      %v3757 = vmax.f32 %v3519, 0.0
      %v3758 = vmax.f32 %v3524, 0.0
      %v3759 = vmax.f32 %v3527, 0.0
      %v3760 = vmax.f32 %v3532, 0.0
      %v3761 = vmax.f32 %v3535, 0.0
      %v3762 = vmax.f32 %v3540, 0.0
      %v3763 = vmax.f32 %v3543, 0.0
      %v3764 = vmax.f32 %v3548, 0.0
      %v3765 = vmax.f32 %v3551, 0.0
      %v3766 = vmax.f32 %v3556, 0.0
      %v3767 = vmax.f32 %v3559, 0.0
      %v3768 = vmax.f32 %v3564, 0.0
      %v3769 = vmax.f32 %v3567, 0.0
      %v3770 = vmax.f32 %v3572, 0.0
      %v3771 = vmax.f32 %v3575, 0.0
      %v3772 = vmax.f32 %v3580, 0.0
      %v3773 = vmax.f32 %v3583, 0.0
      %v3774 = vmax.f32 %v3588, 0.0
      %v3775 = vmax.f32 %v3591, 0.0
      %v3776 = vmax.f32 %v3596, 0.0
      %v3777 = vmax.f32 %v3599, 0.0
      %v3778 = vmax.f32 %v3604, 0.0
      %v3779 = vmax.f32 %v3607, 0.0
      %v3780 = vmax.f32 %v3612, 0.0
      %v3781 = vmax.f32 %v3615, 0.0
      %v3782 = vmax.f32 %v3620, 0.0
      %v3783 = vmax.f32 %v3623, 0.0
      %v3784 = vmax.f32 %v3628, 0.0
      %v3785 = vmax.f32 %v3631, 0.0
      %v3786 = vmax.f32 %v3636, 0.0
      %v3787 = vmax.f32 %v3639, 0.0
      %v3788 = vmax.f32 %v3644, 0.0
      %v3789 = vmax.f32 %v3647, 0.0
      %v3790 = vmax.f32 %v3652, 0.0
      %v3791 = vmax.f32 %v3655, 0.0
      %v3792 = vmax.f32 %v3660, 0.0
      %v3793 = vmax.f32 %v3663, 0.0
      %3794 = vst [vmem:[#allocation2] sm:$0xff] %v3666
      %3795 = vst [vmem:[#allocation2 + $0x10] sm:$0xff] %v3667
      %3796 = vst [vmem:[#allocation2 + $0x20] sm:$0xff] %v3668
      %3797 = vst [vmem:[#allocation2 + $0x30] sm:$0xff] %v3669
      %3798 = vst [vmem:[#allocation2 + $0x40] sm:$0xff] %v3670
      %3799 = vst [vmem:[#allocation2 + $0x50] sm:$0xff] %v3671
      %3800 = vst [vmem:[#allocation2 + $0x60] sm:$0xff] %v3672
      %3801 = vst [vmem:[#allocation2 + $0x70] sm:$0xff] %v3673
      %3802 = vst [vmem:[#allocation2 + $0x80] sm:$0xff] %v3674
      %3803 = vst [vmem:[#allocation2 + $0x90] sm:$0xff] %v3675
      %3804 = vst [vmem:[#allocation2 + $0xa0] sm:$0xff] %v3676
      %3805 = vst [vmem:[#allocation2 + $0xb0] sm:$0xff] %v3677
      %3806 = vst [vmem:[#allocation2 + $0xc0] sm:$0xff] %v3678
      %3807 = vst [vmem:[#allocation2 + $0xd0] sm:$0xff] %v3679
      %3808 = vst [vmem:[#allocation2 + $0xe0] sm:$0xff] %v3680
      %3809 = vst [vmem:[#allocation2 + $0xf0] sm:$0xff] %v3681
      %3810 = vst [vmem:[#allocation2 + $0x100] sm:$0xff] %v3682
      %3811 = vst [vmem:[#allocation2 + $0x110] sm:$0xff] %v3683
      %3812 = vst [vmem:[#allocation2 + $0x120] sm:$0xff] %v3684
      %3813 = vst [vmem:[#allocation2 + $0x130] sm:$0xff] %v3685
      %3814 = vst [vmem:[#allocation2 + $0x140] sm:$0xff] %v3686
      %3815 = vst [vmem:[#allocation2 + $0x150] sm:$0xff] %v3687
      %3816 = vst [vmem:[#allocation2 + $0x160] sm:$0xff] %v3688
      %3817 = vst [vmem:[#allocation2 + $0x170] sm:$0xff] %v3689
      %3818 = vst [vmem:[#allocation2 + $0x180] sm:$0xff] %v3690
      %3819 = vst [vmem:[#allocation2 + $0x190] sm:$0xff] %v3691
      %3820 = vst [vmem:[#allocation2 + $0x1a0] sm:$0xff] %v3692
      %3821 = vst [vmem:[#allocation2 + $0x1b0] sm:$0xff] %v3693
      %3822 = vst [vmem:[#allocation2 + $0x1c0] sm:$0xff] %v3694
      %3823 = vst [vmem:[#allocation2 + $0x1d0] sm:$0xff] %v3695
      %3824 = vst [vmem:[#allocation2 + $0x1e0] sm:$0xff] %v3696
      %3825 = vst [vmem:[#allocation2 + $0x1f0] sm:$0xff] %v3697
      %3826 = vst [vmem:[#allocation2 + $0x200] sm:$0xff] %v3698
      %3827 = vst [vmem:[#allocation2 + $0x210] sm:$0xff] %v3699
      %3828 = vst [vmem:[#allocation2 + $0x220] sm:$0xff] %v3700
      %3829 = vst [vmem:[#allocation2 + $0x230] sm:$0xff] %v3701
      %3830 = vst [vmem:[#allocation2 + $0x240] sm:$0xff] %v3702
      %3831 = vst [vmem:[#allocation2 + $0x250] sm:$0xff] %v3703
      %3832 = vst [vmem:[#allocation2 + $0x260] sm:$0xff] %v3704
      %3833 = vst [vmem:[#allocation2 + $0x270] sm:$0xff] %v3705
      %3834 = vst [vmem:[#allocation2 + $0x280] sm:$0xff] %v3706
      %3835 = vst [vmem:[#allocation2 + $0x290] sm:$0xff] %v3707
      %3836 = vst [vmem:[#allocation2 + $0x2a0] sm:$0xff] %v3708
      %3837 = vst [vmem:[#allocation2 + $0x2b0] sm:$0xff] %v3709
      %3838 = vst [vmem:[#allocation2 + $0x2c0] sm:$0xff] %v3710
      %3839 = vst [vmem:[#allocation2 + $0x2d0] sm:$0xff] %v3711
      %3840 = vst [vmem:[#allocation2 + $0x2e0] sm:$0xff] %v3712
      %3841 = vst [vmem:[#allocation2 + $0x2f0] sm:$0xff] %v3713
      %3842 = vst [vmem:[#allocation2 + $0x300] sm:$0xff] %v3714
      %3843 = vst [vmem:[#allocation2 + $0x310] sm:$0xff] %v3715
      %3844 = vst [vmem:[#allocation2 + $0x320] sm:$0xff] %v3716
      %3845 = vst [vmem:[#allocation2 + $0x330] sm:$0xff] %v3717
      %3846 = vst [vmem:[#allocation2 + $0x340] sm:$0xff] %v3718
      %3847 = vst [vmem:[#allocation2 + $0x350] sm:$0xff] %v3719
      %3848 = vst [vmem:[#allocation2 + $0x360] sm:$0xff] %v3720
      %3849 = vst [vmem:[#allocation2 + $0x370] sm:$0xff] %v3721
      %3850 = vst [vmem:[#allocation2 + $0x380] sm:$0xff] %v3722
      %3851 = vst [vmem:[#allocation2 + $0x390] sm:$0xff] %v3723
      %3852 = vst [vmem:[#allocation2 + $0x3a0] sm:$0xff] %v3724
      %3853 = vst [vmem:[#allocation2 + $0x3b0] sm:$0xff] %v3725
      %3854 = vst [vmem:[#allocation2 + $0x3c0] sm:$0xff] %v3726
      %3855 = vst [vmem:[#allocation2 + $0x3d0] sm:$0xff] %v3727
      %3856 = vst [vmem:[#allocation2 + $0x3e0] sm:$0xff] %v3728
      %3857 = vst [vmem:[#allocation2 + $0x3f0] sm:$0xff] %v3729
      %3858 = vst [vmem:[#allocation2 + $0x400] sm:$0xff] %v3730
      %3859 = vst [vmem:[#allocation2 + $0x410] sm:$0xff] %v3731
      %3860 = vst [vmem:[#allocation2 + $0x420] sm:$0xff] %v3732
      %3861 = vst [vmem:[#allocation2 + $0x430] sm:$0xff] %v3733
      %3862 = vst [vmem:[#allocation2 + $0x440] sm:$0xff] %v3734
      %3863 = vst [vmem:[#allocation2 + $0x450] sm:$0xff] %v3735
      %3864 = vst [vmem:[#allocation2 + $0x460] sm:$0xff] %v3736
      %3865 = vst [vmem:[#allocation2 + $0x470] sm:$0xff] %v3737
      %3866 = vst [vmem:[#allocation2 + $0x480] sm:$0xff] %v3738
      %3867 = vst [vmem:[#allocation2 + $0x490] sm:$0xff] %v3739
      %3868 = vst [vmem:[#allocation2 + $0x4a0] sm:$0xff] %v3740
      %3869 = vst [vmem:[#allocation2 + $0x4b0] sm:$0xff] %v3741
      %3870 = vst [vmem:[#allocation2 + $0x4c0] sm:$0xff] %v3742
      %3871 = vst [vmem:[#allocation2 + $0x4d0] sm:$0xff] %v3743
      %3872 = vst [vmem:[#allocation2 + $0x4e0] sm:$0xff] %v3744
      %3873 = vst [vmem:[#allocation2 + $0x4f0] sm:$0xff] %v3745
      %3874 = vst [vmem:[#allocation2 + $0x500] sm:$0xff] %v3746
      %3875 = vst [vmem:[#allocation2 + $0x510] sm:$0xff] %v3747
      %3876 = vst [vmem:[#allocation2 + $0x520] sm:$0xff] %v3748
      %3877 = vst [vmem:[#allocation2 + $0x530] sm:$0xff] %v3749
      %3878 = vst [vmem:[#allocation2 + $0x540] sm:$0xff] %v3750
      %3879 = vst [vmem:[#allocation2 + $0x550] sm:$0xff] %v3751
      %3880 = vst [vmem:[#allocation2 + $0x560] sm:$0xff] %v3752
      %3881 = vst [vmem:[#allocation2 + $0x570] sm:$0xff] %v3753
      %3882 = vst [vmem:[#allocation2 + $0x580] sm:$0xff] %v3754
      %3883 = vst [vmem:[#allocation2 + $0x590] sm:$0xff] %v3755
      %3884 = vst [vmem:[#allocation2 + $0x5a0] sm:$0xff] %v3756
      %3885 = vst [vmem:[#allocation2 + $0x5b0] sm:$0xff] %v3757
      %3886 = vst [vmem:[#allocation2 + $0x5c0] sm:$0xff] %v3758
      %3887 = vst [vmem:[#allocation2 + $0x5d0] sm:$0xff] %v3759
      %3888 = vst [vmem:[#allocation2 + $0x5e0] sm:$0xff] %v3760
      %3889 = vst [vmem:[#allocation2 + $0x5f0] sm:$0xff] %v3761
      %3890 = vst [vmem:[#allocation2 + $0x600] sm:$0xff] %v3762
      %3891 = vst [vmem:[#allocation2 + $0x610] sm:$0xff] %v3763
      %3892 = vst [vmem:[#allocation2 + $0x620] sm:$0xff] %v3764
      %3893 = vst [vmem:[#allocation2 + $0x630] sm:$0xff] %v3765
      %3894 = vst [vmem:[#allocation2 + $0x640] sm:$0xff] %v3766
      %3895 = vst [vmem:[#allocation2 + $0x650] sm:$0xff] %v3767
      %3896 = vst [vmem:[#allocation2 + $0x660] sm:$0xff] %v3768
      %3897 = vst [vmem:[#allocation2 + $0x670] sm:$0xff] %v3769
      %3898 = vst [vmem:[#allocation2 + $0x680] sm:$0xff] %v3770
      %3899 = vst [vmem:[#allocation2 + $0x690] sm:$0xff] %v3771
      %3900 = vst [vmem:[#allocation2 + $0x6a0] sm:$0xff] %v3772
      %3901 = vst [vmem:[#allocation2 + $0x6b0] sm:$0xff] %v3773
      %3902 = vst [vmem:[#allocation2 + $0x6c0] sm:$0xff] %v3774
      %3903 = vst [vmem:[#allocation2 + $0x6d0] sm:$0xff] %v3775
      %3904 = vst [vmem:[#allocation2 + $0x6e0] sm:$0xff] %v3776
      %3905 = vst [vmem:[#allocation2 + $0x6f0] sm:$0xff] %v3777
      %3906 = vst [vmem:[#allocation2 + $0x700] sm:$0xff] %v3778
      %3907 = vst [vmem:[#allocation2 + $0x710] sm:$0xff] %v3779
      %3908 = vst [vmem:[#allocation2 + $0x720] sm:$0xff] %v3780
      %3909 = vst [vmem:[#allocation2 + $0x730] sm:$0xff] %v3781
      %3910 = vst [vmem:[#allocation2 + $0x740] sm:$0xff] %v3782
      %3911 = vst [vmem:[#allocation2 + $0x750] sm:$0xff] %v3783
      %3912 = vst [vmem:[#allocation2 + $0x760] sm:$0xff] %v3784
      %3913 = vst [vmem:[#allocation2 + $0x770] sm:$0xff] %v3785
      %3914 = vst [vmem:[#allocation2 + $0x780] sm:$0xff] %v3786
      %3915 = vst [vmem:[#allocation2 + $0x790] sm:$0xff] %v3787
      %3916 = vst [vmem:[#allocation2 + $0x7a0] sm:$0xff] %v3788
      %3917 = vst [vmem:[#allocation2 + $0x7b0] sm:$0xff] %v3789
      %3918 = vst [vmem:[#allocation2 + $0x7c0] sm:$0xff] %v3790
      %3919 = vst [vmem:[#allocation2 + $0x7d0] sm:$0xff] %v3791
      %3920 = vst [vmem:[#allocation2 + $0x7e0] sm:$0xff] %v3792
      %3921 = vst [vmem:[#allocation2 + $0x7f0] sm:$0xff] %v3793
      %v4178 = vunpack.c.l.b16 %v842
      %v4179 = vunpack.c.h.b16 %v842
      %v4180 = vunpack.c.l.b16 %v843
      %v4181 = vunpack.c.h.b16 %v843
      %v4182 = vunpack.c.l.b16 %v844
      %v4183 = vunpack.c.h.b16 %v844
      %v4184 = vunpack.c.l.b16 %v845
      %v4185 = vunpack.c.h.b16 %v845
      %v4186 = vunpack.c.l.b16 %v846
      %v4187 = vunpack.c.h.b16 %v846
      %v4188 = vunpack.c.l.b16 %v847
      %v4189 = vunpack.c.h.b16 %v847
      %v4190 = vunpack.c.l.b16 %v848
      %v4191 = vunpack.c.h.b16 %v848
      %v4192 = vunpack.c.l.b16 %v849
      %v4193 = vunpack.c.h.b16 %v849
      %v4194 = vunpack.c.l.b16 %v850
      %v4195 = vunpack.c.h.b16 %v850
      %v4196 = vunpack.c.l.b16 %v851
      %v4197 = vunpack.c.h.b16 %v851
      %v4198 = vunpack.c.l.b16 %v852
      %v4199 = vunpack.c.h.b16 %v852
      %v4200 = vunpack.c.l.b16 %v853
      %v4201 = vunpack.c.h.b16 %v853
      %v4202 = vunpack.c.l.b16 %v854
      %v4203 = vunpack.c.h.b16 %v854
      %v4204 = vunpack.c.l.b16 %v855
      %v4205 = vunpack.c.h.b16 %v855
      %v4206 = vunpack.c.l.b16 %v856
      %v4207 = vunpack.c.h.b16 %v856
      %v4208 = vunpack.c.l.b16 %v857
      %v4209 = vunpack.c.h.b16 %v857
      %v4210 = vunpack.c.l.b16 %v858
      %v4211 = vunpack.c.h.b16 %v858
      %v4212 = vunpack.c.l.b16 %v859
      %v4213 = vunpack.c.h.b16 %v859
      %v4214 = vunpack.c.l.b16 %v860
      %v4215 = vunpack.c.h.b16 %v860
      %v4216 = vunpack.c.l.b16 %v861
      %v4217 = vunpack.c.h.b16 %v861
      %v4218 = vunpack.c.l.b16 %v862
      %v4219 = vunpack.c.h.b16 %v862
      %v4220 = vunpack.c.l.b16 %v863
      %v4221 = vunpack.c.h.b16 %v863
      %v4222 = vunpack.c.l.b16 %v864
      %v4223 = vunpack.c.h.b16 %v864
      %v4224 = vunpack.c.l.b16 %v865
      %v4225 = vunpack.c.h.b16 %v865
      %v4226 = vunpack.c.l.b16 %v866
      %v4227 = vunpack.c.h.b16 %v866
      %v4228 = vunpack.c.l.b16 %v867
      %v4229 = vunpack.c.h.b16 %v867
      %v4230 = vunpack.c.l.b16 %v868
      %v4231 = vunpack.c.h.b16 %v868
      %v4232 = vunpack.c.l.b16 %v869
      %v4233 = vunpack.c.h.b16 %v869
      %v4234 = vunpack.c.l.b16 %v870
      %v4235 = vunpack.c.h.b16 %v870
      %v4236 = vunpack.c.l.b16 %v871
      %v4237 = vunpack.c.h.b16 %v871
      %v4238 = vunpack.c.l.b16 %v872
      %v4239 = vunpack.c.h.b16 %v872
      %v4240 = vunpack.c.l.b16 %v873
      %v4241 = vunpack.c.h.b16 %v873
      %v4242 = vunpack.c.l.b16 %v874
      %v4243 = vunpack.c.h.b16 %v874
      %v4244 = vunpack.c.l.b16 %v875
      %v4245 = vunpack.c.h.b16 %v875
      %v4246 = vunpack.c.l.b16 %v876
      %v4247 = vunpack.c.h.b16 %v876
      %v4248 = vunpack.c.l.b16 %v877
      %v4249 = vunpack.c.h.b16 %v877
      %v4250 = vunpack.c.l.b16 %v878
      %v4251 = vunpack.c.h.b16 %v878
      %v4252 = vunpack.c.l.b16 %v879
      %v4253 = vunpack.c.h.b16 %v879
      %v4254 = vunpack.c.l.b16 %v880
      %v4255 = vunpack.c.h.b16 %v880
      %v4256 = vunpack.c.l.b16 %v881
      %v4257 = vunpack.c.h.b16 %v881
      %v4258 = vunpack.c.l.b16 %v882
      %v4259 = vunpack.c.h.b16 %v882
      %v4260 = vunpack.c.l.b16 %v883
      %v4261 = vunpack.c.h.b16 %v883
      %v4262 = vunpack.c.l.b16 %v884
      %v4263 = vunpack.c.h.b16 %v884
      %v4264 = vunpack.c.l.b16 %v885
      %v4265 = vunpack.c.h.b16 %v885
      %v4266 = vunpack.c.l.b16 %v886
      %v4267 = vunpack.c.h.b16 %v886
      %v4268 = vunpack.c.l.b16 %v887
      %v4269 = vunpack.c.h.b16 %v887
      %v4270 = vunpack.c.l.b16 %v888
      %v4271 = vunpack.c.h.b16 %v888
      %v4272 = vunpack.c.l.b16 %v889
      %v4273 = vunpack.c.h.b16 %v889
      %v4274 = vunpack.c.l.b16 %v890
      %v4275 = vunpack.c.h.b16 %v890
      %v4276 = vunpack.c.l.b16 %v891
      %v4277 = vunpack.c.h.b16 %v891
      %v4278 = vunpack.c.l.b16 %v892
      %v4279 = vunpack.c.h.b16 %v892
      %v4280 = vunpack.c.l.b16 %v893
      %v4281 = vunpack.c.h.b16 %v893
      %v4282 = vunpack.c.l.b16 %v894
      %v4283 = vunpack.c.h.b16 %v894
      %v4284 = vunpack.c.l.b16 %v895
      %v4285 = vunpack.c.h.b16 %v895
      %v4286 = vunpack.c.l.b16 %v896
      %v4287 = vunpack.c.h.b16 %v896
      %v4288 = vunpack.c.l.b16 %v897
      %v4289 = vunpack.c.h.b16 %v897
      %v4290 = vunpack.c.l.b16 %v898
      %v4291 = vunpack.c.h.b16 %v898
      %v4292 = vunpack.c.l.b16 %v899
      %v4293 = vunpack.c.h.b16 %v899
      %v4294 = vunpack.c.l.b16 %v900
      %v4295 = vunpack.c.h.b16 %v900
      %v4296 = vunpack.c.l.b16 %v901
      %v4297 = vunpack.c.h.b16 %v901
      %v4298 = vunpack.c.l.b16 %v902
      %v4299 = vunpack.c.h.b16 %v902
      %v4300 = vunpack.c.l.b16 %v903
      %v4301 = vunpack.c.h.b16 %v903
      %v4302 = vunpack.c.l.b16 %v904
      %v4303 = vunpack.c.h.b16 %v904
      %v4304 = vunpack.c.l.b16 %v905
      %v4305 = vunpack.c.h.b16 %v905
      %v4306 = vunpack.c.l.b16 %v906
      %v4307 = vunpack.c.h.b16 %v906
      %v4308 = vunpack.c.l.b16 %v907
      %v4309 = vunpack.c.h.b16 %v907
      %v4310 = vunpack.c.l.b16 %v908
      %v4311 = vunpack.c.h.b16 %v908
      %v4312 = vunpack.c.l.b16 %v909
      %v4313 = vunpack.c.h.b16 %v909
      %v4314 = vunpack.c.l.b16 %v910
      %v4315 = vunpack.c.h.b16 %v910
      %v4316 = vunpack.c.l.b16 %v911
      %v4317 = vunpack.c.h.b16 %v911
      %v4318 = vunpack.c.l.b16 %v912
      %v4319 = vunpack.c.h.b16 %v912
      %v4320 = vunpack.c.l.b16 %v913
      %v4321 = vunpack.c.h.b16 %v913
      %v4322 = vunpack.c.l.b16 %v914
      %v4323 = vunpack.c.h.b16 %v914
      %v4324 = vunpack.c.l.b16 %v915
      %v4325 = vunpack.c.h.b16 %v915
      %v4326 = vunpack.c.l.b16 %v916
      %v4327 = vunpack.c.h.b16 %v916
      %v4328 = vunpack.c.l.b16 %v917
      %v4329 = vunpack.c.h.b16 %v917
      %v4330 = vunpack.c.l.b16 %v918
      %v4331 = vunpack.c.h.b16 %v918
      %v4332 = vunpack.c.l.b16 %v919
      %v4333 = vunpack.c.h.b16 %v919
      %v4334 = vunpack.c.l.b16 %v920
      %v4335 = vunpack.c.h.b16 %v920
      %v4336 = vunpack.c.l.b16 %v921
      %v4337 = vunpack.c.h.b16 %v921
      %v4338 = vunpack.c.l.b16 %v922
      %v4339 = vunpack.c.h.b16 %v922
      %v4340 = vunpack.c.l.b16 %v923
      %v4341 = vunpack.c.h.b16 %v923
      %v4342 = vunpack.c.l.b16 %v924
      %v4343 = vunpack.c.h.b16 %v924
      %v4344 = vunpack.c.l.b16 %v925
      %v4345 = vunpack.c.h.b16 %v925
      %v4346 = vunpack.c.l.b16 %v926
      %v4347 = vunpack.c.h.b16 %v926
      %v4348 = vunpack.c.l.b16 %v927
      %v4349 = vunpack.c.h.b16 %v927
      %v4350 = vunpack.c.l.b16 %v928
      %v4351 = vunpack.c.h.b16 %v928
      %v4352 = vunpack.c.l.b16 %v929
      %v4353 = vunpack.c.h.b16 %v929
      %v4354 = vunpack.c.l.b16 %v930
      %v4355 = vunpack.c.h.b16 %v930
      %v4356 = vunpack.c.l.b16 %v931
      %v4357 = vunpack.c.h.b16 %v931
      %v4358 = vunpack.c.l.b16 %v932
      %v4359 = vunpack.c.h.b16 %v932
      %v4360 = vunpack.c.l.b16 %v933
      %v4361 = vunpack.c.h.b16 %v933
      %v4362 = vunpack.c.l.b16 %v934
      %v4363 = vunpack.c.h.b16 %v934
      %v4364 = vunpack.c.l.b16 %v935
      %v4365 = vunpack.c.h.b16 %v935
      %v4366 = vunpack.c.l.b16 %v936
      %v4367 = vunpack.c.h.b16 %v936
      %v4368 = vunpack.c.l.b16 %v937
      %v4369 = vunpack.c.h.b16 %v937
      %v4370 = vunpack.c.l.b16 %v938
      %v4371 = vunpack.c.h.b16 %v938
      %v4372 = vunpack.c.l.b16 %v939
      %v4373 = vunpack.c.h.b16 %v939
      %v4374 = vunpack.c.l.b16 %v940
      %v4375 = vunpack.c.h.b16 %v940
      %v4376 = vunpack.c.l.b16 %v941
      %v4377 = vunpack.c.h.b16 %v941
      %v4378 = vunpack.c.l.b16 %v942
      %v4379 = vunpack.c.h.b16 %v942
      %v4380 = vunpack.c.l.b16 %v943
      %v4381 = vunpack.c.h.b16 %v943
      %v4382 = vunpack.c.l.b16 %v944
      %v4383 = vunpack.c.h.b16 %v944
      %v4384 = vunpack.c.l.b16 %v945
      %v4385 = vunpack.c.h.b16 %v945
      %v4386 = vunpack.c.l.b16 %v946
      %v4387 = vunpack.c.h.b16 %v946
      %v4388 = vunpack.c.l.b16 %v947
      %v4389 = vunpack.c.h.b16 %v947
      %v4390 = vunpack.c.l.b16 %v948
      %v4391 = vunpack.c.h.b16 %v948
      %v4392 = vunpack.c.l.b16 %v949
      %v4393 = vunpack.c.h.b16 %v949
      %v4394 = vunpack.c.l.b16 %v950
      %v4395 = vunpack.c.h.b16 %v950
      %v4396 = vunpack.c.l.b16 %v951
      %v4397 = vunpack.c.h.b16 %v951
      %v4398 = vunpack.c.l.b16 %v952
      %v4399 = vunpack.c.h.b16 %v952
      %v4400 = vunpack.c.l.b16 %v953
      %v4401 = vunpack.c.h.b16 %v953
      %v4402 = vunpack.c.l.b16 %v954
      %v4403 = vunpack.c.h.b16 %v954
      %v4404 = vunpack.c.l.b16 %v955
      %v4405 = vunpack.c.h.b16 %v955
      %v4406 = vunpack.c.l.b16 %v956
      %v4407 = vunpack.c.h.b16 %v956
      %v4408 = vunpack.c.l.b16 %v957
      %v4409 = vunpack.c.h.b16 %v957
      %v4410 = vunpack.c.l.b16 %v958
      %v4411 = vunpack.c.h.b16 %v958
      %v4412 = vunpack.c.l.b16 %v959
      %v4413 = vunpack.c.h.b16 %v959
      %v4414 = vunpack.c.l.b16 %v960
      %v4415 = vunpack.c.h.b16 %v960
      %v4416 = vunpack.c.l.b16 %v961
      %v4417 = vunpack.c.h.b16 %v961
      %v4418 = vunpack.c.l.b16 %v962
      %v4419 = vunpack.c.h.b16 %v962
      %v4420 = vunpack.c.l.b16 %v963
      %v4421 = vunpack.c.h.b16 %v963
      %v4422 = vunpack.c.l.b16 %v964
      %v4423 = vunpack.c.h.b16 %v964
      %v4424 = vunpack.c.l.b16 %v965
      %v4425 = vunpack.c.h.b16 %v965
      %v4426 = vunpack.c.l.b16 %v966
      %v4427 = vunpack.c.h.b16 %v966
      %v4428 = vunpack.c.l.b16 %v967
      %v4429 = vunpack.c.h.b16 %v967
      %v4430 = vunpack.c.l.b16 %v968
      %v4431 = vunpack.c.h.b16 %v968
      %v4432 = vunpack.c.l.b16 %v969
      %v4433 = vunpack.c.h.b16 %v969
      %v4434 = vunpack.c.l.b16 %v970
      %v4435 = vunpack.c.h.b16 %v970
      %v4436 = vunpack.c.l.b16 %v971
      %v4437 = vunpack.c.h.b16 %v971
      %v4438 = vunpack.c.l.b16 %v972
      %v4439 = vunpack.c.h.b16 %v972
      %v4440 = vunpack.c.l.b16 %v973
      %v4441 = vunpack.c.h.b16 %v973
      %v4442 = vunpack.c.l.b16 %v974
      %v4443 = vunpack.c.h.b16 %v974
      %v4444 = vunpack.c.l.b16 %v975
      %v4445 = vunpack.c.h.b16 %v975
      %v4446 = vunpack.c.l.b16 %v976
      %v4447 = vunpack.c.h.b16 %v976
      %v4448 = vunpack.c.l.b16 %v977
      %v4449 = vunpack.c.h.b16 %v977
      %v4450 = vunpack.c.l.b16 %v978
      %v4451 = vunpack.c.h.b16 %v978
      %v4452 = vunpack.c.l.b16 %v979
      %v4453 = vunpack.c.h.b16 %v979
      %v4454 = vunpack.c.l.b16 %v980
      %v4455 = vunpack.c.h.b16 %v980
      %v4456 = vunpack.c.l.b16 %v981
      %v4457 = vunpack.c.h.b16 %v981
      %v4458 = vunpack.c.l.b16 %v982
      %v4459 = vunpack.c.h.b16 %v982
      %v4460 = vunpack.c.l.b16 %v983
      %v4461 = vunpack.c.h.b16 %v983
      %v4462 = vunpack.c.l.b16 %v984
      %v4463 = vunpack.c.h.b16 %v984
      %v4464 = vunpack.c.l.b16 %v985
      %v4465 = vunpack.c.h.b16 %v985
      %v4466 = vunpack.c.l.b16 %v986
      %v4467 = vunpack.c.h.b16 %v986
      %v4468 = vunpack.c.l.b16 %v987
      %v4469 = vunpack.c.h.b16 %v987
      %v4470 = vunpack.c.l.b16 %v988
      %v4471 = vunpack.c.h.b16 %v988
      %v4472 = vunpack.c.l.b16 %v989
      %v4473 = vunpack.c.h.b16 %v989
      %v4474 = vunpack.c.l.b16 %v990
      %v4475 = vunpack.c.h.b16 %v990
      %v4476 = vunpack.c.l.b16 %v991
      %v4477 = vunpack.c.h.b16 %v991
      %v4478 = vunpack.c.l.b16 %v992
      %v4479 = vunpack.c.h.b16 %v992
      %v4480 = vunpack.c.l.b16 %v993
      %v4481 = vunpack.c.h.b16 %v993
      %v4482 = vunpack.c.l.b16 %v994
      %v4483 = vunpack.c.h.b16 %v994
      %v4484 = vunpack.c.l.b16 %v995
      %v4485 = vunpack.c.h.b16 %v995
      %v4486 = vunpack.c.l.b16 %v996
      %v4487 = vunpack.c.h.b16 %v996
      %v4488 = vunpack.c.l.b16 %v997
      %v4489 = vunpack.c.h.b16 %v997
      %v4490 = vunpack.c.l.b16 %v998
      %v4491 = vunpack.c.h.b16 %v998
      %v4492 = vunpack.c.l.b16 %v999
      %v4493 = vunpack.c.h.b16 %v999
      %v4494 = vunpack.c.l.b16 %v1000
      %v4495 = vunpack.c.h.b16 %v1000
      %v4496 = vunpack.c.l.b16 %v1001
      %v4497 = vunpack.c.h.b16 %v1001
      %v4498 = vunpack.c.l.b16 %v1002
      %v4499 = vunpack.c.h.b16 %v1002
      %v4500 = vunpack.c.l.b16 %v1003
      %v4501 = vunpack.c.h.b16 %v1003
      %v4502 = vunpack.c.l.b16 %v1004
      %v4503 = vunpack.c.h.b16 %v1004
      %v4504 = vunpack.c.l.b16 %v1005
      %v4505 = vunpack.c.h.b16 %v1005
      %v4506 = vunpack.c.l.b16 %v1006
      %v4507 = vunpack.c.h.b16 %v1006
      %v4508 = vunpack.c.l.b16 %v1007
      %v4509 = vunpack.c.h.b16 %v1007
      %v4510 = vunpack.c.l.b16 %v1008
      %v4511 = vunpack.c.h.b16 %v1008
      %v4512 = vunpack.c.l.b16 %v1009
      %v4513 = vunpack.c.h.b16 %v1009
      %v4514 = vunpack.c.l.b16 %v1010
      %v4515 = vunpack.c.h.b16 %v1010
      %v4516 = vunpack.c.l.b16 %v1011
      %v4517 = vunpack.c.h.b16 %v1011
      %v4518 = vunpack.c.l.b16 %v1012
      %v4519 = vunpack.c.h.b16 %v1012
      %v4520 = vunpack.c.l.b16 %v1013
      %v4521 = vunpack.c.h.b16 %v1013
      %v4522 = vunpack.c.l.b16 %v1014
      %v4523 = vunpack.c.h.b16 %v1014
      %v4524 = vunpack.c.l.b16 %v1015
      %v4525 = vunpack.c.h.b16 %v1015
      %v4526 = vunpack.c.l.b16 %v1016
      %v4527 = vunpack.c.h.b16 %v1016
      %v4528 = vunpack.c.l.b16 %v1017
      %v4529 = vunpack.c.h.b16 %v1017
      %v4530 = vunpack.c.l.b16 %v1018
      %v4531 = vunpack.c.h.b16 %v1018
      %v4532 = vunpack.c.l.b16 %v1019
      %v4533 = vunpack.c.h.b16 %v1019
      %v4534 = vunpack.c.l.b16 %v1020
      %v4535 = vunpack.c.h.b16 %v1020
      %v4536 = vunpack.c.l.b16 %v1021
      %v4537 = vunpack.c.h.b16 %v1021
      %v4538 = vunpack.c.l.b16 %v1022
      %v4539 = vunpack.c.h.b16 %v1022
      %v4540 = vunpack.c.l.b16 %v1023
      %v4541 = vunpack.c.h.b16 %v1023
      %v4542 = vunpack.c.l.b16 %v1024
      %v4543 = vunpack.c.h.b16 %v1024
      %v4544 = vunpack.c.l.b16 %v1025
      %v4545 = vunpack.c.h.b16 %v1025
      %v4546 = vunpack.c.l.b16 %v1026
      %v4547 = vunpack.c.h.b16 %v1026
      %v4548 = vunpack.c.l.b16 %v1027
      %v4549 = vunpack.c.h.b16 %v1027
      %v4550 = vunpack.c.l.b16 %v1028
      %v4551 = vunpack.c.h.b16 %v1028
      %v4552 = vunpack.c.l.b16 %v1029
      %v4553 = vunpack.c.h.b16 %v1029
      %v4554 = vunpack.c.l.b16 %v1030
      %v4555 = vunpack.c.h.b16 %v1030
      %v4556 = vunpack.c.l.b16 %v1031
      %v4557 = vunpack.c.h.b16 %v1031
      %v4558 = vunpack.c.l.b16 %v1032
      %v4559 = vunpack.c.h.b16 %v1032
      %v4560 = vunpack.c.l.b16 %v1033
      %v4561 = vunpack.c.h.b16 %v1033
      %v4562 = vunpack.c.l.b16 %v1034
      %v4563 = vunpack.c.h.b16 %v1034
      %v4564 = vunpack.c.l.b16 %v1035
      %v4565 = vunpack.c.h.b16 %v1035
      %v4566 = vunpack.c.l.b16 %v1036
      %v4567 = vunpack.c.h.b16 %v1036
      %v4568 = vunpack.c.l.b16 %v1037
      %v4569 = vunpack.c.h.b16 %v1037
      %v4570 = vunpack.c.l.b16 %v1038
      %v4571 = vunpack.c.h.b16 %v1038
      %v4572 = vunpack.c.l.b16 %v1039
      %v4573 = vunpack.c.h.b16 %v1039
      %v4574 = vunpack.c.l.b16 %v1040
      %v4575 = vunpack.c.h.b16 %v1040
      %v4576 = vunpack.c.l.b16 %v1041
      %v4577 = vunpack.c.h.b16 %v1041
      %v4578 = vunpack.c.l.b16 %v1042
      %v4579 = vunpack.c.h.b16 %v1042
      %v4580 = vunpack.c.l.b16 %v1043
      %v4581 = vunpack.c.h.b16 %v1043
      %v4582 = vunpack.c.l.b16 %v1044
      %v4583 = vunpack.c.h.b16 %v1044
      %v4584 = vunpack.c.l.b16 %v1045
      %v4585 = vunpack.c.h.b16 %v1045
      %v4586 = vunpack.c.l.b16 %v1046
      %v4587 = vunpack.c.h.b16 %v1046
      %v4588 = vunpack.c.l.b16 %v1047
      %v4589 = vunpack.c.h.b16 %v1047
      %v4590 = vunpack.c.l.b16 %v1048
      %v4591 = vunpack.c.h.b16 %v1048
      %v4592 = vunpack.c.l.b16 %v1049
      %v4593 = vunpack.c.h.b16 %v1049
      %v4594 = vunpack.c.l.b16 %v1050
      %v4595 = vunpack.c.h.b16 %v1050
      %v4596 = vunpack.c.l.b16 %v1051
      %v4597 = vunpack.c.h.b16 %v1051
      %v4598 = vunpack.c.l.b16 %v1052
      %v4599 = vunpack.c.h.b16 %v1052
      %v4600 = vunpack.c.l.b16 %v1053
      %v4601 = vunpack.c.h.b16 %v1053
      %v4602 = vunpack.c.l.b16 %v1054
      %v4603 = vunpack.c.h.b16 %v1054
      %v4604 = vunpack.c.l.b16 %v1055
      %v4605 = vunpack.c.h.b16 %v1055
      %v4606 = vunpack.c.l.b16 %v1056
      %v4607 = vunpack.c.h.b16 %v1056
      %v4608 = vunpack.c.l.b16 %v1057
      %v4609 = vunpack.c.h.b16 %v1057
      %v4610 = vunpack.c.l.b16 %v1058
      %v4611 = vunpack.c.h.b16 %v1058
      %v4612 = vunpack.c.l.b16 %v1059
      %v4613 = vunpack.c.h.b16 %v1059
      %v4614 = vunpack.c.l.b16 %v1060
      %v4615 = vunpack.c.h.b16 %v1060
      %v4616 = vunpack.c.l.b16 %v1061
      %v4617 = vunpack.c.h.b16 %v1061
      %v4618 = vunpack.c.l.b16 %v1062
      %v4619 = vunpack.c.h.b16 %v1062
      %v4620 = vunpack.c.l.b16 %v1063
      %v4621 = vunpack.c.h.b16 %v1063
      %v4622 = vunpack.c.l.b16 %v1064
      %v4623 = vunpack.c.h.b16 %v1064
      %v4624 = vunpack.c.l.b16 %v1065
      %v4625 = vunpack.c.h.b16 %v1065
      %v4626 = vunpack.c.l.b16 %v1066
      %v4627 = vunpack.c.h.b16 %v1066
      %v4628 = vunpack.c.l.b16 %v1067
      %v4629 = vunpack.c.h.b16 %v1067
      %v4630 = vunpack.c.l.b16 %v1068
      %v4631 = vunpack.c.h.b16 %v1068
      %v4632 = vunpack.c.l.b16 %v1069
      %v4633 = vunpack.c.h.b16 %v1069
      %v4634 = vunpack.c.l.b16 %v1070
      %v4635 = vunpack.c.h.b16 %v1070
      %v4636 = vunpack.c.l.b16 %v1071
      %v4637 = vunpack.c.h.b16 %v1071
      %v4638 = vunpack.c.l.b16 %v1072
      %v4639 = vunpack.c.h.b16 %v1072
      %v4640 = vunpack.c.l.b16 %v1073
      %v4641 = vunpack.c.h.b16 %v1073
      %v4642 = vunpack.c.l.b16 %v1074
      %v4643 = vunpack.c.h.b16 %v1074
      %v4644 = vunpack.c.l.b16 %v1075
      %v4645 = vunpack.c.h.b16 %v1075
      %v4646 = vunpack.c.l.b16 %v1076
      %v4647 = vunpack.c.h.b16 %v1076
      %v4648 = vunpack.c.l.b16 %v1077
      %v4649 = vunpack.c.h.b16 %v1077
      %v4650 = vunpack.c.l.b16 %v1078
      %v4651 = vunpack.c.h.b16 %v1078
      %v4652 = vunpack.c.l.b16 %v1079
      %v4653 = vunpack.c.h.b16 %v1079
      %v4654 = vunpack.c.l.b16 %v1080
      %v4655 = vunpack.c.h.b16 %v1080
      %v4656 = vunpack.c.l.b16 %v1081
      %v4657 = vunpack.c.h.b16 %v1081
      %v4658 = vunpack.c.l.b16 %v1082
      %v4659 = vunpack.c.h.b16 %v1082
      %v4660 = vunpack.c.l.b16 %v1083
      %v4661 = vunpack.c.h.b16 %v1083
      %v4662 = vunpack.c.l.b16 %v1084
      %v4663 = vunpack.c.h.b16 %v1084
      %v4664 = vunpack.c.l.b16 %v1085
      %v4665 = vunpack.c.h.b16 %v1085
      %v4666 = vunpack.c.l.b16 %v1086
      %v4667 = vunpack.c.h.b16 %v1086
      %v4668 = vunpack.c.l.b16 %v1087
      %v4669 = vunpack.c.h.b16 %v1087
      %v4670 = vunpack.c.l.b16 %v1088
      %v4671 = vunpack.c.h.b16 %v1088
      %v4672 = vunpack.c.l.b16 %v1089
      %v4673 = vunpack.c.h.b16 %v1089
      %v4674 = vunpack.c.l.b16 %v1090
      %v4675 = vunpack.c.h.b16 %v1090
      %v4676 = vunpack.c.l.b16 %v1091
      %v4677 = vunpack.c.h.b16 %v1091
      %v4678 = vunpack.c.l.b16 %v1092
      %v4679 = vunpack.c.h.b16 %v1092
      %v4680 = vunpack.c.l.b16 %v1093
      %v4681 = vunpack.c.h.b16 %v1093
      %v4682 = vunpack.c.l.b16 %v1094
      %v4683 = vunpack.c.h.b16 %v1094
      %v4684 = vunpack.c.l.b16 %v1095
      %v4685 = vunpack.c.h.b16 %v1095
      %v4686 = vunpack.c.l.b16 %v1096
      %v4687 = vunpack.c.h.b16 %v1096
      %v4688 = vunpack.c.l.b16 %v1097
      %v4689 = vunpack.c.h.b16 %v1097
      %v4690 = vpack.c.b16 %v4182, %v4178
      %v4691 = vpack.c.b16 %v4183, %v4179
      %v4692 = vpack.c.b16 %v4184, %v4180
      %v4693 = vpack.c.b16 %v4185, %v4181
      %v4694 = vpack.c.b16 %v4190, %v4186
      %v4695 = vpack.c.b16 %v4191, %v4187
      %v4696 = vpack.c.b16 %v4192, %v4188
      %v4697 = vpack.c.b16 %v4193, %v4189
      %v4698 = vpack.c.b16 %v4198, %v4194
      %v4699 = vpack.c.b16 %v4199, %v4195
      %v4700 = vpack.c.b16 %v4200, %v4196
      %v4701 = vpack.c.b16 %v4201, %v4197
      %v4702 = vpack.c.b16 %v4206, %v4202
      %v4703 = vpack.c.b16 %v4207, %v4203
      %v4704 = vpack.c.b16 %v4208, %v4204
      %v4705 = vpack.c.b16 %v4209, %v4205
      %v4706 = vpack.c.b16 %v4214, %v4210
      %v4707 = vpack.c.b16 %v4215, %v4211
      %v4708 = vpack.c.b16 %v4216, %v4212
      %v4709 = vpack.c.b16 %v4217, %v4213
      %v4710 = vpack.c.b16 %v4222, %v4218
      %v4711 = vpack.c.b16 %v4223, %v4219
      %v4712 = vpack.c.b16 %v4224, %v4220
      %v4713 = vpack.c.b16 %v4225, %v4221
      %v4714 = vpack.c.b16 %v4230, %v4226
      %v4715 = vpack.c.b16 %v4231, %v4227
      %v4716 = vpack.c.b16 %v4232, %v4228
      %v4717 = vpack.c.b16 %v4233, %v4229
      %v4718 = vpack.c.b16 %v4238, %v4234
      %v4719 = vpack.c.b16 %v4239, %v4235
      %v4720 = vpack.c.b16 %v4240, %v4236
      %v4721 = vpack.c.b16 %v4241, %v4237
      %v4722 = vpack.c.b16 %v4246, %v4242
      %v4723 = vpack.c.b16 %v4247, %v4243
      %v4724 = vpack.c.b16 %v4248, %v4244
      %v4725 = vpack.c.b16 %v4249, %v4245
      %v4726 = vpack.c.b16 %v4254, %v4250
      %v4727 = vpack.c.b16 %v4255, %v4251
      %v4728 = vpack.c.b16 %v4256, %v4252
      %v4729 = vpack.c.b16 %v4257, %v4253
      %v4730 = vpack.c.b16 %v4262, %v4258
      %v4731 = vpack.c.b16 %v4263, %v4259
      %v4732 = vpack.c.b16 %v4264, %v4260
      %v4733 = vpack.c.b16 %v4265, %v4261
      %v4734 = vpack.c.b16 %v4270, %v4266
      %v4735 = vpack.c.b16 %v4271, %v4267
      %v4736 = vpack.c.b16 %v4272, %v4268
      %v4737 = vpack.c.b16 %v4273, %v4269
      %v4738 = vpack.c.b16 %v4278, %v4274
      %v4739 = vpack.c.b16 %v4279, %v4275
      %v4740 = vpack.c.b16 %v4280, %v4276
      %v4741 = vpack.c.b16 %v4281, %v4277
      %v4742 = vpack.c.b16 %v4286, %v4282
      %v4743 = vpack.c.b16 %v4287, %v4283
      %v4744 = vpack.c.b16 %v4288, %v4284
      %v4745 = vpack.c.b16 %v4289, %v4285
      %v4746 = vpack.c.b16 %v4294, %v4290
      %v4747 = vpack.c.b16 %v4295, %v4291
      %v4748 = vpack.c.b16 %v4296, %v4292
      %v4749 = vpack.c.b16 %v4297, %v4293
      %v4750 = vpack.c.b16 %v4302, %v4298
      %v4751 = vpack.c.b16 %v4303, %v4299
      %v4752 = vpack.c.b16 %v4304, %v4300
      %v4753 = vpack.c.b16 %v4305, %v4301
      %v4754 = vpack.c.b16 %v4310, %v4306
      %v4755 = vpack.c.b16 %v4311, %v4307
      %v4756 = vpack.c.b16 %v4312, %v4308
      %v4757 = vpack.c.b16 %v4313, %v4309
      %v4758 = vpack.c.b16 %v4318, %v4314
      %v4759 = vpack.c.b16 %v4319, %v4315
      %v4760 = vpack.c.b16 %v4320, %v4316
      %v4761 = vpack.c.b16 %v4321, %v4317
      %v4762 = vpack.c.b16 %v4326, %v4322
      %v4763 = vpack.c.b16 %v4327, %v4323
      %v4764 = vpack.c.b16 %v4328, %v4324
      %v4765 = vpack.c.b16 %v4329, %v4325
      %v4766 = vpack.c.b16 %v4334, %v4330
      %v4767 = vpack.c.b16 %v4335, %v4331
      %v4768 = vpack.c.b16 %v4336, %v4332
      %v4769 = vpack.c.b16 %v4337, %v4333
      %v4770 = vpack.c.b16 %v4342, %v4338
      %v4771 = vpack.c.b16 %v4343, %v4339
      %v4772 = vpack.c.b16 %v4344, %v4340
      %v4773 = vpack.c.b16 %v4345, %v4341
      %v4774 = vpack.c.b16 %v4350, %v4346
      %v4775 = vpack.c.b16 %v4351, %v4347
      %v4776 = vpack.c.b16 %v4352, %v4348
      %v4777 = vpack.c.b16 %v4353, %v4349
      %v4778 = vpack.c.b16 %v4358, %v4354
      %v4779 = vpack.c.b16 %v4359, %v4355
      %v4780 = vpack.c.b16 %v4360, %v4356
      %v4781 = vpack.c.b16 %v4361, %v4357
      %v4782 = vpack.c.b16 %v4366, %v4362
      %v4783 = vpack.c.b16 %v4367, %v4363
      %v4784 = vpack.c.b16 %v4368, %v4364
      %v4785 = vpack.c.b16 %v4369, %v4365
      %v4786 = vpack.c.b16 %v4374, %v4370
      %v4787 = vpack.c.b16 %v4375, %v4371
      %v4788 = vpack.c.b16 %v4376, %v4372
      %v4789 = vpack.c.b16 %v4377, %v4373
      %v4790 = vpack.c.b16 %v4382, %v4378
      %v4791 = vpack.c.b16 %v4383, %v4379
      %v4792 = vpack.c.b16 %v4384, %v4380
      %v4793 = vpack.c.b16 %v4385, %v4381
      %v4794 = vpack.c.b16 %v4390, %v4386
      %v4795 = vpack.c.b16 %v4391, %v4387
      %v4796 = vpack.c.b16 %v4392, %v4388
      %v4797 = vpack.c.b16 %v4393, %v4389
      %v4798 = vpack.c.b16 %v4398, %v4394
      %v4799 = vpack.c.b16 %v4399, %v4395
      %v4800 = vpack.c.b16 %v4400, %v4396
      %v4801 = vpack.c.b16 %v4401, %v4397
      %v4802 = vpack.c.b16 %v4406, %v4402
      %v4803 = vpack.c.b16 %v4407, %v4403
      %v4804 = vpack.c.b16 %v4408, %v4404
      %v4805 = vpack.c.b16 %v4409, %v4405
      %v4806 = vpack.c.b16 %v4414, %v4410
      %v4807 = vpack.c.b16 %v4415, %v4411
      %v4808 = vpack.c.b16 %v4416, %v4412
      %v4809 = vpack.c.b16 %v4417, %v4413
      %v4810 = vpack.c.b16 %v4422, %v4418
      %v4811 = vpack.c.b16 %v4423, %v4419
      %v4812 = vpack.c.b16 %v4424, %v4420
      %v4813 = vpack.c.b16 %v4425, %v4421
      %v4814 = vpack.c.b16 %v4430, %v4426
      %v4815 = vpack.c.b16 %v4431, %v4427
      %v4816 = vpack.c.b16 %v4432, %v4428
      %v4817 = vpack.c.b16 %v4433, %v4429
      %v4818 = vpack.c.b16 %v4438, %v4434
      %v4819 = vpack.c.b16 %v4439, %v4435
      %v4820 = vpack.c.b16 %v4440, %v4436
      %v4821 = vpack.c.b16 %v4441, %v4437
      %v4822 = vpack.c.b16 %v4446, %v4442
      %v4823 = vpack.c.b16 %v4447, %v4443
      %v4824 = vpack.c.b16 %v4448, %v4444
      %v4825 = vpack.c.b16 %v4449, %v4445
      %v4826 = vpack.c.b16 %v4454, %v4450
      %v4827 = vpack.c.b16 %v4455, %v4451
      %v4828 = vpack.c.b16 %v4456, %v4452
      %v4829 = vpack.c.b16 %v4457, %v4453
      %v4830 = vpack.c.b16 %v4462, %v4458
      %v4831 = vpack.c.b16 %v4463, %v4459
      %v4832 = vpack.c.b16 %v4464, %v4460
      %v4833 = vpack.c.b16 %v4465, %v4461
      %v4834 = vpack.c.b16 %v4470, %v4466
      %v4835 = vpack.c.b16 %v4471, %v4467
      %v4836 = vpack.c.b16 %v4472, %v4468
      %v4837 = vpack.c.b16 %v4473, %v4469
      %v4838 = vpack.c.b16 %v4478, %v4474
      %v4839 = vpack.c.b16 %v4479, %v4475
      %v4840 = vpack.c.b16 %v4480, %v4476
      %v4841 = vpack.c.b16 %v4481, %v4477
      %v4842 = vpack.c.b16 %v4486, %v4482
      %v4843 = vpack.c.b16 %v4487, %v4483
      %v4844 = vpack.c.b16 %v4488, %v4484
      %v4845 = vpack.c.b16 %v4489, %v4485
      %v4846 = vpack.c.b16 %v4494, %v4490
      %v4847 = vpack.c.b16 %v4495, %v4491
      %v4848 = vpack.c.b16 %v4496, %v4492
      %v4849 = vpack.c.b16 %v4497, %v4493
      %v4850 = vpack.c.b16 %v4502, %v4498
      %v4851 = vpack.c.b16 %v4503, %v4499
      %v4852 = vpack.c.b16 %v4504, %v4500
      %v4853 = vpack.c.b16 %v4505, %v4501
      %v4854 = vpack.c.b16 %v4510, %v4506
      %v4855 = vpack.c.b16 %v4511, %v4507
      %v4856 = vpack.c.b16 %v4512, %v4508
      %v4857 = vpack.c.b16 %v4513, %v4509
      %v4858 = vpack.c.b16 %v4518, %v4514
      %v4859 = vpack.c.b16 %v4519, %v4515
      %v4860 = vpack.c.b16 %v4520, %v4516
      %v4861 = vpack.c.b16 %v4521, %v4517
      %v4862 = vpack.c.b16 %v4526, %v4522
      %v4863 = vpack.c.b16 %v4527, %v4523
      %v4864 = vpack.c.b16 %v4528, %v4524
      %v4865 = vpack.c.b16 %v4529, %v4525
      %v4866 = vpack.c.b16 %v4534, %v4530
      %v4867 = vpack.c.b16 %v4535, %v4531
      %v4868 = vpack.c.b16 %v4536, %v4532
      %v4869 = vpack.c.b16 %v4537, %v4533
      %v4870 = vpack.c.b16 %v4542, %v4538
      %v4871 = vpack.c.b16 %v4543, %v4539
      %v4872 = vpack.c.b16 %v4544, %v4540
      %v4873 = vpack.c.b16 %v4545, %v4541
      %v4874 = vpack.c.b16 %v4550, %v4546
      %v4875 = vpack.c.b16 %v4551, %v4547
      %v4876 = vpack.c.b16 %v4552, %v4548
      %v4877 = vpack.c.b16 %v4553, %v4549
      %v4878 = vpack.c.b16 %v4558, %v4554
      %v4879 = vpack.c.b16 %v4559, %v4555
      %v4880 = vpack.c.b16 %v4560, %v4556
      %v4881 = vpack.c.b16 %v4561, %v4557
      %v4882 = vpack.c.b16 %v4566, %v4562
      %v4883 = vpack.c.b16 %v4567, %v4563
      %v4884 = vpack.c.b16 %v4568, %v4564
      %v4885 = vpack.c.b16 %v4569, %v4565
      %v4886 = vpack.c.b16 %v4574, %v4570
      %v4887 = vpack.c.b16 %v4575, %v4571
      %v4888 = vpack.c.b16 %v4576, %v4572
      %v4889 = vpack.c.b16 %v4577, %v4573
      %v4890 = vpack.c.b16 %v4582, %v4578
      %v4891 = vpack.c.b16 %v4583, %v4579
      %v4892 = vpack.c.b16 %v4584, %v4580
      %v4893 = vpack.c.b16 %v4585, %v4581
      %v4894 = vpack.c.b16 %v4590, %v4586
      %v4895 = vpack.c.b16 %v4591, %v4587
      %v4896 = vpack.c.b16 %v4592, %v4588
      %v4897 = vpack.c.b16 %v4593, %v4589
      %v4898 = vpack.c.b16 %v4598, %v4594
      %v4899 = vpack.c.b16 %v4599, %v4595
      %v4900 = vpack.c.b16 %v4600, %v4596
      %v4901 = vpack.c.b16 %v4601, %v4597
      %v4902 = vpack.c.b16 %v4606, %v4602
      %v4903 = vpack.c.b16 %v4607, %v4603
      %v4904 = vpack.c.b16 %v4608, %v4604
      %v4905 = vpack.c.b16 %v4609, %v4605
      %v4906 = vpack.c.b16 %v4614, %v4610
      %v4907 = vpack.c.b16 %v4615, %v4611
      %v4908 = vpack.c.b16 %v4616, %v4612
      %v4909 = vpack.c.b16 %v4617, %v4613
      %v4910 = vpack.c.b16 %v4622, %v4618
      %v4911 = vpack.c.b16 %v4623, %v4619
      %v4912 = vpack.c.b16 %v4624, %v4620
      %v4913 = vpack.c.b16 %v4625, %v4621
      %v4914 = vpack.c.b16 %v4630, %v4626
      %v4915 = vpack.c.b16 %v4631, %v4627
      %v4916 = vpack.c.b16 %v4632, %v4628
      %v4917 = vpack.c.b16 %v4633, %v4629
      %v4918 = vpack.c.b16 %v4638, %v4634
      %v4919 = vpack.c.b16 %v4639, %v4635
      %v4920 = vpack.c.b16 %v4640, %v4636
      %v4921 = vpack.c.b16 %v4641, %v4637
      %v4922 = vpack.c.b16 %v4646, %v4642
      %v4923 = vpack.c.b16 %v4647, %v4643
      %v4924 = vpack.c.b16 %v4648, %v4644
      %v4925 = vpack.c.b16 %v4649, %v4645
      %v4926 = vpack.c.b16 %v4654, %v4650
      %v4927 = vpack.c.b16 %v4655, %v4651
      %v4928 = vpack.c.b16 %v4656, %v4652
      %v4929 = vpack.c.b16 %v4657, %v4653
      %v4930 = vpack.c.b16 %v4662, %v4658
      %v4931 = vpack.c.b16 %v4663, %v4659
      %v4932 = vpack.c.b16 %v4664, %v4660
      %v4933 = vpack.c.b16 %v4665, %v4661
      %v4934 = vpack.c.b16 %v4670, %v4666
      %v4935 = vpack.c.b16 %v4671, %v4667
      %v4936 = vpack.c.b16 %v4672, %v4668
      %v4937 = vpack.c.b16 %v4673, %v4669
      %v4938 = vpack.c.b16 %v4678, %v4674
      %v4939 = vpack.c.b16 %v4679, %v4675
      %v4940 = vpack.c.b16 %v4680, %v4676
      %v4941 = vpack.c.b16 %v4681, %v4677
      %v4942 = vpack.c.b16 %v4686, %v4682
      %v4943 = vpack.c.b16 %v4687, %v4683
      %v4944 = vpack.c.b16 %v4688, %v4684
      %v4945 = vpack.c.b16 %v4689, %v4685
      %5202 = vmatprep.subr.bf16.mxu0 0
      %5203 = vmatpush1.bf16.msra.mxu0 %v2512
      %5204 = vmatprep.subr.bf16.mxu0 0
      %5205 = vmatpush1.bf16.msra.mxu0 %v2513
      %5206 = vmatprep.subr.bf16.mxu0 0
      %5207 = vmatpush1.bf16.msra.mxu0 %v2514
      %5208 = vmatprep.subr.bf16.mxu0 0
      %5209 = vmatpush1.bf16.msra.mxu0 %v2515
      %5210 = vmatprep.subr.bf16.mxu0 0
      %5211 = vmatpush1.bf16.msra.mxu0 %v2516
      %5212 = vmatprep.subr.bf16.mxu0 0
      %5213 = vmatpush1.bf16.msra.mxu0 %v2517
      %5214 = vmatprep.subr.bf16.mxu0 0
      %5215 = vmatpush1.bf16.msra.mxu0 %v2518
      %5216 = vmatprep.subr.bf16.mxu0 0
      %5217 = vmatpush1.bf16.msra.mxu0 %v2519
      %5218 = vmatprep.subr.bf16.mxu0 0
      %5219 = vmatpush1.bf16.msra.mxu0 %v2520
      %5220 = vmatprep.subr.bf16.mxu0 0
      %5221 = vmatpush1.bf16.msra.mxu0 %v2521
      %5222 = vmatprep.subr.bf16.mxu0 0
      %5223 = vmatpush1.bf16.msra.mxu0 %v2522
      %5224 = vmatprep.subr.bf16.mxu0 0
      %5225 = vmatpush1.bf16.msra.mxu0 %v2523
      %5226 = vmatprep.subr.bf16.mxu0 0
      %5227 = vmatpush1.bf16.msra.mxu0 %v2524
      %5228 = vmatprep.subr.bf16.mxu0 0
      %5229 = vmatpush1.bf16.msra.mxu0 %v2525
      %5230 = vmatprep.subr.bf16.mxu0 0
      %5231 = vmatpush1.bf16.msra.mxu0 %v2526
      %5232 = vmatprep.subr.bf16.mxu0 0
      %5233 = vmatpush1.bf16.msra.mxu0 %v2527
      %5234 = vmatprep.mubr.bf16.mxu0 %v4691
      %5235 = vmatmul.mubr.bf16.gmra.mrb[0].mxu0 %v4690
      %v5236 = vpop.f32.mrb[0].mxu0
      %v5237 = vadd.f32 %v1102, %v5236
      %v5238 = vpop.f32.mrb[0].mxu0
      %v5239 = vpop.f32.mrb[0].mxu0
      %v5240 = vadd.f32 %v1102, %v5239
      %v5241 = vpop.f32.mrb[0].mxu0
      %5242 = vmatprep.mubr.bf16.mxu0 %v4695
      %5243 = vmatmul.mubr.bf16.gmra.mrb[0].mxu0 %v4694
      %v5244 = vpop.f32.mrb[0].mxu0
      %v5245 = vadd.f32 %v1102, %v5244
      %v5246 = vpop.f32.mrb[0].mxu0
      %v5247 = vpop.f32.mrb[0].mxu0
      %v5248 = vadd.f32 %v1102, %v5247
      %v5249 = vpop.f32.mrb[0].mxu0
      %5250 = vmatprep.mubr.bf16.mxu0 %v4699
      %5251 = vmatmul.mubr.bf16.gmra.mrb[0].mxu0 %v4698
      %v5252 = vpop.f32.mrb[0].mxu0
      %v5253 = vadd.f32 %v1102, %v5252
      %v5254 = vpop.f32.mrb[0].mxu0
      %v5255 = vpop.f32.mrb[0].mxu0
      %v5256 = vadd.f32 %v1102, %v5255
      %v5257 = vpop.f32.mrb[0].mxu0
      %5258 = vmatprep.mubr.bf16.mxu0 %v4703
      %5259 = vmatmul.mubr.bf16.gmra.mrb[0].mxu0 %v4702
      %v5260 = vpop.f32.mrb[0].mxu0
      %v5261 = vadd.f32 %v1102, %v5260
      %v5262 = vpop.f32.mrb[0].mxu0
      %v5263 = vpop.f32.mrb[0].mxu0
      %v5264 = vadd.f32 %v1102, %v5263
      %v5265 = vpop.f32.mrb[0].mxu0
      %5266 = vmatprep.mubr.bf16.mxu0 %v4707
      %5267 = vmatmul.mubr.bf16.gmra.mrb[0].mxu0 %v4706
      %v5268 = vpop.f32.mrb[0].mxu0
      %v5269 = vadd.f32 %v1102, %v5268
      %v5270 = vpop.f32.mrb[0].mxu0
      %v5271 = vpop.f32.mrb[0].mxu0
      %v5272 = vadd.f32 %v1102, %v5271
      %v5273 = vpop.f32.mrb[0].mxu0
      %5274 = vmatprep.mubr.bf16.mxu0 %v4711
      %5275 = vmatmul.mubr.bf16.gmra.mrb[0].mxu0 %v4710
      %v5276 = vpop.f32.mrb[0].mxu0
      %v5277 = vadd.f32 %v1102, %v5276
      %v5278 = vpop.f32.mrb[0].mxu0
      %v5279 = vpop.f32.mrb[0].mxu0
      %v5280 = vadd.f32 %v1102, %v5279
      %v5281 = vpop.f32.mrb[0].mxu0
      %5282 = vmatprep.mubr.bf16.mxu0 %v4715
      %5283 = vmatmul.mubr.bf16.gmra.mrb[0].mxu0 %v4714
      %v5284 = vpop.f32.mrb[0].mxu0
      %v5285 = vadd.f32 %v1102, %v5284
      %v5286 = vpop.f32.mrb[0].mxu0
      %v5287 = vpop.f32.mrb[0].mxu0
      %v5288 = vadd.f32 %v1102, %v5287
      %v5289 = vpop.f32.mrb[0].mxu0
      %5290 = vmatprep.mubr.bf16.mxu0 %v4719
      %5291 = vmatmul.mubr.bf16.gmra.mrb[0].mxu0 %v4718
      %v5292 = vpop.f32.mrb[0].mxu0
      %v5293 = vadd.f32 %v1102, %v5292
      %v5294 = vpop.f32.mrb[0].mxu0
      %v5295 = vpop.f32.mrb[0].mxu0
      %v5296 = vadd.f32 %v1102, %v5295
      %v5297 = vpop.f32.mrb[0].mxu0
      %5298 = vmatprep.mubr.bf16.mxu0 %v4723
      %5299 = vmatmul.mubr.bf16.gmra.mrb[0].mxu0 %v4722
      %v5300 = vpop.f32.mrb[0].mxu0
      %v5301 = vadd.f32 %v1102, %v5300
      %v5302 = vpop.f32.mrb[0].mxu0
      %v5303 = vpop.f32.mrb[0].mxu0
      %v5304 = vadd.f32 %v1102, %v5303
      %v5305 = vpop.f32.mrb[0].mxu0
      %5306 = vmatprep.mubr.bf16.mxu0 %v4727
      %5307 = vmatmul.mubr.bf16.gmra.mrb[0].mxu0 %v4726
      %v5308 = vpop.f32.mrb[0].mxu0
      %v5309 = vadd.f32 %v1102, %v5308
      %v5310 = vpop.f32.mrb[0].mxu0
      %v5311 = vpop.f32.mrb[0].mxu0
      %v5312 = vadd.f32 %v1102, %v5311
      %v5313 = vpop.f32.mrb[0].mxu0
      %5314 = vmatprep.mubr.bf16.mxu0 %v4731
      %5315 = vmatmul.mubr.bf16.gmra.mrb[0].mxu0 %v4730
      %v5316 = vpop.f32.mrb[0].mxu0
      %v5317 = vadd.f32 %v1102, %v5316
      %v5318 = vpop.f32.mrb[0].mxu0
      %v5319 = vpop.f32.mrb[0].mxu0
      %v5320 = vadd.f32 %v1102, %v5319
      %v5321 = vpop.f32.mrb[0].mxu0
      %5322 = vmatprep.mubr.bf16.mxu0 %v4735
      %5323 = vmatmul.mubr.bf16.gmra.mrb[0].mxu0 %v4734
      %v5324 = vpop.f32.mrb[0].mxu0
      %v5325 = vadd.f32 %v1102, %v5324
      %v5326 = vpop.f32.mrb[0].mxu0
      %v5327 = vpop.f32.mrb[0].mxu0
      %v5328 = vadd.f32 %v1102, %v5327
      %v5329 = vpop.f32.mrb[0].mxu0
      %5330 = vmatprep.mubr.bf16.mxu0 %v4739
      %5331 = vmatmul.mubr.bf16.gmra.mrb[0].mxu0 %v4738
      %v5332 = vpop.f32.mrb[0].mxu0
      %v5333 = vadd.f32 %v1102, %v5332
      %v5334 = vpop.f32.mrb[0].mxu0
      %v5335 = vpop.f32.mrb[0].mxu0
      %v5336 = vadd.f32 %v1102, %v5335
      %v5337 = vpop.f32.mrb[0].mxu0
      %5338 = vmatprep.mubr.bf16.mxu0 %v4743
      %5339 = vmatmul.mubr.bf16.gmra.mrb[0].mxu0 %v4742
      %v5340 = vpop.f32.mrb[0].mxu0
      %v5341 = vadd.f32 %v1102, %v5340
      %v5342 = vpop.f32.mrb[0].mxu0
      %v5343 = vpop.f32.mrb[0].mxu0
      %v5344 = vadd.f32 %v1102, %v5343
      %v5345 = vpop.f32.mrb[0].mxu0
      %5346 = vmatprep.mubr.bf16.mxu0 %v4747
      %5347 = vmatmul.mubr.bf16.gmra.mrb[0].mxu0 %v4746
      %v5348 = vpop.f32.mrb[0].mxu0
      %v5349 = vadd.f32 %v1102, %v5348
      %v5350 = vpop.f32.mrb[0].mxu0
      %v5351 = vpop.f32.mrb[0].mxu0
      %v5352 = vadd.f32 %v1102, %v5351
      %v5353 = vpop.f32.mrb[0].mxu0
      %5354 = vmatprep.mubr.bf16.mxu0 %v4751
      %5355 = vmatmul.mubr.bf16.gmra.mrb[0].mxu0 %v4750
      %v5356 = vpop.f32.mrb[0].mxu0
      %v5357 = vadd.f32 %v1102, %v5356
      %v5358 = vpop.f32.mrb[0].mxu0
      %v5359 = vpop.f32.mrb[0].mxu0
      %v5360 = vadd.f32 %v1102, %v5359
      %v5361 = vpop.f32.mrb[0].mxu0
      %5362 = vmatprep.mubr.bf16.mxu0 %v4755
      %5363 = vmatmul.mubr.bf16.gmra.mrb[0].mxu0 %v4754
      %v5364 = vpop.f32.mrb[0].mxu0
      %v5365 = vadd.f32 %v1102, %v5364
      %v5366 = vpop.f32.mrb[0].mxu0
      %v5367 = vpop.f32.mrb[0].mxu0
      %v5368 = vadd.f32 %v1102, %v5367
      %v5369 = vpop.f32.mrb[0].mxu0
      %5370 = vmatprep.mubr.bf16.mxu0 %v4759
      %5371 = vmatmul.mubr.bf16.gmra.mrb[0].mxu0 %v4758
      %v5372 = vpop.f32.mrb[0].mxu0
      %v5373 = vadd.f32 %v1102, %v5372
      %v5374 = vpop.f32.mrb[0].mxu0
      %v5375 = vpop.f32.mrb[0].mxu0
      %v5376 = vadd.f32 %v1102, %v5375
      %v5377 = vpop.f32.mrb[0].mxu0
      %5378 = vmatprep.mubr.bf16.mxu0 %v4763
      %5379 = vmatmul.mubr.bf16.gmra.mrb[0].mxu0 %v4762
      %v5380 = vpop.f32.mrb[0].mxu0
      %v5381 = vadd.f32 %v1102, %v5380
      %v5382 = vpop.f32.mrb[0].mxu0
      %v5383 = vpop.f32.mrb[0].mxu0
      %v5384 = vadd.f32 %v1102, %v5383
      %v5385 = vpop.f32.mrb[0].mxu0
      %5386 = vmatprep.mubr.bf16.mxu0 %v4767
      %5387 = vmatmul.mubr.bf16.gmra.mrb[0].mxu0 %v4766
      %v5388 = vpop.f32.mrb[0].mxu0
      %v5389 = vadd.f32 %v1102, %v5388
      %v5390 = vpop.f32.mrb[0].mxu0
      %v5391 = vpop.f32.mrb[0].mxu0
      %v5392 = vadd.f32 %v1102, %v5391
      %v5393 = vpop.f32.mrb[0].mxu0
      %5394 = vmatprep.mubr.bf16.mxu0 %v4771
      %5395 = vmatmul.mubr.bf16.gmra.mrb[0].mxu0 %v4770
      %v5396 = vpop.f32.mrb[0].mxu0
      %v5397 = vadd.f32 %v1102, %v5396
      %v5398 = vpop.f32.mrb[0].mxu0
      %v5399 = vpop.f32.mrb[0].mxu0
      %v5400 = vadd.f32 %v1102, %v5399
      %v5401 = vpop.f32.mrb[0].mxu0
      %5402 = vmatprep.mubr.bf16.mxu0 %v4775
      %5403 = vmatmul.mubr.bf16.gmra.mrb[0].mxu0 %v4774
      %v5404 = vpop.f32.mrb[0].mxu0
      %v5405 = vadd.f32 %v1102, %v5404
      %v5406 = vpop.f32.mrb[0].mxu0
      %v5407 = vpop.f32.mrb[0].mxu0
      %v5408 = vadd.f32 %v1102, %v5407
      %v5409 = vpop.f32.mrb[0].mxu0
      %5410 = vmatprep.mubr.bf16.mxu0 %v4779
      %5411 = vmatmul.mubr.bf16.gmra.mrb[0].mxu0 %v4778
      %v5412 = vpop.f32.mrb[0].mxu0
      %v5413 = vadd.f32 %v1102, %v5412
      %v5414 = vpop.f32.mrb[0].mxu0
      %v5415 = vpop.f32.mrb[0].mxu0
      %v5416 = vadd.f32 %v1102, %v5415
      %v5417 = vpop.f32.mrb[0].mxu0
      %5418 = vmatprep.mubr.bf16.mxu0 %v4783
      %5419 = vmatmul.mubr.bf16.gmra.mrb[0].mxu0 %v4782
      %v5420 = vpop.f32.mrb[0].mxu0
      %v5421 = vadd.f32 %v1102, %v5420
      %v5422 = vpop.f32.mrb[0].mxu0
      %v5423 = vpop.f32.mrb[0].mxu0
      %v5424 = vadd.f32 %v1102, %v5423
      %v5425 = vpop.f32.mrb[0].mxu0
      %5426 = vmatprep.mubr.bf16.mxu0 %v4787
      %5427 = vmatmul.mubr.bf16.gmra.mrb[0].mxu0 %v4786
      %v5428 = vpop.f32.mrb[0].mxu0
      %v5429 = vadd.f32 %v1102, %v5428
      %v5430 = vpop.f32.mrb[0].mxu0
      %v5431 = vpop.f32.mrb[0].mxu0
      %v5432 = vadd.f32 %v1102, %v5431
      %v5433 = vpop.f32.mrb[0].mxu0
      %5434 = vmatprep.mubr.bf16.mxu0 %v4791
      %5435 = vmatmul.mubr.bf16.gmra.mrb[0].mxu0 %v4790
      %v5436 = vpop.f32.mrb[0].mxu0
      %v5437 = vadd.f32 %v1102, %v5436
      %v5438 = vpop.f32.mrb[0].mxu0
      %v5439 = vpop.f32.mrb[0].mxu0
      %v5440 = vadd.f32 %v1102, %v5439
      %v5441 = vpop.f32.mrb[0].mxu0
      %5442 = vmatprep.mubr.bf16.mxu0 %v4795
      %5443 = vmatmul.mubr.bf16.gmra.mrb[0].mxu0 %v4794
      %v5444 = vpop.f32.mrb[0].mxu0
      %v5445 = vadd.f32 %v1102, %v5444
      %v5446 = vpop.f32.mrb[0].mxu0
      %v5447 = vpop.f32.mrb[0].mxu0
      %v5448 = vadd.f32 %v1102, %v5447
      %v5449 = vpop.f32.mrb[0].mxu0
      %5450 = vmatprep.mubr.bf16.mxu0 %v4799
      %5451 = vmatmul.mubr.bf16.gmra.mrb[0].mxu0 %v4798
      %v5452 = vpop.f32.mrb[0].mxu0
      %v5453 = vadd.f32 %v1102, %v5452
      %v5454 = vpop.f32.mrb[0].mxu0
      %v5455 = vpop.f32.mrb[0].mxu0
      %v5456 = vadd.f32 %v1102, %v5455
      %v5457 = vpop.f32.mrb[0].mxu0
      %5458 = vmatprep.mubr.bf16.mxu0 %v4803
      %5459 = vmatmul.mubr.bf16.gmra.mrb[0].mxu0 %v4802
      %v5460 = vpop.f32.mrb[0].mxu0
      %v5461 = vadd.f32 %v1102, %v5460
      %v5462 = vpop.f32.mrb[0].mxu0
      %v5463 = vpop.f32.mrb[0].mxu0
      %v5464 = vadd.f32 %v1102, %v5463
      %v5465 = vpop.f32.mrb[0].mxu0
      %5466 = vmatprep.mubr.bf16.mxu0 %v4807
      %5467 = vmatmul.mubr.bf16.gmra.mrb[0].mxu0 %v4806
      %v5468 = vpop.f32.mrb[0].mxu0
      %v5469 = vadd.f32 %v1102, %v5468
      %v5470 = vpop.f32.mrb[0].mxu0
      %v5471 = vpop.f32.mrb[0].mxu0
      %v5472 = vadd.f32 %v1102, %v5471
      %v5473 = vpop.f32.mrb[0].mxu0
      %5474 = vmatprep.mubr.bf16.mxu0 %v4811
      %5475 = vmatmul.mubr.bf16.gmra.mrb[0].mxu0 %v4810
      %v5476 = vpop.f32.mrb[0].mxu0
      %v5477 = vadd.f32 %v1102, %v5476
      %v5478 = vpop.f32.mrb[0].mxu0
      %v5479 = vpop.f32.mrb[0].mxu0
      %v5480 = vadd.f32 %v1102, %v5479
      %v5481 = vpop.f32.mrb[0].mxu0
      %5482 = vmatprep.mubr.bf16.mxu0 %v4815
      %5483 = vmatmul.mubr.bf16.gmra.mrb[0].mxu0 %v4814
      %v5484 = vpop.f32.mrb[0].mxu0
      %v5485 = vadd.f32 %v1102, %v5484
      %v5486 = vpop.f32.mrb[0].mxu0
      %v5487 = vpop.f32.mrb[0].mxu0
      %v5488 = vadd.f32 %v1102, %v5487
      %v5489 = vpop.f32.mrb[0].mxu0
      %5490 = vmatprep.mubr.bf16.mxu0 %v4819
      %5491 = vmatmul.mubr.bf16.gmra.mrb[0].mxu0 %v4818
      %v5492 = vpop.f32.mrb[0].mxu0
      %v5493 = vadd.f32 %v1102, %v5492
      %v5494 = vpop.f32.mrb[0].mxu0
      %v5495 = vpop.f32.mrb[0].mxu0
      %v5496 = vadd.f32 %v1102, %v5495
      %v5497 = vpop.f32.mrb[0].mxu0
      %5498 = vmatprep.mubr.bf16.mxu0 %v4823
      %5499 = vmatmul.mubr.bf16.gmra.mrb[0].mxu0 %v4822
      %v5500 = vpop.f32.mrb[0].mxu0
      %v5501 = vadd.f32 %v1102, %v5500
      %v5502 = vpop.f32.mrb[0].mxu0
      %v5503 = vpop.f32.mrb[0].mxu0
      %v5504 = vadd.f32 %v1102, %v5503
      %v5505 = vpop.f32.mrb[0].mxu0
      %5506 = vmatprep.mubr.bf16.mxu0 %v4827
      %5507 = vmatmul.mubr.bf16.gmra.mrb[0].mxu0 %v4826
      %v5508 = vpop.f32.mrb[0].mxu0
      %v5509 = vadd.f32 %v1102, %v5508
      %v5510 = vpop.f32.mrb[0].mxu0
      %v5511 = vpop.f32.mrb[0].mxu0
      %v5512 = vadd.f32 %v1102, %v5511
      %v5513 = vpop.f32.mrb[0].mxu0
      %5514 = vmatprep.mubr.bf16.mxu0 %v4831
      %5515 = vmatmul.mubr.bf16.gmra.mrb[0].mxu0 %v4830
      %v5516 = vpop.f32.mrb[0].mxu0
      %v5517 = vadd.f32 %v1102, %v5516
      %v5518 = vpop.f32.mrb[0].mxu0
      %v5519 = vpop.f32.mrb[0].mxu0
      %v5520 = vadd.f32 %v1102, %v5519
      %v5521 = vpop.f32.mrb[0].mxu0
      %5522 = vmatprep.mubr.bf16.mxu0 %v4835
      %5523 = vmatmul.mubr.bf16.gmra.mrb[0].mxu0 %v4834
      %v5524 = vpop.f32.mrb[0].mxu0
      %v5525 = vadd.f32 %v1102, %v5524
      %v5526 = vpop.f32.mrb[0].mxu0
      %v5527 = vpop.f32.mrb[0].mxu0
      %v5528 = vadd.f32 %v1102, %v5527
      %v5529 = vpop.f32.mrb[0].mxu0
      %5530 = vmatprep.mubr.bf16.mxu0 %v4839
      %5531 = vmatmul.mubr.bf16.gmra.mrb[0].mxu0 %v4838
      %v5532 = vpop.f32.mrb[0].mxu0
      %v5533 = vadd.f32 %v1102, %v5532
      %v5534 = vpop.f32.mrb[0].mxu0
      %v5535 = vpop.f32.mrb[0].mxu0
      %v5536 = vadd.f32 %v1102, %v5535
      %v5537 = vpop.f32.mrb[0].mxu0
      %5538 = vmatprep.mubr.bf16.mxu0 %v4843
      %5539 = vmatmul.mubr.bf16.gmra.mrb[0].mxu0 %v4842
      %v5540 = vpop.f32.mrb[0].mxu0
      %v5541 = vadd.f32 %v1102, %v5540
      %v5542 = vpop.f32.mrb[0].mxu0
      %v5543 = vpop.f32.mrb[0].mxu0
      %v5544 = vadd.f32 %v1102, %v5543
      %v5545 = vpop.f32.mrb[0].mxu0
      %5546 = vmatprep.mubr.bf16.mxu0 %v4847
      %5547 = vmatmul.mubr.bf16.gmra.mrb[0].mxu0 %v4846
      %v5548 = vpop.f32.mrb[0].mxu0
      %v5549 = vadd.f32 %v1102, %v5548
      %v5550 = vpop.f32.mrb[0].mxu0
      %v5551 = vpop.f32.mrb[0].mxu0
      %v5552 = vadd.f32 %v1102, %v5551
      %v5553 = vpop.f32.mrb[0].mxu0
      %5554 = vmatprep.mubr.bf16.mxu0 %v4851
      %5555 = vmatmul.mubr.bf16.gmra.mrb[0].mxu0 %v4850
      %v5556 = vpop.f32.mrb[0].mxu0
      %v5557 = vadd.f32 %v1102, %v5556
      %v5558 = vpop.f32.mrb[0].mxu0
      %v5559 = vpop.f32.mrb[0].mxu0
      %v5560 = vadd.f32 %v1102, %v5559
      %v5561 = vpop.f32.mrb[0].mxu0
      %5562 = vmatprep.mubr.bf16.mxu0 %v4855
      %5563 = vmatmul.mubr.bf16.gmra.mrb[0].mxu0 %v4854
      %v5564 = vpop.f32.mrb[0].mxu0
      %v5565 = vadd.f32 %v1102, %v5564
      %v5566 = vpop.f32.mrb[0].mxu0
      %v5567 = vpop.f32.mrb[0].mxu0
      %v5568 = vadd.f32 %v1102, %v5567
      %v5569 = vpop.f32.mrb[0].mxu0
      %5570 = vmatprep.mubr.bf16.mxu0 %v4859
      %5571 = vmatmul.mubr.bf16.gmra.mrb[0].mxu0 %v4858
      %v5572 = vpop.f32.mrb[0].mxu0
      %v5573 = vadd.f32 %v1102, %v5572
      %v5574 = vpop.f32.mrb[0].mxu0
      %v5575 = vpop.f32.mrb[0].mxu0
      %v5576 = vadd.f32 %v1102, %v5575
      %v5577 = vpop.f32.mrb[0].mxu0
      %5578 = vmatprep.mubr.bf16.mxu0 %v4863
      %5579 = vmatmul.mubr.bf16.gmra.mrb[0].mxu0 %v4862
      %v5580 = vpop.f32.mrb[0].mxu0
      %v5581 = vadd.f32 %v1102, %v5580
      %v5582 = vpop.f32.mrb[0].mxu0
      %v5583 = vpop.f32.mrb[0].mxu0
      %v5584 = vadd.f32 %v1102, %v5583
      %v5585 = vpop.f32.mrb[0].mxu0
      %5586 = vmatprep.mubr.bf16.mxu0 %v4867
      %5587 = vmatmul.mubr.bf16.gmra.mrb[0].mxu0 %v4866
      %v5588 = vpop.f32.mrb[0].mxu0
      %v5589 = vadd.f32 %v1102, %v5588
      %v5590 = vpop.f32.mrb[0].mxu0
      %v5591 = vpop.f32.mrb[0].mxu0
      %v5592 = vadd.f32 %v1102, %v5591
      %v5593 = vpop.f32.mrb[0].mxu0
      %5594 = vmatprep.mubr.bf16.mxu0 %v4871
      %5595 = vmatmul.mubr.bf16.gmra.mrb[0].mxu0 %v4870
      %v5596 = vpop.f32.mrb[0].mxu0
      %v5597 = vadd.f32 %v1102, %v5596
      %v5598 = vpop.f32.mrb[0].mxu0
      %v5599 = vpop.f32.mrb[0].mxu0
      %v5600 = vadd.f32 %v1102, %v5599
      %v5601 = vpop.f32.mrb[0].mxu0
      %5602 = vmatprep.mubr.bf16.mxu0 %v4875
      %5603 = vmatmul.mubr.bf16.gmra.mrb[0].mxu0 %v4874
      %v5604 = vpop.f32.mrb[0].mxu0
      %v5605 = vadd.f32 %v1102, %v5604
      %v5606 = vpop.f32.mrb[0].mxu0
      %v5607 = vpop.f32.mrb[0].mxu0
      %v5608 = vadd.f32 %v1102, %v5607
      %v5609 = vpop.f32.mrb[0].mxu0
      %5610 = vmatprep.mubr.bf16.mxu0 %v4879
      %5611 = vmatmul.mubr.bf16.gmra.mrb[0].mxu0 %v4878
      %v5612 = vpop.f32.mrb[0].mxu0
      %v5613 = vadd.f32 %v1102, %v5612
      %v5614 = vpop.f32.mrb[0].mxu0
      %v5615 = vpop.f32.mrb[0].mxu0
      %v5616 = vadd.f32 %v1102, %v5615
      %v5617 = vpop.f32.mrb[0].mxu0
      %5618 = vmatprep.mubr.bf16.mxu0 %v4883
      %5619 = vmatmul.mubr.bf16.gmra.mrb[0].mxu0 %v4882
      %v5620 = vpop.f32.mrb[0].mxu0
      %v5621 = vadd.f32 %v1102, %v5620
      %v5622 = vpop.f32.mrb[0].mxu0
      %v5623 = vpop.f32.mrb[0].mxu0
      %v5624 = vadd.f32 %v1102, %v5623
      %v5625 = vpop.f32.mrb[0].mxu0
      %5626 = vmatprep.mubr.bf16.mxu0 %v4887
      %5627 = vmatmul.mubr.bf16.gmra.mrb[0].mxu0 %v4886
      %v5628 = vpop.f32.mrb[0].mxu0
      %v5629 = vadd.f32 %v1102, %v5628
      %v5630 = vpop.f32.mrb[0].mxu0
      %v5631 = vpop.f32.mrb[0].mxu0
      %v5632 = vadd.f32 %v1102, %v5631
      %v5633 = vpop.f32.mrb[0].mxu0
      %5634 = vmatprep.mubr.bf16.mxu0 %v4891
      %5635 = vmatmul.mubr.bf16.gmra.mrb[0].mxu0 %v4890
      %v5636 = vpop.f32.mrb[0].mxu0
      %v5637 = vadd.f32 %v1102, %v5636
      %v5638 = vpop.f32.mrb[0].mxu0
      %v5639 = vpop.f32.mrb[0].mxu0
      %v5640 = vadd.f32 %v1102, %v5639
      %v5641 = vpop.f32.mrb[0].mxu0
      %5642 = vmatprep.mubr.bf16.mxu0 %v4895
      %5643 = vmatmul.mubr.bf16.gmra.mrb[0].mxu0 %v4894
      %v5644 = vpop.f32.mrb[0].mxu0
      %v5645 = vadd.f32 %v1102, %v5644
      %v5646 = vpop.f32.mrb[0].mxu0
      %v5647 = vpop.f32.mrb[0].mxu0
      %v5648 = vadd.f32 %v1102, %v5647
      %v5649 = vpop.f32.mrb[0].mxu0
      %5650 = vmatprep.mubr.bf16.mxu0 %v4899
      %5651 = vmatmul.mubr.bf16.gmra.mrb[0].mxu0 %v4898
      %v5652 = vpop.f32.mrb[0].mxu0
      %v5653 = vadd.f32 %v1102, %v5652
      %v5654 = vpop.f32.mrb[0].mxu0
      %v5655 = vpop.f32.mrb[0].mxu0
      %v5656 = vadd.f32 %v1102, %v5655
      %v5657 = vpop.f32.mrb[0].mxu0
      %5658 = vmatprep.mubr.bf16.mxu0 %v4903
      %5659 = vmatmul.mubr.bf16.gmra.mrb[0].mxu0 %v4902
      %v5660 = vpop.f32.mrb[0].mxu0
      %v5661 = vadd.f32 %v1102, %v5660
      %v5662 = vpop.f32.mrb[0].mxu0
      %v5663 = vpop.f32.mrb[0].mxu0
      %v5664 = vadd.f32 %v1102, %v5663
      %v5665 = vpop.f32.mrb[0].mxu0
      %5666 = vmatprep.mubr.bf16.mxu0 %v4907
      %5667 = vmatmul.mubr.bf16.gmra.mrb[0].mxu0 %v4906
      %v5668 = vpop.f32.mrb[0].mxu0
      %v5669 = vadd.f32 %v1102, %v5668
      %v5670 = vpop.f32.mrb[0].mxu0
      %v5671 = vpop.f32.mrb[0].mxu0
      %v5672 = vadd.f32 %v1102, %v5671
      %v5673 = vpop.f32.mrb[0].mxu0
      %5674 = vmatprep.mubr.bf16.mxu0 %v4911
      %5675 = vmatmul.mubr.bf16.gmra.mrb[0].mxu0 %v4910
      %v5676 = vpop.f32.mrb[0].mxu0
      %v5677 = vadd.f32 %v1102, %v5676
      %v5678 = vpop.f32.mrb[0].mxu0
      %v5679 = vpop.f32.mrb[0].mxu0
      %v5680 = vadd.f32 %v1102, %v5679
      %v5681 = vpop.f32.mrb[0].mxu0
      %5682 = vmatprep.mubr.bf16.mxu0 %v4915
      %5683 = vmatmul.mubr.bf16.gmra.mrb[0].mxu0 %v4914
      %v5684 = vpop.f32.mrb[0].mxu0
      %v5685 = vadd.f32 %v1102, %v5684
      %v5686 = vpop.f32.mrb[0].mxu0
      %v5687 = vpop.f32.mrb[0].mxu0
      %v5688 = vadd.f32 %v1102, %v5687
      %v5689 = vpop.f32.mrb[0].mxu0
      %5690 = vmatprep.mubr.bf16.mxu0 %v4919
      %5691 = vmatmul.mubr.bf16.gmra.mrb[0].mxu0 %v4918
      %v5692 = vpop.f32.mrb[0].mxu0
      %v5693 = vadd.f32 %v1102, %v5692
      %v5694 = vpop.f32.mrb[0].mxu0
      %v5695 = vpop.f32.mrb[0].mxu0
      %v5696 = vadd.f32 %v1102, %v5695
      %v5697 = vpop.f32.mrb[0].mxu0
      %5698 = vmatprep.mubr.bf16.mxu0 %v4923
      %5699 = vmatmul.mubr.bf16.gmra.mrb[0].mxu0 %v4922
      %v5700 = vpop.f32.mrb[0].mxu0
      %v5701 = vadd.f32 %v1102, %v5700
      %v5702 = vpop.f32.mrb[0].mxu0
      %v5703 = vpop.f32.mrb[0].mxu0
      %v5704 = vadd.f32 %v1102, %v5703
      %v5705 = vpop.f32.mrb[0].mxu0
      %5706 = vmatprep.mubr.bf16.mxu0 %v4927
      %5707 = vmatmul.mubr.bf16.gmra.mrb[0].mxu0 %v4926
      %v5708 = vpop.f32.mrb[0].mxu0
      %v5709 = vadd.f32 %v1102, %v5708
      %v5710 = vpop.f32.mrb[0].mxu0
      %v5711 = vpop.f32.mrb[0].mxu0
      %v5712 = vadd.f32 %v1102, %v5711
      %v5713 = vpop.f32.mrb[0].mxu0
      %5714 = vmatprep.mubr.bf16.mxu0 %v4931
      %5715 = vmatmul.mubr.bf16.gmra.mrb[0].mxu0 %v4930
      %v5716 = vpop.f32.mrb[0].mxu0
      %v5717 = vadd.f32 %v1102, %v5716
      %v5718 = vpop.f32.mrb[0].mxu0
      %v5719 = vpop.f32.mrb[0].mxu0
      %v5720 = vadd.f32 %v1102, %v5719
      %v5721 = vpop.f32.mrb[0].mxu0
      %5722 = vmatprep.mubr.bf16.mxu0 %v4935
      %5723 = vmatmul.mubr.bf16.gmra.mrb[0].mxu0 %v4934
      %v5724 = vpop.f32.mrb[0].mxu0
      %v5725 = vadd.f32 %v1102, %v5724
      %v5726 = vpop.f32.mrb[0].mxu0
      %v5727 = vpop.f32.mrb[0].mxu0
      %v5728 = vadd.f32 %v1102, %v5727
      %v5729 = vpop.f32.mrb[0].mxu0
      %5730 = vmatprep.mubr.bf16.mxu0 %v4939
      %5731 = vmatmul.mubr.bf16.gmra.mrb[0].mxu0 %v4938
      %v5732 = vpop.f32.mrb[0].mxu0
      %v5733 = vadd.f32 %v1102, %v5732
      %v5734 = vpop.f32.mrb[0].mxu0
      %v5735 = vpop.f32.mrb[0].mxu0
      %v5736 = vadd.f32 %v1102, %v5735
      %v5737 = vpop.f32.mrb[0].mxu0
      %5738 = vmatprep.mubr.bf16.mxu0 %v4943
      %5739 = vmatmul.mubr.bf16.gmra.mrb[0].mxu0 %v4942
      %v5740 = vpop.f32.mrb[0].mxu0
      %v5741 = vadd.f32 %v1102, %v5740
      %v5742 = vpop.f32.mrb[0].mxu0
      %v5743 = vpop.f32.mrb[0].mxu0
      %v5744 = vadd.f32 %v1102, %v5743
      %v5745 = vpop.f32.mrb[0].mxu0
      %5746 = vdwg.mxu0
      %5747 = vmatprep.subr.bf16.mxu0 0
      %5748 = vmatpush1.bf16.msra.mxu0 %v2528
      %5749 = vmatprep.subr.bf16.mxu0 0
      %5750 = vmatpush1.bf16.msra.mxu0 %v2529
      %5751 = vmatprep.subr.bf16.mxu0 0
      %5752 = vmatpush1.bf16.msra.mxu0 %v2530
      %5753 = vmatprep.subr.bf16.mxu0 0
      %5754 = vmatpush1.bf16.msra.mxu0 %v2531
      %5755 = vmatprep.subr.bf16.mxu0 0
      %5756 = vmatpush1.bf16.msra.mxu0 %v2532
      %5757 = vmatprep.subr.bf16.mxu0 0
      %5758 = vmatpush1.bf16.msra.mxu0 %v2533
      %5759 = vmatprep.subr.bf16.mxu0 0
      %5760 = vmatpush1.bf16.msra.mxu0 %v2534
      %5761 = vmatprep.subr.bf16.mxu0 0
      %5762 = vmatpush1.bf16.msra.mxu0 %v2535
      %5763 = vmatprep.subr.bf16.mxu0 0
      %5764 = vmatpush1.bf16.msra.mxu0 %v2536
      %5765 = vmatprep.subr.bf16.mxu0 0
      %5766 = vmatpush1.bf16.msra.mxu0 %v2537
      %5767 = vmatprep.subr.bf16.mxu0 0
      %5768 = vmatpush1.bf16.msra.mxu0 %v2538
      %5769 = vmatprep.subr.bf16.mxu0 0
      %5770 = vmatpush1.bf16.msra.mxu0 %v2539
      %5771 = vmatprep.subr.bf16.mxu0 0
      %5772 = vmatpush1.bf16.msra.mxu0 %v2540
      %5773 = vmatprep.subr.bf16.mxu0 0
      %5774 = vmatpush1.bf16.msra.mxu0 %v2541
      %5775 = vmatprep.subr.bf16.mxu0 0
      %5776 = vmatpush1.bf16.msra.mxu0 %v2542
      %5777 = vmatprep.subr.bf16.mxu0 0
      %5778 = vmatpush1.bf16.msra.mxu0 %v2543
      %5779 = vmatprep.mubr.bf16.mxu0 %v4693
      %5780 = vmatmul.mubr.bf16.gmra.mrb[0].mxu0 %v4692
      %v5781 = vpop.f32.mrb[0].mxu0
      %v5782 = vadd.f32 %v5237, %v5781
      %v5783 = vpop.f32.mrb[0].mxu0
      %v5784 = vpop.f32.mrb[0].mxu0
      %v5785 = vadd.f32 %v5240, %v5784
      %v5786 = vpop.f32.mrb[0].mxu0
      %5787 = vmatprep.mubr.bf16.mxu0 %v4697
      %5788 = vmatmul.mubr.bf16.gmra.mrb[0].mxu0 %v4696
      %v5789 = vpop.f32.mrb[0].mxu0
      %v5790 = vadd.f32 %v5245, %v5789
      %v5791 = vpop.f32.mrb[0].mxu0
      %v5792 = vpop.f32.mrb[0].mxu0
      %v5793 = vadd.f32 %v5248, %v5792
      %v5794 = vpop.f32.mrb[0].mxu0
      %5795 = vmatprep.mubr.bf16.mxu0 %v4701
      %5796 = vmatmul.mubr.bf16.gmra.mrb[0].mxu0 %v4700
      %v5797 = vpop.f32.mrb[0].mxu0
      %v5798 = vadd.f32 %v5253, %v5797
      %v5799 = vpop.f32.mrb[0].mxu0
      %v5800 = vpop.f32.mrb[0].mxu0
      %v5801 = vadd.f32 %v5256, %v5800
      %v5802 = vpop.f32.mrb[0].mxu0
      %5803 = vmatprep.mubr.bf16.mxu0 %v4705
      %5804 = vmatmul.mubr.bf16.gmra.mrb[0].mxu0 %v4704
      %v5805 = vpop.f32.mrb[0].mxu0
      %v5806 = vadd.f32 %v5261, %v5805
      %v5807 = vpop.f32.mrb[0].mxu0
      %v5808 = vpop.f32.mrb[0].mxu0
      %v5809 = vadd.f32 %v5264, %v5808
      %v5810 = vpop.f32.mrb[0].mxu0
      %5811 = vmatprep.mubr.bf16.mxu0 %v4709
      %5812 = vmatmul.mubr.bf16.gmra.mrb[0].mxu0 %v4708
      %v5813 = vpop.f32.mrb[0].mxu0
      %v5814 = vadd.f32 %v5269, %v5813
      %v5815 = vpop.f32.mrb[0].mxu0
      %v5816 = vpop.f32.mrb[0].mxu0
      %v5817 = vadd.f32 %v5272, %v5816
      %v5818 = vpop.f32.mrb[0].mxu0
      %5819 = vmatprep.mubr.bf16.mxu0 %v4713
      %5820 = vmatmul.mubr.bf16.gmra.mrb[0].mxu0 %v4712
      %v5821 = vpop.f32.mrb[0].mxu0
      %v5822 = vadd.f32 %v5277, %v5821
      %v5823 = vpop.f32.mrb[0].mxu0
      %v5824 = vpop.f32.mrb[0].mxu0
      %v5825 = vadd.f32 %v5280, %v5824
      %v5826 = vpop.f32.mrb[0].mxu0
      %5827 = vmatprep.mubr.bf16.mxu0 %v4717
      %5828 = vmatmul.mubr.bf16.gmra.mrb[0].mxu0 %v4716
      %v5829 = vpop.f32.mrb[0].mxu0
      %v5830 = vadd.f32 %v5285, %v5829
      %v5831 = vpop.f32.mrb[0].mxu0
      %v5832 = vpop.f32.mrb[0].mxu0
      %v5833 = vadd.f32 %v5288, %v5832
      %v5834 = vpop.f32.mrb[0].mxu0
      %5835 = vmatprep.mubr.bf16.mxu0 %v4721
      %5836 = vmatmul.mubr.bf16.gmra.mrb[0].mxu0 %v4720
      %v5837 = vpop.f32.mrb[0].mxu0
      %v5838 = vadd.f32 %v5293, %v5837
      %v5839 = vpop.f32.mrb[0].mxu0
      %v5840 = vpop.f32.mrb[0].mxu0
      %v5841 = vadd.f32 %v5296, %v5840
      %v5842 = vpop.f32.mrb[0].mxu0
      %5843 = vmatprep.mubr.bf16.mxu0 %v4725
      %5844 = vmatmul.mubr.bf16.gmra.mrb[0].mxu0 %v4724
      %v5845 = vpop.f32.mrb[0].mxu0
      %v5846 = vadd.f32 %v5301, %v5845
      %v5847 = vpop.f32.mrb[0].mxu0
      %v5848 = vpop.f32.mrb[0].mxu0
      %v5849 = vadd.f32 %v5304, %v5848
      %v5850 = vpop.f32.mrb[0].mxu0
      %5851 = vmatprep.mubr.bf16.mxu0 %v4729
      %5852 = vmatmul.mubr.bf16.gmra.mrb[0].mxu0 %v4728
      %v5853 = vpop.f32.mrb[0].mxu0
      %v5854 = vadd.f32 %v5309, %v5853
      %v5855 = vpop.f32.mrb[0].mxu0
      %v5856 = vpop.f32.mrb[0].mxu0
      %v5857 = vadd.f32 %v5312, %v5856
      %v5858 = vpop.f32.mrb[0].mxu0
      %5859 = vmatprep.mubr.bf16.mxu0 %v4733
      %5860 = vmatmul.mubr.bf16.gmra.mrb[0].mxu0 %v4732
      %v5861 = vpop.f32.mrb[0].mxu0
      %v5862 = vadd.f32 %v5317, %v5861
      %v5863 = vpop.f32.mrb[0].mxu0
      %v5864 = vpop.f32.mrb[0].mxu0
      %v5865 = vadd.f32 %v5320, %v5864
      %v5866 = vpop.f32.mrb[0].mxu0
      %5867 = vmatprep.mubr.bf16.mxu0 %v4737
      %5868 = vmatmul.mubr.bf16.gmra.mrb[0].mxu0 %v4736
      %v5869 = vpop.f32.mrb[0].mxu0
      %v5870 = vadd.f32 %v5325, %v5869
      %v5871 = vpop.f32.mrb[0].mxu0
      %v5872 = vpop.f32.mrb[0].mxu0
      %v5873 = vadd.f32 %v5328, %v5872
      %v5874 = vpop.f32.mrb[0].mxu0
      %5875 = vmatprep.mubr.bf16.mxu0 %v4741
      %5876 = vmatmul.mubr.bf16.gmra.mrb[0].mxu0 %v4740
      %v5877 = vpop.f32.mrb[0].mxu0
      %v5878 = vadd.f32 %v5333, %v5877
      %v5879 = vpop.f32.mrb[0].mxu0
      %v5880 = vpop.f32.mrb[0].mxu0
      %v5881 = vadd.f32 %v5336, %v5880
      %v5882 = vpop.f32.mrb[0].mxu0
      %5883 = vmatprep.mubr.bf16.mxu0 %v4745
      %5884 = vmatmul.mubr.bf16.gmra.mrb[0].mxu0 %v4744
      %v5885 = vpop.f32.mrb[0].mxu0
      %v5886 = vadd.f32 %v5341, %v5885
      %v5887 = vpop.f32.mrb[0].mxu0
      %v5888 = vpop.f32.mrb[0].mxu0
      %v5889 = vadd.f32 %v5344, %v5888
      %v5890 = vpop.f32.mrb[0].mxu0
      %5891 = vmatprep.mubr.bf16.mxu0 %v4749
      %5892 = vmatmul.mubr.bf16.gmra.mrb[0].mxu0 %v4748
      %v5893 = vpop.f32.mrb[0].mxu0
      %v5894 = vadd.f32 %v5349, %v5893
      %v5895 = vpop.f32.mrb[0].mxu0
      %v5896 = vpop.f32.mrb[0].mxu0
      %v5897 = vadd.f32 %v5352, %v5896
      %v5898 = vpop.f32.mrb[0].mxu0
      %5899 = vmatprep.mubr.bf16.mxu0 %v4753
      %5900 = vmatmul.mubr.bf16.gmra.mrb[0].mxu0 %v4752
      %v5901 = vpop.f32.mrb[0].mxu0
      %v5902 = vadd.f32 %v5357, %v5901
      %v5903 = vpop.f32.mrb[0].mxu0
      %v5904 = vpop.f32.mrb[0].mxu0
      %v5905 = vadd.f32 %v5360, %v5904
      %v5906 = vpop.f32.mrb[0].mxu0
      %5907 = vmatprep.mubr.bf16.mxu0 %v4757
      %5908 = vmatmul.mubr.bf16.gmra.mrb[0].mxu0 %v4756
      %v5909 = vpop.f32.mrb[0].mxu0
      %v5910 = vadd.f32 %v5365, %v5909
      %v5911 = vpop.f32.mrb[0].mxu0
      %v5912 = vpop.f32.mrb[0].mxu0
      %v5913 = vadd.f32 %v5368, %v5912
      %v5914 = vpop.f32.mrb[0].mxu0
      %5915 = vmatprep.mubr.bf16.mxu0 %v4761
      %5916 = vmatmul.mubr.bf16.gmra.mrb[0].mxu0 %v4760
      %v5917 = vpop.f32.mrb[0].mxu0
      %v5918 = vadd.f32 %v5373, %v5917
      %v5919 = vpop.f32.mrb[0].mxu0
      %v5920 = vpop.f32.mrb[0].mxu0
      %v5921 = vadd.f32 %v5376, %v5920
      %v5922 = vpop.f32.mrb[0].mxu0
      %5923 = vmatprep.mubr.bf16.mxu0 %v4765
      %5924 = vmatmul.mubr.bf16.gmra.mrb[0].mxu0 %v4764
      %v5925 = vpop.f32.mrb[0].mxu0
      %v5926 = vadd.f32 %v5381, %v5925
      %v5927 = vpop.f32.mrb[0].mxu0
      %v5928 = vpop.f32.mrb[0].mxu0
      %v5929 = vadd.f32 %v5384, %v5928
      %v5930 = vpop.f32.mrb[0].mxu0
      %5931 = vmatprep.mubr.bf16.mxu0 %v4769
      %5932 = vmatmul.mubr.bf16.gmra.mrb[0].mxu0 %v4768
      %v5933 = vpop.f32.mrb[0].mxu0
      %v5934 = vadd.f32 %v5389, %v5933
      %v5935 = vpop.f32.mrb[0].mxu0
      %v5936 = vpop.f32.mrb[0].mxu0
      %v5937 = vadd.f32 %v5392, %v5936
      %v5938 = vpop.f32.mrb[0].mxu0
      %5939 = vmatprep.mubr.bf16.mxu0 %v4773
      %5940 = vmatmul.mubr.bf16.gmra.mrb[0].mxu0 %v4772
      %v5941 = vpop.f32.mrb[0].mxu0
      %v5942 = vadd.f32 %v5397, %v5941
      %v5943 = vpop.f32.mrb[0].mxu0
      %v5944 = vpop.f32.mrb[0].mxu0
      %v5945 = vadd.f32 %v5400, %v5944
      %v5946 = vpop.f32.mrb[0].mxu0
      %5947 = vmatprep.mubr.bf16.mxu0 %v4777
      %5948 = vmatmul.mubr.bf16.gmra.mrb[0].mxu0 %v4776
      %v5949 = vpop.f32.mrb[0].mxu0
      %v5950 = vadd.f32 %v5405, %v5949
      %v5951 = vpop.f32.mrb[0].mxu0
      %v5952 = vpop.f32.mrb[0].mxu0
      %v5953 = vadd.f32 %v5408, %v5952
      %v5954 = vpop.f32.mrb[0].mxu0
      %5955 = vmatprep.mubr.bf16.mxu0 %v4781
      %5956 = vmatmul.mubr.bf16.gmra.mrb[0].mxu0 %v4780
      %v5957 = vpop.f32.mrb[0].mxu0
      %v5958 = vadd.f32 %v5413, %v5957
      %v5959 = vpop.f32.mrb[0].mxu0
      %v5960 = vpop.f32.mrb[0].mxu0
      %v5961 = vadd.f32 %v5416, %v5960
      %v5962 = vpop.f32.mrb[0].mxu0
      %5963 = vmatprep.mubr.bf16.mxu0 %v4785
      %5964 = vmatmul.mubr.bf16.gmra.mrb[0].mxu0 %v4784
      %v5965 = vpop.f32.mrb[0].mxu0
      %v5966 = vadd.f32 %v5421, %v5965
      %v5967 = vpop.f32.mrb[0].mxu0
      %v5968 = vpop.f32.mrb[0].mxu0
      %v5969 = vadd.f32 %v5424, %v5968
      %v5970 = vpop.f32.mrb[0].mxu0
      %5971 = vmatprep.mubr.bf16.mxu0 %v4789
      %5972 = vmatmul.mubr.bf16.gmra.mrb[0].mxu0 %v4788
      %v5973 = vpop.f32.mrb[0].mxu0
      %v5974 = vadd.f32 %v5429, %v5973
      %v5975 = vpop.f32.mrb[0].mxu0
      %v5976 = vpop.f32.mrb[0].mxu0
      %v5977 = vadd.f32 %v5432, %v5976
      %v5978 = vpop.f32.mrb[0].mxu0
      %5979 = vmatprep.mubr.bf16.mxu0 %v4793
      %5980 = vmatmul.mubr.bf16.gmra.mrb[0].mxu0 %v4792
      %v5981 = vpop.f32.mrb[0].mxu0
      %v5982 = vadd.f32 %v5437, %v5981
      %v5983 = vpop.f32.mrb[0].mxu0
      %v5984 = vpop.f32.mrb[0].mxu0
      %v5985 = vadd.f32 %v5440, %v5984
      %v5986 = vpop.f32.mrb[0].mxu0
      %5987 = vmatprep.mubr.bf16.mxu0 %v4797
      %5988 = vmatmul.mubr.bf16.gmra.mrb[0].mxu0 %v4796
      %v5989 = vpop.f32.mrb[0].mxu0
      %v5990 = vadd.f32 %v5445, %v5989
      %v5991 = vpop.f32.mrb[0].mxu0
      %v5992 = vpop.f32.mrb[0].mxu0
      %v5993 = vadd.f32 %v5448, %v5992
      %v5994 = vpop.f32.mrb[0].mxu0
      %5995 = vmatprep.mubr.bf16.mxu0 %v4801
      %5996 = vmatmul.mubr.bf16.gmra.mrb[0].mxu0 %v4800
      %v5997 = vpop.f32.mrb[0].mxu0
      %v5998 = vadd.f32 %v5453, %v5997
      %v5999 = vpop.f32.mrb[0].mxu0
      %v6000 = vpop.f32.mrb[0].mxu0
      %v6001 = vadd.f32 %v5456, %v6000
      %v6002 = vpop.f32.mrb[0].mxu0
      %6003 = vmatprep.mubr.bf16.mxu0 %v4805
      %6004 = vmatmul.mubr.bf16.gmra.mrb[0].mxu0 %v4804
      %v6005 = vpop.f32.mrb[0].mxu0
      %v6006 = vadd.f32 %v5461, %v6005
      %v6007 = vpop.f32.mrb[0].mxu0
      %v6008 = vpop.f32.mrb[0].mxu0
      %v6009 = vadd.f32 %v5464, %v6008
      %v6010 = vpop.f32.mrb[0].mxu0
      %6011 = vmatprep.mubr.bf16.mxu0 %v4809
      %6012 = vmatmul.mubr.bf16.gmra.mrb[0].mxu0 %v4808
      %v6013 = vpop.f32.mrb[0].mxu0
      %v6014 = vadd.f32 %v5469, %v6013
      %v6015 = vpop.f32.mrb[0].mxu0
      %v6016 = vpop.f32.mrb[0].mxu0
      %v6017 = vadd.f32 %v5472, %v6016
      %v6018 = vpop.f32.mrb[0].mxu0
      %6019 = vmatprep.mubr.bf16.mxu0 %v4813
      %6020 = vmatmul.mubr.bf16.gmra.mrb[0].mxu0 %v4812
      %v6021 = vpop.f32.mrb[0].mxu0
      %v6022 = vadd.f32 %v5477, %v6021
      %v6023 = vpop.f32.mrb[0].mxu0
      %v6024 = vpop.f32.mrb[0].mxu0
      %v6025 = vadd.f32 %v5480, %v6024
      %v6026 = vpop.f32.mrb[0].mxu0
      %6027 = vmatprep.mubr.bf16.mxu0 %v4817
      %6028 = vmatmul.mubr.bf16.gmra.mrb[0].mxu0 %v4816
      %v6029 = vpop.f32.mrb[0].mxu0
      %v6030 = vadd.f32 %v5485, %v6029
      %v6031 = vpop.f32.mrb[0].mxu0
      %v6032 = vpop.f32.mrb[0].mxu0
      %v6033 = vadd.f32 %v5488, %v6032
      %v6034 = vpop.f32.mrb[0].mxu0
      %6035 = vmatprep.mubr.bf16.mxu0 %v4821
      %6036 = vmatmul.mubr.bf16.gmra.mrb[0].mxu0 %v4820
      %v6037 = vpop.f32.mrb[0].mxu0
      %v6038 = vadd.f32 %v5493, %v6037
      %v6039 = vpop.f32.mrb[0].mxu0
      %v6040 = vpop.f32.mrb[0].mxu0
      %v6041 = vadd.f32 %v5496, %v6040
      %v6042 = vpop.f32.mrb[0].mxu0
      %6043 = vmatprep.mubr.bf16.mxu0 %v4825
      %6044 = vmatmul.mubr.bf16.gmra.mrb[0].mxu0 %v4824
      %v6045 = vpop.f32.mrb[0].mxu0
      %v6046 = vadd.f32 %v5501, %v6045
      %v6047 = vpop.f32.mrb[0].mxu0
      %v6048 = vpop.f32.mrb[0].mxu0
      %v6049 = vadd.f32 %v5504, %v6048
      %v6050 = vpop.f32.mrb[0].mxu0
      %6051 = vmatprep.mubr.bf16.mxu0 %v4829
      %6052 = vmatmul.mubr.bf16.gmra.mrb[0].mxu0 %v4828
      %v6053 = vpop.f32.mrb[0].mxu0
      %v6054 = vadd.f32 %v5509, %v6053
      %v6055 = vpop.f32.mrb[0].mxu0
      %v6056 = vpop.f32.mrb[0].mxu0
      %v6057 = vadd.f32 %v5512, %v6056
      %v6058 = vpop.f32.mrb[0].mxu0
      %6059 = vmatprep.mubr.bf16.mxu0 %v4833
      %6060 = vmatmul.mubr.bf16.gmra.mrb[0].mxu0 %v4832
      %v6061 = vpop.f32.mrb[0].mxu0
      %v6062 = vadd.f32 %v5517, %v6061
      %v6063 = vpop.f32.mrb[0].mxu0
      %v6064 = vpop.f32.mrb[0].mxu0
      %v6065 = vadd.f32 %v5520, %v6064
      %v6066 = vpop.f32.mrb[0].mxu0
      %6067 = vmatprep.mubr.bf16.mxu0 %v4837
      %6068 = vmatmul.mubr.bf16.gmra.mrb[0].mxu0 %v4836
      %v6069 = vpop.f32.mrb[0].mxu0
      %v6070 = vadd.f32 %v5525, %v6069
      %v6071 = vpop.f32.mrb[0].mxu0
      %v6072 = vpop.f32.mrb[0].mxu0
      %v6073 = vadd.f32 %v5528, %v6072
      %v6074 = vpop.f32.mrb[0].mxu0
      %6075 = vmatprep.mubr.bf16.mxu0 %v4841
      %6076 = vmatmul.mubr.bf16.gmra.mrb[0].mxu0 %v4840
      %v6077 = vpop.f32.mrb[0].mxu0
      %v6078 = vadd.f32 %v5533, %v6077
      %v6079 = vpop.f32.mrb[0].mxu0
      %v6080 = vpop.f32.mrb[0].mxu0
      %v6081 = vadd.f32 %v5536, %v6080
      %v6082 = vpop.f32.mrb[0].mxu0
      %6083 = vmatprep.mubr.bf16.mxu0 %v4845
      %6084 = vmatmul.mubr.bf16.gmra.mrb[0].mxu0 %v4844
      %v6085 = vpop.f32.mrb[0].mxu0
      %v6086 = vadd.f32 %v5541, %v6085
      %v6087 = vpop.f32.mrb[0].mxu0
      %v6088 = vpop.f32.mrb[0].mxu0
      %v6089 = vadd.f32 %v5544, %v6088
      %v6090 = vpop.f32.mrb[0].mxu0
      %6091 = vmatprep.mubr.bf16.mxu0 %v4849
      %6092 = vmatmul.mubr.bf16.gmra.mrb[0].mxu0 %v4848
      %v6093 = vpop.f32.mrb[0].mxu0
      %v6094 = vadd.f32 %v5549, %v6093
      %v6095 = vpop.f32.mrb[0].mxu0
      %v6096 = vpop.f32.mrb[0].mxu0
      %v6097 = vadd.f32 %v5552, %v6096
      %v6098 = vpop.f32.mrb[0].mxu0
      %6099 = vmatprep.mubr.bf16.mxu0 %v4853
      %6100 = vmatmul.mubr.bf16.gmra.mrb[0].mxu0 %v4852
      %v6101 = vpop.f32.mrb[0].mxu0
      %v6102 = vadd.f32 %v5557, %v6101
      %v6103 = vpop.f32.mrb[0].mxu0
      %v6104 = vpop.f32.mrb[0].mxu0
      %v6105 = vadd.f32 %v5560, %v6104
      %v6106 = vpop.f32.mrb[0].mxu0
      %6107 = vmatprep.mubr.bf16.mxu0 %v4857
      %6108 = vmatmul.mubr.bf16.gmra.mrb[0].mxu0 %v4856
      %v6109 = vpop.f32.mrb[0].mxu0
      %v6110 = vadd.f32 %v5565, %v6109
      %v6111 = vpop.f32.mrb[0].mxu0
      %v6112 = vpop.f32.mrb[0].mxu0
      %v6113 = vadd.f32 %v5568, %v6112
      %v6114 = vpop.f32.mrb[0].mxu0
      %6115 = vmatprep.mubr.bf16.mxu0 %v4861
      %6116 = vmatmul.mubr.bf16.gmra.mrb[0].mxu0 %v4860
      %v6117 = vpop.f32.mrb[0].mxu0
      %v6118 = vadd.f32 %v5573, %v6117
      %v6119 = vpop.f32.mrb[0].mxu0
      %v6120 = vpop.f32.mrb[0].mxu0
      %v6121 = vadd.f32 %v5576, %v6120
      %v6122 = vpop.f32.mrb[0].mxu0
      %6123 = vmatprep.mubr.bf16.mxu0 %v4865
      %6124 = vmatmul.mubr.bf16.gmra.mrb[0].mxu0 %v4864
      %v6125 = vpop.f32.mrb[0].mxu0
      %v6126 = vadd.f32 %v5581, %v6125
      %v6127 = vpop.f32.mrb[0].mxu0
      %v6128 = vpop.f32.mrb[0].mxu0
      %v6129 = vadd.f32 %v5584, %v6128
      %v6130 = vpop.f32.mrb[0].mxu0
      %6131 = vmatprep.mubr.bf16.mxu0 %v4869
      %6132 = vmatmul.mubr.bf16.gmra.mrb[0].mxu0 %v4868
      %v6133 = vpop.f32.mrb[0].mxu0
      %v6134 = vadd.f32 %v5589, %v6133
      %v6135 = vpop.f32.mrb[0].mxu0
      %v6136 = vpop.f32.mrb[0].mxu0
      %v6137 = vadd.f32 %v5592, %v6136
      %v6138 = vpop.f32.mrb[0].mxu0
      %6139 = vmatprep.mubr.bf16.mxu0 %v4873
      %6140 = vmatmul.mubr.bf16.gmra.mrb[0].mxu0 %v4872
      %v6141 = vpop.f32.mrb[0].mxu0
      %v6142 = vadd.f32 %v5597, %v6141
      %v6143 = vpop.f32.mrb[0].mxu0
      %v6144 = vpop.f32.mrb[0].mxu0
      %v6145 = vadd.f32 %v5600, %v6144
      %v6146 = vpop.f32.mrb[0].mxu0
      %6147 = vmatprep.mubr.bf16.mxu0 %v4877
      %6148 = vmatmul.mubr.bf16.gmra.mrb[0].mxu0 %v4876
      %v6149 = vpop.f32.mrb[0].mxu0
      %v6150 = vadd.f32 %v5605, %v6149
      %v6151 = vpop.f32.mrb[0].mxu0
      %v6152 = vpop.f32.mrb[0].mxu0
      %v6153 = vadd.f32 %v5608, %v6152
      %v6154 = vpop.f32.mrb[0].mxu0
      %6155 = vmatprep.mubr.bf16.mxu0 %v4881
      %6156 = vmatmul.mubr.bf16.gmra.mrb[0].mxu0 %v4880
      %v6157 = vpop.f32.mrb[0].mxu0
      %v6158 = vadd.f32 %v5613, %v6157
      %v6159 = vpop.f32.mrb[0].mxu0
      %v6160 = vpop.f32.mrb[0].mxu0
      %v6161 = vadd.f32 %v5616, %v6160
      %v6162 = vpop.f32.mrb[0].mxu0
      %6163 = vmatprep.mubr.bf16.mxu0 %v4885
      %6164 = vmatmul.mubr.bf16.gmra.mrb[0].mxu0 %v4884
      %v6165 = vpop.f32.mrb[0].mxu0
      %v6166 = vadd.f32 %v5621, %v6165
      %v6167 = vpop.f32.mrb[0].mxu0
      %v6168 = vpop.f32.mrb[0].mxu0
      %v6169 = vadd.f32 %v5624, %v6168
      %v6170 = vpop.f32.mrb[0].mxu0
      %6171 = vmatprep.mubr.bf16.mxu0 %v4889
      %6172 = vmatmul.mubr.bf16.gmra.mrb[0].mxu0 %v4888
      %v6173 = vpop.f32.mrb[0].mxu0
      %v6174 = vadd.f32 %v5629, %v6173
      %v6175 = vpop.f32.mrb[0].mxu0
      %v6176 = vpop.f32.mrb[0].mxu0
      %v6177 = vadd.f32 %v5632, %v6176
      %v6178 = vpop.f32.mrb[0].mxu0
      %6179 = vmatprep.mubr.bf16.mxu0 %v4893
      %6180 = vmatmul.mubr.bf16.gmra.mrb[0].mxu0 %v4892
      %v6181 = vpop.f32.mrb[0].mxu0
      %v6182 = vadd.f32 %v5637, %v6181
      %v6183 = vpop.f32.mrb[0].mxu0
      %v6184 = vpop.f32.mrb[0].mxu0
      %v6185 = vadd.f32 %v5640, %v6184
      %v6186 = vpop.f32.mrb[0].mxu0
      %6187 = vmatprep.mubr.bf16.mxu0 %v4897
      %6188 = vmatmul.mubr.bf16.gmra.mrb[0].mxu0 %v4896
      %v6189 = vpop.f32.mrb[0].mxu0
      %v6190 = vadd.f32 %v5645, %v6189
      %v6191 = vpop.f32.mrb[0].mxu0
      %v6192 = vpop.f32.mrb[0].mxu0
      %v6193 = vadd.f32 %v5648, %v6192
      %v6194 = vpop.f32.mrb[0].mxu0
      %6195 = vmatprep.mubr.bf16.mxu0 %v4901
      %6196 = vmatmul.mubr.bf16.gmra.mrb[0].mxu0 %v4900
      %v6197 = vpop.f32.mrb[0].mxu0
      %v6198 = vadd.f32 %v5653, %v6197
      %v6199 = vpop.f32.mrb[0].mxu0
      %v6200 = vpop.f32.mrb[0].mxu0
      %v6201 = vadd.f32 %v5656, %v6200
      %v6202 = vpop.f32.mrb[0].mxu0
      %6203 = vmatprep.mubr.bf16.mxu0 %v4905
      %6204 = vmatmul.mubr.bf16.gmra.mrb[0].mxu0 %v4904
      %v6205 = vpop.f32.mrb[0].mxu0
      %v6206 = vadd.f32 %v5661, %v6205
      %v6207 = vpop.f32.mrb[0].mxu0
      %v6208 = vpop.f32.mrb[0].mxu0
      %v6209 = vadd.f32 %v5664, %v6208
      %v6210 = vpop.f32.mrb[0].mxu0
      %6211 = vmatprep.mubr.bf16.mxu0 %v4909
      %6212 = vmatmul.mubr.bf16.gmra.mrb[0].mxu0 %v4908
      %v6213 = vpop.f32.mrb[0].mxu0
      %v6214 = vadd.f32 %v5669, %v6213
      %v6215 = vpop.f32.mrb[0].mxu0
      %v6216 = vpop.f32.mrb[0].mxu0
      %v6217 = vadd.f32 %v5672, %v6216
      %v6218 = vpop.f32.mrb[0].mxu0
      %6219 = vmatprep.mubr.bf16.mxu0 %v4913
      %6220 = vmatmul.mubr.bf16.gmra.mrb[0].mxu0 %v4912
      %v6221 = vpop.f32.mrb[0].mxu0
      %v6222 = vadd.f32 %v5677, %v6221
      %v6223 = vpop.f32.mrb[0].mxu0
      %v6224 = vpop.f32.mrb[0].mxu0
      %v6225 = vadd.f32 %v5680, %v6224
      %v6226 = vpop.f32.mrb[0].mxu0
      %6227 = vmatprep.mubr.bf16.mxu0 %v4917
      %6228 = vmatmul.mubr.bf16.gmra.mrb[0].mxu0 %v4916
      %v6229 = vpop.f32.mrb[0].mxu0
      %v6230 = vadd.f32 %v5685, %v6229
      %v6231 = vpop.f32.mrb[0].mxu0
      %v6232 = vpop.f32.mrb[0].mxu0
      %v6233 = vadd.f32 %v5688, %v6232
      %v6234 = vpop.f32.mrb[0].mxu0
      %6235 = vmatprep.mubr.bf16.mxu0 %v4921
      %6236 = vmatmul.mubr.bf16.gmra.mrb[0].mxu0 %v4920
      %v6237 = vpop.f32.mrb[0].mxu0
      %v6238 = vadd.f32 %v5693, %v6237
      %v6239 = vpop.f32.mrb[0].mxu0
      %v6240 = vpop.f32.mrb[0].mxu0
      %v6241 = vadd.f32 %v5696, %v6240
      %v6242 = vpop.f32.mrb[0].mxu0
      %6243 = vmatprep.mubr.bf16.mxu0 %v4925
      %6244 = vmatmul.mubr.bf16.gmra.mrb[0].mxu0 %v4924
      %v6245 = vpop.f32.mrb[0].mxu0
      %v6246 = vadd.f32 %v5701, %v6245
      %v6247 = vpop.f32.mrb[0].mxu0
      %v6248 = vpop.f32.mrb[0].mxu0
      %v6249 = vadd.f32 %v5704, %v6248
      %v6250 = vpop.f32.mrb[0].mxu0
      %6251 = vmatprep.mubr.bf16.mxu0 %v4929
      %6252 = vmatmul.mubr.bf16.gmra.mrb[0].mxu0 %v4928
      %v6253 = vpop.f32.mrb[0].mxu0
      %v6254 = vadd.f32 %v5709, %v6253
      %v6255 = vpop.f32.mrb[0].mxu0
      %v6256 = vpop.f32.mrb[0].mxu0
      %v6257 = vadd.f32 %v5712, %v6256
      %v6258 = vpop.f32.mrb[0].mxu0
      %6259 = vmatprep.mubr.bf16.mxu0 %v4933
      %6260 = vmatmul.mubr.bf16.gmra.mrb[0].mxu0 %v4932
      %v6261 = vpop.f32.mrb[0].mxu0
      %v6262 = vadd.f32 %v5717, %v6261
      %v6263 = vpop.f32.mrb[0].mxu0
      %v6264 = vpop.f32.mrb[0].mxu0
      %v6265 = vadd.f32 %v5720, %v6264
      %v6266 = vpop.f32.mrb[0].mxu0
      %6267 = vmatprep.mubr.bf16.mxu0 %v4937
      %6268 = vmatmul.mubr.bf16.gmra.mrb[0].mxu0 %v4936
      %v6269 = vpop.f32.mrb[0].mxu0
      %v6270 = vadd.f32 %v5725, %v6269
      %v6271 = vpop.f32.mrb[0].mxu0
      %v6272 = vpop.f32.mrb[0].mxu0
      %v6273 = vadd.f32 %v5728, %v6272
      %v6274 = vpop.f32.mrb[0].mxu0
      %6275 = vmatprep.mubr.bf16.mxu0 %v4941
      %6276 = vmatmul.mubr.bf16.gmra.mrb[0].mxu0 %v4940
      %v6277 = vpop.f32.mrb[0].mxu0
      %v6278 = vadd.f32 %v5733, %v6277
      %v6279 = vpop.f32.mrb[0].mxu0
      %v6280 = vpop.f32.mrb[0].mxu0
      %v6281 = vadd.f32 %v5736, %v6280
      %v6282 = vpop.f32.mrb[0].mxu0
      %6283 = vmatprep.mubr.bf16.mxu0 %v4945
      %6284 = vmatmul.mubr.bf16.gmra.mrb[0].mxu0 %v4944
      %v6285 = vpop.f32.mrb[0].mxu0
      %v6286 = vadd.f32 %v5741, %v6285
      %v6287 = vpop.f32.mrb[0].mxu0
      %v6288 = vpop.f32.mrb[0].mxu0
      %v6289 = vadd.f32 %v5744, %v6288
      %v6290 = vpop.f32.mrb[0].mxu0
      %6291 = vdwg.mxu0
      %v6292 = vmax.f32 %v5782, 0.0
      %v6293 = vmax.f32 %v5785, 0.0
      %v6294 = vmax.f32 %v5790, 0.0
      %v6295 = vmax.f32 %v5793, 0.0
      %v6296 = vmax.f32 %v5798, 0.0
      %v6297 = vmax.f32 %v5801, 0.0
      %v6298 = vmax.f32 %v5806, 0.0
      %v6299 = vmax.f32 %v5809, 0.0
      %v6300 = vmax.f32 %v5814, 0.0
      %v6301 = vmax.f32 %v5817, 0.0
      %v6302 = vmax.f32 %v5822, 0.0
      %v6303 = vmax.f32 %v5825, 0.0
      %v6304 = vmax.f32 %v5830, 0.0
      %v6305 = vmax.f32 %v5833, 0.0
      %v6306 = vmax.f32 %v5838, 0.0
      %v6307 = vmax.f32 %v5841, 0.0
      %v6308 = vmax.f32 %v5846, 0.0
      %v6309 = vmax.f32 %v5849, 0.0
      %v6310 = vmax.f32 %v5854, 0.0
      %v6311 = vmax.f32 %v5857, 0.0
      %v6312 = vmax.f32 %v5862, 0.0
      %v6313 = vmax.f32 %v5865, 0.0
      %v6314 = vmax.f32 %v5870, 0.0
      %v6315 = vmax.f32 %v5873, 0.0
      %v6316 = vmax.f32 %v5878, 0.0
      %v6317 = vmax.f32 %v5881, 0.0
      %v6318 = vmax.f32 %v5886, 0.0
      %v6319 = vmax.f32 %v5889, 0.0
      %v6320 = vmax.f32 %v5894, 0.0
      %v6321 = vmax.f32 %v5897, 0.0
      %v6322 = vmax.f32 %v5902, 0.0
      %v6323 = vmax.f32 %v5905, 0.0
      %v6324 = vmax.f32 %v5910, 0.0
      %v6325 = vmax.f32 %v5913, 0.0
      %v6326 = vmax.f32 %v5918, 0.0
      %v6327 = vmax.f32 %v5921, 0.0
      %v6328 = vmax.f32 %v5926, 0.0
      %v6329 = vmax.f32 %v5929, 0.0
      %v6330 = vmax.f32 %v5934, 0.0
      %v6331 = vmax.f32 %v5937, 0.0
      %v6332 = vmax.f32 %v5942, 0.0
      %v6333 = vmax.f32 %v5945, 0.0
      %v6334 = vmax.f32 %v5950, 0.0
      %v6335 = vmax.f32 %v5953, 0.0
      %v6336 = vmax.f32 %v5958, 0.0
      %v6337 = vmax.f32 %v5961, 0.0
      %v6338 = vmax.f32 %v5966, 0.0
      %v6339 = vmax.f32 %v5969, 0.0
      %v6340 = vmax.f32 %v5974, 0.0
      %v6341 = vmax.f32 %v5977, 0.0
      %v6342 = vmax.f32 %v5982, 0.0
      %v6343 = vmax.f32 %v5985, 0.0
      %v6344 = vmax.f32 %v5990, 0.0
      %v6345 = vmax.f32 %v5993, 0.0
      %v6346 = vmax.f32 %v5998, 0.0
      %v6347 = vmax.f32 %v6001, 0.0
      %v6348 = vmax.f32 %v6006, 0.0
      %v6349 = vmax.f32 %v6009, 0.0
      %v6350 = vmax.f32 %v6014, 0.0
      %v6351 = vmax.f32 %v6017, 0.0
      %v6352 = vmax.f32 %v6022, 0.0
      %v6353 = vmax.f32 %v6025, 0.0
      %v6354 = vmax.f32 %v6030, 0.0
      %v6355 = vmax.f32 %v6033, 0.0
      %v6356 = vmax.f32 %v6038, 0.0
      %v6357 = vmax.f32 %v6041, 0.0
      %v6358 = vmax.f32 %v6046, 0.0
      %v6359 = vmax.f32 %v6049, 0.0
      %v6360 = vmax.f32 %v6054, 0.0
      %v6361 = vmax.f32 %v6057, 0.0
      %v6362 = vmax.f32 %v6062, 0.0
      %v6363 = vmax.f32 %v6065, 0.0
      %v6364 = vmax.f32 %v6070, 0.0
      %v6365 = vmax.f32 %v6073, 0.0
      %v6366 = vmax.f32 %v6078, 0.0
      %v6367 = vmax.f32 %v6081, 0.0
      %v6368 = vmax.f32 %v6086, 0.0
      %v6369 = vmax.f32 %v6089, 0.0
      %v6370 = vmax.f32 %v6094, 0.0
      %v6371 = vmax.f32 %v6097, 0.0
      %v6372 = vmax.f32 %v6102, 0.0
      %v6373 = vmax.f32 %v6105, 0.0
      %v6374 = vmax.f32 %v6110, 0.0
      %v6375 = vmax.f32 %v6113, 0.0
      %v6376 = vmax.f32 %v6118, 0.0
      %v6377 = vmax.f32 %v6121, 0.0
      %v6378 = vmax.f32 %v6126, 0.0
      %v6379 = vmax.f32 %v6129, 0.0
      %v6380 = vmax.f32 %v6134, 0.0
      %v6381 = vmax.f32 %v6137, 0.0
      %v6382 = vmax.f32 %v6142, 0.0
      %v6383 = vmax.f32 %v6145, 0.0
      %v6384 = vmax.f32 %v6150, 0.0
      %v6385 = vmax.f32 %v6153, 0.0
      %v6386 = vmax.f32 %v6158, 0.0
      %v6387 = vmax.f32 %v6161, 0.0
      %v6388 = vmax.f32 %v6166, 0.0
      %v6389 = vmax.f32 %v6169, 0.0
      %v6390 = vmax.f32 %v6174, 0.0
      %v6391 = vmax.f32 %v6177, 0.0
      %v6392 = vmax.f32 %v6182, 0.0
      %v6393 = vmax.f32 %v6185, 0.0
      %v6394 = vmax.f32 %v6190, 0.0
      %v6395 = vmax.f32 %v6193, 0.0
      %v6396 = vmax.f32 %v6198, 0.0
      %v6397 = vmax.f32 %v6201, 0.0
      %v6398 = vmax.f32 %v6206, 0.0
      %v6399 = vmax.f32 %v6209, 0.0
      %v6400 = vmax.f32 %v6214, 0.0
      %v6401 = vmax.f32 %v6217, 0.0
      %v6402 = vmax.f32 %v6222, 0.0
      %v6403 = vmax.f32 %v6225, 0.0
      %v6404 = vmax.f32 %v6230, 0.0
      %v6405 = vmax.f32 %v6233, 0.0
      %v6406 = vmax.f32 %v6238, 0.0
      %v6407 = vmax.f32 %v6241, 0.0
      %v6408 = vmax.f32 %v6246, 0.0
      %v6409 = vmax.f32 %v6249, 0.0
      %v6410 = vmax.f32 %v6254, 0.0
      %v6411 = vmax.f32 %v6257, 0.0
      %v6412 = vmax.f32 %v6262, 0.0
      %v6413 = vmax.f32 %v6265, 0.0
      %v6414 = vmax.f32 %v6270, 0.0
      %v6415 = vmax.f32 %v6273, 0.0
      %v6416 = vmax.f32 %v6278, 0.0
      %v6417 = vmax.f32 %v6281, 0.0
      %v6418 = vmax.f32 %v6286, 0.0
      %v6419 = vmax.f32 %v6289, 0.0
      %6420 = vst [vmem:[#allocation2 + $0x8] sm:$0xff] %v6292
      %6421 = vst [vmem:[#allocation2 + $0x18] sm:$0xff] %v6293
      %6422 = vst [vmem:[#allocation2 + $0x28] sm:$0xff] %v6294
      %6423 = vst [vmem:[#allocation2 + $0x38] sm:$0xff] %v6295
      %6424 = vst [vmem:[#allocation2 + $0x48] sm:$0xff] %v6296
      %6425 = vst [vmem:[#allocation2 + $0x58] sm:$0xff] %v6297
      %6426 = vst [vmem:[#allocation2 + $0x68] sm:$0xff] %v6298
      %6427 = vst [vmem:[#allocation2 + $0x78] sm:$0xff] %v6299
      %6428 = vst [vmem:[#allocation2 + $0x88] sm:$0xff] %v6300
      %6429 = vst [vmem:[#allocation2 + $0x98] sm:$0xff] %v6301
      %6430 = vst [vmem:[#allocation2 + $0xa8] sm:$0xff] %v6302
      %6431 = vst [vmem:[#allocation2 + $0xb8] sm:$0xff] %v6303
      %6432 = vst [vmem:[#allocation2 + $0xc8] sm:$0xff] %v6304
      %6433 = vst [vmem:[#allocation2 + $0xd8] sm:$0xff] %v6305
      %6434 = vst [vmem:[#allocation2 + $0xe8] sm:$0xff] %v6306
      %6435 = vst [vmem:[#allocation2 + $0xf8] sm:$0xff] %v6307
      %6436 = vst [vmem:[#allocation2 + $0x108] sm:$0xff] %v6308
      %6437 = vst [vmem:[#allocation2 + $0x118] sm:$0xff] %v6309
      %6438 = vst [vmem:[#allocation2 + $0x128] sm:$0xff] %v6310
      %6439 = vst [vmem:[#allocation2 + $0x138] sm:$0xff] %v6311
      %6440 = vst [vmem:[#allocation2 + $0x148] sm:$0xff] %v6312
      %6441 = vst [vmem:[#allocation2 + $0x158] sm:$0xff] %v6313
      %6442 = vst [vmem:[#allocation2 + $0x168] sm:$0xff] %v6314
      %6443 = vst [vmem:[#allocation2 + $0x178] sm:$0xff] %v6315
      %6444 = vst [vmem:[#allocation2 + $0x188] sm:$0xff] %v6316
      %6445 = vst [vmem:[#allocation2 + $0x198] sm:$0xff] %v6317
      %6446 = vst [vmem:[#allocation2 + $0x1a8] sm:$0xff] %v6318
      %6447 = vst [vmem:[#allocation2 + $0x1b8] sm:$0xff] %v6319
      %6448 = vst [vmem:[#allocation2 + $0x1c8] sm:$0xff] %v6320
      %6449 = vst [vmem:[#allocation2 + $0x1d8] sm:$0xff] %v6321
      %6450 = vst [vmem:[#allocation2 + $0x1e8] sm:$0xff] %v6322
      %6451 = vst [vmem:[#allocation2 + $0x1f8] sm:$0xff] %v6323
      %6452 = vst [vmem:[#allocation2 + $0x208] sm:$0xff] %v6324
      %6453 = vst [vmem:[#allocation2 + $0x218] sm:$0xff] %v6325
      %6454 = vst [vmem:[#allocation2 + $0x228] sm:$0xff] %v6326
      %6455 = vst [vmem:[#allocation2 + $0x238] sm:$0xff] %v6327
      %6456 = vst [vmem:[#allocation2 + $0x248] sm:$0xff] %v6328
      %6457 = vst [vmem:[#allocation2 + $0x258] sm:$0xff] %v6329
      %6458 = vst [vmem:[#allocation2 + $0x268] sm:$0xff] %v6330
      %6459 = vst [vmem:[#allocation2 + $0x278] sm:$0xff] %v6331
      %6460 = vst [vmem:[#allocation2 + $0x288] sm:$0xff] %v6332
      %6461 = vst [vmem:[#allocation2 + $0x298] sm:$0xff] %v6333
      %6462 = vst [vmem:[#allocation2 + $0x2a8] sm:$0xff] %v6334
      %6463 = vst [vmem:[#allocation2 + $0x2b8] sm:$0xff] %v6335
      %6464 = vst [vmem:[#allocation2 + $0x2c8] sm:$0xff] %v6336
      %6465 = vst [vmem:[#allocation2 + $0x2d8] sm:$0xff] %v6337
      %6466 = vst [vmem:[#allocation2 + $0x2e8] sm:$0xff] %v6338
      %6467 = vst [vmem:[#allocation2 + $0x2f8] sm:$0xff] %v6339
      %6468 = vst [vmem:[#allocation2 + $0x308] sm:$0xff] %v6340
      %6469 = vst [vmem:[#allocation2 + $0x318] sm:$0xff] %v6341
      %6470 = vst [vmem:[#allocation2 + $0x328] sm:$0xff] %v6342
      %6471 = vst [vmem:[#allocation2 + $0x338] sm:$0xff] %v6343
      %6472 = vst [vmem:[#allocation2 + $0x348] sm:$0xff] %v6344
      %6473 = vst [vmem:[#allocation2 + $0x358] sm:$0xff] %v6345
      %6474 = vst [vmem:[#allocation2 + $0x368] sm:$0xff] %v6346
      %6475 = vst [vmem:[#allocation2 + $0x378] sm:$0xff] %v6347
      %6476 = vst [vmem:[#allocation2 + $0x388] sm:$0xff] %v6348
      %6477 = vst [vmem:[#allocation2 + $0x398] sm:$0xff] %v6349
      %6478 = vst [vmem:[#allocation2 + $0x3a8] sm:$0xff] %v6350
      %6479 = vst [vmem:[#allocation2 + $0x3b8] sm:$0xff] %v6351
      %6480 = vst [vmem:[#allocation2 + $0x3c8] sm:$0xff] %v6352
      %6481 = vst [vmem:[#allocation2 + $0x3d8] sm:$0xff] %v6353
      %6482 = vst [vmem:[#allocation2 + $0x3e8] sm:$0xff] %v6354
      %6483 = vst [vmem:[#allocation2 + $0x3f8] sm:$0xff] %v6355
      %6484 = vst [vmem:[#allocation2 + $0x408] sm:$0xff] %v6356
      %6485 = vst [vmem:[#allocation2 + $0x418] sm:$0xff] %v6357
      %6486 = vst [vmem:[#allocation2 + $0x428] sm:$0xff] %v6358
      %6487 = vst [vmem:[#allocation2 + $0x438] sm:$0xff] %v6359
      %6488 = vst [vmem:[#allocation2 + $0x448] sm:$0xff] %v6360
      %6489 = vst [vmem:[#allocation2 + $0x458] sm:$0xff] %v6361
      %6490 = vst [vmem:[#allocation2 + $0x468] sm:$0xff] %v6362
      %6491 = vst [vmem:[#allocation2 + $0x478] sm:$0xff] %v6363
      %6492 = vst [vmem:[#allocation2 + $0x488] sm:$0xff] %v6364
      %6493 = vst [vmem:[#allocation2 + $0x498] sm:$0xff] %v6365
      %6494 = vst [vmem:[#allocation2 + $0x4a8] sm:$0xff] %v6366
      %6495 = vst [vmem:[#allocation2 + $0x4b8] sm:$0xff] %v6367
      %6496 = vst [vmem:[#allocation2 + $0x4c8] sm:$0xff] %v6368
      %6497 = vst [vmem:[#allocation2 + $0x4d8] sm:$0xff] %v6369
      %6498 = vst [vmem:[#allocation2 + $0x4e8] sm:$0xff] %v6370
      %6499 = vst [vmem:[#allocation2 + $0x4f8] sm:$0xff] %v6371
      %6500 = vst [vmem:[#allocation2 + $0x508] sm:$0xff] %v6372
      %6501 = vst [vmem:[#allocation2 + $0x518] sm:$0xff] %v6373
      %6502 = vst [vmem:[#allocation2 + $0x528] sm:$0xff] %v6374
      %6503 = vst [vmem:[#allocation2 + $0x538] sm:$0xff] %v6375
      %6504 = vst [vmem:[#allocation2 + $0x548] sm:$0xff] %v6376
      %6505 = vst [vmem:[#allocation2 + $0x558] sm:$0xff] %v6377
      %6506 = vst [vmem:[#allocation2 + $0x568] sm:$0xff] %v6378
      %6507 = vst [vmem:[#allocation2 + $0x578] sm:$0xff] %v6379
      %6508 = vst [vmem:[#allocation2 + $0x588] sm:$0xff] %v6380
      %6509 = vst [vmem:[#allocation2 + $0x598] sm:$0xff] %v6381
      %6510 = vst [vmem:[#allocation2 + $0x5a8] sm:$0xff] %v6382
      %6511 = vst [vmem:[#allocation2 + $0x5b8] sm:$0xff] %v6383
      %6512 = vst [vmem:[#allocation2 + $0x5c8] sm:$0xff] %v6384
      %6513 = vst [vmem:[#allocation2 + $0x5d8] sm:$0xff] %v6385
      %6514 = vst [vmem:[#allocation2 + $0x5e8] sm:$0xff] %v6386
      %6515 = vst [vmem:[#allocation2 + $0x5f8] sm:$0xff] %v6387
      %6516 = vst [vmem:[#allocation2 + $0x608] sm:$0xff] %v6388
      %6517 = vst [vmem:[#allocation2 + $0x618] sm:$0xff] %v6389
      %6518 = vst [vmem:[#allocation2 + $0x628] sm:$0xff] %v6390
      %6519 = vst [vmem:[#allocation2 + $0x638] sm:$0xff] %v6391
      %6520 = vst [vmem:[#allocation2 + $0x648] sm:$0xff] %v6392
      %6521 = vst [vmem:[#allocation2 + $0x658] sm:$0xff] %v6393
      %6522 = vst [vmem:[#allocation2 + $0x668] sm:$0xff] %v6394
      %6523 = vst [vmem:[#allocation2 + $0x678] sm:$0xff] %v6395
      %6524 = vst [vmem:[#allocation2 + $0x688] sm:$0xff] %v6396
      %6525 = vst [vmem:[#allocation2 + $0x698] sm:$0xff] %v6397
      %6526 = vst [vmem:[#allocation2 + $0x6a8] sm:$0xff] %v6398
      %6527 = vst [vmem:[#allocation2 + $0x6b8] sm:$0xff] %v6399
      %6528 = vst [vmem:[#allocation2 + $0x6c8] sm:$0xff] %v6400
      %6529 = vst [vmem:[#allocation2 + $0x6d8] sm:$0xff] %v6401
      %6530 = vst [vmem:[#allocation2 + $0x6e8] sm:$0xff] %v6402
      %6531 = vst [vmem:[#allocation2 + $0x6f8] sm:$0xff] %v6403
      %6532 = vst [vmem:[#allocation2 + $0x708] sm:$0xff] %v6404
      %6533 = vst [vmem:[#allocation2 + $0x718] sm:$0xff] %v6405
      %6534 = vst [vmem:[#allocation2 + $0x728] sm:$0xff] %v6406
      %6535 = vst [vmem:[#allocation2 + $0x738] sm:$0xff] %v6407
      %6536 = vst [vmem:[#allocation2 + $0x748] sm:$0xff] %v6408
      %6537 = vst [vmem:[#allocation2 + $0x758] sm:$0xff] %v6409
      %6538 = vst [vmem:[#allocation2 + $0x768] sm:$0xff] %v6410
      %6539 = vst [vmem:[#allocation2 + $0x778] sm:$0xff] %v6411
      %6540 = vst [vmem:[#allocation2 + $0x788] sm:$0xff] %v6412
      %6541 = vst [vmem:[#allocation2 + $0x798] sm:$0xff] %v6413
      %6542 = vst [vmem:[#allocation2 + $0x7a8] sm:$0xff] %v6414
      %6543 = vst [vmem:[#allocation2 + $0x7b8] sm:$0xff] %v6415
      %6544 = vst [vmem:[#allocation2 + $0x7c8] sm:$0xff] %v6416
      %6545 = vst [vmem:[#allocation2 + $0x7d8] sm:$0xff] %v6417
      %6546 = vst [vmem:[#allocation2 + $0x7e8] sm:$0xff] %v6418
      %6547 = vst [vmem:[#allocation2 + $0x7f8] sm:$0xff] %v6419
      %v6548 = vld [vmem:[#allocation2] sm:$0xff]
      %v6549 = vld [vmem:[#allocation2 + $0x8] sm:$0xff]
      %v6550 = vld [vmem:[#allocation2 + $0x10] sm:$0xff]
      %v6551 = vld [vmem:[#allocation2 + $0x18] sm:$0xff]
      %v6552 = vld [vmem:[#allocation2 + $0x20] sm:$0xff]
      %v6553 = vld [vmem:[#allocation2 + $0x28] sm:$0xff]
      %v6554 = vld [vmem:[#allocation2 + $0x30] sm:$0xff]
      %v6555 = vld [vmem:[#allocation2 + $0x38] sm:$0xff]
      %v6556 = vld [vmem:[#allocation2 + $0x40] sm:$0xff]
      %v6557 = vld [vmem:[#allocation2 + $0x48] sm:$0xff]
      %v6558 = vld [vmem:[#allocation2 + $0x50] sm:$0xff]
      %v6559 = vld [vmem:[#allocation2 + $0x58] sm:$0xff]
      %v6560 = vld [vmem:[#allocation2 + $0x60] sm:$0xff]
      %v6561 = vld [vmem:[#allocation2 + $0x68] sm:$0xff]
      %v6562 = vld [vmem:[#allocation2 + $0x70] sm:$0xff]
      %v6563 = vld [vmem:[#allocation2 + $0x78] sm:$0xff]
      %v6564 = vld [vmem:[#allocation2 + $0x80] sm:$0xff]
      %v6565 = vld [vmem:[#allocation2 + $0x88] sm:$0xff]
      %v6566 = vld [vmem:[#allocation2 + $0x90] sm:$0xff]
      %v6567 = vld [vmem:[#allocation2 + $0x98] sm:$0xff]
      %v6568 = vld [vmem:[#allocation2 + $0xa0] sm:$0xff]
      %v6569 = vld [vmem:[#allocation2 + $0xa8] sm:$0xff]
      %v6570 = vld [vmem:[#allocation2 + $0xb0] sm:$0xff]
      %v6571 = vld [vmem:[#allocation2 + $0xb8] sm:$0xff]
      %v6572 = vld [vmem:[#allocation2 + $0xc0] sm:$0xff]
      %v6573 = vld [vmem:[#allocation2 + $0xc8] sm:$0xff]
      %v6574 = vld [vmem:[#allocation2 + $0xd0] sm:$0xff]
      %v6575 = vld [vmem:[#allocation2 + $0xd8] sm:$0xff]
      %v6576 = vld [vmem:[#allocation2 + $0xe0] sm:$0xff]
      %v6577 = vld [vmem:[#allocation2 + $0xe8] sm:$0xff]
      %v6578 = vld [vmem:[#allocation2 + $0xf0] sm:$0xff]
      %v6579 = vld [vmem:[#allocation2 + $0xf8] sm:$0xff]
      %v6580 = vld [vmem:[#allocation2 + $0x100] sm:$0xff]
      %v6581 = vld [vmem:[#allocation2 + $0x108] sm:$0xff]
      %v6582 = vld [vmem:[#allocation2 + $0x110] sm:$0xff]
      %v6583 = vld [vmem:[#allocation2 + $0x118] sm:$0xff]
      %v6584 = vld [vmem:[#allocation2 + $0x120] sm:$0xff]
      %v6585 = vld [vmem:[#allocation2 + $0x128] sm:$0xff]
      %v6586 = vld [vmem:[#allocation2 + $0x130] sm:$0xff]
      %v6587 = vld [vmem:[#allocation2 + $0x138] sm:$0xff]
      %v6588 = vld [vmem:[#allocation2 + $0x140] sm:$0xff]
      %v6589 = vld [vmem:[#allocation2 + $0x148] sm:$0xff]
      %v6590 = vld [vmem:[#allocation2 + $0x150] sm:$0xff]
      %v6591 = vld [vmem:[#allocation2 + $0x158] sm:$0xff]
      %v6592 = vld [vmem:[#allocation2 + $0x160] sm:$0xff]
      %v6593 = vld [vmem:[#allocation2 + $0x168] sm:$0xff]
      %v6594 = vld [vmem:[#allocation2 + $0x170] sm:$0xff]
      %v6595 = vld [vmem:[#allocation2 + $0x178] sm:$0xff]
      %v6596 = vld [vmem:[#allocation2 + $0x180] sm:$0xff]
      %v6597 = vld [vmem:[#allocation2 + $0x188] sm:$0xff]
      %v6598 = vld [vmem:[#allocation2 + $0x190] sm:$0xff]
      %v6599 = vld [vmem:[#allocation2 + $0x198] sm:$0xff]
      %v6600 = vld [vmem:[#allocation2 + $0x1a0] sm:$0xff]
      %v6601 = vld [vmem:[#allocation2 + $0x1a8] sm:$0xff]
      %v6602 = vld [vmem:[#allocation2 + $0x1b0] sm:$0xff]
      %v6603 = vld [vmem:[#allocation2 + $0x1b8] sm:$0xff]
      %v6604 = vld [vmem:[#allocation2 + $0x1c0] sm:$0xff]
      %v6605 = vld [vmem:[#allocation2 + $0x1c8] sm:$0xff]
      %v6606 = vld [vmem:[#allocation2 + $0x1d0] sm:$0xff]
      %v6607 = vld [vmem:[#allocation2 + $0x1d8] sm:$0xff]
      %v6608 = vld [vmem:[#allocation2 + $0x1e0] sm:$0xff]
      %v6609 = vld [vmem:[#allocation2 + $0x1e8] sm:$0xff]
      %v6610 = vld [vmem:[#allocation2 + $0x1f0] sm:$0xff]
      %v6611 = vld [vmem:[#allocation2 + $0x1f8] sm:$0xff]
      %v6612 = vld [vmem:[#allocation2 + $0x200] sm:$0xff]
      %v6613 = vld [vmem:[#allocation2 + $0x208] sm:$0xff]
      %v6614 = vld [vmem:[#allocation2 + $0x210] sm:$0xff]
      %v6615 = vld [vmem:[#allocation2 + $0x218] sm:$0xff]
      %v6616 = vld [vmem:[#allocation2 + $0x220] sm:$0xff]
      %v6617 = vld [vmem:[#allocation2 + $0x228] sm:$0xff]
      %v6618 = vld [vmem:[#allocation2 + $0x230] sm:$0xff]
      %v6619 = vld [vmem:[#allocation2 + $0x238] sm:$0xff]
      %v6620 = vld [vmem:[#allocation2 + $0x240] sm:$0xff]
      %v6621 = vld [vmem:[#allocation2 + $0x248] sm:$0xff]
      %v6622 = vld [vmem:[#allocation2 + $0x250] sm:$0xff]
      %v6623 = vld [vmem:[#allocation2 + $0x258] sm:$0xff]
      %v6624 = vld [vmem:[#allocation2 + $0x260] sm:$0xff]
      %v6625 = vld [vmem:[#allocation2 + $0x268] sm:$0xff]
      %v6626 = vld [vmem:[#allocation2 + $0x270] sm:$0xff]
      %v6627 = vld [vmem:[#allocation2 + $0x278] sm:$0xff]
      %v6628 = vld [vmem:[#allocation2 + $0x280] sm:$0xff]
      %v6629 = vld [vmem:[#allocation2 + $0x288] sm:$0xff]
      %v6630 = vld [vmem:[#allocation2 + $0x290] sm:$0xff]
      %v6631 = vld [vmem:[#allocation2 + $0x298] sm:$0xff]
      %v6632 = vld [vmem:[#allocation2 + $0x2a0] sm:$0xff]
      %v6633 = vld [vmem:[#allocation2 + $0x2a8] sm:$0xff]
      %v6634 = vld [vmem:[#allocation2 + $0x2b0] sm:$0xff]
      %v6635 = vld [vmem:[#allocation2 + $0x2b8] sm:$0xff]
      %v6636 = vld [vmem:[#allocation2 + $0x2c0] sm:$0xff]
      %v6637 = vld [vmem:[#allocation2 + $0x2c8] sm:$0xff]
      %v6638 = vld [vmem:[#allocation2 + $0x2d0] sm:$0xff]
      %v6639 = vld [vmem:[#allocation2 + $0x2d8] sm:$0xff]
      %v6640 = vld [vmem:[#allocation2 + $0x2e0] sm:$0xff]
      %v6641 = vld [vmem:[#allocation2 + $0x2e8] sm:$0xff]
      %v6642 = vld [vmem:[#allocation2 + $0x2f0] sm:$0xff]
      %v6643 = vld [vmem:[#allocation2 + $0x2f8] sm:$0xff]
      %v6644 = vld [vmem:[#allocation2 + $0x300] sm:$0xff]
      %v6645 = vld [vmem:[#allocation2 + $0x308] sm:$0xff]
      %v6646 = vld [vmem:[#allocation2 + $0x310] sm:$0xff]
      %v6647 = vld [vmem:[#allocation2 + $0x318] sm:$0xff]
      %v6648 = vld [vmem:[#allocation2 + $0x320] sm:$0xff]
      %v6649 = vld [vmem:[#allocation2 + $0x328] sm:$0xff]
      %v6650 = vld [vmem:[#allocation2 + $0x330] sm:$0xff]
      %v6651 = vld [vmem:[#allocation2 + $0x338] sm:$0xff]
      %v6652 = vld [vmem:[#allocation2 + $0x340] sm:$0xff]
      %v6653 = vld [vmem:[#allocation2 + $0x348] sm:$0xff]
      %v6654 = vld [vmem:[#allocation2 + $0x350] sm:$0xff]
      %v6655 = vld [vmem:[#allocation2 + $0x358] sm:$0xff]
      %v6656 = vld [vmem:[#allocation2 + $0x360] sm:$0xff]
      %v6657 = vld [vmem:[#allocation2 + $0x368] sm:$0xff]
      %v6658 = vld [vmem:[#allocation2 + $0x370] sm:$0xff]
      %v6659 = vld [vmem:[#allocation2 + $0x378] sm:$0xff]
      %v6660 = vld [vmem:[#allocation2 + $0x380] sm:$0xff]
      %v6661 = vld [vmem:[#allocation2 + $0x388] sm:$0xff]
      %v6662 = vld [vmem:[#allocation2 + $0x390] sm:$0xff]
      %v6663 = vld [vmem:[#allocation2 + $0x398] sm:$0xff]
      %v6664 = vld [vmem:[#allocation2 + $0x3a0] sm:$0xff]
      %v6665 = vld [vmem:[#allocation2 + $0x3a8] sm:$0xff]
      %v6666 = vld [vmem:[#allocation2 + $0x3b0] sm:$0xff]
      %v6667 = vld [vmem:[#allocation2 + $0x3b8] sm:$0xff]
      %v6668 = vld [vmem:[#allocation2 + $0x3c0] sm:$0xff]
      %v6669 = vld [vmem:[#allocation2 + $0x3c8] sm:$0xff]
      %v6670 = vld [vmem:[#allocation2 + $0x3d0] sm:$0xff]
      %v6671 = vld [vmem:[#allocation2 + $0x3d8] sm:$0xff]
      %v6672 = vld [vmem:[#allocation2 + $0x3e0] sm:$0xff]
      %v6673 = vld [vmem:[#allocation2 + $0x3e8] sm:$0xff]
      %v6674 = vld [vmem:[#allocation2 + $0x3f0] sm:$0xff]
      %v6675 = vld [vmem:[#allocation2 + $0x3f8] sm:$0xff]
      %v6676 = vld [vmem:[#allocation2 + $0x400] sm:$0xff]
      %v6677 = vld [vmem:[#allocation2 + $0x408] sm:$0xff]
      %v6678 = vld [vmem:[#allocation2 + $0x410] sm:$0xff]
      %v6679 = vld [vmem:[#allocation2 + $0x418] sm:$0xff]
      %v6680 = vld [vmem:[#allocation2 + $0x420] sm:$0xff]
      %v6681 = vld [vmem:[#allocation2 + $0x428] sm:$0xff]
      %v6682 = vld [vmem:[#allocation2 + $0x430] sm:$0xff]
      %v6683 = vld [vmem:[#allocation2 + $0x438] sm:$0xff]
      %v6684 = vld [vmem:[#allocation2 + $0x440] sm:$0xff]
      %v6685 = vld [vmem:[#allocation2 + $0x448] sm:$0xff]
      %v6686 = vld [vmem:[#allocation2 + $0x450] sm:$0xff]
      %v6687 = vld [vmem:[#allocation2 + $0x458] sm:$0xff]
      %v6688 = vld [vmem:[#allocation2 + $0x460] sm:$0xff]
      %v6689 = vld [vmem:[#allocation2 + $0x468] sm:$0xff]
      %v6690 = vld [vmem:[#allocation2 + $0x470] sm:$0xff]
      %v6691 = vld [vmem:[#allocation2 + $0x478] sm:$0xff]
      %v6692 = vld [vmem:[#allocation2 + $0x480] sm:$0xff]
      %v6693 = vld [vmem:[#allocation2 + $0x488] sm:$0xff]
      %v6694 = vld [vmem:[#allocation2 + $0x490] sm:$0xff]
      %v6695 = vld [vmem:[#allocation2 + $0x498] sm:$0xff]
      %v6696 = vld [vmem:[#allocation2 + $0x4a0] sm:$0xff]
      %v6697 = vld [vmem:[#allocation2 + $0x4a8] sm:$0xff]
      %v6698 = vld [vmem:[#allocation2 + $0x4b0] sm:$0xff]
      %v6699 = vld [vmem:[#allocation2 + $0x4b8] sm:$0xff]
      %v6700 = vld [vmem:[#allocation2 + $0x4c0] sm:$0xff]
      %v6701 = vld [vmem:[#allocation2 + $0x4c8] sm:$0xff]
      %v6702 = vld [vmem:[#allocation2 + $0x4d0] sm:$0xff]
      %v6703 = vld [vmem:[#allocation2 + $0x4d8] sm:$0xff]
      %v6704 = vld [vmem:[#allocation2 + $0x4e0] sm:$0xff]
      %v6705 = vld [vmem:[#allocation2 + $0x4e8] sm:$0xff]
      %v6706 = vld [vmem:[#allocation2 + $0x4f0] sm:$0xff]
      %v6707 = vld [vmem:[#allocation2 + $0x4f8] sm:$0xff]
      %v6708 = vld [vmem:[#allocation2 + $0x500] sm:$0xff]
      %v6709 = vld [vmem:[#allocation2 + $0x508] sm:$0xff]
      %v6710 = vld [vmem:[#allocation2 + $0x510] sm:$0xff]
      %v6711 = vld [vmem:[#allocation2 + $0x518] sm:$0xff]
      %v6712 = vld [vmem:[#allocation2 + $0x520] sm:$0xff]
      %v6713 = vld [vmem:[#allocation2 + $0x528] sm:$0xff]
      %v6714 = vld [vmem:[#allocation2 + $0x530] sm:$0xff]
      %v6715 = vld [vmem:[#allocation2 + $0x538] sm:$0xff]
      %v6716 = vld [vmem:[#allocation2 + $0x540] sm:$0xff]
      %v6717 = vld [vmem:[#allocation2 + $0x548] sm:$0xff]
      %v6718 = vld [vmem:[#allocation2 + $0x550] sm:$0xff]
      %v6719 = vld [vmem:[#allocation2 + $0x558] sm:$0xff]
      %v6720 = vld [vmem:[#allocation2 + $0x560] sm:$0xff]
      %v6721 = vld [vmem:[#allocation2 + $0x568] sm:$0xff]
      %v6722 = vld [vmem:[#allocation2 + $0x570] sm:$0xff]
      %v6723 = vld [vmem:[#allocation2 + $0x578] sm:$0xff]
      %v6724 = vld [vmem:[#allocation2 + $0x580] sm:$0xff]
      %v6725 = vld [vmem:[#allocation2 + $0x588] sm:$0xff]
      %v6726 = vld [vmem:[#allocation2 + $0x590] sm:$0xff]
      %v6727 = vld [vmem:[#allocation2 + $0x598] sm:$0xff]
      %v6728 = vld [vmem:[#allocation2 + $0x5a0] sm:$0xff]
      %v6729 = vld [vmem:[#allocation2 + $0x5a8] sm:$0xff]
      %v6730 = vld [vmem:[#allocation2 + $0x5b0] sm:$0xff]
      %v6731 = vld [vmem:[#allocation2 + $0x5b8] sm:$0xff]
      %v6732 = vld [vmem:[#allocation2 + $0x5c0] sm:$0xff]
      %v6733 = vld [vmem:[#allocation2 + $0x5c8] sm:$0xff]
      %v6734 = vld [vmem:[#allocation2 + $0x5d0] sm:$0xff]
      %v6735 = vld [vmem:[#allocation2 + $0x5d8] sm:$0xff]
      %v6736 = vld [vmem:[#allocation2 + $0x5e0] sm:$0xff]
      %v6737 = vld [vmem:[#allocation2 + $0x5e8] sm:$0xff]
      %v6738 = vld [vmem:[#allocation2 + $0x5f0] sm:$0xff]
      %v6739 = vld [vmem:[#allocation2 + $0x5f8] sm:$0xff]
      %v6740 = vld [vmem:[#allocation2 + $0x600] sm:$0xff]
      %v6741 = vld [vmem:[#allocation2 + $0x608] sm:$0xff]
      %v6742 = vld [vmem:[#allocation2 + $0x610] sm:$0xff]
      %v6743 = vld [vmem:[#allocation2 + $0x618] sm:$0xff]
      %v6744 = vld [vmem:[#allocation2 + $0x620] sm:$0xff]
      %v6745 = vld [vmem:[#allocation2 + $0x628] sm:$0xff]
      %v6746 = vld [vmem:[#allocation2 + $0x630] sm:$0xff]
      %v6747 = vld [vmem:[#allocation2 + $0x638] sm:$0xff]
      %v6748 = vld [vmem:[#allocation2 + $0x640] sm:$0xff]
      %v6749 = vld [vmem:[#allocation2 + $0x648] sm:$0xff]
      %v6750 = vld [vmem:[#allocation2 + $0x650] sm:$0xff]
      %v6751 = vld [vmem:[#allocation2 + $0x658] sm:$0xff]
      %v6752 = vld [vmem:[#allocation2 + $0x660] sm:$0xff]
      %v6753 = vld [vmem:[#allocation2 + $0x668] sm:$0xff]
      %v6754 = vld [vmem:[#allocation2 + $0x670] sm:$0xff]
      %v6755 = vld [vmem:[#allocation2 + $0x678] sm:$0xff]
      %v6756 = vld [vmem:[#allocation2 + $0x680] sm:$0xff]
      %v6757 = vld [vmem:[#allocation2 + $0x688] sm:$0xff]
      %v6758 = vld [vmem:[#allocation2 + $0x690] sm:$0xff]
      %v6759 = vld [vmem:[#allocation2 + $0x698] sm:$0xff]
      %v6760 = vld [vmem:[#allocation2 + $0x6a0] sm:$0xff]
      %v6761 = vld [vmem:[#allocation2 + $0x6a8] sm:$0xff]
      %v6762 = vld [vmem:[#allocation2 + $0x6b0] sm:$0xff]
      %v6763 = vld [vmem:[#allocation2 + $0x6b8] sm:$0xff]
      %v6764 = vld [vmem:[#allocation2 + $0x6c0] sm:$0xff]
      %v6765 = vld [vmem:[#allocation2 + $0x6c8] sm:$0xff]
      %v6766 = vld [vmem:[#allocation2 + $0x6d0] sm:$0xff]
      %v6767 = vld [vmem:[#allocation2 + $0x6d8] sm:$0xff]
      %v6768 = vld [vmem:[#allocation2 + $0x6e0] sm:$0xff]
      %v6769 = vld [vmem:[#allocation2 + $0x6e8] sm:$0xff]
      %v6770 = vld [vmem:[#allocation2 + $0x6f0] sm:$0xff]
      %v6771 = vld [vmem:[#allocation2 + $0x6f8] sm:$0xff]
      %v6772 = vld [vmem:[#allocation2 + $0x700] sm:$0xff]
      %v6773 = vld [vmem:[#allocation2 + $0x708] sm:$0xff]
      %v6774 = vld [vmem:[#allocation2 + $0x710] sm:$0xff]
      %v6775 = vld [vmem:[#allocation2 + $0x718] sm:$0xff]
      %v6776 = vld [vmem:[#allocation2 + $0x720] sm:$0xff]
      %v6777 = vld [vmem:[#allocation2 + $0x728] sm:$0xff]
      %v6778 = vld [vmem:[#allocation2 + $0x730] sm:$0xff]
      %v6779 = vld [vmem:[#allocation2 + $0x738] sm:$0xff]
      %v6780 = vld [vmem:[#allocation2 + $0x740] sm:$0xff]
      %v6781 = vld [vmem:[#allocation2 + $0x748] sm:$0xff]
      %v6782 = vld [vmem:[#allocation2 + $0x750] sm:$0xff]
      %v6783 = vld [vmem:[#allocation2 + $0x758] sm:$0xff]
      %v6784 = vld [vmem:[#allocation2 + $0x760] sm:$0xff]
      %v6785 = vld [vmem:[#allocation2 + $0x768] sm:$0xff]
      %v6786 = vld [vmem:[#allocation2 + $0x770] sm:$0xff]
      %v6787 = vld [vmem:[#allocation2 + $0x778] sm:$0xff]
      %v6788 = vld [vmem:[#allocation2 + $0x780] sm:$0xff]
      %v6789 = vld [vmem:[#allocation2 + $0x788] sm:$0xff]
      %v6790 = vld [vmem:[#allocation2 + $0x790] sm:$0xff]
      %v6791 = vld [vmem:[#allocation2 + $0x798] sm:$0xff]
      %v6792 = vld [vmem:[#allocation2 + $0x7a0] sm:$0xff]
      %v6793 = vld [vmem:[#allocation2 + $0x7a8] sm:$0xff]
      %v6794 = vld [vmem:[#allocation2 + $0x7b0] sm:$0xff]
      %v6795 = vld [vmem:[#allocation2 + $0x7b8] sm:$0xff]
      %v6796 = vld [vmem:[#allocation2 + $0x7c0] sm:$0xff]
      %v6797 = vld [vmem:[#allocation2 + $0x7c8] sm:$0xff]
      %v6798 = vld [vmem:[#allocation2 + $0x7d0] sm:$0xff]
      %v6799 = vld [vmem:[#allocation2 + $0x7d8] sm:$0xff]
      %v6800 = vld [vmem:[#allocation2 + $0x7e0] sm:$0xff]
      %v6801 = vld [vmem:[#allocation2 + $0x7e8] sm:$0xff]
      %v6802 = vld [vmem:[#allocation2 + $0x7f0] sm:$0xff]
      %v6803 = vld [vmem:[#allocation2 + $0x7f8] sm:$0xff]
      %v6804 = vld [vmem:[%s4] sm:$0xff]
      %v6805 = vld [vmem:[%s4 + $0x8] sm:$0xff]
      %v6806 = vld [vmem:[%s4 + $0x10] sm:$0xff]
      %v6807 = vld [vmem:[%s4 + $0x18] sm:$0xff]
      %v6808 = vld [vmem:[%s4 + $0x20] sm:$0xff]
      %v6809 = vld [vmem:[%s4 + $0x28] sm:$0xff]
      %v6810 = vld [vmem:[%s4 + $0x30] sm:$0xff]
      %v6811 = vld [vmem:[%s4 + $0x38] sm:$0xff]
      %v6812 = vld [vmem:[%s4 + $0x40] sm:$0xff]
      %v6813 = vld [vmem:[%s4 + $0x48] sm:$0xff]
      %v6814 = vld [vmem:[%s4 + $0x50] sm:$0xff]
      %v6815 = vld [vmem:[%s4 + $0x58] sm:$0xff]
      %v6816 = vld [vmem:[%s4 + $0x60] sm:$0xff]
      %v6817 = vld [vmem:[%s4 + $0x68] sm:$0xff]
      %v6818 = vld [vmem:[%s4 + $0x70] sm:$0xff]
      %v6819 = vld [vmem:[%s4 + $0x78] sm:$0xff]
      %v6820 = vld [vmem:[%s4 + $0x80] sm:$0xff]
      %v6821 = vld [vmem:[%s4 + $0x88] sm:$0xff]
      %v6822 = vld [vmem:[%s4 + $0x90] sm:$0xff]
      %v6823 = vld [vmem:[%s4 + $0x98] sm:$0xff]
      %v6824 = vld [vmem:[%s4 + $0xa0] sm:$0xff]
      %v6825 = vld [vmem:[%s4 + $0xa8] sm:$0xff]
      %v6826 = vld [vmem:[%s4 + $0xb0] sm:$0xff]
      %v6827 = vld [vmem:[%s4 + $0xb8] sm:$0xff]
      %v6828 = vld [vmem:[%s4 + $0xc0] sm:$0xff]
      %v6829 = vld [vmem:[%s4 + $0xc8] sm:$0xff]
      %v6830 = vld [vmem:[%s4 + $0xd0] sm:$0xff]
      %v6831 = vld [vmem:[%s4 + $0xd8] sm:$0xff]
      %v6832 = vld [vmem:[%s4 + $0xe0] sm:$0xff]
      %v6833 = vld [vmem:[%s4 + $0xe8] sm:$0xff]
      %v6834 = vld [vmem:[%s4 + $0xf0] sm:$0xff]
      %v6835 = vld [vmem:[%s4 + $0xf8] sm:$0xff]
      %v6836 = vld [vmem:[%s5] sm:$0x1]
      %v6838 = vlaneseq
      %v6839 = vshrl.u32 %v6838, 7
      %v6840 = vsub.s32 0, %v6839
      %v6841 = vrot.slane %v6836, %v6840
      %6843 = vmatprep.subr.mxu0 0.0
      %6844 = vmatpush1.msra.mxu0 %v6804
      %6845 = vmatprep.subr.mxu0 0.0
      %6846 = vmatpush1.msra.mxu0 %v6805
      %6847 = vmatprep.subr.mxu0 0.0
      %6848 = vmatpush1.msra.mxu0 %v6806
      %6849 = vmatprep.subr.mxu0 0.0
      %6850 = vmatpush1.msra.mxu0 %v6807
      %6851 = vmatprep.subr.mxu0 0.0
      %6852 = vmatpush1.msra.mxu0 %v6808
      %6853 = vmatprep.subr.mxu0 0.0
      %6854 = vmatpush1.msra.mxu0 %v6809
      %6855 = vmatprep.subr.mxu0 0.0
      %6856 = vmatpush1.msra.mxu0 %v6810
      %6857 = vmatprep.subr.mxu0 0.0
      %6858 = vmatpush1.msra.mxu0 %v6811
      %6859 = vmatprep.subr.mxu0 0.0
      %6860 = vmatpush1.msra.mxu0 %v6812
      %6861 = vmatprep.subr.mxu0 0.0
      %6862 = vmatpush1.msra.mxu0 %v6813
      %6863 = vmatprep.subr.mxu0 0.0
      %6864 = vmatpush1.msra.mxu0 %v6814
      %6865 = vmatprep.subr.mxu0 0.0
      %6866 = vmatpush1.msra.mxu0 %v6815
      %6867 = vmatprep.subr.mxu0 0.0
      %6868 = vmatpush1.msra.mxu0 %v6816
      %6869 = vmatprep.subr.mxu0 0.0
      %6870 = vmatpush1.msra.mxu0 %v6817
      %6871 = vmatprep.subr.mxu0 0.0
      %6872 = vmatpush1.msra.mxu0 %v6818
      %6873 = vmatprep.subr.mxu0 0.0
      %6874 = vmatpush1.msra.mxu0 %v6819
      %6875 = vmatprep.subr.mxu0 0.0
      %6876 = vmatpush1.msra.mxu0 %v6820
      %6877 = vmatprep.subr.mxu0 0.0
      %6878 = vmatpush1.msra.mxu0 %v6821
      %6879 = vmatprep.subr.mxu0 0.0
      %6880 = vmatpush1.msra.mxu0 %v6822
      %6881 = vmatprep.subr.mxu0 0.0
      %6882 = vmatpush1.msra.mxu0 %v6823
      %6883 = vmatprep.subr.mxu0 0.0
      %6884 = vmatpush1.msra.mxu0 %v6824
      %6885 = vmatprep.subr.mxu0 0.0
      %6886 = vmatpush1.msra.mxu0 %v6825
      %6887 = vmatprep.subr.mxu0 0.0
      %6888 = vmatpush1.msra.mxu0 %v6826
      %6889 = vmatprep.subr.mxu0 0.0
      %6890 = vmatpush1.msra.mxu0 %v6827
      %6891 = vmatprep.subr.mxu0 0.0
      %6892 = vmatpush1.msra.mxu0 %v6828
      %6893 = vmatprep.subr.mxu0 0.0
      %6894 = vmatpush1.msra.mxu0 %v6829
      %6895 = vmatprep.subr.mxu0 0.0
      %6896 = vmatpush1.msra.mxu0 %v6830
      %6897 = vmatprep.subr.mxu0 0.0
      %6898 = vmatpush1.msra.mxu0 %v6831
      %6899 = vmatprep.subr.mxu0 0.0
      %6900 = vmatpush1.msra.mxu0 %v6832
      %6901 = vmatprep.subr.mxu0 0.0
      %6902 = vmatpush1.msra.mxu0 %v6833
      %6903 = vmatprep.subr.mxu0 0.0
      %6904 = vmatpush1.msra.mxu0 %v6834
      %6905 = vmatprep.subr.mxu0 0.0
      %6906 = vmatpush1.msra.mxu0 %v6835
      %6907 = vmatprep.mubr.f32.mxu0 %v6549
      %6908 = vmatmul.mubr.f32.gmra.mrb[0].mxu0 %v6548
      %v6909 = vpop.f32.mrb[0].mxu0
      %v6910 = vadd.f32 %v6841, %v6909
      %v6911 = vpop.f32.mrb[0].mxu0
      %6912 = vmatprep.mubr.f32.mxu0 %v6551
      %6913 = vmatmul.mubr.f32.gmra.mrb[0].mxu0 %v6550
      %v6914 = vpop.f32.mrb[0].mxu0
      %v6915 = vadd.f32 %v6841, %v6914
      %v6916 = vpop.f32.mrb[0].mxu0
      %6917 = vmatprep.mubr.f32.mxu0 %v6553
      %6918 = vmatmul.mubr.f32.gmra.mrb[0].mxu0 %v6552
      %v6919 = vpop.f32.mrb[0].mxu0
      %v6920 = vadd.f32 %v6841, %v6919
      %v6921 = vpop.f32.mrb[0].mxu0
      %6922 = vmatprep.mubr.f32.mxu0 %v6555
      %6923 = vmatmul.mubr.f32.gmra.mrb[0].mxu0 %v6554
      %v6924 = vpop.f32.mrb[0].mxu0
      %v6925 = vadd.f32 %v6841, %v6924
      %v6926 = vpop.f32.mrb[0].mxu0
      %6927 = vmatprep.mubr.f32.mxu0 %v6557
      %6928 = vmatmul.mubr.f32.gmra.mrb[0].mxu0 %v6556
      %v6929 = vpop.f32.mrb[0].mxu0
      %v6930 = vadd.f32 %v6841, %v6929
      %v6931 = vpop.f32.mrb[0].mxu0
      %6932 = vmatprep.mubr.f32.mxu0 %v6559
      %6933 = vmatmul.mubr.f32.gmra.mrb[0].mxu0 %v6558
      %v6934 = vpop.f32.mrb[0].mxu0
      %v6935 = vadd.f32 %v6841, %v6934
      %v6936 = vpop.f32.mrb[0].mxu0
      %6937 = vmatprep.mubr.f32.mxu0 %v6561
      %6938 = vmatmul.mubr.f32.gmra.mrb[0].mxu0 %v6560
      %v6939 = vpop.f32.mrb[0].mxu0
      %v6940 = vadd.f32 %v6841, %v6939
      %v6941 = vpop.f32.mrb[0].mxu0
      %6942 = vmatprep.mubr.f32.mxu0 %v6563
      %6943 = vmatmul.mubr.f32.gmra.mrb[0].mxu0 %v6562
      %v6944 = vpop.f32.mrb[0].mxu0
      %v6945 = vadd.f32 %v6841, %v6944
      %v6946 = vpop.f32.mrb[0].mxu0
      %6947 = vmatprep.mubr.f32.mxu0 %v6565
      %6948 = vmatmul.mubr.f32.gmra.mrb[0].mxu0 %v6564
      %v6949 = vpop.f32.mrb[0].mxu0
      %v6950 = vadd.f32 %v6841, %v6949
      %v6951 = vpop.f32.mrb[0].mxu0
      %6952 = vmatprep.mubr.f32.mxu0 %v6567
      %6953 = vmatmul.mubr.f32.gmra.mrb[0].mxu0 %v6566
      %v6954 = vpop.f32.mrb[0].mxu0
      %v6955 = vadd.f32 %v6841, %v6954
      %v6956 = vpop.f32.mrb[0].mxu0
      %6957 = vmatprep.mubr.f32.mxu0 %v6569
      %6958 = vmatmul.mubr.f32.gmra.mrb[0].mxu0 %v6568
      %v6959 = vpop.f32.mrb[0].mxu0
      %v6960 = vadd.f32 %v6841, %v6959
      %v6961 = vpop.f32.mrb[0].mxu0
      %6962 = vmatprep.mubr.f32.mxu0 %v6571
      %6963 = vmatmul.mubr.f32.gmra.mrb[0].mxu0 %v6570
      %v6964 = vpop.f32.mrb[0].mxu0
      %v6965 = vadd.f32 %v6841, %v6964
      %v6966 = vpop.f32.mrb[0].mxu0
      %6967 = vmatprep.mubr.f32.mxu0 %v6573
      %6968 = vmatmul.mubr.f32.gmra.mrb[0].mxu0 %v6572
      %v6969 = vpop.f32.mrb[0].mxu0
      %v6970 = vadd.f32 %v6841, %v6969
      %v6971 = vpop.f32.mrb[0].mxu0
      %6972 = vmatprep.mubr.f32.mxu0 %v6575
      %6973 = vmatmul.mubr.f32.gmra.mrb[0].mxu0 %v6574
      %v6974 = vpop.f32.mrb[0].mxu0
      %v6975 = vadd.f32 %v6841, %v6974
      %v6976 = vpop.f32.mrb[0].mxu0
      %6977 = vmatprep.mubr.f32.mxu0 %v6577
      %6978 = vmatmul.mubr.f32.gmra.mrb[0].mxu0 %v6576
      %v6979 = vpop.f32.mrb[0].mxu0
      %v6980 = vadd.f32 %v6841, %v6979
      %v6981 = vpop.f32.mrb[0].mxu0
      %6982 = vmatprep.mubr.f32.mxu0 %v6579
      %6983 = vmatmul.mubr.f32.gmra.mrb[0].mxu0 %v6578
      %v6984 = vpop.f32.mrb[0].mxu0
      %v6985 = vadd.f32 %v6841, %v6984
      %v6986 = vpop.f32.mrb[0].mxu0
      %6987 = vmatprep.mubr.f32.mxu0 %v6581
      %6988 = vmatmul.mubr.f32.gmra.mrb[0].mxu0 %v6580
      %v6989 = vpop.f32.mrb[0].mxu0
      %v6990 = vadd.f32 %v6841, %v6989
      %v6991 = vpop.f32.mrb[0].mxu0
      %6992 = vmatprep.mubr.f32.mxu0 %v6583
      %6993 = vmatmul.mubr.f32.gmra.mrb[0].mxu0 %v6582
      %v6994 = vpop.f32.mrb[0].mxu0
      %v6995 = vadd.f32 %v6841, %v6994
      %v6996 = vpop.f32.mrb[0].mxu0
      %6997 = vmatprep.mubr.f32.mxu0 %v6585
      %6998 = vmatmul.mubr.f32.gmra.mrb[0].mxu0 %v6584
      %v6999 = vpop.f32.mrb[0].mxu0
      %v7000 = vadd.f32 %v6841, %v6999
      %v7001 = vpop.f32.mrb[0].mxu0
      %7002 = vmatprep.mubr.f32.mxu0 %v6587
      %7003 = vmatmul.mubr.f32.gmra.mrb[0].mxu0 %v6586
      %v7004 = vpop.f32.mrb[0].mxu0
      %v7005 = vadd.f32 %v6841, %v7004
      %v7006 = vpop.f32.mrb[0].mxu0
      %7007 = vmatprep.mubr.f32.mxu0 %v6589
      %7008 = vmatmul.mubr.f32.gmra.mrb[0].mxu0 %v6588
      %v7009 = vpop.f32.mrb[0].mxu0
      %v7010 = vadd.f32 %v6841, %v7009
      %v7011 = vpop.f32.mrb[0].mxu0
      %7012 = vmatprep.mubr.f32.mxu0 %v6591
      %7013 = vmatmul.mubr.f32.gmra.mrb[0].mxu0 %v6590
      %v7014 = vpop.f32.mrb[0].mxu0
      %v7015 = vadd.f32 %v6841, %v7014
      %v7016 = vpop.f32.mrb[0].mxu0
      %7017 = vmatprep.mubr.f32.mxu0 %v6593
      %7018 = vmatmul.mubr.f32.gmra.mrb[0].mxu0 %v6592
      %v7019 = vpop.f32.mrb[0].mxu0
      %v7020 = vadd.f32 %v6841, %v7019
      %v7021 = vpop.f32.mrb[0].mxu0
      %7022 = vmatprep.mubr.f32.mxu0 %v6595
      %7023 = vmatmul.mubr.f32.gmra.mrb[0].mxu0 %v6594
      %v7024 = vpop.f32.mrb[0].mxu0
      %v7025 = vadd.f32 %v6841, %v7024
      %v7026 = vpop.f32.mrb[0].mxu0
      %7027 = vmatprep.mubr.f32.mxu0 %v6597
      %7028 = vmatmul.mubr.f32.gmra.mrb[0].mxu0 %v6596
      %v7029 = vpop.f32.mrb[0].mxu0
      %v7030 = vadd.f32 %v6841, %v7029
      %v7031 = vpop.f32.mrb[0].mxu0
      %7032 = vmatprep.mubr.f32.mxu0 %v6599
      %7033 = vmatmul.mubr.f32.gmra.mrb[0].mxu0 %v6598
      %v7034 = vpop.f32.mrb[0].mxu0
      %v7035 = vadd.f32 %v6841, %v7034
      %v7036 = vpop.f32.mrb[0].mxu0
      %7037 = vmatprep.mubr.f32.mxu0 %v6601
      %7038 = vmatmul.mubr.f32.gmra.mrb[0].mxu0 %v6600
      %v7039 = vpop.f32.mrb[0].mxu0
      %v7040 = vadd.f32 %v6841, %v7039
      %v7041 = vpop.f32.mrb[0].mxu0
      %7042 = vmatprep.mubr.f32.mxu0 %v6603
      %7043 = vmatmul.mubr.f32.gmra.mrb[0].mxu0 %v6602
      %v7044 = vpop.f32.mrb[0].mxu0
      %v7045 = vadd.f32 %v6841, %v7044
      %v7046 = vpop.f32.mrb[0].mxu0
      %7047 = vmatprep.mubr.f32.mxu0 %v6605
      %7048 = vmatmul.mubr.f32.gmra.mrb[0].mxu0 %v6604
      %v7049 = vpop.f32.mrb[0].mxu0
      %v7050 = vadd.f32 %v6841, %v7049
      %v7051 = vpop.f32.mrb[0].mxu0
      %7052 = vmatprep.mubr.f32.mxu0 %v6607
      %7053 = vmatmul.mubr.f32.gmra.mrb[0].mxu0 %v6606
      %v7054 = vpop.f32.mrb[0].mxu0
      %v7055 = vadd.f32 %v6841, %v7054
      %v7056 = vpop.f32.mrb[0].mxu0
      %7057 = vmatprep.mubr.f32.mxu0 %v6609
      %7058 = vmatmul.mubr.f32.gmra.mrb[0].mxu0 %v6608
      %v7059 = vpop.f32.mrb[0].mxu0
      %v7060 = vadd.f32 %v6841, %v7059
      %v7061 = vpop.f32.mrb[0].mxu0
      %7062 = vmatprep.mubr.f32.mxu0 %v6611
      %7063 = vmatmul.mubr.f32.gmra.mrb[0].mxu0 %v6610
      %v7064 = vpop.f32.mrb[0].mxu0
      %v7065 = vadd.f32 %v6841, %v7064
      %v7066 = vpop.f32.mrb[0].mxu0
      %7067 = vmatprep.mubr.f32.mxu0 %v6613
      %7068 = vmatmul.mubr.f32.gmra.mrb[0].mxu0 %v6612
      %v7069 = vpop.f32.mrb[0].mxu0
      %v7070 = vadd.f32 %v6841, %v7069
      %v7071 = vpop.f32.mrb[0].mxu0
      %7072 = vmatprep.mubr.f32.mxu0 %v6615
      %7073 = vmatmul.mubr.f32.gmra.mrb[0].mxu0 %v6614
      %v7074 = vpop.f32.mrb[0].mxu0
      %v7075 = vadd.f32 %v6841, %v7074
      %v7076 = vpop.f32.mrb[0].mxu0
      %7077 = vmatprep.mubr.f32.mxu0 %v6617
      %7078 = vmatmul.mubr.f32.gmra.mrb[0].mxu0 %v6616
      %v7079 = vpop.f32.mrb[0].mxu0
      %v7080 = vadd.f32 %v6841, %v7079
      %v7081 = vpop.f32.mrb[0].mxu0
      %7082 = vmatprep.mubr.f32.mxu0 %v6619
      %7083 = vmatmul.mubr.f32.gmra.mrb[0].mxu0 %v6618
      %v7084 = vpop.f32.mrb[0].mxu0
      %v7085 = vadd.f32 %v6841, %v7084
      %v7086 = vpop.f32.mrb[0].mxu0
      %7087 = vmatprep.mubr.f32.mxu0 %v6621
      %7088 = vmatmul.mubr.f32.gmra.mrb[0].mxu0 %v6620
      %v7089 = vpop.f32.mrb[0].mxu0
      %v7090 = vadd.f32 %v6841, %v7089
      %v7091 = vpop.f32.mrb[0].mxu0
      %7092 = vmatprep.mubr.f32.mxu0 %v6623
      %7093 = vmatmul.mubr.f32.gmra.mrb[0].mxu0 %v6622
      %v7094 = vpop.f32.mrb[0].mxu0
      %v7095 = vadd.f32 %v6841, %v7094
      %v7096 = vpop.f32.mrb[0].mxu0
      %7097 = vmatprep.mubr.f32.mxu0 %v6625
      %7098 = vmatmul.mubr.f32.gmra.mrb[0].mxu0 %v6624
      %v7099 = vpop.f32.mrb[0].mxu0
      %v7100 = vadd.f32 %v6841, %v7099
      %v7101 = vpop.f32.mrb[0].mxu0
      %7102 = vmatprep.mubr.f32.mxu0 %v6627
      %7103 = vmatmul.mubr.f32.gmra.mrb[0].mxu0 %v6626
      %v7104 = vpop.f32.mrb[0].mxu0
      %v7105 = vadd.f32 %v6841, %v7104
      %v7106 = vpop.f32.mrb[0].mxu0
      %7107 = vmatprep.mubr.f32.mxu0 %v6629
      %7108 = vmatmul.mubr.f32.gmra.mrb[0].mxu0 %v6628
      %v7109 = vpop.f32.mrb[0].mxu0
      %v7110 = vadd.f32 %v6841, %v7109
      %v7111 = vpop.f32.mrb[0].mxu0
      %7112 = vmatprep.mubr.f32.mxu0 %v6631
      %7113 = vmatmul.mubr.f32.gmra.mrb[0].mxu0 %v6630
      %v7114 = vpop.f32.mrb[0].mxu0
      %v7115 = vadd.f32 %v6841, %v7114
      %v7116 = vpop.f32.mrb[0].mxu0
      %7117 = vmatprep.mubr.f32.mxu0 %v6633
      %7118 = vmatmul.mubr.f32.gmra.mrb[0].mxu0 %v6632
      %v7119 = vpop.f32.mrb[0].mxu0
      %v7120 = vadd.f32 %v6841, %v7119
      %v7121 = vpop.f32.mrb[0].mxu0
      %7122 = vmatprep.mubr.f32.mxu0 %v6635
      %7123 = vmatmul.mubr.f32.gmra.mrb[0].mxu0 %v6634
      %v7124 = vpop.f32.mrb[0].mxu0
      %v7125 = vadd.f32 %v6841, %v7124
      %v7126 = vpop.f32.mrb[0].mxu0
      %7127 = vmatprep.mubr.f32.mxu0 %v6637
      %7128 = vmatmul.mubr.f32.gmra.mrb[0].mxu0 %v6636
      %v7129 = vpop.f32.mrb[0].mxu0
      %v7130 = vadd.f32 %v6841, %v7129
      %v7131 = vpop.f32.mrb[0].mxu0
      %7132 = vmatprep.mubr.f32.mxu0 %v6639
      %7133 = vmatmul.mubr.f32.gmra.mrb[0].mxu0 %v6638
      %v7134 = vpop.f32.mrb[0].mxu0
      %v7135 = vadd.f32 %v6841, %v7134
      %v7136 = vpop.f32.mrb[0].mxu0
      %7137 = vmatprep.mubr.f32.mxu0 %v6641
      %7138 = vmatmul.mubr.f32.gmra.mrb[0].mxu0 %v6640
      %v7139 = vpop.f32.mrb[0].mxu0
      %v7140 = vadd.f32 %v6841, %v7139
      %v7141 = vpop.f32.mrb[0].mxu0
      %7142 = vmatprep.mubr.f32.mxu0 %v6643
      %7143 = vmatmul.mubr.f32.gmra.mrb[0].mxu0 %v6642
      %v7144 = vpop.f32.mrb[0].mxu0
      %v7145 = vadd.f32 %v6841, %v7144
      %v7146 = vpop.f32.mrb[0].mxu0
      %7147 = vmatprep.mubr.f32.mxu0 %v6645
      %7148 = vmatmul.mubr.f32.gmra.mrb[0].mxu0 %v6644
      %v7149 = vpop.f32.mrb[0].mxu0
      %v7150 = vadd.f32 %v6841, %v7149
      %v7151 = vpop.f32.mrb[0].mxu0
      %7152 = vmatprep.mubr.f32.mxu0 %v6647
      %7153 = vmatmul.mubr.f32.gmra.mrb[0].mxu0 %v6646
      %v7154 = vpop.f32.mrb[0].mxu0
      %v7155 = vadd.f32 %v6841, %v7154
      %v7156 = vpop.f32.mrb[0].mxu0
      %7157 = vmatprep.mubr.f32.mxu0 %v6649
      %7158 = vmatmul.mubr.f32.gmra.mrb[0].mxu0 %v6648
      %v7159 = vpop.f32.mrb[0].mxu0
      %v7160 = vadd.f32 %v6841, %v7159
      %v7161 = vpop.f32.mrb[0].mxu0
      %7162 = vmatprep.mubr.f32.mxu0 %v6651
      %7163 = vmatmul.mubr.f32.gmra.mrb[0].mxu0 %v6650
      %v7164 = vpop.f32.mrb[0].mxu0
      %v7165 = vadd.f32 %v6841, %v7164
      %v7166 = vpop.f32.mrb[0].mxu0
      %7167 = vmatprep.mubr.f32.mxu0 %v6653
      %7168 = vmatmul.mubr.f32.gmra.mrb[0].mxu0 %v6652
      %v7169 = vpop.f32.mrb[0].mxu0
      %v7170 = vadd.f32 %v6841, %v7169
      %v7171 = vpop.f32.mrb[0].mxu0
      %7172 = vmatprep.mubr.f32.mxu0 %v6655
      %7173 = vmatmul.mubr.f32.gmra.mrb[0].mxu0 %v6654
      %v7174 = vpop.f32.mrb[0].mxu0
      %v7175 = vadd.f32 %v6841, %v7174
      %v7176 = vpop.f32.mrb[0].mxu0
      %7177 = vmatprep.mubr.f32.mxu0 %v6657
      %7178 = vmatmul.mubr.f32.gmra.mrb[0].mxu0 %v6656
      %v7179 = vpop.f32.mrb[0].mxu0
      %v7180 = vadd.f32 %v6841, %v7179
      %v7181 = vpop.f32.mrb[0].mxu0
      %7182 = vmatprep.mubr.f32.mxu0 %v6659
      %7183 = vmatmul.mubr.f32.gmra.mrb[0].mxu0 %v6658
      %v7184 = vpop.f32.mrb[0].mxu0
      %v7185 = vadd.f32 %v6841, %v7184
      %v7186 = vpop.f32.mrb[0].mxu0
      %7187 = vmatprep.mubr.f32.mxu0 %v6661
      %7188 = vmatmul.mubr.f32.gmra.mrb[0].mxu0 %v6660
      %v7189 = vpop.f32.mrb[0].mxu0
      %v7190 = vadd.f32 %v6841, %v7189
      %v7191 = vpop.f32.mrb[0].mxu0
      %7192 = vmatprep.mubr.f32.mxu0 %v6663
      %7193 = vmatmul.mubr.f32.gmra.mrb[0].mxu0 %v6662
      %v7194 = vpop.f32.mrb[0].mxu0
      %v7195 = vadd.f32 %v6841, %v7194
      %v7196 = vpop.f32.mrb[0].mxu0
      %7197 = vmatprep.mubr.f32.mxu0 %v6665
      %7198 = vmatmul.mubr.f32.gmra.mrb[0].mxu0 %v6664
      %v7199 = vpop.f32.mrb[0].mxu0
      %v7200 = vadd.f32 %v6841, %v7199
      %v7201 = vpop.f32.mrb[0].mxu0
      %7202 = vmatprep.mubr.f32.mxu0 %v6667
      %7203 = vmatmul.mubr.f32.gmra.mrb[0].mxu0 %v6666
      %v7204 = vpop.f32.mrb[0].mxu0
      %v7205 = vadd.f32 %v6841, %v7204
      %v7206 = vpop.f32.mrb[0].mxu0
      %7207 = vmatprep.mubr.f32.mxu0 %v6669
      %7208 = vmatmul.mubr.f32.gmra.mrb[0].mxu0 %v6668
      %v7209 = vpop.f32.mrb[0].mxu0
      %v7210 = vadd.f32 %v6841, %v7209
      %v7211 = vpop.f32.mrb[0].mxu0
      %7212 = vmatprep.mubr.f32.mxu0 %v6671
      %7213 = vmatmul.mubr.f32.gmra.mrb[0].mxu0 %v6670
      %v7214 = vpop.f32.mrb[0].mxu0
      %v7215 = vadd.f32 %v6841, %v7214
      %v7216 = vpop.f32.mrb[0].mxu0
      %7217 = vmatprep.mubr.f32.mxu0 %v6673
      %7218 = vmatmul.mubr.f32.gmra.mrb[0].mxu0 %v6672
      %v7219 = vpop.f32.mrb[0].mxu0
      %v7220 = vadd.f32 %v6841, %v7219
      %v7221 = vpop.f32.mrb[0].mxu0
      %7222 = vmatprep.mubr.f32.mxu0 %v6675
      %7223 = vmatmul.mubr.f32.gmra.mrb[0].mxu0 %v6674
      %v7224 = vpop.f32.mrb[0].mxu0
      %v7225 = vadd.f32 %v6841, %v7224
      %v7226 = vpop.f32.mrb[0].mxu0
      %7227 = vmatprep.mubr.f32.mxu0 %v6677
      %7228 = vmatmul.mubr.f32.gmra.mrb[0].mxu0 %v6676
      %v7229 = vpop.f32.mrb[0].mxu0
      %v7230 = vadd.f32 %v6841, %v7229
      %v7231 = vpop.f32.mrb[0].mxu0
      %7232 = vmatprep.mubr.f32.mxu0 %v6679
      %7233 = vmatmul.mubr.f32.gmra.mrb[0].mxu0 %v6678
      %v7234 = vpop.f32.mrb[0].mxu0
      %v7235 = vadd.f32 %v6841, %v7234
      %v7236 = vpop.f32.mrb[0].mxu0
      %7237 = vmatprep.mubr.f32.mxu0 %v6681
      %7238 = vmatmul.mubr.f32.gmra.mrb[0].mxu0 %v6680
      %v7239 = vpop.f32.mrb[0].mxu0
      %v7240 = vadd.f32 %v6841, %v7239
      %v7241 = vpop.f32.mrb[0].mxu0
      %7242 = vmatprep.mubr.f32.mxu0 %v6683
      %7243 = vmatmul.mubr.f32.gmra.mrb[0].mxu0 %v6682
      %v7244 = vpop.f32.mrb[0].mxu0
      %v7245 = vadd.f32 %v6841, %v7244
      %v7246 = vpop.f32.mrb[0].mxu0
      %7247 = vmatprep.mubr.f32.mxu0 %v6685
      %7248 = vmatmul.mubr.f32.gmra.mrb[0].mxu0 %v6684
      %v7249 = vpop.f32.mrb[0].mxu0
      %v7250 = vadd.f32 %v6841, %v7249
      %v7251 = vpop.f32.mrb[0].mxu0
      %7252 = vmatprep.mubr.f32.mxu0 %v6687
      %7253 = vmatmul.mubr.f32.gmra.mrb[0].mxu0 %v6686
      %v7254 = vpop.f32.mrb[0].mxu0
      %v7255 = vadd.f32 %v6841, %v7254
      %v7256 = vpop.f32.mrb[0].mxu0
      %7257 = vmatprep.mubr.f32.mxu0 %v6689
      %7258 = vmatmul.mubr.f32.gmra.mrb[0].mxu0 %v6688
      %v7259 = vpop.f32.mrb[0].mxu0
      %v7260 = vadd.f32 %v6841, %v7259
      %v7261 = vpop.f32.mrb[0].mxu0
      %7262 = vmatprep.mubr.f32.mxu0 %v6691
      %7263 = vmatmul.mubr.f32.gmra.mrb[0].mxu0 %v6690
      %v7264 = vpop.f32.mrb[0].mxu0
      %v7265 = vadd.f32 %v6841, %v7264
      %v7266 = vpop.f32.mrb[0].mxu0
      %7267 = vmatprep.mubr.f32.mxu0 %v6693
      %7268 = vmatmul.mubr.f32.gmra.mrb[0].mxu0 %v6692
      %v7269 = vpop.f32.mrb[0].mxu0
      %v7270 = vadd.f32 %v6841, %v7269
      %v7271 = vpop.f32.mrb[0].mxu0
      %7272 = vmatprep.mubr.f32.mxu0 %v6695
      %7273 = vmatmul.mubr.f32.gmra.mrb[0].mxu0 %v6694
      %v7274 = vpop.f32.mrb[0].mxu0
      %v7275 = vadd.f32 %v6841, %v7274
      %v7276 = vpop.f32.mrb[0].mxu0
      %7277 = vmatprep.mubr.f32.mxu0 %v6697
      %7278 = vmatmul.mubr.f32.gmra.mrb[0].mxu0 %v6696
      %v7279 = vpop.f32.mrb[0].mxu0
      %v7280 = vadd.f32 %v6841, %v7279
      %v7281 = vpop.f32.mrb[0].mxu0
      %7282 = vmatprep.mubr.f32.mxu0 %v6699
      %7283 = vmatmul.mubr.f32.gmra.mrb[0].mxu0 %v6698
      %v7284 = vpop.f32.mrb[0].mxu0
      %v7285 = vadd.f32 %v6841, %v7284
      %v7286 = vpop.f32.mrb[0].mxu0
      %7287 = vmatprep.mubr.f32.mxu0 %v6701
      %7288 = vmatmul.mubr.f32.gmra.mrb[0].mxu0 %v6700
      %v7289 = vpop.f32.mrb[0].mxu0
      %v7290 = vadd.f32 %v6841, %v7289
      %v7291 = vpop.f32.mrb[0].mxu0
      %7292 = vmatprep.mubr.f32.mxu0 %v6703
      %7293 = vmatmul.mubr.f32.gmra.mrb[0].mxu0 %v6702
      %v7294 = vpop.f32.mrb[0].mxu0
      %v7295 = vadd.f32 %v6841, %v7294
      %v7296 = vpop.f32.mrb[0].mxu0
      %7297 = vmatprep.mubr.f32.mxu0 %v6705
      %7298 = vmatmul.mubr.f32.gmra.mrb[0].mxu0 %v6704
      %v7299 = vpop.f32.mrb[0].mxu0
      %v7300 = vadd.f32 %v6841, %v7299
      %v7301 = vpop.f32.mrb[0].mxu0
      %7302 = vmatprep.mubr.f32.mxu0 %v6707
      %7303 = vmatmul.mubr.f32.gmra.mrb[0].mxu0 %v6706
      %v7304 = vpop.f32.mrb[0].mxu0
      %v7305 = vadd.f32 %v6841, %v7304
      %v7306 = vpop.f32.mrb[0].mxu0
      %7307 = vmatprep.mubr.f32.mxu0 %v6709
      %7308 = vmatmul.mubr.f32.gmra.mrb[0].mxu0 %v6708
      %v7309 = vpop.f32.mrb[0].mxu0
      %v7310 = vadd.f32 %v6841, %v7309
      %v7311 = vpop.f32.mrb[0].mxu0
      %7312 = vmatprep.mubr.f32.mxu0 %v6711
      %7313 = vmatmul.mubr.f32.gmra.mrb[0].mxu0 %v6710
      %v7314 = vpop.f32.mrb[0].mxu0
      %v7315 = vadd.f32 %v6841, %v7314
      %v7316 = vpop.f32.mrb[0].mxu0
      %7317 = vmatprep.mubr.f32.mxu0 %v6713
      %7318 = vmatmul.mubr.f32.gmra.mrb[0].mxu0 %v6712
      %v7319 = vpop.f32.mrb[0].mxu0
      %v7320 = vadd.f32 %v6841, %v7319
      %v7321 = vpop.f32.mrb[0].mxu0
      %7322 = vmatprep.mubr.f32.mxu0 %v6715
      %7323 = vmatmul.mubr.f32.gmra.mrb[0].mxu0 %v6714
      %v7324 = vpop.f32.mrb[0].mxu0
      %v7325 = vadd.f32 %v6841, %v7324
      %v7326 = vpop.f32.mrb[0].mxu0
      %7327 = vmatprep.mubr.f32.mxu0 %v6717
      %7328 = vmatmul.mubr.f32.gmra.mrb[0].mxu0 %v6716
      %v7329 = vpop.f32.mrb[0].mxu0
      %v7330 = vadd.f32 %v6841, %v7329
      %v7331 = vpop.f32.mrb[0].mxu0
      %7332 = vmatprep.mubr.f32.mxu0 %v6719
      %7333 = vmatmul.mubr.f32.gmra.mrb[0].mxu0 %v6718
      %v7334 = vpop.f32.mrb[0].mxu0
      %v7335 = vadd.f32 %v6841, %v7334
      %v7336 = vpop.f32.mrb[0].mxu0
      %7337 = vmatprep.mubr.f32.mxu0 %v6721
      %7338 = vmatmul.mubr.f32.gmra.mrb[0].mxu0 %v6720
      %v7339 = vpop.f32.mrb[0].mxu0
      %v7340 = vadd.f32 %v6841, %v7339
      %v7341 = vpop.f32.mrb[0].mxu0
      %7342 = vmatprep.mubr.f32.mxu0 %v6723
      %7343 = vmatmul.mubr.f32.gmra.mrb[0].mxu0 %v6722
      %v7344 = vpop.f32.mrb[0].mxu0
      %v7345 = vadd.f32 %v6841, %v7344
      %v7346 = vpop.f32.mrb[0].mxu0
      %7347 = vmatprep.mubr.f32.mxu0 %v6725
      %7348 = vmatmul.mubr.f32.gmra.mrb[0].mxu0 %v6724
      %v7349 = vpop.f32.mrb[0].mxu0
      %v7350 = vadd.f32 %v6841, %v7349
      %v7351 = vpop.f32.mrb[0].mxu0
      %7352 = vmatprep.mubr.f32.mxu0 %v6727
      %7353 = vmatmul.mubr.f32.gmra.mrb[0].mxu0 %v6726
      %v7354 = vpop.f32.mrb[0].mxu0
      %v7355 = vadd.f32 %v6841, %v7354
      %v7356 = vpop.f32.mrb[0].mxu0
      %7357 = vmatprep.mubr.f32.mxu0 %v6729
      %7358 = vmatmul.mubr.f32.gmra.mrb[0].mxu0 %v6728
      %v7359 = vpop.f32.mrb[0].mxu0
      %v7360 = vadd.f32 %v6841, %v7359
      %v7361 = vpop.f32.mrb[0].mxu0
      %7362 = vmatprep.mubr.f32.mxu0 %v6731
      %7363 = vmatmul.mubr.f32.gmra.mrb[0].mxu0 %v6730
      %v7364 = vpop.f32.mrb[0].mxu0
      %v7365 = vadd.f32 %v6841, %v7364
      %v7366 = vpop.f32.mrb[0].mxu0
      %7367 = vmatprep.mubr.f32.mxu0 %v6733
      %7368 = vmatmul.mubr.f32.gmra.mrb[0].mxu0 %v6732
      %v7369 = vpop.f32.mrb[0].mxu0
      %v7370 = vadd.f32 %v6841, %v7369
      %v7371 = vpop.f32.mrb[0].mxu0
      %7372 = vmatprep.mubr.f32.mxu0 %v6735
      %7373 = vmatmul.mubr.f32.gmra.mrb[0].mxu0 %v6734
      %v7374 = vpop.f32.mrb[0].mxu0
      %v7375 = vadd.f32 %v6841, %v7374
      %v7376 = vpop.f32.mrb[0].mxu0
      %7377 = vmatprep.mubr.f32.mxu0 %v6737
      %7378 = vmatmul.mubr.f32.gmra.mrb[0].mxu0 %v6736
      %v7379 = vpop.f32.mrb[0].mxu0
      %v7380 = vadd.f32 %v6841, %v7379
      %v7381 = vpop.f32.mrb[0].mxu0
      %7382 = vmatprep.mubr.f32.mxu0 %v6739
      %7383 = vmatmul.mubr.f32.gmra.mrb[0].mxu0 %v6738
      %v7384 = vpop.f32.mrb[0].mxu0
      %v7385 = vadd.f32 %v6841, %v7384
      %v7386 = vpop.f32.mrb[0].mxu0
      %7387 = vmatprep.mubr.f32.mxu0 %v6741
      %7388 = vmatmul.mubr.f32.gmra.mrb[0].mxu0 %v6740
      %v7389 = vpop.f32.mrb[0].mxu0
      %v7390 = vadd.f32 %v6841, %v7389
      %v7391 = vpop.f32.mrb[0].mxu0
      %7392 = vmatprep.mubr.f32.mxu0 %v6743
      %7393 = vmatmul.mubr.f32.gmra.mrb[0].mxu0 %v6742
      %v7394 = vpop.f32.mrb[0].mxu0
      %v7395 = vadd.f32 %v6841, %v7394
      %v7396 = vpop.f32.mrb[0].mxu0
      %7397 = vmatprep.mubr.f32.mxu0 %v6745
      %7398 = vmatmul.mubr.f32.gmra.mrb[0].mxu0 %v6744
      %v7399 = vpop.f32.mrb[0].mxu0
      %v7400 = vadd.f32 %v6841, %v7399
      %v7401 = vpop.f32.mrb[0].mxu0
      %7402 = vmatprep.mubr.f32.mxu0 %v6747
      %7403 = vmatmul.mubr.f32.gmra.mrb[0].mxu0 %v6746
      %v7404 = vpop.f32.mrb[0].mxu0
      %v7405 = vadd.f32 %v6841, %v7404
      %v7406 = vpop.f32.mrb[0].mxu0
      %7407 = vmatprep.mubr.f32.mxu0 %v6749
      %7408 = vmatmul.mubr.f32.gmra.mrb[0].mxu0 %v6748
      %v7409 = vpop.f32.mrb[0].mxu0
      %v7410 = vadd.f32 %v6841, %v7409
      %v7411 = vpop.f32.mrb[0].mxu0
      %7412 = vmatprep.mubr.f32.mxu0 %v6751
      %7413 = vmatmul.mubr.f32.gmra.mrb[0].mxu0 %v6750
      %v7414 = vpop.f32.mrb[0].mxu0
      %v7415 = vadd.f32 %v6841, %v7414
      %v7416 = vpop.f32.mrb[0].mxu0
      %7417 = vmatprep.mubr.f32.mxu0 %v6753
      %7418 = vmatmul.mubr.f32.gmra.mrb[0].mxu0 %v6752
      %v7419 = vpop.f32.mrb[0].mxu0
      %v7420 = vadd.f32 %v6841, %v7419
      %v7421 = vpop.f32.mrb[0].mxu0
      %7422 = vmatprep.mubr.f32.mxu0 %v6755
      %7423 = vmatmul.mubr.f32.gmra.mrb[0].mxu0 %v6754
      %v7424 = vpop.f32.mrb[0].mxu0
      %v7425 = vadd.f32 %v6841, %v7424
      %v7426 = vpop.f32.mrb[0].mxu0
      %7427 = vmatprep.mubr.f32.mxu0 %v6757
      %7428 = vmatmul.mubr.f32.gmra.mrb[0].mxu0 %v6756
      %v7429 = vpop.f32.mrb[0].mxu0
      %v7430 = vadd.f32 %v6841, %v7429
      %v7431 = vpop.f32.mrb[0].mxu0
      %7432 = vmatprep.mubr.f32.mxu0 %v6759
      %7433 = vmatmul.mubr.f32.gmra.mrb[0].mxu0 %v6758
      %v7434 = vpop.f32.mrb[0].mxu0
      %v7435 = vadd.f32 %v6841, %v7434
      %v7436 = vpop.f32.mrb[0].mxu0
      %7437 = vmatprep.mubr.f32.mxu0 %v6761
      %7438 = vmatmul.mubr.f32.gmra.mrb[0].mxu0 %v6760
      %v7439 = vpop.f32.mrb[0].mxu0
      %v7440 = vadd.f32 %v6841, %v7439
      %v7441 = vpop.f32.mrb[0].mxu0
      %7442 = vmatprep.mubr.f32.mxu0 %v6763
      %7443 = vmatmul.mubr.f32.gmra.mrb[0].mxu0 %v6762
      %v7444 = vpop.f32.mrb[0].mxu0
      %v7445 = vadd.f32 %v6841, %v7444
      %v7446 = vpop.f32.mrb[0].mxu0
      %7447 = vmatprep.mubr.f32.mxu0 %v6765
      %7448 = vmatmul.mubr.f32.gmra.mrb[0].mxu0 %v6764
      %v7449 = vpop.f32.mrb[0].mxu0
      %v7450 = vadd.f32 %v6841, %v7449
      %v7451 = vpop.f32.mrb[0].mxu0
      %7452 = vmatprep.mubr.f32.mxu0 %v6767
      %7453 = vmatmul.mubr.f32.gmra.mrb[0].mxu0 %v6766
      %v7454 = vpop.f32.mrb[0].mxu0
      %v7455 = vadd.f32 %v6841, %v7454
      %v7456 = vpop.f32.mrb[0].mxu0
      %7457 = vmatprep.mubr.f32.mxu0 %v6769
      %7458 = vmatmul.mubr.f32.gmra.mrb[0].mxu0 %v6768
      %v7459 = vpop.f32.mrb[0].mxu0
      %v7460 = vadd.f32 %v6841, %v7459
      %v7461 = vpop.f32.mrb[0].mxu0
      %7462 = vmatprep.mubr.f32.mxu0 %v6771
      %7463 = vmatmul.mubr.f32.gmra.mrb[0].mxu0 %v6770
      %v7464 = vpop.f32.mrb[0].mxu0
      %v7465 = vadd.f32 %v6841, %v7464
      %v7466 = vpop.f32.mrb[0].mxu0
      %7467 = vmatprep.mubr.f32.mxu0 %v6773
      %7468 = vmatmul.mubr.f32.gmra.mrb[0].mxu0 %v6772
      %v7469 = vpop.f32.mrb[0].mxu0
      %v7470 = vadd.f32 %v6841, %v7469
      %v7471 = vpop.f32.mrb[0].mxu0
      %7472 = vmatprep.mubr.f32.mxu0 %v6775
      %7473 = vmatmul.mubr.f32.gmra.mrb[0].mxu0 %v6774
      %v7474 = vpop.f32.mrb[0].mxu0
      %v7475 = vadd.f32 %v6841, %v7474
      %v7476 = vpop.f32.mrb[0].mxu0
      %7477 = vmatprep.mubr.f32.mxu0 %v6777
      %7478 = vmatmul.mubr.f32.gmra.mrb[0].mxu0 %v6776
      %v7479 = vpop.f32.mrb[0].mxu0
      %v7480 = vadd.f32 %v6841, %v7479
      %v7481 = vpop.f32.mrb[0].mxu0
      %7482 = vmatprep.mubr.f32.mxu0 %v6779
      %7483 = vmatmul.mubr.f32.gmra.mrb[0].mxu0 %v6778
      %v7484 = vpop.f32.mrb[0].mxu0
      %v7485 = vadd.f32 %v6841, %v7484
      %v7486 = vpop.f32.mrb[0].mxu0
      %7487 = vmatprep.mubr.f32.mxu0 %v6781
      %7488 = vmatmul.mubr.f32.gmra.mrb[0].mxu0 %v6780
      %v7489 = vpop.f32.mrb[0].mxu0
      %v7490 = vadd.f32 %v6841, %v7489
      %v7491 = vpop.f32.mrb[0].mxu0
      %7492 = vmatprep.mubr.f32.mxu0 %v6783
      %7493 = vmatmul.mubr.f32.gmra.mrb[0].mxu0 %v6782
      %v7494 = vpop.f32.mrb[0].mxu0
      %v7495 = vadd.f32 %v6841, %v7494
      %v7496 = vpop.f32.mrb[0].mxu0
      %7497 = vmatprep.mubr.f32.mxu0 %v6785
      %7498 = vmatmul.mubr.f32.gmra.mrb[0].mxu0 %v6784
      %v7499 = vpop.f32.mrb[0].mxu0
      %v7500 = vadd.f32 %v6841, %v7499
      %v7501 = vpop.f32.mrb[0].mxu0
      %7502 = vmatprep.mubr.f32.mxu0 %v6787
      %7503 = vmatmul.mubr.f32.gmra.mrb[0].mxu0 %v6786
      %v7504 = vpop.f32.mrb[0].mxu0
      %v7505 = vadd.f32 %v6841, %v7504
      %v7506 = vpop.f32.mrb[0].mxu0
      %7507 = vmatprep.mubr.f32.mxu0 %v6789
      %7508 = vmatmul.mubr.f32.gmra.mrb[0].mxu0 %v6788
      %v7509 = vpop.f32.mrb[0].mxu0
      %v7510 = vadd.f32 %v6841, %v7509
      %v7511 = vpop.f32.mrb[0].mxu0
      %7512 = vmatprep.mubr.f32.mxu0 %v6791
      %7513 = vmatmul.mubr.f32.gmra.mrb[0].mxu0 %v6790
      %v7514 = vpop.f32.mrb[0].mxu0
      %v7515 = vadd.f32 %v6841, %v7514
      %v7516 = vpop.f32.mrb[0].mxu0
      %7517 = vmatprep.mubr.f32.mxu0 %v6793
      %7518 = vmatmul.mubr.f32.gmra.mrb[0].mxu0 %v6792
      %v7519 = vpop.f32.mrb[0].mxu0
      %v7520 = vadd.f32 %v6841, %v7519
      %v7521 = vpop.f32.mrb[0].mxu0
      %7522 = vmatprep.mubr.f32.mxu0 %v6795
      %7523 = vmatmul.mubr.f32.gmra.mrb[0].mxu0 %v6794
      %v7524 = vpop.f32.mrb[0].mxu0
      %v7525 = vadd.f32 %v6841, %v7524
      %v7526 = vpop.f32.mrb[0].mxu0
      %7527 = vmatprep.mubr.f32.mxu0 %v6797
      %7528 = vmatmul.mubr.f32.gmra.mrb[0].mxu0 %v6796
      %v7529 = vpop.f32.mrb[0].mxu0
      %v7530 = vadd.f32 %v6841, %v7529
      %v7531 = vpop.f32.mrb[0].mxu0
      %7532 = vmatprep.mubr.f32.mxu0 %v6799
      %7533 = vmatmul.mubr.f32.gmra.mrb[0].mxu0 %v6798
      %v7534 = vpop.f32.mrb[0].mxu0
      %v7535 = vadd.f32 %v6841, %v7534
      %v7536 = vpop.f32.mrb[0].mxu0
      %7537 = vmatprep.mubr.f32.mxu0 %v6801
      %7538 = vmatmul.mubr.f32.gmra.mrb[0].mxu0 %v6800
      %v7539 = vpop.f32.mrb[0].mxu0
      %v7540 = vadd.f32 %v6841, %v7539
      %v7541 = vpop.f32.mrb[0].mxu0
      %7542 = vmatprep.mubr.f32.mxu0 %v6803
      %7543 = vmatmul.mubr.f32.gmra.mrb[0].mxu0 %v6802
      %v7544 = vpop.f32.mrb[0].mxu0
      %v7545 = vadd.f32 %v6841, %v7544
      %v7546 = vpop.f32.mrb[0].mxu0
      %7547 = vdwg.mxu0
      %v7548 = vmax.f32 %v6910, 0.0
      %v7549 = vmax.f32 %v6915, 0.0
      %v7550 = vmax.f32 %v6920, 0.0
      %v7551 = vmax.f32 %v6925, 0.0
      %v7552 = vmax.f32 %v6930, 0.0
      %v7553 = vmax.f32 %v6935, 0.0
      %v7554 = vmax.f32 %v6940, 0.0
      %v7555 = vmax.f32 %v6945, 0.0
      %v7556 = vmax.f32 %v6950, 0.0
      %v7557 = vmax.f32 %v6955, 0.0
      %v7558 = vmax.f32 %v6960, 0.0
      %v7559 = vmax.f32 %v6965, 0.0
      %v7560 = vmax.f32 %v6970, 0.0
      %v7561 = vmax.f32 %v6975, 0.0
      %v7562 = vmax.f32 %v6980, 0.0
      %v7563 = vmax.f32 %v6985, 0.0
      %v7564 = vmax.f32 %v6990, 0.0
      %v7565 = vmax.f32 %v6995, 0.0
      %v7566 = vmax.f32 %v7000, 0.0
      %v7567 = vmax.f32 %v7005, 0.0
      %v7568 = vmax.f32 %v7010, 0.0
      %v7569 = vmax.f32 %v7015, 0.0
      %v7570 = vmax.f32 %v7020, 0.0
      %v7571 = vmax.f32 %v7025, 0.0
      %v7572 = vmax.f32 %v7030, 0.0
      %v7573 = vmax.f32 %v7035, 0.0
      %v7574 = vmax.f32 %v7040, 0.0
      %v7575 = vmax.f32 %v7045, 0.0
      %v7576 = vmax.f32 %v7050, 0.0
      %v7577 = vmax.f32 %v7055, 0.0
      %v7578 = vmax.f32 %v7060, 0.0
      %v7579 = vmax.f32 %v7065, 0.0
      %v7580 = vmax.f32 %v7070, 0.0
      %v7581 = vmax.f32 %v7075, 0.0
      %v7582 = vmax.f32 %v7080, 0.0
      %v7583 = vmax.f32 %v7085, 0.0
      %v7584 = vmax.f32 %v7090, 0.0
      %v7585 = vmax.f32 %v7095, 0.0
      %v7586 = vmax.f32 %v7100, 0.0
      %v7587 = vmax.f32 %v7105, 0.0
      %v7588 = vmax.f32 %v7110, 0.0
      %v7589 = vmax.f32 %v7115, 0.0
      %v7590 = vmax.f32 %v7120, 0.0
      %v7591 = vmax.f32 %v7125, 0.0
      %v7592 = vmax.f32 %v7130, 0.0
      %v7593 = vmax.f32 %v7135, 0.0
      %v7594 = vmax.f32 %v7140, 0.0
      %v7595 = vmax.f32 %v7145, 0.0
      %v7596 = vmax.f32 %v7150, 0.0
      %v7597 = vmax.f32 %v7155, 0.0
      %v7598 = vmax.f32 %v7160, 0.0
      %v7599 = vmax.f32 %v7165, 0.0
      %v7600 = vmax.f32 %v7170, 0.0
      %v7601 = vmax.f32 %v7175, 0.0
      %v7602 = vmax.f32 %v7180, 0.0
      %v7603 = vmax.f32 %v7185, 0.0
      %v7604 = vmax.f32 %v7190, 0.0
      %v7605 = vmax.f32 %v7195, 0.0
      %v7606 = vmax.f32 %v7200, 0.0
      %v7607 = vmax.f32 %v7205, 0.0
      %v7608 = vmax.f32 %v7210, 0.0
      %v7609 = vmax.f32 %v7215, 0.0
      %v7610 = vmax.f32 %v7220, 0.0
      %v7611 = vmax.f32 %v7225, 0.0
      %v7612 = vmax.f32 %v7230, 0.0
      %v7613 = vmax.f32 %v7235, 0.0
      %v7614 = vmax.f32 %v7240, 0.0
      %v7615 = vmax.f32 %v7245, 0.0
      %v7616 = vmax.f32 %v7250, 0.0
      %v7617 = vmax.f32 %v7255, 0.0
      %v7618 = vmax.f32 %v7260, 0.0
      %v7619 = vmax.f32 %v7265, 0.0
      %v7620 = vmax.f32 %v7270, 0.0
      %v7621 = vmax.f32 %v7275, 0.0
      %v7622 = vmax.f32 %v7280, 0.0
      %v7623 = vmax.f32 %v7285, 0.0
      %v7624 = vmax.f32 %v7290, 0.0
      %v7625 = vmax.f32 %v7295, 0.0
      %v7626 = vmax.f32 %v7300, 0.0
      %v7627 = vmax.f32 %v7305, 0.0
      %v7628 = vmax.f32 %v7310, 0.0
      %v7629 = vmax.f32 %v7315, 0.0
      %v7630 = vmax.f32 %v7320, 0.0
      %v7631 = vmax.f32 %v7325, 0.0
      %v7632 = vmax.f32 %v7330, 0.0
      %v7633 = vmax.f32 %v7335, 0.0
      %v7634 = vmax.f32 %v7340, 0.0
      %v7635 = vmax.f32 %v7345, 0.0
      %v7636 = vmax.f32 %v7350, 0.0
      %v7637 = vmax.f32 %v7355, 0.0
      %v7638 = vmax.f32 %v7360, 0.0
      %v7639 = vmax.f32 %v7365, 0.0
      %v7640 = vmax.f32 %v7370, 0.0
      %v7641 = vmax.f32 %v7375, 0.0
      %v7642 = vmax.f32 %v7380, 0.0
      %v7643 = vmax.f32 %v7385, 0.0
      %v7644 = vmax.f32 %v7390, 0.0
      %v7645 = vmax.f32 %v7395, 0.0
      %v7646 = vmax.f32 %v7400, 0.0
      %v7647 = vmax.f32 %v7405, 0.0
      %v7648 = vmax.f32 %v7410, 0.0
      %v7649 = vmax.f32 %v7415, 0.0
      %v7650 = vmax.f32 %v7420, 0.0
      %v7651 = vmax.f32 %v7425, 0.0
      %v7652 = vmax.f32 %v7430, 0.0
      %v7653 = vmax.f32 %v7435, 0.0
      %v7654 = vmax.f32 %v7440, 0.0
      %v7655 = vmax.f32 %v7445, 0.0
      %v7656 = vmax.f32 %v7450, 0.0
      %v7657 = vmax.f32 %v7455, 0.0
      %v7658 = vmax.f32 %v7460, 0.0
      %v7659 = vmax.f32 %v7465, 0.0
      %v7660 = vmax.f32 %v7470, 0.0
      %v7661 = vmax.f32 %v7475, 0.0
      %v7662 = vmax.f32 %v7480, 0.0
      %v7663 = vmax.f32 %v7485, 0.0
      %v7664 = vmax.f32 %v7490, 0.0
      %v7665 = vmax.f32 %v7495, 0.0
      %v7666 = vmax.f32 %v7500, 0.0
      %v7667 = vmax.f32 %v7505, 0.0
      %v7668 = vmax.f32 %v7510, 0.0
      %v7669 = vmax.f32 %v7515, 0.0
      %v7670 = vmax.f32 %v7520, 0.0
      %v7671 = vmax.f32 %v7525, 0.0
      %v7672 = vmax.f32 %v7530, 0.0
      %v7673 = vmax.f32 %v7535, 0.0
      %v7674 = vmax.f32 %v7540, 0.0
      %v7675 = vmax.f32 %v7545, 0.0
      %v7676 = vld [vmem:[%s6] sm:$0xff]
      %v7677 = vld [vmem:[%s6 + $0x8] sm:$0xff]
      %v7678 = vld [vmem:[%s6 + $0x10] sm:$0xff]
      %v7679 = vld [vmem:[%s6 + $0x18] sm:$0xff]
      %s7680 = scalar_lea.vmem %s6, 32
      %v7681 = vld [vmem:[%s7680] sm:$0xff]
      %v7682 = vld [vmem:[%s7680 + $0x8] sm:$0xff]
      %v7683 = vld [vmem:[%s7680 + $0x10] sm:$0xff]
      %v7684 = vld [vmem:[%s7680 + $0x18] sm:$0xff]
      %vm7685 = vcmask 261120
      %v7687 = vsel %vm7685, %v7580, 0
      %v7690 = vsel %vm7685, %v7581, 0
      %v7693 = vsel %vm7685, %v7582, 0
      %v7696 = vsel %vm7685, %v7583, 0
      %v7699 = vsel %vm7685, %v7584, 0
      %v7702 = vsel %vm7685, %v7585, 0
      %v7705 = vsel %vm7685, %v7586, 0
      %v7708 = vsel %vm7685, %v7587, 0
      %v7711 = vsel %vm7685, %v7588, 0
      %v7714 = vsel %vm7685, %v7589, 0
      %v7717 = vsel %vm7685, %v7590, 0
      %v7720 = vsel %vm7685, %v7591, 0
      %v7723 = vsel %vm7685, %v7592, 0
      %v7726 = vsel %vm7685, %v7593, 0
      %v7729 = vsel %vm7685, %v7594, 0
      %v7732 = vsel %vm7685, %v7595, 0
      %v7735 = vsel %vm7685, %v7596, 0
      %v7738 = vsel %vm7685, %v7597, 0
      %v7741 = vsel %vm7685, %v7598, 0
      %v7744 = vsel %vm7685, %v7599, 0
      %v7747 = vsel %vm7685, %v7600, 0
      %v7750 = vsel %vm7685, %v7601, 0
      %v7753 = vsel %vm7685, %v7602, 0
      %v7756 = vsel %vm7685, %v7603, 0
      %v7759 = vsel %vm7685, %v7604, 0
      %v7762 = vsel %vm7685, %v7605, 0
      %v7765 = vsel %vm7685, %v7606, 0
      %v7768 = vsel %vm7685, %v7607, 0
      %v7771 = vsel %vm7685, %v7608, 0
      %v7774 = vsel %vm7685, %v7609, 0
      %v7777 = vsel %vm7685, %v7610, 0
      %v7780 = vsel %vm7685, %v7611, 0
      %7782 = vmatprep.subr.mxu0 0.0
      %7783 = vmatpush1.msra.mxu0 %v7681
      %7784 = vmatprep.subr.mxu0 0.0
      %7785 = vmatpush1.msra.mxu0 %v7682
      %7786 = vmatprep.subr.mxu0 0.0
      %7787 = vmatpush1.msra.mxu0 %v7683
      %7788 = vmatprep.subr.mxu0 0.0
      %7789 = vmatpush1.msra.mxu0 %v7684
      %7790 = vmatprep.subr.mxu0 0.0
      %7791 = vmatpush1.msra.mxu0 0.0
      %7792 = vmatprep.subr.mxu0 0.0
      %7793 = vmatpush1.msra.mxu0 0.0
      %7794 = vmatprep.subr.mxu0 0.0
      %7795 = vmatpush1.msra.mxu0 0.0
      %7796 = vmatprep.subr.mxu0 0.0
      %7797 = vmatpush1.msra.mxu0 0.0
      %7798 = vmatprep.subr.mxu0 0.0
      %7799 = vmatpush1.msra.mxu0 0.0
      %7800 = vmatprep.subr.mxu0 0.0
      %7801 = vmatpush1.msra.mxu0 0.0
      %7802 = vmatprep.subr.mxu0 0.0
      %7803 = vmatpush1.msra.mxu0 0.0
      %7804 = vmatprep.subr.mxu0 0.0
      %7805 = vmatpush1.msra.mxu0 0.0
      %7806 = vmatprep.subr.mxu0 0.0
      %7807 = vmatpush1.msra.mxu0 0.0
      %7808 = vmatprep.subr.mxu0 0.0
      %7809 = vmatpush1.msra.mxu0 0.0
      %7810 = vmatprep.subr.mxu0 0.0
      %7811 = vmatpush1.msra.mxu0 0.0
      %7812 = vmatprep.subr.mxu0 0.0
      %7813 = vmatpush1.msra.mxu0 0.0
      %7814 = vmatprep.subr.mxu0 0.0
      %7815 = vmatpush1.msra.mxu0 0.0
      %7816 = vmatprep.subr.mxu0 0.0
      %7817 = vmatpush1.msra.mxu0 0.0
      %7818 = vmatprep.subr.mxu0 0.0
      %7819 = vmatpush1.msra.mxu0 0.0
      %7820 = vmatprep.subr.mxu0 0.0
      %7821 = vmatpush1.msra.mxu0 0.0
      %7822 = vmatprep.subr.mxu0 0.0
      %7823 = vmatpush1.msra.mxu0 0.0
      %7824 = vmatprep.subr.mxu0 0.0
      %7825 = vmatpush1.msra.mxu0 0.0
      %7826 = vmatprep.subr.mxu0 0.0
      %7827 = vmatpush1.msra.mxu0 0.0
      %7828 = vmatprep.subr.mxu0 0.0
      %7829 = vmatpush1.msra.mxu0 0.0
      %7830 = vmatprep.subr.mxu0 0.0
      %7831 = vmatpush1.msra.mxu0 0.0
      %7832 = vmatprep.subr.mxu0 0.0
      %7833 = vmatpush1.msra.mxu0 0.0
      %7834 = vmatprep.subr.mxu0 0.0
      %7835 = vmatpush1.msra.mxu0 0.0
      %7836 = vmatprep.subr.mxu0 0.0
      %7837 = vmatpush1.msra.mxu0 0.0
      %7838 = vmatprep.subr.mxu0 0.0
      %7839 = vmatpush1.msra.mxu0 0.0
      %7840 = vmatprep.subr.mxu0 0.0
      %7841 = vmatpush1.msra.mxu0 0.0
      %7842 = vmatprep.subr.mxu0 0.0
      %7843 = vmatpush1.msra.mxu0 0.0
      %7844 = vmatprep.subr.mxu0 0.0
      %7845 = vmatpush1.msra.mxu0 0.0
      %7846 = vmatprep.mubr.f32.mxu0 0.0
      %7847 = vmatmul.mubr.f32.gmra.mrb[0].mxu0 %v7687
      %v7848 = vpop.f32.mrb[0].mxu0
      %v7849 = vadd.f32 0.0, %v7848
      %v7850 = vpop.f32.mrb[0].mxu0
      %7851 = vmatprep.mubr.f32.mxu0 0.0
      %7852 = vmatmul.mubr.f32.gmra.mrb[0].mxu0 %v7690
      %v7853 = vpop.f32.mrb[0].mxu0
      %v7854 = vadd.f32 0.0, %v7853
      %v7855 = vpop.f32.mrb[0].mxu0
      %7856 = vmatprep.mubr.f32.mxu0 0.0
      %7857 = vmatmul.mubr.f32.gmra.mrb[0].mxu0 %v7693
      %v7858 = vpop.f32.mrb[0].mxu0
      %v7859 = vadd.f32 0.0, %v7858
      %v7860 = vpop.f32.mrb[0].mxu0
      %7861 = vmatprep.mubr.f32.mxu0 0.0
      %7862 = vmatmul.mubr.f32.gmra.mrb[0].mxu0 %v7696
      %v7863 = vpop.f32.mrb[0].mxu0
      %v7864 = vadd.f32 0.0, %v7863
      %v7865 = vpop.f32.mrb[0].mxu0
      %7866 = vmatprep.mubr.f32.mxu0 0.0
      %7867 = vmatmul.mubr.f32.gmra.mrb[0].mxu0 %v7699
      %v7868 = vpop.f32.mrb[0].mxu0
      %v7869 = vadd.f32 0.0, %v7868
      %v7870 = vpop.f32.mrb[0].mxu0
      %7871 = vmatprep.mubr.f32.mxu0 0.0
      %7872 = vmatmul.mubr.f32.gmra.mrb[0].mxu0 %v7702
      %v7873 = vpop.f32.mrb[0].mxu0
      %v7874 = vadd.f32 0.0, %v7873
      %v7875 = vpop.f32.mrb[0].mxu0
      %7876 = vmatprep.mubr.f32.mxu0 0.0
      %7877 = vmatmul.mubr.f32.gmra.mrb[0].mxu0 %v7705
      %v7878 = vpop.f32.mrb[0].mxu0
      %v7879 = vadd.f32 0.0, %v7878
      %v7880 = vpop.f32.mrb[0].mxu0
      %7881 = vmatprep.mubr.f32.mxu0 0.0
      %7882 = vmatmul.mubr.f32.gmra.mrb[0].mxu0 %v7708
      %v7883 = vpop.f32.mrb[0].mxu0
      %v7884 = vadd.f32 0.0, %v7883
      %v7885 = vpop.f32.mrb[0].mxu0
      %7886 = vmatprep.mubr.f32.mxu0 0.0
      %7887 = vmatmul.mubr.f32.gmra.mrb[0].mxu0 %v7711
      %v7888 = vpop.f32.mrb[0].mxu0
      %v7889 = vadd.f32 0.0, %v7888
      %v7890 = vpop.f32.mrb[0].mxu0
      %7891 = vmatprep.mubr.f32.mxu0 0.0
      %7892 = vmatmul.mubr.f32.gmra.mrb[0].mxu0 %v7714
      %v7893 = vpop.f32.mrb[0].mxu0
      %v7894 = vadd.f32 0.0, %v7893
      %v7895 = vpop.f32.mrb[0].mxu0
      %7896 = vmatprep.mubr.f32.mxu0 0.0
      %7897 = vmatmul.mubr.f32.gmra.mrb[0].mxu0 %v7717
      %v7898 = vpop.f32.mrb[0].mxu0
      %v7899 = vadd.f32 0.0, %v7898
      %v7900 = vpop.f32.mrb[0].mxu0
      %7901 = vmatprep.mubr.f32.mxu0 0.0
      %7902 = vmatmul.mubr.f32.gmra.mrb[0].mxu0 %v7720
      %v7903 = vpop.f32.mrb[0].mxu0
      %v7904 = vadd.f32 0.0, %v7903
      %v7905 = vpop.f32.mrb[0].mxu0
      %7906 = vmatprep.mubr.f32.mxu0 0.0
      %7907 = vmatmul.mubr.f32.gmra.mrb[0].mxu0 %v7723
      %v7908 = vpop.f32.mrb[0].mxu0
      %v7909 = vadd.f32 0.0, %v7908
      %v7910 = vpop.f32.mrb[0].mxu0
      %7911 = vmatprep.mubr.f32.mxu0 0.0
      %7912 = vmatmul.mubr.f32.gmra.mrb[0].mxu0 %v7726
      %v7913 = vpop.f32.mrb[0].mxu0
      %v7914 = vadd.f32 0.0, %v7913
      %v7915 = vpop.f32.mrb[0].mxu0
      %7916 = vmatprep.mubr.f32.mxu0 0.0
      %7917 = vmatmul.mubr.f32.gmra.mrb[0].mxu0 %v7729
      %v7918 = vpop.f32.mrb[0].mxu0
      %v7919 = vadd.f32 0.0, %v7918
      %v7920 = vpop.f32.mrb[0].mxu0
      %7921 = vmatprep.mubr.f32.mxu0 0.0
      %7922 = vmatmul.mubr.f32.gmra.mrb[0].mxu0 %v7732
      %v7923 = vpop.f32.mrb[0].mxu0
      %v7924 = vadd.f32 0.0, %v7923
      %v7925 = vpop.f32.mrb[0].mxu0
      %7926 = vmatprep.mubr.f32.mxu0 0.0
      %7927 = vmatmul.mubr.f32.gmra.mrb[0].mxu0 %v7735
      %v7928 = vpop.f32.mrb[0].mxu0
      %v7929 = vadd.f32 0.0, %v7928
      %v7930 = vpop.f32.mrb[0].mxu0
      %7931 = vmatprep.mubr.f32.mxu0 0.0
      %7932 = vmatmul.mubr.f32.gmra.mrb[0].mxu0 %v7738
      %v7933 = vpop.f32.mrb[0].mxu0
      %v7934 = vadd.f32 0.0, %v7933
      %v7935 = vpop.f32.mrb[0].mxu0
      %7936 = vmatprep.mubr.f32.mxu0 0.0
      %7937 = vmatmul.mubr.f32.gmra.mrb[0].mxu0 %v7741
      %v7938 = vpop.f32.mrb[0].mxu0
      %v7939 = vadd.f32 0.0, %v7938
      %v7940 = vpop.f32.mrb[0].mxu0
      %7941 = vmatprep.mubr.f32.mxu0 0.0
      %7942 = vmatmul.mubr.f32.gmra.mrb[0].mxu0 %v7744
      %v7943 = vpop.f32.mrb[0].mxu0
      %v7944 = vadd.f32 0.0, %v7943
      %v7945 = vpop.f32.mrb[0].mxu0
      %7946 = vmatprep.mubr.f32.mxu0 0.0
      %7947 = vmatmul.mubr.f32.gmra.mrb[0].mxu0 %v7747
      %v7948 = vpop.f32.mrb[0].mxu0
      %v7949 = vadd.f32 0.0, %v7948
      %v7950 = vpop.f32.mrb[0].mxu0
      %7951 = vmatprep.mubr.f32.mxu0 0.0
      %7952 = vmatmul.mubr.f32.gmra.mrb[0].mxu0 %v7750
      %v7953 = vpop.f32.mrb[0].mxu0
      %v7954 = vadd.f32 0.0, %v7953
      %v7955 = vpop.f32.mrb[0].mxu0
      %7956 = vmatprep.mubr.f32.mxu0 0.0
      %7957 = vmatmul.mubr.f32.gmra.mrb[0].mxu0 %v7753
      %v7958 = vpop.f32.mrb[0].mxu0
      %v7959 = vadd.f32 0.0, %v7958
      %v7960 = vpop.f32.mrb[0].mxu0
      %7961 = vmatprep.mubr.f32.mxu0 0.0
      %7962 = vmatmul.mubr.f32.gmra.mrb[0].mxu0 %v7756
      %v7963 = vpop.f32.mrb[0].mxu0
      %v7964 = vadd.f32 0.0, %v7963
      %v7965 = vpop.f32.mrb[0].mxu0
      %7966 = vmatprep.mubr.f32.mxu0 0.0
      %7967 = vmatmul.mubr.f32.gmra.mrb[0].mxu0 %v7759
      %v7968 = vpop.f32.mrb[0].mxu0
      %v7969 = vadd.f32 0.0, %v7968
      %v7970 = vpop.f32.mrb[0].mxu0
      %7971 = vmatprep.mubr.f32.mxu0 0.0
      %7972 = vmatmul.mubr.f32.gmra.mrb[0].mxu0 %v7762
      %v7973 = vpop.f32.mrb[0].mxu0
      %v7974 = vadd.f32 0.0, %v7973
      %v7975 = vpop.f32.mrb[0].mxu0
      %7976 = vmatprep.mubr.f32.mxu0 0.0
      %7977 = vmatmul.mubr.f32.gmra.mrb[0].mxu0 %v7765
      %v7978 = vpop.f32.mrb[0].mxu0
      %v7979 = vadd.f32 0.0, %v7978
      %v7980 = vpop.f32.mrb[0].mxu0
      %7981 = vmatprep.mubr.f32.mxu0 0.0
      %7982 = vmatmul.mubr.f32.gmra.mrb[0].mxu0 %v7768
      %v7983 = vpop.f32.mrb[0].mxu0
      %v7984 = vadd.f32 0.0, %v7983
      %v7985 = vpop.f32.mrb[0].mxu0
      %7986 = vmatprep.mubr.f32.mxu0 0.0
      %7987 = vmatmul.mubr.f32.gmra.mrb[0].mxu0 %v7771
      %v7988 = vpop.f32.mrb[0].mxu0
      %v7989 = vadd.f32 0.0, %v7988
      %v7990 = vpop.f32.mrb[0].mxu0
      %7991 = vmatprep.mubr.f32.mxu0 0.0
      %7992 = vmatmul.mubr.f32.gmra.mrb[0].mxu0 %v7774
      %v7993 = vpop.f32.mrb[0].mxu0
      %v7994 = vadd.f32 0.0, %v7993
      %v7995 = vpop.f32.mrb[0].mxu0
      %7996 = vmatprep.mubr.f32.mxu0 0.0
      %7997 = vmatmul.mubr.f32.gmra.mrb[0].mxu0 %v7777
      %v7998 = vpop.f32.mrb[0].mxu0
      %v7999 = vadd.f32 0.0, %v7998
      %v8000 = vpop.f32.mrb[0].mxu0
      %8001 = vmatprep.mubr.f32.mxu0 0.0
      %8002 = vmatmul.mubr.f32.gmra.mrb[0].mxu0 %v7780
      %v8003 = vpop.f32.mrb[0].mxu0
      %v8004 = vadd.f32 0.0, %v8003
      %v8005 = vpop.f32.mrb[0].mxu0
      %8006 = vdwg.mxu0
      %v8008 = vsel %vm7685, %v7548, 0
      %v8011 = vsel %vm7685, %v7549, 0
      %v8014 = vsel %vm7685, %v7550, 0
      %v8017 = vsel %vm7685, %v7551, 0
      %v8020 = vsel %vm7685, %v7552, 0
      %v8023 = vsel %vm7685, %v7553, 0
      %v8026 = vsel %vm7685, %v7554, 0
      %v8029 = vsel %vm7685, %v7555, 0
      %v8032 = vsel %vm7685, %v7556, 0
      %v8035 = vsel %vm7685, %v7557, 0
      %v8038 = vsel %vm7685, %v7558, 0
      %v8041 = vsel %vm7685, %v7559, 0
      %v8044 = vsel %vm7685, %v7560, 0
      %v8047 = vsel %vm7685, %v7561, 0
      %v8050 = vsel %vm7685, %v7562, 0
      %v8053 = vsel %vm7685, %v7563, 0
      %v8056 = vsel %vm7685, %v7564, 0
      %v8059 = vsel %vm7685, %v7565, 0
      %v8062 = vsel %vm7685, %v7566, 0
      %v8065 = vsel %vm7685, %v7567, 0
      %v8068 = vsel %vm7685, %v7568, 0
      %v8071 = vsel %vm7685, %v7569, 0
      %v8074 = vsel %vm7685, %v7570, 0
      %v8077 = vsel %vm7685, %v7571, 0
      %v8080 = vsel %vm7685, %v7572, 0
      %v8083 = vsel %vm7685, %v7573, 0
      %v8086 = vsel %vm7685, %v7574, 0
      %v8089 = vsel %vm7685, %v7575, 0
      %v8092 = vsel %vm7685, %v7576, 0
      %v8095 = vsel %vm7685, %v7577, 0
      %v8098 = vsel %vm7685, %v7578, 0
      %v8101 = vsel %vm7685, %v7579, 0
      %8103 = vmatprep.subr.mxu0 0.0
      %8104 = vmatpush1.msra.mxu0 %v7676
      %8105 = vmatprep.subr.mxu0 0.0
      %8106 = vmatpush1.msra.mxu0 %v7677
      %8107 = vmatprep.subr.mxu0 0.0
      %8108 = vmatpush1.msra.mxu0 %v7678
      %8109 = vmatprep.subr.mxu0 0.0
      %8110 = vmatpush1.msra.mxu0 %v7679
      %8111 = vmatprep.subr.mxu0 0.0
      %8112 = vmatpush1.msra.mxu0 0.0
      %8113 = vmatprep.subr.mxu0 0.0
      %8114 = vmatpush1.msra.mxu0 0.0
      %8115 = vmatprep.subr.mxu0 0.0
      %8116 = vmatpush1.msra.mxu0 0.0
      %8117 = vmatprep.subr.mxu0 0.0
      %8118 = vmatpush1.msra.mxu0 0.0
      %8119 = vmatprep.subr.mxu0 0.0
      %8120 = vmatpush1.msra.mxu0 0.0
      %8121 = vmatprep.subr.mxu0 0.0
      %8122 = vmatpush1.msra.mxu0 0.0
      %8123 = vmatprep.subr.mxu0 0.0
      %8124 = vmatpush1.msra.mxu0 0.0
      %8125 = vmatprep.subr.mxu0 0.0
      %8126 = vmatpush1.msra.mxu0 0.0
      %8127 = vmatprep.subr.mxu0 0.0
      %8128 = vmatpush1.msra.mxu0 0.0
      %8129 = vmatprep.subr.mxu0 0.0
      %8130 = vmatpush1.msra.mxu0 0.0
      %8131 = vmatprep.subr.mxu0 0.0
      %8132 = vmatpush1.msra.mxu0 0.0
      %8133 = vmatprep.subr.mxu0 0.0
      %8134 = vmatpush1.msra.mxu0 0.0
      %8135 = vmatprep.subr.mxu0 0.0
      %8136 = vmatpush1.msra.mxu0 0.0
      %8137 = vmatprep.subr.mxu0 0.0
      %8138 = vmatpush1.msra.mxu0 0.0
      %8139 = vmatprep.subr.mxu0 0.0
      %8140 = vmatpush1.msra.mxu0 0.0
      %8141 = vmatprep.subr.mxu0 0.0
      %8142 = vmatpush1.msra.mxu0 0.0
      %8143 = vmatprep.subr.mxu0 0.0
      %8144 = vmatpush1.msra.mxu0 0.0
      %8145 = vmatprep.subr.mxu0 0.0
      %8146 = vmatpush1.msra.mxu0 0.0
      %8147 = vmatprep.subr.mxu0 0.0
      %8148 = vmatpush1.msra.mxu0 0.0
      %8149 = vmatprep.subr.mxu0 0.0
      %8150 = vmatpush1.msra.mxu0 0.0
      %8151 = vmatprep.subr.mxu0 0.0
      %8152 = vmatpush1.msra.mxu0 0.0
      %8153 = vmatprep.subr.mxu0 0.0
      %8154 = vmatpush1.msra.mxu0 0.0
      %8155 = vmatprep.subr.mxu0 0.0
      %8156 = vmatpush1.msra.mxu0 0.0
      %8157 = vmatprep.subr.mxu0 0.0
      %8158 = vmatpush1.msra.mxu0 0.0
      %8159 = vmatprep.subr.mxu0 0.0
      %8160 = vmatpush1.msra.mxu0 0.0
      %8161 = vmatprep.subr.mxu0 0.0
      %8162 = vmatpush1.msra.mxu0 0.0
      %8163 = vmatprep.subr.mxu0 0.0
      %8164 = vmatpush1.msra.mxu0 0.0
      %8165 = vmatprep.subr.mxu0 0.0
      %8166 = vmatpush1.msra.mxu0 0.0
      %8167 = vmatprep.mubr.f32.mxu0 0.0
      %8168 = vmatmul.mubr.f32.gmra.mrb[0].mxu0 %v8008
      %v8169 = vpop.f32.mrb[0].mxu0
      %v8170 = vadd.f32 %v7849, %v8169
      %v8171 = vpop.f32.mrb[0].mxu0
      %8172 = vmatprep.mubr.f32.mxu0 0.0
      %8173 = vmatmul.mubr.f32.gmra.mrb[0].mxu0 %v8011
      %v8174 = vpop.f32.mrb[0].mxu0
      %v8175 = vadd.f32 %v7854, %v8174
      %v8176 = vpop.f32.mrb[0].mxu0
      %8177 = vmatprep.mubr.f32.mxu0 0.0
      %8178 = vmatmul.mubr.f32.gmra.mrb[0].mxu0 %v8014
      %v8179 = vpop.f32.mrb[0].mxu0
      %v8180 = vadd.f32 %v7859, %v8179
      %v8181 = vpop.f32.mrb[0].mxu0
      %8182 = vmatprep.mubr.f32.mxu0 0.0
      %8183 = vmatmul.mubr.f32.gmra.mrb[0].mxu0 %v8017
      %v8184 = vpop.f32.mrb[0].mxu0
      %v8185 = vadd.f32 %v7864, %v8184
      %v8186 = vpop.f32.mrb[0].mxu0
      %8187 = vmatprep.mubr.f32.mxu0 0.0
      %8188 = vmatmul.mubr.f32.gmra.mrb[0].mxu0 %v8020
      %v8189 = vpop.f32.mrb[0].mxu0
      %v8190 = vadd.f32 %v7869, %v8189
      %v8191 = vpop.f32.mrb[0].mxu0
      %8192 = vmatprep.mubr.f32.mxu0 0.0
      %8193 = vmatmul.mubr.f32.gmra.mrb[0].mxu0 %v8023
      %v8194 = vpop.f32.mrb[0].mxu0
      %v8195 = vadd.f32 %v7874, %v8194
      %v8196 = vpop.f32.mrb[0].mxu0
      %8197 = vmatprep.mubr.f32.mxu0 0.0
      %8198 = vmatmul.mubr.f32.gmra.mrb[0].mxu0 %v8026
      %v8199 = vpop.f32.mrb[0].mxu0
      %v8200 = vadd.f32 %v7879, %v8199
      %v8201 = vpop.f32.mrb[0].mxu0
      %8202 = vmatprep.mubr.f32.mxu0 0.0
      %8203 = vmatmul.mubr.f32.gmra.mrb[0].mxu0 %v8029
      %v8204 = vpop.f32.mrb[0].mxu0
      %v8205 = vadd.f32 %v7884, %v8204
      %v8206 = vpop.f32.mrb[0].mxu0
      %8207 = vmatprep.mubr.f32.mxu0 0.0
      %8208 = vmatmul.mubr.f32.gmra.mrb[0].mxu0 %v8032
      %v8209 = vpop.f32.mrb[0].mxu0
      %v8210 = vadd.f32 %v7889, %v8209
      %v8211 = vpop.f32.mrb[0].mxu0
      %8212 = vmatprep.mubr.f32.mxu0 0.0
      %8213 = vmatmul.mubr.f32.gmra.mrb[0].mxu0 %v8035
      %v8214 = vpop.f32.mrb[0].mxu0
      %v8215 = vadd.f32 %v7894, %v8214
      %v8216 = vpop.f32.mrb[0].mxu0
      %8217 = vmatprep.mubr.f32.mxu0 0.0
      %8218 = vmatmul.mubr.f32.gmra.mrb[0].mxu0 %v8038
      %v8219 = vpop.f32.mrb[0].mxu0
      %v8220 = vadd.f32 %v7899, %v8219
      %v8221 = vpop.f32.mrb[0].mxu0
      %8222 = vmatprep.mubr.f32.mxu0 0.0
      %8223 = vmatmul.mubr.f32.gmra.mrb[0].mxu0 %v8041
      %v8224 = vpop.f32.mrb[0].mxu0
      %v8225 = vadd.f32 %v7904, %v8224
      %v8226 = vpop.f32.mrb[0].mxu0
      %8227 = vmatprep.mubr.f32.mxu0 0.0
      %8228 = vmatmul.mubr.f32.gmra.mrb[0].mxu0 %v8044
      %v8229 = vpop.f32.mrb[0].mxu0
      %v8230 = vadd.f32 %v7909, %v8229
      %v8231 = vpop.f32.mrb[0].mxu0
      %8232 = vmatprep.mubr.f32.mxu0 0.0
      %8233 = vmatmul.mubr.f32.gmra.mrb[0].mxu0 %v8047
      %v8234 = vpop.f32.mrb[0].mxu0
      %v8235 = vadd.f32 %v7914, %v8234
      %v8236 = vpop.f32.mrb[0].mxu0
      %8237 = vmatprep.mubr.f32.mxu0 0.0
      %8238 = vmatmul.mubr.f32.gmra.mrb[0].mxu0 %v8050
      %v8239 = vpop.f32.mrb[0].mxu0
      %v8240 = vadd.f32 %v7919, %v8239
      %v8241 = vpop.f32.mrb[0].mxu0
      %8242 = vmatprep.mubr.f32.mxu0 0.0
      %8243 = vmatmul.mubr.f32.gmra.mrb[0].mxu0 %v8053
      %v8244 = vpop.f32.mrb[0].mxu0
      %v8245 = vadd.f32 %v7924, %v8244
      %v8246 = vpop.f32.mrb[0].mxu0
      %8247 = vmatprep.mubr.f32.mxu0 0.0
      %8248 = vmatmul.mubr.f32.gmra.mrb[0].mxu0 %v8056
      %v8249 = vpop.f32.mrb[0].mxu0
      %v8250 = vadd.f32 %v7929, %v8249
      %v8251 = vpop.f32.mrb[0].mxu0
      %8252 = vmatprep.mubr.f32.mxu0 0.0
      %8253 = vmatmul.mubr.f32.gmra.mrb[0].mxu0 %v8059
      %v8254 = vpop.f32.mrb[0].mxu0
      %v8255 = vadd.f32 %v7934, %v8254
      %v8256 = vpop.f32.mrb[0].mxu0
      %8257 = vmatprep.mubr.f32.mxu0 0.0
      %8258 = vmatmul.mubr.f32.gmra.mrb[0].mxu0 %v8062
      %v8259 = vpop.f32.mrb[0].mxu0
      %v8260 = vadd.f32 %v7939, %v8259
      %v8261 = vpop.f32.mrb[0].mxu0
      %8262 = vmatprep.mubr.f32.mxu0 0.0
      %8263 = vmatmul.mubr.f32.gmra.mrb[0].mxu0 %v8065
      %v8264 = vpop.f32.mrb[0].mxu0
      %v8265 = vadd.f32 %v7944, %v8264
      %v8266 = vpop.f32.mrb[0].mxu0
      %8267 = vmatprep.mubr.f32.mxu0 0.0
      %8268 = vmatmul.mubr.f32.gmra.mrb[0].mxu0 %v8068
      %v8269 = vpop.f32.mrb[0].mxu0
      %v8270 = vadd.f32 %v7949, %v8269
      %v8271 = vpop.f32.mrb[0].mxu0
      %8272 = vmatprep.mubr.f32.mxu0 0.0
      %8273 = vmatmul.mubr.f32.gmra.mrb[0].mxu0 %v8071
      %v8274 = vpop.f32.mrb[0].mxu0
      %v8275 = vadd.f32 %v7954, %v8274
      %v8276 = vpop.f32.mrb[0].mxu0
      %8277 = vmatprep.mubr.f32.mxu0 0.0
      %8278 = vmatmul.mubr.f32.gmra.mrb[0].mxu0 %v8074
      %v8279 = vpop.f32.mrb[0].mxu0
      %v8280 = vadd.f32 %v7959, %v8279
      %v8281 = vpop.f32.mrb[0].mxu0
      %8282 = vmatprep.mubr.f32.mxu0 0.0
      %8283 = vmatmul.mubr.f32.gmra.mrb[0].mxu0 %v8077
      %v8284 = vpop.f32.mrb[0].mxu0
      %v8285 = vadd.f32 %v7964, %v8284
      %v8286 = vpop.f32.mrb[0].mxu0
      %8287 = vmatprep.mubr.f32.mxu0 0.0
      %8288 = vmatmul.mubr.f32.gmra.mrb[0].mxu0 %v8080
      %v8289 = vpop.f32.mrb[0].mxu0
      %v8290 = vadd.f32 %v7969, %v8289
      %v8291 = vpop.f32.mrb[0].mxu0
      %8292 = vmatprep.mubr.f32.mxu0 0.0
      %8293 = vmatmul.mubr.f32.gmra.mrb[0].mxu0 %v8083
      %v8294 = vpop.f32.mrb[0].mxu0
      %v8295 = vadd.f32 %v7974, %v8294
      %v8296 = vpop.f32.mrb[0].mxu0
      %8297 = vmatprep.mubr.f32.mxu0 0.0
      %8298 = vmatmul.mubr.f32.gmra.mrb[0].mxu0 %v8086
      %v8299 = vpop.f32.mrb[0].mxu0
      %v8300 = vadd.f32 %v7979, %v8299
      %v8301 = vpop.f32.mrb[0].mxu0
      %8302 = vmatprep.mubr.f32.mxu0 0.0
      %8303 = vmatmul.mubr.f32.gmra.mrb[0].mxu0 %v8089
      %v8304 = vpop.f32.mrb[0].mxu0
      %v8305 = vadd.f32 %v7984, %v8304
      %v8306 = vpop.f32.mrb[0].mxu0
      %8307 = vmatprep.mubr.f32.mxu0 0.0
      %8308 = vmatmul.mubr.f32.gmra.mrb[0].mxu0 %v8092
      %v8309 = vpop.f32.mrb[0].mxu0
      %v8310 = vadd.f32 %v7989, %v8309
      %v8311 = vpop.f32.mrb[0].mxu0
      %8312 = vmatprep.mubr.f32.mxu0 0.0
      %8313 = vmatmul.mubr.f32.gmra.mrb[0].mxu0 %v8095
      %v8314 = vpop.f32.mrb[0].mxu0
      %v8315 = vadd.f32 %v7994, %v8314
      %v8316 = vpop.f32.mrb[0].mxu0
      %8317 = vmatprep.mubr.f32.mxu0 0.0
      %8318 = vmatmul.mubr.f32.gmra.mrb[0].mxu0 %v8098
      %v8319 = vpop.f32.mrb[0].mxu0
      %v8320 = vadd.f32 %v7999, %v8319
      %v8321 = vpop.f32.mrb[0].mxu0
      %8322 = vmatprep.mubr.f32.mxu0 0.0
      %8323 = vmatmul.mubr.f32.gmra.mrb[0].mxu0 %v8101
      %v8324 = vpop.f32.mrb[0].mxu0
      %v8325 = vadd.f32 %v8004, %v8324
      %v8326 = vpop.f32.mrb[0].mxu0
      %8327 = vdwg.mxu0
      %s8328 = scalar_lea.vmem %s6, 64
      %v8329 = vld [vmem:[%s8328] sm:$0xff]
      %v8330 = vld [vmem:[%s8328 + $0x8] sm:$0xff]
      %v8331 = vld [vmem:[%s8328 + $0x10] sm:$0xff]
      %v8332 = vld [vmem:[%s8328 + $0x18] sm:$0xff]
      %v8334 = vsel %vm7685, %v7612, 0
      %v8337 = vsel %vm7685, %v7613, 0
      %v8340 = vsel %vm7685, %v7614, 0
      %v8343 = vsel %vm7685, %v7615, 0
      %v8346 = vsel %vm7685, %v7616, 0
      %v8349 = vsel %vm7685, %v7617, 0
      %v8352 = vsel %vm7685, %v7618, 0
      %v8355 = vsel %vm7685, %v7619, 0
      %v8358 = vsel %vm7685, %v7620, 0
      %v8361 = vsel %vm7685, %v7621, 0
      %v8364 = vsel %vm7685, %v7622, 0
      %v8367 = vsel %vm7685, %v7623, 0
      %v8370 = vsel %vm7685, %v7624, 0
      %v8373 = vsel %vm7685, %v7625, 0
      %v8376 = vsel %vm7685, %v7626, 0
      %v8379 = vsel %vm7685, %v7627, 0
      %v8382 = vsel %vm7685, %v7628, 0
      %v8385 = vsel %vm7685, %v7629, 0
      %v8388 = vsel %vm7685, %v7630, 0
      %v8391 = vsel %vm7685, %v7631, 0
      %v8394 = vsel %vm7685, %v7632, 0
      %v8397 = vsel %vm7685, %v7633, 0
      %v8400 = vsel %vm7685, %v7634, 0
      %v8403 = vsel %vm7685, %v7635, 0
      %v8406 = vsel %vm7685, %v7636, 0
      %v8409 = vsel %vm7685, %v7637, 0
      %v8412 = vsel %vm7685, %v7638, 0
      %v8415 = vsel %vm7685, %v7639, 0
      %v8418 = vsel %vm7685, %v7640, 0
      %v8421 = vsel %vm7685, %v7641, 0
      %v8424 = vsel %vm7685, %v7642, 0
      %v8427 = vsel %vm7685, %v7643, 0
      %8429 = vmatprep.subr.mxu0 0.0
      %8430 = vmatpush1.msra.mxu0 %v8329
      %8431 = vmatprep.subr.mxu0 0.0
      %8432 = vmatpush1.msra.mxu0 %v8330
      %8433 = vmatprep.subr.mxu0 0.0
      %8434 = vmatpush1.msra.mxu0 %v8331
      %8435 = vmatprep.subr.mxu0 0.0
      %8436 = vmatpush1.msra.mxu0 %v8332
      %8437 = vmatprep.subr.mxu0 0.0
      %8438 = vmatpush1.msra.mxu0 0.0
      %8439 = vmatprep.subr.mxu0 0.0
      %8440 = vmatpush1.msra.mxu0 0.0
      %8441 = vmatprep.subr.mxu0 0.0
      %8442 = vmatpush1.msra.mxu0 0.0
      %8443 = vmatprep.subr.mxu0 0.0
      %8444 = vmatpush1.msra.mxu0 0.0
      %8445 = vmatprep.subr.mxu0 0.0
      %8446 = vmatpush1.msra.mxu0 0.0
      %8447 = vmatprep.subr.mxu0 0.0
      %8448 = vmatpush1.msra.mxu0 0.0
      %8449 = vmatprep.subr.mxu0 0.0
      %8450 = vmatpush1.msra.mxu0 0.0
      %8451 = vmatprep.subr.mxu0 0.0
      %8452 = vmatpush1.msra.mxu0 0.0
      %8453 = vmatprep.subr.mxu0 0.0
      %8454 = vmatpush1.msra.mxu0 0.0
      %8455 = vmatprep.subr.mxu0 0.0
      %8456 = vmatpush1.msra.mxu0 0.0
      %8457 = vmatprep.subr.mxu0 0.0
      %8458 = vmatpush1.msra.mxu0 0.0
      %8459 = vmatprep.subr.mxu0 0.0
      %8460 = vmatpush1.msra.mxu0 0.0
      %8461 = vmatprep.subr.mxu0 0.0
      %8462 = vmatpush1.msra.mxu0 0.0
      %8463 = vmatprep.subr.mxu0 0.0
      %8464 = vmatpush1.msra.mxu0 0.0
      %8465 = vmatprep.subr.mxu0 0.0
      %8466 = vmatpush1.msra.mxu0 0.0
      %8467 = vmatprep.subr.mxu0 0.0
      %8468 = vmatpush1.msra.mxu0 0.0
      %8469 = vmatprep.subr.mxu0 0.0
      %8470 = vmatpush1.msra.mxu0 0.0
      %8471 = vmatprep.subr.mxu0 0.0
      %8472 = vmatpush1.msra.mxu0 0.0
      %8473 = vmatprep.subr.mxu0 0.0
      %8474 = vmatpush1.msra.mxu0 0.0
      %8475 = vmatprep.subr.mxu0 0.0
      %8476 = vmatpush1.msra.mxu0 0.0
      %8477 = vmatprep.subr.mxu0 0.0
      %8478 = vmatpush1.msra.mxu0 0.0
      %8479 = vmatprep.subr.mxu0 0.0
      %8480 = vmatpush1.msra.mxu0 0.0
      %8481 = vmatprep.subr.mxu0 0.0
      %8482 = vmatpush1.msra.mxu0 0.0
      %8483 = vmatprep.subr.mxu0 0.0
      %8484 = vmatpush1.msra.mxu0 0.0
      %8485 = vmatprep.subr.mxu0 0.0
      %8486 = vmatpush1.msra.mxu0 0.0
      %8487 = vmatprep.subr.mxu0 0.0
      %8488 = vmatpush1.msra.mxu0 0.0
      %8489 = vmatprep.subr.mxu0 0.0
      %8490 = vmatpush1.msra.mxu0 0.0
      %8491 = vmatprep.subr.mxu0 0.0
      %8492 = vmatpush1.msra.mxu0 0.0
      %8493 = vmatprep.mubr.f32.mxu0 0.0
      %8494 = vmatmul.mubr.f32.gmra.mrb[0].mxu0 %v8334
      %v8495 = vpop.f32.mrb[0].mxu0
      %v8496 = vadd.f32 0.0, %v8495
      %v8497 = vpop.f32.mrb[0].mxu0
      %8498 = vmatprep.mubr.f32.mxu0 0.0
      %8499 = vmatmul.mubr.f32.gmra.mrb[0].mxu0 %v8337
      %v8500 = vpop.f32.mrb[0].mxu0
      %v8501 = vadd.f32 0.0, %v8500
      %v8502 = vpop.f32.mrb[0].mxu0
      %8503 = vmatprep.mubr.f32.mxu0 0.0
      %8504 = vmatmul.mubr.f32.gmra.mrb[0].mxu0 %v8340
      %v8505 = vpop.f32.mrb[0].mxu0
      %v8506 = vadd.f32 0.0, %v8505
      %v8507 = vpop.f32.mrb[0].mxu0
      %8508 = vmatprep.mubr.f32.mxu0 0.0
      %8509 = vmatmul.mubr.f32.gmra.mrb[0].mxu0 %v8343
      %v8510 = vpop.f32.mrb[0].mxu0
      %v8511 = vadd.f32 0.0, %v8510
      %v8512 = vpop.f32.mrb[0].mxu0
      %8513 = vmatprep.mubr.f32.mxu0 0.0
      %8514 = vmatmul.mubr.f32.gmra.mrb[0].mxu0 %v8346
      %v8515 = vpop.f32.mrb[0].mxu0
      %v8516 = vadd.f32 0.0, %v8515
      %v8517 = vpop.f32.mrb[0].mxu0
      %8518 = vmatprep.mubr.f32.mxu0 0.0
      %8519 = vmatmul.mubr.f32.gmra.mrb[0].mxu0 %v8349
      %v8520 = vpop.f32.mrb[0].mxu0
      %v8521 = vadd.f32 0.0, %v8520
      %v8522 = vpop.f32.mrb[0].mxu0
      %8523 = vmatprep.mubr.f32.mxu0 0.0
      %8524 = vmatmul.mubr.f32.gmra.mrb[0].mxu0 %v8352
      %v8525 = vpop.f32.mrb[0].mxu0
      %v8526 = vadd.f32 0.0, %v8525
      %v8527 = vpop.f32.mrb[0].mxu0
      %8528 = vmatprep.mubr.f32.mxu0 0.0
      %8529 = vmatmul.mubr.f32.gmra.mrb[0].mxu0 %v8355
      %v8530 = vpop.f32.mrb[0].mxu0
      %v8531 = vadd.f32 0.0, %v8530
      %v8532 = vpop.f32.mrb[0].mxu0
      %8533 = vmatprep.mubr.f32.mxu0 0.0
      %8534 = vmatmul.mubr.f32.gmra.mrb[0].mxu0 %v8358
      %v8535 = vpop.f32.mrb[0].mxu0
      %v8536 = vadd.f32 0.0, %v8535
      %v8537 = vpop.f32.mrb[0].mxu0
      %8538 = vmatprep.mubr.f32.mxu0 0.0
      %8539 = vmatmul.mubr.f32.gmra.mrb[0].mxu0 %v8361
      %v8540 = vpop.f32.mrb[0].mxu0
      %v8541 = vadd.f32 0.0, %v8540
      %v8542 = vpop.f32.mrb[0].mxu0
      %8543 = vmatprep.mubr.f32.mxu0 0.0
      %8544 = vmatmul.mubr.f32.gmra.mrb[0].mxu0 %v8364
      %v8545 = vpop.f32.mrb[0].mxu0
      %v8546 = vadd.f32 0.0, %v8545
      %v8547 = vpop.f32.mrb[0].mxu0
      %8548 = vmatprep.mubr.f32.mxu0 0.0
      %8549 = vmatmul.mubr.f32.gmra.mrb[0].mxu0 %v8367
      %v8550 = vpop.f32.mrb[0].mxu0
      %v8551 = vadd.f32 0.0, %v8550
      %v8552 = vpop.f32.mrb[0].mxu0
      %8553 = vmatprep.mubr.f32.mxu0 0.0
      %8554 = vmatmul.mubr.f32.gmra.mrb[0].mxu0 %v8370
      %v8555 = vpop.f32.mrb[0].mxu0
      %v8556 = vadd.f32 0.0, %v8555
      %v8557 = vpop.f32.mrb[0].mxu0
      %8558 = vmatprep.mubr.f32.mxu0 0.0
      %8559 = vmatmul.mubr.f32.gmra.mrb[0].mxu0 %v8373
      %v8560 = vpop.f32.mrb[0].mxu0
      %v8561 = vadd.f32 0.0, %v8560
      %v8562 = vpop.f32.mrb[0].mxu0
      %8563 = vmatprep.mubr.f32.mxu0 0.0
      %8564 = vmatmul.mubr.f32.gmra.mrb[0].mxu0 %v8376
      %v8565 = vpop.f32.mrb[0].mxu0
      %v8566 = vadd.f32 0.0, %v8565
      %v8567 = vpop.f32.mrb[0].mxu0
      %8568 = vmatprep.mubr.f32.mxu0 0.0
      %8569 = vmatmul.mubr.f32.gmra.mrb[0].mxu0 %v8379
      %v8570 = vpop.f32.mrb[0].mxu0
      %v8571 = vadd.f32 0.0, %v8570
      %v8572 = vpop.f32.mrb[0].mxu0
      %8573 = vmatprep.mubr.f32.mxu0 0.0
      %8574 = vmatmul.mubr.f32.gmra.mrb[0].mxu0 %v8382
      %v8575 = vpop.f32.mrb[0].mxu0
      %v8576 = vadd.f32 0.0, %v8575
      %v8577 = vpop.f32.mrb[0].mxu0
      %8578 = vmatprep.mubr.f32.mxu0 0.0
      %8579 = vmatmul.mubr.f32.gmra.mrb[0].mxu0 %v8385
      %v8580 = vpop.f32.mrb[0].mxu0
      %v8581 = vadd.f32 0.0, %v8580
      %v8582 = vpop.f32.mrb[0].mxu0
      %8583 = vmatprep.mubr.f32.mxu0 0.0
      %8584 = vmatmul.mubr.f32.gmra.mrb[0].mxu0 %v8388
      %v8585 = vpop.f32.mrb[0].mxu0
      %v8586 = vadd.f32 0.0, %v8585
      %v8587 = vpop.f32.mrb[0].mxu0
      %8588 = vmatprep.mubr.f32.mxu0 0.0
      %8589 = vmatmul.mubr.f32.gmra.mrb[0].mxu0 %v8391
      %v8590 = vpop.f32.mrb[0].mxu0
      %v8591 = vadd.f32 0.0, %v8590
      %v8592 = vpop.f32.mrb[0].mxu0
      %8593 = vmatprep.mubr.f32.mxu0 0.0
      %8594 = vmatmul.mubr.f32.gmra.mrb[0].mxu0 %v8394
      %v8595 = vpop.f32.mrb[0].mxu0
      %v8596 = vadd.f32 0.0, %v8595
      %v8597 = vpop.f32.mrb[0].mxu0
      %8598 = vmatprep.mubr.f32.mxu0 0.0
      %8599 = vmatmul.mubr.f32.gmra.mrb[0].mxu0 %v8397
      %v8600 = vpop.f32.mrb[0].mxu0
      %v8601 = vadd.f32 0.0, %v8600
      %v8602 = vpop.f32.mrb[0].mxu0
      %8603 = vmatprep.mubr.f32.mxu0 0.0
      %8604 = vmatmul.mubr.f32.gmra.mrb[0].mxu0 %v8400
      %v8605 = vpop.f32.mrb[0].mxu0
      %v8606 = vadd.f32 0.0, %v8605
      %v8607 = vpop.f32.mrb[0].mxu0
      %8608 = vmatprep.mubr.f32.mxu0 0.0
      %8609 = vmatmul.mubr.f32.gmra.mrb[0].mxu0 %v8403
      %v8610 = vpop.f32.mrb[0].mxu0
      %v8611 = vadd.f32 0.0, %v8610
      %v8612 = vpop.f32.mrb[0].mxu0
      %8613 = vmatprep.mubr.f32.mxu0 0.0
      %8614 = vmatmul.mubr.f32.gmra.mrb[0].mxu0 %v8406
      %v8615 = vpop.f32.mrb[0].mxu0
      %v8616 = vadd.f32 0.0, %v8615
      %v8617 = vpop.f32.mrb[0].mxu0
      %8618 = vmatprep.mubr.f32.mxu0 0.0
      %8619 = vmatmul.mubr.f32.gmra.mrb[0].mxu0 %v8409
      %v8620 = vpop.f32.mrb[0].mxu0
      %v8621 = vadd.f32 0.0, %v8620
      %v8622 = vpop.f32.mrb[0].mxu0
      %8623 = vmatprep.mubr.f32.mxu0 0.0
      %8624 = vmatmul.mubr.f32.gmra.mrb[0].mxu0 %v8412
      %v8625 = vpop.f32.mrb[0].mxu0
      %v8626 = vadd.f32 0.0, %v8625
      %v8627 = vpop.f32.mrb[0].mxu0
      %8628 = vmatprep.mubr.f32.mxu0 0.0
      %8629 = vmatmul.mubr.f32.gmra.mrb[0].mxu0 %v8415
      %v8630 = vpop.f32.mrb[0].mxu0
      %v8631 = vadd.f32 0.0, %v8630
      %v8632 = vpop.f32.mrb[0].mxu0
      %8633 = vmatprep.mubr.f32.mxu0 0.0
      %8634 = vmatmul.mubr.f32.gmra.mrb[0].mxu0 %v8418
      %v8635 = vpop.f32.mrb[0].mxu0
      %v8636 = vadd.f32 0.0, %v8635
      %v8637 = vpop.f32.mrb[0].mxu0
      %8638 = vmatprep.mubr.f32.mxu0 0.0
      %8639 = vmatmul.mubr.f32.gmra.mrb[0].mxu0 %v8421
      %v8640 = vpop.f32.mrb[0].mxu0
      %v8641 = vadd.f32 0.0, %v8640
      %v8642 = vpop.f32.mrb[0].mxu0
      %8643 = vmatprep.mubr.f32.mxu0 0.0
      %8644 = vmatmul.mubr.f32.gmra.mrb[0].mxu0 %v8424
      %v8645 = vpop.f32.mrb[0].mxu0
      %v8646 = vadd.f32 0.0, %v8645
      %v8647 = vpop.f32.mrb[0].mxu0
      %8648 = vmatprep.mubr.f32.mxu0 0.0
      %8649 = vmatmul.mubr.f32.gmra.mrb[0].mxu0 %v8427
      %v8650 = vpop.f32.mrb[0].mxu0
      %v8651 = vadd.f32 0.0, %v8650
      %v8652 = vpop.f32.mrb[0].mxu0
      %8653 = vdwg.mxu0
      %v8654 = vadd.f32 %v8170, %v8496
      %v8655 = vadd.f32 %v8175, %v8501
      %v8656 = vadd.f32 %v8180, %v8506
      %v8657 = vadd.f32 %v8185, %v8511
      %v8658 = vadd.f32 %v8190, %v8516
      %v8659 = vadd.f32 %v8195, %v8521
      %v8660 = vadd.f32 %v8200, %v8526
      %v8661 = vadd.f32 %v8205, %v8531
      %v8662 = vadd.f32 %v8210, %v8536
      %v8663 = vadd.f32 %v8215, %v8541
      %v8664 = vadd.f32 %v8220, %v8546
      %v8665 = vadd.f32 %v8225, %v8551
      %v8666 = vadd.f32 %v8230, %v8556
      %v8667 = vadd.f32 %v8235, %v8561
      %v8668 = vadd.f32 %v8240, %v8566
      %v8669 = vadd.f32 %v8245, %v8571
      %v8670 = vadd.f32 %v8250, %v8576
      %v8671 = vadd.f32 %v8255, %v8581
      %v8672 = vadd.f32 %v8260, %v8586
      %v8673 = vadd.f32 %v8265, %v8591
      %v8674 = vadd.f32 %v8270, %v8596
      %v8675 = vadd.f32 %v8275, %v8601
      %v8676 = vadd.f32 %v8280, %v8606
      %v8677 = vadd.f32 %v8285, %v8611
      %v8678 = vadd.f32 %v8290, %v8616
      %v8679 = vadd.f32 %v8295, %v8621
      %v8680 = vadd.f32 %v8300, %v8626
      %v8681 = vadd.f32 %v8305, %v8631
      %v8682 = vadd.f32 %v8310, %v8636
      %v8683 = vadd.f32 %v8315, %v8641
      %v8684 = vadd.f32 %v8320, %v8646
      %v8685 = vadd.f32 %v8325, %v8651
      %s8686 = scalar_lea.vmem %s6, 96
      %v8687 = vld [vmem:[%s8686] sm:$0xff]
      %v8688 = vld [vmem:[%s8686 + $0x8] sm:$0xff]
      %v8689 = vld [vmem:[%s8686 + $0x10] sm:$0xff]
      %v8690 = vld [vmem:[%s8686 + $0x18] sm:$0xff]
      %v8692 = vsel %vm7685, %v7644, 0
      %v8695 = vsel %vm7685, %v7645, 0
      %v8698 = vsel %vm7685, %v7646, 0
      %v8701 = vsel %vm7685, %v7647, 0
      %v8704 = vsel %vm7685, %v7648, 0
      %v8707 = vsel %vm7685, %v7649, 0
      %v8710 = vsel %vm7685, %v7650, 0
      %v8713 = vsel %vm7685, %v7651, 0
      %v8716 = vsel %vm7685, %v7652, 0
      %v8719 = vsel %vm7685, %v7653, 0
      %v8722 = vsel %vm7685, %v7654, 0
      %v8725 = vsel %vm7685, %v7655, 0
      %v8728 = vsel %vm7685, %v7656, 0
      %v8731 = vsel %vm7685, %v7657, 0
      %v8734 = vsel %vm7685, %v7658, 0
      %v8737 = vsel %vm7685, %v7659, 0
      %v8740 = vsel %vm7685, %v7660, 0
      %v8743 = vsel %vm7685, %v7661, 0
      %v8746 = vsel %vm7685, %v7662, 0
      %v8749 = vsel %vm7685, %v7663, 0
      %v8752 = vsel %vm7685, %v7664, 0
      %v8755 = vsel %vm7685, %v7665, 0
      %v8758 = vsel %vm7685, %v7666, 0
      %v8761 = vsel %vm7685, %v7667, 0
      %v8764 = vsel %vm7685, %v7668, 0
      %v8767 = vsel %vm7685, %v7669, 0
      %v8770 = vsel %vm7685, %v7670, 0
      %v8773 = vsel %vm7685, %v7671, 0
      %v8776 = vsel %vm7685, %v7672, 0
      %v8779 = vsel %vm7685, %v7673, 0
      %v8782 = vsel %vm7685, %v7674, 0
      %v8785 = vsel %vm7685, %v7675, 0
      %8787 = vmatprep.subr.mxu0 0.0
      %8788 = vmatpush1.msra.mxu0 %v8687
      %8789 = vmatprep.subr.mxu0 0.0
      %8790 = vmatpush1.msra.mxu0 %v8688
      %8791 = vmatprep.subr.mxu0 0.0
      %8792 = vmatpush1.msra.mxu0 %v8689
      %8793 = vmatprep.subr.mxu0 0.0
      %8794 = vmatpush1.msra.mxu0 %v8690
      %8795 = vmatprep.subr.mxu0 0.0
      %8796 = vmatpush1.msra.mxu0 0.0
      %8797 = vmatprep.subr.mxu0 0.0
      %8798 = vmatpush1.msra.mxu0 0.0
      %8799 = vmatprep.subr.mxu0 0.0
      %8800 = vmatpush1.msra.mxu0 0.0
      %8801 = vmatprep.subr.mxu0 0.0
      %8802 = vmatpush1.msra.mxu0 0.0
      %8803 = vmatprep.subr.mxu0 0.0
      %8804 = vmatpush1.msra.mxu0 0.0
      %8805 = vmatprep.subr.mxu0 0.0
      %8806 = vmatpush1.msra.mxu0 0.0
      %8807 = vmatprep.subr.mxu0 0.0
      %8808 = vmatpush1.msra.mxu0 0.0
      %8809 = vmatprep.subr.mxu0 0.0
      %8810 = vmatpush1.msra.mxu0 0.0
      %8811 = vmatprep.subr.mxu0 0.0
      %8812 = vmatpush1.msra.mxu0 0.0
      %8813 = vmatprep.subr.mxu0 0.0
      %8814 = vmatpush1.msra.mxu0 0.0
      %8815 = vmatprep.subr.mxu0 0.0
      %8816 = vmatpush1.msra.mxu0 0.0
      %8817 = vmatprep.subr.mxu0 0.0
      %8818 = vmatpush1.msra.mxu0 0.0
      %8819 = vmatprep.subr.mxu0 0.0
      %8820 = vmatpush1.msra.mxu0 0.0
      %8821 = vmatprep.subr.mxu0 0.0
      %8822 = vmatpush1.msra.mxu0 0.0
      %8823 = vmatprep.subr.mxu0 0.0
      %8824 = vmatpush1.msra.mxu0 0.0
      %8825 = vmatprep.subr.mxu0 0.0
      %8826 = vmatpush1.msra.mxu0 0.0
      %8827 = vmatprep.subr.mxu0 0.0
      %8828 = vmatpush1.msra.mxu0 0.0
      %8829 = vmatprep.subr.mxu0 0.0
      %8830 = vmatpush1.msra.mxu0 0.0
      %8831 = vmatprep.subr.mxu0 0.0
      %8832 = vmatpush1.msra.mxu0 0.0
      %8833 = vmatprep.subr.mxu0 0.0
      %8834 = vmatpush1.msra.mxu0 0.0
      %8835 = vmatprep.subr.mxu0 0.0
      %8836 = vmatpush1.msra.mxu0 0.0
      %8837 = vmatprep.subr.mxu0 0.0
      %8838 = vmatpush1.msra.mxu0 0.0
      %8839 = vmatprep.subr.mxu0 0.0
      %8840 = vmatpush1.msra.mxu0 0.0
      %8841 = vmatprep.subr.mxu0 0.0
      %8842 = vmatpush1.msra.mxu0 0.0
      %8843 = vmatprep.subr.mxu0 0.0
      %8844 = vmatpush1.msra.mxu0 0.0
      %8845 = vmatprep.subr.mxu0 0.0
      %8846 = vmatpush1.msra.mxu0 0.0
      %8847 = vmatprep.subr.mxu0 0.0
      %8848 = vmatpush1.msra.mxu0 0.0
      %8849 = vmatprep.subr.mxu0 0.0
      %8850 = vmatpush1.msra.mxu0 0.0
      %8851 = vmatprep.mubr.f32.mxu0 0.0
      %8852 = vmatmul.mubr.f32.gmra.mrb[0].mxu0 %v8692
      %v8853 = vpop.f32.mrb[0].mxu0
      %v8854 = vadd.f32 0.0, %v8853
      %v8855 = vpop.f32.mrb[0].mxu0
      %8856 = vmatprep.mubr.f32.mxu0 0.0
      %8857 = vmatmul.mubr.f32.gmra.mrb[0].mxu0 %v8695
      %v8858 = vpop.f32.mrb[0].mxu0
      %v8859 = vadd.f32 0.0, %v8858
      %v8860 = vpop.f32.mrb[0].mxu0
      %8861 = vmatprep.mubr.f32.mxu0 0.0
      %8862 = vmatmul.mubr.f32.gmra.mrb[0].mxu0 %v8698
      %v8863 = vpop.f32.mrb[0].mxu0
      %v8864 = vadd.f32 0.0, %v8863
      %v8865 = vpop.f32.mrb[0].mxu0
      %8866 = vmatprep.mubr.f32.mxu0 0.0
      %8867 = vmatmul.mubr.f32.gmra.mrb[0].mxu0 %v8701
      %v8868 = vpop.f32.mrb[0].mxu0
      %v8869 = vadd.f32 0.0, %v8868
      %v8870 = vpop.f32.mrb[0].mxu0
      %8871 = vmatprep.mubr.f32.mxu0 0.0
      %8872 = vmatmul.mubr.f32.gmra.mrb[0].mxu0 %v8704
      %v8873 = vpop.f32.mrb[0].mxu0
      %v8874 = vadd.f32 0.0, %v8873
      %v8875 = vpop.f32.mrb[0].mxu0
      %8876 = vmatprep.mubr.f32.mxu0 0.0
      %8877 = vmatmul.mubr.f32.gmra.mrb[0].mxu0 %v8707
      %v8878 = vpop.f32.mrb[0].mxu0
      %v8879 = vadd.f32 0.0, %v8878
      %v8880 = vpop.f32.mrb[0].mxu0
      %8881 = vmatprep.mubr.f32.mxu0 0.0
      %8882 = vmatmul.mubr.f32.gmra.mrb[0].mxu0 %v8710
      %v8883 = vpop.f32.mrb[0].mxu0
      %v8884 = vadd.f32 0.0, %v8883
      %v8885 = vpop.f32.mrb[0].mxu0
      %8886 = vmatprep.mubr.f32.mxu0 0.0
      %8887 = vmatmul.mubr.f32.gmra.mrb[0].mxu0 %v8713
      %v8888 = vpop.f32.mrb[0].mxu0
      %v8889 = vadd.f32 0.0, %v8888
      %v8890 = vpop.f32.mrb[0].mxu0
      %8891 = vmatprep.mubr.f32.mxu0 0.0
      %8892 = vmatmul.mubr.f32.gmra.mrb[0].mxu0 %v8716
      %v8893 = vpop.f32.mrb[0].mxu0
      %v8894 = vadd.f32 0.0, %v8893
      %v8895 = vpop.f32.mrb[0].mxu0
      %8896 = vmatprep.mubr.f32.mxu0 0.0
      %8897 = vmatmul.mubr.f32.gmra.mrb[0].mxu0 %v8719
      %v8898 = vpop.f32.mrb[0].mxu0
      %v8899 = vadd.f32 0.0, %v8898
      %v8900 = vpop.f32.mrb[0].mxu0
      %8901 = vmatprep.mubr.f32.mxu0 0.0
      %8902 = vmatmul.mubr.f32.gmra.mrb[0].mxu0 %v8722
      %v8903 = vpop.f32.mrb[0].mxu0
      %v8904 = vadd.f32 0.0, %v8903
      %v8905 = vpop.f32.mrb[0].mxu0
      %8906 = vmatprep.mubr.f32.mxu0 0.0
      %8907 = vmatmul.mubr.f32.gmra.mrb[0].mxu0 %v8725
      %v8908 = vpop.f32.mrb[0].mxu0
      %v8909 = vadd.f32 0.0, %v8908
      %v8910 = vpop.f32.mrb[0].mxu0
      %8911 = vmatprep.mubr.f32.mxu0 0.0
      %8912 = vmatmul.mubr.f32.gmra.mrb[0].mxu0 %v8728
      %v8913 = vpop.f32.mrb[0].mxu0
      %v8914 = vadd.f32 0.0, %v8913
      %v8915 = vpop.f32.mrb[0].mxu0
      %8916 = vmatprep.mubr.f32.mxu0 0.0
      %8917 = vmatmul.mubr.f32.gmra.mrb[0].mxu0 %v8731
      %v8918 = vpop.f32.mrb[0].mxu0
      %v8919 = vadd.f32 0.0, %v8918
      %v8920 = vpop.f32.mrb[0].mxu0
      %8921 = vmatprep.mubr.f32.mxu0 0.0
      %8922 = vmatmul.mubr.f32.gmra.mrb[0].mxu0 %v8734
      %v8923 = vpop.f32.mrb[0].mxu0
      %v8924 = vadd.f32 0.0, %v8923
      %v8925 = vpop.f32.mrb[0].mxu0
      %8926 = vmatprep.mubr.f32.mxu0 0.0
      %8927 = vmatmul.mubr.f32.gmra.mrb[0].mxu0 %v8737
      %v8928 = vpop.f32.mrb[0].mxu0
      %v8929 = vadd.f32 0.0, %v8928
      %v8930 = vpop.f32.mrb[0].mxu0
      %8931 = vmatprep.mubr.f32.mxu0 0.0
      %8932 = vmatmul.mubr.f32.gmra.mrb[0].mxu0 %v8740
      %v8933 = vpop.f32.mrb[0].mxu0
      %v8934 = vadd.f32 0.0, %v8933
      %v8935 = vpop.f32.mrb[0].mxu0
      %8936 = vmatprep.mubr.f32.mxu0 0.0
      %8937 = vmatmul.mubr.f32.gmra.mrb[0].mxu0 %v8743
      %v8938 = vpop.f32.mrb[0].mxu0
      %v8939 = vadd.f32 0.0, %v8938
      %v8940 = vpop.f32.mrb[0].mxu0
      %8941 = vmatprep.mubr.f32.mxu0 0.0
      %8942 = vmatmul.mubr.f32.gmra.mrb[0].mxu0 %v8746
      %v8943 = vpop.f32.mrb[0].mxu0
      %v8944 = vadd.f32 0.0, %v8943
      %v8945 = vpop.f32.mrb[0].mxu0
      %8946 = vmatprep.mubr.f32.mxu0 0.0
      %8947 = vmatmul.mubr.f32.gmra.mrb[0].mxu0 %v8749
      %v8948 = vpop.f32.mrb[0].mxu0
      %v8949 = vadd.f32 0.0, %v8948
      %v8950 = vpop.f32.mrb[0].mxu0
      %8951 = vmatprep.mubr.f32.mxu0 0.0
      %8952 = vmatmul.mubr.f32.gmra.mrb[0].mxu0 %v8752
      %v8953 = vpop.f32.mrb[0].mxu0
      %v8954 = vadd.f32 0.0, %v8953
      %v8955 = vpop.f32.mrb[0].mxu0
      %8956 = vmatprep.mubr.f32.mxu0 0.0
      %8957 = vmatmul.mubr.f32.gmra.mrb[0].mxu0 %v8755
      %v8958 = vpop.f32.mrb[0].mxu0
      %v8959 = vadd.f32 0.0, %v8958
      %v8960 = vpop.f32.mrb[0].mxu0
      %8961 = vmatprep.mubr.f32.mxu0 0.0
      %8962 = vmatmul.mubr.f32.gmra.mrb[0].mxu0 %v8758
      %v8963 = vpop.f32.mrb[0].mxu0
      %v8964 = vadd.f32 0.0, %v8963
      %v8965 = vpop.f32.mrb[0].mxu0
      %8966 = vmatprep.mubr.f32.mxu0 0.0
      %8967 = vmatmul.mubr.f32.gmra.mrb[0].mxu0 %v8761
      %v8968 = vpop.f32.mrb[0].mxu0
      %v8969 = vadd.f32 0.0, %v8968
      %v8970 = vpop.f32.mrb[0].mxu0
      %8971 = vmatprep.mubr.f32.mxu0 0.0
      %8972 = vmatmul.mubr.f32.gmra.mrb[0].mxu0 %v8764
      %v8973 = vpop.f32.mrb[0].mxu0
      %v8974 = vadd.f32 0.0, %v8973
      %v8975 = vpop.f32.mrb[0].mxu0
      %8976 = vmatprep.mubr.f32.mxu0 0.0
      %8977 = vmatmul.mubr.f32.gmra.mrb[0].mxu0 %v8767
      %v8978 = vpop.f32.mrb[0].mxu0
      %v8979 = vadd.f32 0.0, %v8978
      %v8980 = vpop.f32.mrb[0].mxu0
      %8981 = vmatprep.mubr.f32.mxu0 0.0
      %8982 = vmatmul.mubr.f32.gmra.mrb[0].mxu0 %v8770
      %v8983 = vpop.f32.mrb[0].mxu0
      %v8984 = vadd.f32 0.0, %v8983
      %v8985 = vpop.f32.mrb[0].mxu0
      %8986 = vmatprep.mubr.f32.mxu0 0.0
      %8987 = vmatmul.mubr.f32.gmra.mrb[0].mxu0 %v8773
      %v8988 = vpop.f32.mrb[0].mxu0
      %v8989 = vadd.f32 0.0, %v8988
      %v8990 = vpop.f32.mrb[0].mxu0
      %8991 = vmatprep.mubr.f32.mxu0 0.0
      %8992 = vmatmul.mubr.f32.gmra.mrb[0].mxu0 %v8776
      %v8993 = vpop.f32.mrb[0].mxu0
      %v8994 = vadd.f32 0.0, %v8993
      %v8995 = vpop.f32.mrb[0].mxu0
      %8996 = vmatprep.mubr.f32.mxu0 0.0
      %8997 = vmatmul.mubr.f32.gmra.mrb[0].mxu0 %v8779
      %v8998 = vpop.f32.mrb[0].mxu0
      %v8999 = vadd.f32 0.0, %v8998
      %v9000 = vpop.f32.mrb[0].mxu0
      %9001 = vmatprep.mubr.f32.mxu0 0.0
      %9002 = vmatmul.mubr.f32.gmra.mrb[0].mxu0 %v8782
      %v9003 = vpop.f32.mrb[0].mxu0
      %v9004 = vadd.f32 0.0, %v9003
      %v9005 = vpop.f32.mrb[0].mxu0
      %9006 = vmatprep.mubr.f32.mxu0 0.0
      %9007 = vmatmul.mubr.f32.gmra.mrb[0].mxu0 %v8785
      %v9008 = vpop.f32.mrb[0].mxu0
      %v9009 = vadd.f32 0.0, %v9008
      %v9010 = vpop.f32.mrb[0].mxu0
      %9011 = vdwg.mxu0
      %v9012 = vadd.f32 %v8654, %v8854
      %v9013 = vadd.f32 %v8655, %v8859
      %v9014 = vadd.f32 %v8656, %v8864
      %v9015 = vadd.f32 %v8657, %v8869
      %v9016 = vadd.f32 %v8658, %v8874
      %v9017 = vadd.f32 %v8659, %v8879
      %v9018 = vadd.f32 %v8660, %v8884
      %v9019 = vadd.f32 %v8661, %v8889
      %v9020 = vadd.f32 %v8662, %v8894
      %v9021 = vadd.f32 %v8663, %v8899
      %v9022 = vadd.f32 %v8664, %v8904
      %v9023 = vadd.f32 %v8665, %v8909
      %v9024 = vadd.f32 %v8666, %v8914
      %v9025 = vadd.f32 %v8667, %v8919
      %v9026 = vadd.f32 %v8668, %v8924
      %v9027 = vadd.f32 %v8669, %v8929
      %v9028 = vadd.f32 %v8670, %v8934
      %v9029 = vadd.f32 %v8671, %v8939
      %v9030 = vadd.f32 %v8672, %v8944
      %v9031 = vadd.f32 %v8673, %v8949
      %v9032 = vadd.f32 %v8674, %v8954
      %v9033 = vadd.f32 %v8675, %v8959
      %v9034 = vadd.f32 %v8676, %v8964
      %v9035 = vadd.f32 %v8677, %v8969
      %v9036 = vadd.f32 %v8678, %v8974
      %v9037 = vadd.f32 %v8679, %v8979
      %v9038 = vadd.f32 %v8680, %v8984
      %v9039 = vadd.f32 %v8681, %v8989
      %v9040 = vadd.f32 %v8682, %v8994
      %v9041 = vadd.f32 %v8683, %v8999
      %v9042 = vadd.f32 %v8684, %v9004
      %v9043 = vadd.f32 %v8685, %v9009
      %v9044 = vld [vmem:[%s7] sm:$0x1]
      %v9046 = vlaneseq
      %v9047 = vshrl.u32 %v9046, 7
      %v9048 = vsub.s32 0, %v9047
      %v9049 = vrot.slane %v9044, %v9048
      %v9051 = vadd.f32 %v9012, %v9049
      %v9052 = vadd.f32 %v9013, %v9049
      %v9053 = vadd.f32 %v9014, %v9049
      %v9054 = vadd.f32 %v9015, %v9049
      %v9055 = vadd.f32 %v9016, %v9049
      %v9056 = vadd.f32 %v9017, %v9049
      %v9057 = vadd.f32 %v9018, %v9049
      %v9058 = vadd.f32 %v9019, %v9049
      %v9059 = vadd.f32 %v9020, %v9049
      %v9060 = vadd.f32 %v9021, %v9049
      %v9061 = vadd.f32 %v9022, %v9049
      %v9062 = vadd.f32 %v9023, %v9049
      %v9063 = vadd.f32 %v9024, %v9049
      %v9064 = vadd.f32 %v9025, %v9049
      %v9065 = vadd.f32 %v9026, %v9049
      %v9066 = vadd.f32 %v9027, %v9049
      %v9067 = vadd.f32 %v9028, %v9049
      %v9068 = vadd.f32 %v9029, %v9049
      %v9069 = vadd.f32 %v9030, %v9049
      %v9070 = vadd.f32 %v9031, %v9049
      %v9071 = vadd.f32 %v9032, %v9049
      %v9072 = vadd.f32 %v9033, %v9049
      %v9073 = vadd.f32 %v9034, %v9049
      %v9074 = vadd.f32 %v9035, %v9049
      %v9075 = vadd.f32 %v9036, %v9049
      %v9076 = vadd.f32 %v9037, %v9049
      %v9077 = vadd.f32 %v9038, %v9049
      %v9078 = vadd.f32 %v9039, %v9049
      %v9079 = vadd.f32 %v9040, %v9049
      %v9080 = vadd.f32 %v9041, %v9049
      %v9081 = vadd.f32 %v9042, %v9049
      %v9082 = vadd.f32 %v9043, %v9049
      %v9083 = vmax.f32 %v9051, 0.0
      %v9084 = vmax.f32 %v9052, 0.0
      %v9085 = vmax.f32 %v9053, 0.0
      %v9086 = vmax.f32 %v9054, 0.0
      %v9087 = vmax.f32 %v9055, 0.0
      %v9088 = vmax.f32 %v9056, 0.0
      %v9089 = vmax.f32 %v9057, 0.0
      %v9090 = vmax.f32 %v9058, 0.0
      %v9091 = vmax.f32 %v9059, 0.0
      %v9092 = vmax.f32 %v9060, 0.0
      %v9093 = vmax.f32 %v9061, 0.0
      %v9094 = vmax.f32 %v9062, 0.0
      %v9095 = vmax.f32 %v9063, 0.0
      %v9096 = vmax.f32 %v9064, 0.0
      %v9097 = vmax.f32 %v9065, 0.0
      %v9098 = vmax.f32 %v9066, 0.0
      %v9099 = vmax.f32 %v9067, 0.0
      %v9100 = vmax.f32 %v9068, 0.0
      %v9101 = vmax.f32 %v9069, 0.0
      %v9102 = vmax.f32 %v9070, 0.0
      %v9103 = vmax.f32 %v9071, 0.0
      %v9104 = vmax.f32 %v9072, 0.0
      %v9105 = vmax.f32 %v9073, 0.0
      %v9106 = vmax.f32 %v9074, 0.0
      %v9107 = vmax.f32 %v9075, 0.0
      %v9108 = vmax.f32 %v9076, 0.0
      %v9109 = vmax.f32 %v9077, 0.0
      %v9110 = vmax.f32 %v9078, 0.0
      %v9111 = vmax.f32 %v9079, 0.0
      %v9112 = vmax.f32 %v9080, 0.0
      %v9113 = vmax.f32 %v9081, 0.0
      %v9114 = vmax.f32 %v9082, 0.0
      %v9115 = vld [vmem:[%s8] sm:$0xff]
      %v9116 = vld [vmem:[%s8 + $0x8] sm:$0xff]
      %v9117 = vld [vmem:[%s8 + $0x10] sm:$0xff]
      %v9118 = vld [vmem:[%s8 + $0x18] sm:$0xff]
      %v9119 = vld [vmem:[%s8 + $0x20] sm:$0xff]
      %v9120 = vld [vmem:[%s8 + $0x28] sm:$0xff]
      %v9121 = vld [vmem:[%s8 + $0x30] sm:$0xff]
      %v9122 = vld [vmem:[%s8 + $0x38] sm:$0xff]
      %s9123 = scalar_lea.vmem %s8, 64
      %v9124 = vld [vmem:[%s9123] sm:$0xff]
      %v9125 = vld [vmem:[%s9123 + $0x8] sm:$0xff]
      %v9126 = vld [vmem:[%s9123 + $0x10] sm:$0xff]
      %v9127 = vld [vmem:[%s9123 + $0x18] sm:$0xff]
      %v9128 = vld [vmem:[%s9123 + $0x20] sm:$0xff]
      %v9129 = vld [vmem:[%s9123 + $0x28] sm:$0xff]
      %v9130 = vld [vmem:[%s9123 + $0x30] sm:$0xff]
      %v9131 = vld [vmem:[%s9123 + $0x38] sm:$0xff]
      %v9133 = vsel %vm7685, %v9085, 0
      %v9136 = vsel %vm7685, %v9086, 0
      %9138 = vmatprep.subr.mxu0 %v9125
      %9139 = vmatpush1.msra.mxu0 %v9124
      %9140 = vmatprep.subr.mxu0 %v9127
      %9141 = vmatpush1.msra.mxu0 %v9126
      %9142 = vmatprep.subr.mxu0 %v9129
      %9143 = vmatpush1.msra.mxu0 %v9128
      %9144 = vmatprep.subr.mxu0 %v9131
      %9145 = vmatpush1.msra.mxu0 %v9130
      %9146 = vmatprep.subr.mxu0 0.0
      %9147 = vmatpush1.msra.mxu0 0.0
      %9148 = vmatprep.subr.mxu0 0.0
      %9149 = vmatpush1.msra.mxu0 0.0
      %9150 = vmatprep.subr.mxu0 0.0
      %9151 = vmatpush1.msra.mxu0 0.0
      %9152 = vmatprep.subr.mxu0 0.0
      %9153 = vmatpush1.msra.mxu0 0.0
      %9154 = vmatprep.subr.mxu0 0.0
      %9155 = vmatpush1.msra.mxu0 0.0
      %9156 = vmatprep.subr.mxu0 0.0
      %9157 = vmatpush1.msra.mxu0 0.0
      %9158 = vmatprep.subr.mxu0 0.0
      %9159 = vmatpush1.msra.mxu0 0.0
      %9160 = vmatprep.subr.mxu0 0.0
      %9161 = vmatpush1.msra.mxu0 0.0
      %9162 = vmatprep.subr.mxu0 0.0
      %9163 = vmatpush1.msra.mxu0 0.0
      %9164 = vmatprep.subr.mxu0 0.0
      %9165 = vmatpush1.msra.mxu0 0.0
      %9166 = vmatprep.subr.mxu0 0.0
      %9167 = vmatpush1.msra.mxu0 0.0
      %9168 = vmatprep.subr.mxu0 0.0
      %9169 = vmatpush1.msra.mxu0 0.0
      %9170 = vmatprep.subr.mxu0 0.0
      %9171 = vmatpush1.msra.mxu0 0.0
      %9172 = vmatprep.subr.mxu0 0.0
      %9173 = vmatpush1.msra.mxu0 0.0
      %9174 = vmatprep.subr.mxu0 0.0
      %9175 = vmatpush1.msra.mxu0 0.0
      %9176 = vmatprep.subr.mxu0 0.0
      %9177 = vmatpush1.msra.mxu0 0.0
      %9178 = vmatprep.subr.mxu0 0.0
      %9179 = vmatpush1.msra.mxu0 0.0
      %9180 = vmatprep.subr.mxu0 0.0
      %9181 = vmatpush1.msra.mxu0 0.0
      %9182 = vmatprep.subr.mxu0 0.0
      %9183 = vmatpush1.msra.mxu0 0.0
      %9184 = vmatprep.subr.mxu0 0.0
      %9185 = vmatpush1.msra.mxu0 0.0
      %9186 = vmatprep.subr.mxu0 0.0
      %9187 = vmatpush1.msra.mxu0 0.0
      %9188 = vmatprep.subr.mxu0 0.0
      %9189 = vmatpush1.msra.mxu0 0.0
      %9190 = vmatprep.subr.mxu0 0.0
      %9191 = vmatpush1.msra.mxu0 0.0
      %9192 = vmatprep.subr.mxu0 0.0
      %9193 = vmatpush1.msra.mxu0 0.0
      %9194 = vmatprep.subr.mxu0 0.0
      %9195 = vmatpush1.msra.mxu0 0.0
      %9196 = vmatprep.subr.mxu0 0.0
      %9197 = vmatpush1.msra.mxu0 0.0
      %9198 = vmatprep.subr.mxu0 0.0
      %9199 = vmatpush1.msra.mxu0 0.0
      %9200 = vmatprep.subr.mxu0 0.0
      %9201 = vmatpush1.msra.mxu0 0.0
      %9202 = vmatprep.mubr.f32.mxu0 0.0
      %9203 = vmatmul.mubr.f32.gmra.mrb[0].mxu0 %v9133
      %v9204 = vpop.f32.mrb[0].mxu0
      %v9205 = vadd.f32 0.0, %v9204
      %v9206 = vpop.f32.mrb[0].mxu0
      %v9207 = vadd.f32 0.0, %v9206
      %9208 = vmatprep.mubr.f32.mxu0 0.0
      %9209 = vmatmul.mubr.f32.gmra.mrb[0].mxu0 %v9136
      %v9210 = vpop.f32.mrb[0].mxu0
      %v9211 = vadd.f32 0.0, %v9210
      %v9212 = vpop.f32.mrb[0].mxu0
      %v9213 = vadd.f32 0.0, %v9212
      %9214 = vdwg.mxu0
      %v9216 = vsel %vm7685, %v9083, 0
      %v9219 = vsel %vm7685, %v9084, 0
      %9221 = vmatprep.subr.mxu0 %v9116
      %9222 = vmatpush1.msra.mxu0 %v9115
      %9223 = vmatprep.subr.mxu0 %v9118
      %9224 = vmatpush1.msra.mxu0 %v9117
      %9225 = vmatprep.subr.mxu0 %v9120
      %9226 = vmatpush1.msra.mxu0 %v9119
      %9227 = vmatprep.subr.mxu0 %v9122
      %9228 = vmatpush1.msra.mxu0 %v9121
      %9229 = vmatprep.subr.mxu0 0.0
      %9230 = vmatpush1.msra.mxu0 0.0
      %9231 = vmatprep.subr.mxu0 0.0
      %9232 = vmatpush1.msra.mxu0 0.0
      %9233 = vmatprep.subr.mxu0 0.0
      %9234 = vmatpush1.msra.mxu0 0.0
      %9235 = vmatprep.subr.mxu0 0.0
      %9236 = vmatpush1.msra.mxu0 0.0
      %9237 = vmatprep.subr.mxu0 0.0
      %9238 = vmatpush1.msra.mxu0 0.0
      %9239 = vmatprep.subr.mxu0 0.0
      %9240 = vmatpush1.msra.mxu0 0.0
      %9241 = vmatprep.subr.mxu0 0.0
      %9242 = vmatpush1.msra.mxu0 0.0
      %9243 = vmatprep.subr.mxu0 0.0
      %9244 = vmatpush1.msra.mxu0 0.0
      %9245 = vmatprep.subr.mxu0 0.0
      %9246 = vmatpush1.msra.mxu0 0.0
      %9247 = vmatprep.subr.mxu0 0.0
      %9248 = vmatpush1.msra.mxu0 0.0
      %9249 = vmatprep.subr.mxu0 0.0
      %9250 = vmatpush1.msra.mxu0 0.0
      %9251 = vmatprep.subr.mxu0 0.0
      %9252 = vmatpush1.msra.mxu0 0.0
      %9253 = vmatprep.subr.mxu0 0.0
      %9254 = vmatpush1.msra.mxu0 0.0
      %9255 = vmatprep.subr.mxu0 0.0
      %9256 = vmatpush1.msra.mxu0 0.0
      %9257 = vmatprep.subr.mxu0 0.0
      %9258 = vmatpush1.msra.mxu0 0.0
      %9259 = vmatprep.subr.mxu0 0.0
      %9260 = vmatpush1.msra.mxu0 0.0
      %9261 = vmatprep.subr.mxu0 0.0
      %9262 = vmatpush1.msra.mxu0 0.0
      %9263 = vmatprep.subr.mxu0 0.0
      %9264 = vmatpush1.msra.mxu0 0.0
      %9265 = vmatprep.subr.mxu0 0.0
      %9266 = vmatpush1.msra.mxu0 0.0
      %9267 = vmatprep.subr.mxu0 0.0
      %9268 = vmatpush1.msra.mxu0 0.0
      %9269 = vmatprep.subr.mxu0 0.0
      %9270 = vmatpush1.msra.mxu0 0.0
      %9271 = vmatprep.subr.mxu0 0.0
      %9272 = vmatpush1.msra.mxu0 0.0
      %9273 = vmatprep.subr.mxu0 0.0
      %9274 = vmatpush1.msra.mxu0 0.0
      %9275 = vmatprep.subr.mxu0 0.0
      %9276 = vmatpush1.msra.mxu0 0.0
      %9277 = vmatprep.subr.mxu0 0.0
      %9278 = vmatpush1.msra.mxu0 0.0
      %9279 = vmatprep.subr.mxu0 0.0
      %9280 = vmatpush1.msra.mxu0 0.0
      %9281 = vmatprep.subr.mxu0 0.0
      %9282 = vmatpush1.msra.mxu0 0.0
      %9283 = vmatprep.subr.mxu0 0.0
      %9284 = vmatpush1.msra.mxu0 0.0
      %9285 = vmatprep.mubr.f32.mxu0 0.0
      %9286 = vmatmul.mubr.f32.gmra.mrb[0].mxu0 %v9216
      %v9287 = vpop.f32.mrb[0].mxu0
      %v9288 = vadd.f32 %v9205, %v9287
      %v9289 = vpop.f32.mrb[0].mxu0
      %v9290 = vadd.f32 %v9207, %v9289
      %9291 = vmatprep.mubr.f32.mxu0 0.0
      %9292 = vmatmul.mubr.f32.gmra.mrb[0].mxu0 %v9219
      %v9293 = vpop.f32.mrb[0].mxu0
      %v9294 = vadd.f32 %v9211, %v9293
      %v9295 = vpop.f32.mrb[0].mxu0
      %v9296 = vadd.f32 %v9213, %v9295
      %9297 = vdwg.mxu0
      %s9298 = scalar_lea.vmem %s8, 128
      %v9299 = vld [vmem:[%s9298] sm:$0xff]
      %v9300 = vld [vmem:[%s9298 + $0x8] sm:$0xff]
      %v9301 = vld [vmem:[%s9298 + $0x10] sm:$0xff]
      %v9302 = vld [vmem:[%s9298 + $0x18] sm:$0xff]
      %v9303 = vld [vmem:[%s9298 + $0x20] sm:$0xff]
      %v9304 = vld [vmem:[%s9298 + $0x28] sm:$0xff]
      %v9305 = vld [vmem:[%s9298 + $0x30] sm:$0xff]
      %v9306 = vld [vmem:[%s9298 + $0x38] sm:$0xff]
      %v9308 = vsel %vm7685, %v9087, 0
      %v9311 = vsel %vm7685, %v9088, 0
      %9313 = vmatprep.subr.mxu0 %v9300
      %9314 = vmatpush1.msra.mxu0 %v9299
      %9315 = vmatprep.subr.mxu0 %v9302
      %9316 = vmatpush1.msra.mxu0 %v9301
      %9317 = vmatprep.subr.mxu0 %v9304
      %9318 = vmatpush1.msra.mxu0 %v9303
      %9319 = vmatprep.subr.mxu0 %v9306
      %9320 = vmatpush1.msra.mxu0 %v9305
      %9321 = vmatprep.subr.mxu0 0.0
      %9322 = vmatpush1.msra.mxu0 0.0
      %9323 = vmatprep.subr.mxu0 0.0
      %9324 = vmatpush1.msra.mxu0 0.0
      %9325 = vmatprep.subr.mxu0 0.0
      %9326 = vmatpush1.msra.mxu0 0.0
      %9327 = vmatprep.subr.mxu0 0.0
      %9328 = vmatpush1.msra.mxu0 0.0
      %9329 = vmatprep.subr.mxu0 0.0
      %9330 = vmatpush1.msra.mxu0 0.0
      %9331 = vmatprep.subr.mxu0 0.0
      %9332 = vmatpush1.msra.mxu0 0.0
      %9333 = vmatprep.subr.mxu0 0.0
      %9334 = vmatpush1.msra.mxu0 0.0
      %9335 = vmatprep.subr.mxu0 0.0
      %9336 = vmatpush1.msra.mxu0 0.0
      %9337 = vmatprep.subr.mxu0 0.0
      %9338 = vmatpush1.msra.mxu0 0.0
      %9339 = vmatprep.subr.mxu0 0.0
      %9340 = vmatpush1.msra.mxu0 0.0
      %9341 = vmatprep.subr.mxu0 0.0
      %9342 = vmatpush1.msra.mxu0 0.0
      %9343 = vmatprep.subr.mxu0 0.0
      %9344 = vmatpush1.msra.mxu0 0.0
      %9345 = vmatprep.subr.mxu0 0.0
      %9346 = vmatpush1.msra.mxu0 0.0
      %9347 = vmatprep.subr.mxu0 0.0
      %9348 = vmatpush1.msra.mxu0 0.0
      %9349 = vmatprep.subr.mxu0 0.0
      %9350 = vmatpush1.msra.mxu0 0.0
      %9351 = vmatprep.subr.mxu0 0.0
      %9352 = vmatpush1.msra.mxu0 0.0
      %9353 = vmatprep.subr.mxu0 0.0
      %9354 = vmatpush1.msra.mxu0 0.0
      %9355 = vmatprep.subr.mxu0 0.0
      %9356 = vmatpush1.msra.mxu0 0.0
      %9357 = vmatprep.subr.mxu0 0.0
      %9358 = vmatpush1.msra.mxu0 0.0
      %9359 = vmatprep.subr.mxu0 0.0
      %9360 = vmatpush1.msra.mxu0 0.0
      %9361 = vmatprep.subr.mxu0 0.0
      %9362 = vmatpush1.msra.mxu0 0.0
      %9363 = vmatprep.subr.mxu0 0.0
      %9364 = vmatpush1.msra.mxu0 0.0
      %9365 = vmatprep.subr.mxu0 0.0
      %9366 = vmatpush1.msra.mxu0 0.0
      %9367 = vmatprep.subr.mxu0 0.0
      %9368 = vmatpush1.msra.mxu0 0.0
      %9369 = vmatprep.subr.mxu0 0.0
      %9370 = vmatpush1.msra.mxu0 0.0
      %9371 = vmatprep.subr.mxu0 0.0
      %9372 = vmatpush1.msra.mxu0 0.0
      %9373 = vmatprep.subr.mxu0 0.0
      %9374 = vmatpush1.msra.mxu0 0.0
      %9375 = vmatprep.subr.mxu0 0.0
      %9376 = vmatpush1.msra.mxu0 0.0
      %9377 = vmatprep.mubr.f32.mxu0 0.0
      %9378 = vmatmul.mubr.f32.gmra.mrb[0].mxu0 %v9308
      %v9379 = vpop.f32.mrb[0].mxu0
      %v9380 = vadd.f32 0.0, %v9379
      %v9381 = vpop.f32.mrb[0].mxu0
      %v9382 = vadd.f32 0.0, %v9381
      %9383 = vmatprep.mubr.f32.mxu0 0.0
      %9384 = vmatmul.mubr.f32.gmra.mrb[0].mxu0 %v9311
      %v9385 = vpop.f32.mrb[0].mxu0
      %v9386 = vadd.f32 0.0, %v9385
      %v9387 = vpop.f32.mrb[0].mxu0
      %v9388 = vadd.f32 0.0, %v9387
      %9389 = vdwg.mxu0
      %v9390 = vadd.f32 %v9288, %v9380
      %v9391 = vadd.f32 %v9290, %v9382
      %v9392 = vadd.f32 %v9294, %v9386
      %v9393 = vadd.f32 %v9296, %v9388
      %s9394 = scalar_lea.vmem %s8, 192
      %v9395 = vld [vmem:[%s9394] sm:$0xff]
      %v9396 = vld [vmem:[%s9394 + $0x8] sm:$0xff]
      %v9397 = vld [vmem:[%s9394 + $0x10] sm:$0xff]
      %v9398 = vld [vmem:[%s9394 + $0x18] sm:$0xff]
      %v9399 = vld [vmem:[%s9394 + $0x20] sm:$0xff]
      %v9400 = vld [vmem:[%s9394 + $0x28] sm:$0xff]
      %v9401 = vld [vmem:[%s9394 + $0x30] sm:$0xff]
      %v9402 = vld [vmem:[%s9394 + $0x38] sm:$0xff]
      %v9404 = vsel %vm7685, %v9089, 0
      %v9407 = vsel %vm7685, %v9090, 0
      %9409 = vmatprep.subr.mxu0 %v9396
      %9410 = vmatpush1.msra.mxu0 %v9395
      %9411 = vmatprep.subr.mxu0 %v9398
      %9412 = vmatpush1.msra.mxu0 %v9397
      %9413 = vmatprep.subr.mxu0 %v9400
      %9414 = vmatpush1.msra.mxu0 %v9399
      %9415 = vmatprep.subr.mxu0 %v9402
      %9416 = vmatpush1.msra.mxu0 %v9401
      %9417 = vmatprep.subr.mxu0 0.0
      %9418 = vmatpush1.msra.mxu0 0.0
      %9419 = vmatprep.subr.mxu0 0.0
      %9420 = vmatpush1.msra.mxu0 0.0
      %9421 = vmatprep.subr.mxu0 0.0
      %9422 = vmatpush1.msra.mxu0 0.0
      %9423 = vmatprep.subr.mxu0 0.0
      %9424 = vmatpush1.msra.mxu0 0.0
      %9425 = vmatprep.subr.mxu0 0.0
      %9426 = vmatpush1.msra.mxu0 0.0
      %9427 = vmatprep.subr.mxu0 0.0
      %9428 = vmatpush1.msra.mxu0 0.0
      %9429 = vmatprep.subr.mxu0 0.0
      %9430 = vmatpush1.msra.mxu0 0.0
      %9431 = vmatprep.subr.mxu0 0.0
      %9432 = vmatpush1.msra.mxu0 0.0
      %9433 = vmatprep.subr.mxu0 0.0
      %9434 = vmatpush1.msra.mxu0 0.0
      %9435 = vmatprep.subr.mxu0 0.0
      %9436 = vmatpush1.msra.mxu0 0.0
      %9437 = vmatprep.subr.mxu0 0.0
      %9438 = vmatpush1.msra.mxu0 0.0
      %9439 = vmatprep.subr.mxu0 0.0
      %9440 = vmatpush1.msra.mxu0 0.0
      %9441 = vmatprep.subr.mxu0 0.0
      %9442 = vmatpush1.msra.mxu0 0.0
      %9443 = vmatprep.subr.mxu0 0.0
      %9444 = vmatpush1.msra.mxu0 0.0
      %9445 = vmatprep.subr.mxu0 0.0
      %9446 = vmatpush1.msra.mxu0 0.0
      %9447 = vmatprep.subr.mxu0 0.0
      %9448 = vmatpush1.msra.mxu0 0.0
      %9449 = vmatprep.subr.mxu0 0.0
      %9450 = vmatpush1.msra.mxu0 0.0
      %9451 = vmatprep.subr.mxu0 0.0
      %9452 = vmatpush1.msra.mxu0 0.0
      %9453 = vmatprep.subr.mxu0 0.0
      %9454 = vmatpush1.msra.mxu0 0.0
      %9455 = vmatprep.subr.mxu0 0.0
      %9456 = vmatpush1.msra.mxu0 0.0
      %9457 = vmatprep.subr.mxu0 0.0
      %9458 = vmatpush1.msra.mxu0 0.0
      %9459 = vmatprep.subr.mxu0 0.0
      %9460 = vmatpush1.msra.mxu0 0.0
      %9461 = vmatprep.subr.mxu0 0.0
      %9462 = vmatpush1.msra.mxu0 0.0
      %9463 = vmatprep.subr.mxu0 0.0
      %9464 = vmatpush1.msra.mxu0 0.0
      %9465 = vmatprep.subr.mxu0 0.0
      %9466 = vmatpush1.msra.mxu0 0.0
      %9467 = vmatprep.subr.mxu0 0.0
      %9468 = vmatpush1.msra.mxu0 0.0
      %9469 = vmatprep.subr.mxu0 0.0
      %9470 = vmatpush1.msra.mxu0 0.0
      %9471 = vmatprep.subr.mxu0 0.0
      %9472 = vmatpush1.msra.mxu0 0.0
      %9473 = vmatprep.mubr.f32.mxu0 0.0
      %9474 = vmatmul.mubr.f32.gmra.mrb[0].mxu0 %v9404
      %v9475 = vpop.f32.mrb[0].mxu0
      %v9476 = vadd.f32 0.0, %v9475
      %v9477 = vpop.f32.mrb[0].mxu0
      %v9478 = vadd.f32 0.0, %v9477
      %9479 = vmatprep.mubr.f32.mxu0 0.0
      %9480 = vmatmul.mubr.f32.gmra.mrb[0].mxu0 %v9407
      %v9481 = vpop.f32.mrb[0].mxu0
      %v9482 = vadd.f32 0.0, %v9481
      %v9483 = vpop.f32.mrb[0].mxu0
      %v9484 = vadd.f32 0.0, %v9483
      %9485 = vdwg.mxu0
      %v9486 = vadd.f32 %v9390, %v9476
      %v9487 = vadd.f32 %v9391, %v9478
      %v9488 = vadd.f32 %v9392, %v9482
      %v9489 = vadd.f32 %v9393, %v9484
      %s9490 = scalar_lea.vmem %s8, 256
      %v9491 = vld [vmem:[%s9490] sm:$0xff]
      %v9492 = vld [vmem:[%s9490 + $0x8] sm:$0xff]
      %v9493 = vld [vmem:[%s9490 + $0x10] sm:$0xff]
      %v9494 = vld [vmem:[%s9490 + $0x18] sm:$0xff]
      %v9495 = vld [vmem:[%s9490 + $0x20] sm:$0xff]
      %v9496 = vld [vmem:[%s9490 + $0x28] sm:$0xff]
      %v9497 = vld [vmem:[%s9490 + $0x30] sm:$0xff]
      %v9498 = vld [vmem:[%s9490 + $0x38] sm:$0xff]
      %v9500 = vsel %vm7685, %v9091, 0
      %v9503 = vsel %vm7685, %v9092, 0
      %9505 = vmatprep.subr.mxu0 %v9492
      %9506 = vmatpush1.msra.mxu0 %v9491
      %9507 = vmatprep.subr.mxu0 %v9494
      %9508 = vmatpush1.msra.mxu0 %v9493
      %9509 = vmatprep.subr.mxu0 %v9496
      %9510 = vmatpush1.msra.mxu0 %v9495
      %9511 = vmatprep.subr.mxu0 %v9498
      %9512 = vmatpush1.msra.mxu0 %v9497
      %9513 = vmatprep.subr.mxu0 0.0
      %9514 = vmatpush1.msra.mxu0 0.0
      %9515 = vmatprep.subr.mxu0 0.0
      %9516 = vmatpush1.msra.mxu0 0.0
      %9517 = vmatprep.subr.mxu0 0.0
      %9518 = vmatpush1.msra.mxu0 0.0
      %9519 = vmatprep.subr.mxu0 0.0
      %9520 = vmatpush1.msra.mxu0 0.0
      %9521 = vmatprep.subr.mxu0 0.0
      %9522 = vmatpush1.msra.mxu0 0.0
      %9523 = vmatprep.subr.mxu0 0.0
      %9524 = vmatpush1.msra.mxu0 0.0
      %9525 = vmatprep.subr.mxu0 0.0
      %9526 = vmatpush1.msra.mxu0 0.0
      %9527 = vmatprep.subr.mxu0 0.0
      %9528 = vmatpush1.msra.mxu0 0.0
      %9529 = vmatprep.subr.mxu0 0.0
      %9530 = vmatpush1.msra.mxu0 0.0
      %9531 = vmatprep.subr.mxu0 0.0
      %9532 = vmatpush1.msra.mxu0 0.0
      %9533 = vmatprep.subr.mxu0 0.0
      %9534 = vmatpush1.msra.mxu0 0.0
      %9535 = vmatprep.subr.mxu0 0.0
      %9536 = vmatpush1.msra.mxu0 0.0
      %9537 = vmatprep.subr.mxu0 0.0
      %9538 = vmatpush1.msra.mxu0 0.0
      %9539 = vmatprep.subr.mxu0 0.0
      %9540 = vmatpush1.msra.mxu0 0.0
      %9541 = vmatprep.subr.mxu0 0.0
      %9542 = vmatpush1.msra.mxu0 0.0
      %9543 = vmatprep.subr.mxu0 0.0
      %9544 = vmatpush1.msra.mxu0 0.0
      %9545 = vmatprep.subr.mxu0 0.0
      %9546 = vmatpush1.msra.mxu0 0.0
      %9547 = vmatprep.subr.mxu0 0.0
      %9548 = vmatpush1.msra.mxu0 0.0
      %9549 = vmatprep.subr.mxu0 0.0
      %9550 = vmatpush1.msra.mxu0 0.0
      %9551 = vmatprep.subr.mxu0 0.0
      %9552 = vmatpush1.msra.mxu0 0.0
      %9553 = vmatprep.subr.mxu0 0.0
      %9554 = vmatpush1.msra.mxu0 0.0
      %9555 = vmatprep.subr.mxu0 0.0
      %9556 = vmatpush1.msra.mxu0 0.0
      %9557 = vmatprep.subr.mxu0 0.0
      %9558 = vmatpush1.msra.mxu0 0.0
      %9559 = vmatprep.subr.mxu0 0.0
      %9560 = vmatpush1.msra.mxu0 0.0
      %9561 = vmatprep.subr.mxu0 0.0
      %9562 = vmatpush1.msra.mxu0 0.0
      %9563 = vmatprep.subr.mxu0 0.0
      %9564 = vmatpush1.msra.mxu0 0.0
      %9565 = vmatprep.subr.mxu0 0.0
      %9566 = vmatpush1.msra.mxu0 0.0
      %9567 = vmatprep.subr.mxu0 0.0
      %9568 = vmatpush1.msra.mxu0 0.0
      %9569 = vmatprep.mubr.f32.mxu0 0.0
      %9570 = vmatmul.mubr.f32.gmra.mrb[0].mxu0 %v9500
      %v9571 = vpop.f32.mrb[0].mxu0
      %v9572 = vadd.f32 0.0, %v9571
      %v9573 = vpop.f32.mrb[0].mxu0
      %v9574 = vadd.f32 0.0, %v9573
      %9575 = vmatprep.mubr.f32.mxu0 0.0
      %9576 = vmatmul.mubr.f32.gmra.mrb[0].mxu0 %v9503
      %v9577 = vpop.f32.mrb[0].mxu0
      %v9578 = vadd.f32 0.0, %v9577
      %v9579 = vpop.f32.mrb[0].mxu0
      %v9580 = vadd.f32 0.0, %v9579
      %9581 = vdwg.mxu0
      %v9582 = vadd.f32 %v9486, %v9572
      %v9583 = vadd.f32 %v9487, %v9574
      %v9584 = vadd.f32 %v9488, %v9578
      %v9585 = vadd.f32 %v9489, %v9580
      %s9586 = scalar_lea.vmem %s8, 320
      %v9587 = vld [vmem:[%s9586] sm:$0xff]
      %v9588 = vld [vmem:[%s9586 + $0x8] sm:$0xff]
      %v9589 = vld [vmem:[%s9586 + $0x10] sm:$0xff]
      %v9590 = vld [vmem:[%s9586 + $0x18] sm:$0xff]
      %v9591 = vld [vmem:[%s9586 + $0x20] sm:$0xff]
      %v9592 = vld [vmem:[%s9586 + $0x28] sm:$0xff]
      %v9593 = vld [vmem:[%s9586 + $0x30] sm:$0xff]
      %v9594 = vld [vmem:[%s9586 + $0x38] sm:$0xff]
      %v9596 = vsel %vm7685, %v9093, 0
      %v9599 = vsel %vm7685, %v9094, 0
      %9601 = vmatprep.subr.mxu0 %v9588
      %9602 = vmatpush1.msra.mxu0 %v9587
      %9603 = vmatprep.subr.mxu0 %v9590
      %9604 = vmatpush1.msra.mxu0 %v9589
      %9605 = vmatprep.subr.mxu0 %v9592
      %9606 = vmatpush1.msra.mxu0 %v9591
      %9607 = vmatprep.subr.mxu0 %v9594
      %9608 = vmatpush1.msra.mxu0 %v9593
      %9609 = vmatprep.subr.mxu0 0.0
      %9610 = vmatpush1.msra.mxu0 0.0
      %9611 = vmatprep.subr.mxu0 0.0
      %9612 = vmatpush1.msra.mxu0 0.0
      %9613 = vmatprep.subr.mxu0 0.0
      %9614 = vmatpush1.msra.mxu0 0.0
      %9615 = vmatprep.subr.mxu0 0.0
      %9616 = vmatpush1.msra.mxu0 0.0
      %9617 = vmatprep.subr.mxu0 0.0
      %9618 = vmatpush1.msra.mxu0 0.0
      %9619 = vmatprep.subr.mxu0 0.0
      %9620 = vmatpush1.msra.mxu0 0.0
      %9621 = vmatprep.subr.mxu0 0.0
      %9622 = vmatpush1.msra.mxu0 0.0
      %9623 = vmatprep.subr.mxu0 0.0
      %9624 = vmatpush1.msra.mxu0 0.0
      %9625 = vmatprep.subr.mxu0 0.0
      %9626 = vmatpush1.msra.mxu0 0.0
      %9627 = vmatprep.subr.mxu0 0.0
      %9628 = vmatpush1.msra.mxu0 0.0
      %9629 = vmatprep.subr.mxu0 0.0
      %9630 = vmatpush1.msra.mxu0 0.0
      %9631 = vmatprep.subr.mxu0 0.0
      %9632 = vmatpush1.msra.mxu0 0.0
      %9633 = vmatprep.subr.mxu0 0.0
      %9634 = vmatpush1.msra.mxu0 0.0
      %9635 = vmatprep.subr.mxu0 0.0
      %9636 = vmatpush1.msra.mxu0 0.0
      %9637 = vmatprep.subr.mxu0 0.0
      %9638 = vmatpush1.msra.mxu0 0.0
      %9639 = vmatprep.subr.mxu0 0.0
      %9640 = vmatpush1.msra.mxu0 0.0
      %9641 = vmatprep.subr.mxu0 0.0
      %9642 = vmatpush1.msra.mxu0 0.0
      %9643 = vmatprep.subr.mxu0 0.0
      %9644 = vmatpush1.msra.mxu0 0.0
      %9645 = vmatprep.subr.mxu0 0.0
      %9646 = vmatpush1.msra.mxu0 0.0
      %9647 = vmatprep.subr.mxu0 0.0
      %9648 = vmatpush1.msra.mxu0 0.0
      %9649 = vmatprep.subr.mxu0 0.0
      %9650 = vmatpush1.msra.mxu0 0.0
      %9651 = vmatprep.subr.mxu0 0.0
      %9652 = vmatpush1.msra.mxu0 0.0
      %9653 = vmatprep.subr.mxu0 0.0
      %9654 = vmatpush1.msra.mxu0 0.0
      %9655 = vmatprep.subr.mxu0 0.0
      %9656 = vmatpush1.msra.mxu0 0.0
      %9657 = vmatprep.subr.mxu0 0.0
      %9658 = vmatpush1.msra.mxu0 0.0
      %9659 = vmatprep.subr.mxu0 0.0
      %9660 = vmatpush1.msra.mxu0 0.0
      %9661 = vmatprep.subr.mxu0 0.0
      %9662 = vmatpush1.msra.mxu0 0.0
      %9663 = vmatprep.subr.mxu0 0.0
      %9664 = vmatpush1.msra.mxu0 0.0
      %9665 = vmatprep.mubr.f32.mxu0 0.0
      %9666 = vmatmul.mubr.f32.gmra.mrb[0].mxu0 %v9596
      %v9667 = vpop.f32.mrb[0].mxu0
      %v9668 = vadd.f32 0.0, %v9667
      %v9669 = vpop.f32.mrb[0].mxu0
      %v9670 = vadd.f32 0.0, %v9669
      %9671 = vmatprep.mubr.f32.mxu0 0.0
      %9672 = vmatmul.mubr.f32.gmra.mrb[0].mxu0 %v9599
      %v9673 = vpop.f32.mrb[0].mxu0
      %v9674 = vadd.f32 0.0, %v9673
      %v9675 = vpop.f32.mrb[0].mxu0
      %v9676 = vadd.f32 0.0, %v9675
      %9677 = vdwg.mxu0
      %v9678 = vadd.f32 %v9582, %v9668
      %v9679 = vadd.f32 %v9583, %v9670
      %v9680 = vadd.f32 %v9584, %v9674
      %v9681 = vadd.f32 %v9585, %v9676
      %s9682 = scalar_lea.vmem %s8, 384
      %v9683 = vld [vmem:[%s9682] sm:$0xff]
      %v9684 = vld [vmem:[%s9682 + $0x8] sm:$0xff]
      %v9685 = vld [vmem:[%s9682 + $0x10] sm:$0xff]
      %v9686 = vld [vmem:[%s9682 + $0x18] sm:$0xff]
      %v9687 = vld [vmem:[%s9682 + $0x20] sm:$0xff]
      %v9688 = vld [vmem:[%s9682 + $0x28] sm:$0xff]
      %v9689 = vld [vmem:[%s9682 + $0x30] sm:$0xff]
      %v9690 = vld [vmem:[%s9682 + $0x38] sm:$0xff]
      %v9692 = vsel %vm7685, %v9095, 0
      %v9695 = vsel %vm7685, %v9096, 0
      %9697 = vmatprep.subr.mxu0 %v9684
      %9698 = vmatpush1.msra.mxu0 %v9683
      %9699 = vmatprep.subr.mxu0 %v9686
      %9700 = vmatpush1.msra.mxu0 %v9685
      %9701 = vmatprep.subr.mxu0 %v9688
      %9702 = vmatpush1.msra.mxu0 %v9687
      %9703 = vmatprep.subr.mxu0 %v9690
      %9704 = vmatpush1.msra.mxu0 %v9689
      %9705 = vmatprep.subr.mxu0 0.0
      %9706 = vmatpush1.msra.mxu0 0.0
      %9707 = vmatprep.subr.mxu0 0.0
      %9708 = vmatpush1.msra.mxu0 0.0
      %9709 = vmatprep.subr.mxu0 0.0
      %9710 = vmatpush1.msra.mxu0 0.0
      %9711 = vmatprep.subr.mxu0 0.0
      %9712 = vmatpush1.msra.mxu0 0.0
      %9713 = vmatprep.subr.mxu0 0.0
      %9714 = vmatpush1.msra.mxu0 0.0
      %9715 = vmatprep.subr.mxu0 0.0
      %9716 = vmatpush1.msra.mxu0 0.0
      %9717 = vmatprep.subr.mxu0 0.0
      %9718 = vmatpush1.msra.mxu0 0.0
      %9719 = vmatprep.subr.mxu0 0.0
      %9720 = vmatpush1.msra.mxu0 0.0
      %9721 = vmatprep.subr.mxu0 0.0
      %9722 = vmatpush1.msra.mxu0 0.0
      %9723 = vmatprep.subr.mxu0 0.0
      %9724 = vmatpush1.msra.mxu0 0.0
      %9725 = vmatprep.subr.mxu0 0.0
      %9726 = vmatpush1.msra.mxu0 0.0
      %9727 = vmatprep.subr.mxu0 0.0
      %9728 = vmatpush1.msra.mxu0 0.0
      %9729 = vmatprep.subr.mxu0 0.0
      %9730 = vmatpush1.msra.mxu0 0.0
      %9731 = vmatprep.subr.mxu0 0.0
      %9732 = vmatpush1.msra.mxu0 0.0
      %9733 = vmatprep.subr.mxu0 0.0
      %9734 = vmatpush1.msra.mxu0 0.0
      %9735 = vmatprep.subr.mxu0 0.0
      %9736 = vmatpush1.msra.mxu0 0.0
      %9737 = vmatprep.subr.mxu0 0.0
      %9738 = vmatpush1.msra.mxu0 0.0
      %9739 = vmatprep.subr.mxu0 0.0
      %9740 = vmatpush1.msra.mxu0 0.0
      %9741 = vmatprep.subr.mxu0 0.0
      %9742 = vmatpush1.msra.mxu0 0.0
      %9743 = vmatprep.subr.mxu0 0.0
      %9744 = vmatpush1.msra.mxu0 0.0
      %9745 = vmatprep.subr.mxu0 0.0
      %9746 = vmatpush1.msra.mxu0 0.0
      %9747 = vmatprep.subr.mxu0 0.0
      %9748 = vmatpush1.msra.mxu0 0.0
      %9749 = vmatprep.subr.mxu0 0.0
      %9750 = vmatpush1.msra.mxu0 0.0
      %9751 = vmatprep.subr.mxu0 0.0
      %9752 = vmatpush1.msra.mxu0 0.0
      %9753 = vmatprep.subr.mxu0 0.0
      %9754 = vmatpush1.msra.mxu0 0.0
      %9755 = vmatprep.subr.mxu0 0.0
      %9756 = vmatpush1.msra.mxu0 0.0
      %9757 = vmatprep.subr.mxu0 0.0
      %9758 = vmatpush1.msra.mxu0 0.0
      %9759 = vmatprep.subr.mxu0 0.0
      %9760 = vmatpush1.msra.mxu0 0.0
      %9761 = vmatprep.mubr.f32.mxu0 0.0
      %9762 = vmatmul.mubr.f32.gmra.mrb[0].mxu0 %v9692
      %v9763 = vpop.f32.mrb[0].mxu0
      %v9764 = vadd.f32 0.0, %v9763
      %v9765 = vpop.f32.mrb[0].mxu0
      %v9766 = vadd.f32 0.0, %v9765
      %9767 = vmatprep.mubr.f32.mxu0 0.0
      %9768 = vmatmul.mubr.f32.gmra.mrb[0].mxu0 %v9695
      %v9769 = vpop.f32.mrb[0].mxu0
      %v9770 = vadd.f32 0.0, %v9769
      %v9771 = vpop.f32.mrb[0].mxu0
      %v9772 = vadd.f32 0.0, %v9771
      %9773 = vdwg.mxu0
      %v9774 = vadd.f32 %v9678, %v9764
      %v9775 = vadd.f32 %v9679, %v9766
      %v9776 = vadd.f32 %v9680, %v9770
      %v9777 = vadd.f32 %v9681, %v9772
      %s9778 = scalar_lea.vmem %s8, 448
      %v9779 = vld [vmem:[%s9778] sm:$0xff]
      %v9780 = vld [vmem:[%s9778 + $0x8] sm:$0xff]
      %v9781 = vld [vmem:[%s9778 + $0x10] sm:$0xff]
      %v9782 = vld [vmem:[%s9778 + $0x18] sm:$0xff]
      %v9783 = vld [vmem:[%s9778 + $0x20] sm:$0xff]
      %v9784 = vld [vmem:[%s9778 + $0x28] sm:$0xff]
      %v9785 = vld [vmem:[%s9778 + $0x30] sm:$0xff]
      %v9786 = vld [vmem:[%s9778 + $0x38] sm:$0xff]
      %v9788 = vsel %vm7685, %v9097, 0
      %v9791 = vsel %vm7685, %v9098, 0
      %9793 = vmatprep.subr.mxu0 %v9780
      %9794 = vmatpush1.msra.mxu0 %v9779
      %9795 = vmatprep.subr.mxu0 %v9782
      %9796 = vmatpush1.msra.mxu0 %v9781
      %9797 = vmatprep.subr.mxu0 %v9784
      %9798 = vmatpush1.msra.mxu0 %v9783
      %9799 = vmatprep.subr.mxu0 %v9786
      %9800 = vmatpush1.msra.mxu0 %v9785
      %9801 = vmatprep.subr.mxu0 0.0
      %9802 = vmatpush1.msra.mxu0 0.0
      %9803 = vmatprep.subr.mxu0 0.0
      %9804 = vmatpush1.msra.mxu0 0.0
      %9805 = vmatprep.subr.mxu0 0.0
      %9806 = vmatpush1.msra.mxu0 0.0
      %9807 = vmatprep.subr.mxu0 0.0
      %9808 = vmatpush1.msra.mxu0 0.0
      %9809 = vmatprep.subr.mxu0 0.0
      %9810 = vmatpush1.msra.mxu0 0.0
      %9811 = vmatprep.subr.mxu0 0.0
      %9812 = vmatpush1.msra.mxu0 0.0
      %9813 = vmatprep.subr.mxu0 0.0
      %9814 = vmatpush1.msra.mxu0 0.0
      %9815 = vmatprep.subr.mxu0 0.0
      %9816 = vmatpush1.msra.mxu0 0.0
      %9817 = vmatprep.subr.mxu0 0.0
      %9818 = vmatpush1.msra.mxu0 0.0
      %9819 = vmatprep.subr.mxu0 0.0
      %9820 = vmatpush1.msra.mxu0 0.0
      %9821 = vmatprep.subr.mxu0 0.0
      %9822 = vmatpush1.msra.mxu0 0.0
      %9823 = vmatprep.subr.mxu0 0.0
      %9824 = vmatpush1.msra.mxu0 0.0
      %9825 = vmatprep.subr.mxu0 0.0
      %9826 = vmatpush1.msra.mxu0 0.0
      %9827 = vmatprep.subr.mxu0 0.0
      %9828 = vmatpush1.msra.mxu0 0.0
      %9829 = vmatprep.subr.mxu0 0.0
      %9830 = vmatpush1.msra.mxu0 0.0
      %9831 = vmatprep.subr.mxu0 0.0
      %9832 = vmatpush1.msra.mxu0 0.0
      %9833 = vmatprep.subr.mxu0 0.0
      %9834 = vmatpush1.msra.mxu0 0.0
      %9835 = vmatprep.subr.mxu0 0.0
      %9836 = vmatpush1.msra.mxu0 0.0
      %9837 = vmatprep.subr.mxu0 0.0
      %9838 = vmatpush1.msra.mxu0 0.0
      %9839 = vmatprep.subr.mxu0 0.0
      %9840 = vmatpush1.msra.mxu0 0.0
      %9841 = vmatprep.subr.mxu0 0.0
      %9842 = vmatpush1.msra.mxu0 0.0
      %9843 = vmatprep.subr.mxu0 0.0
      %9844 = vmatpush1.msra.mxu0 0.0
      %9845 = vmatprep.subr.mxu0 0.0
      %9846 = vmatpush1.msra.mxu0 0.0
      %9847 = vmatprep.subr.mxu0 0.0
      %9848 = vmatpush1.msra.mxu0 0.0
      %9849 = vmatprep.subr.mxu0 0.0
      %9850 = vmatpush1.msra.mxu0 0.0
      %9851 = vmatprep.subr.mxu0 0.0
      %9852 = vmatpush1.msra.mxu0 0.0
      %9853 = vmatprep.subr.mxu0 0.0
      %9854 = vmatpush1.msra.mxu0 0.0
      %9855 = vmatprep.subr.mxu0 0.0
      %9856 = vmatpush1.msra.mxu0 0.0
      %9857 = vmatprep.mubr.f32.mxu0 0.0
      %9858 = vmatmul.mubr.f32.gmra.mrb[0].mxu0 %v9788
      %v9859 = vpop.f32.mrb[0].mxu0
      %v9860 = vadd.f32 0.0, %v9859
      %v9861 = vpop.f32.mrb[0].mxu0
      %v9862 = vadd.f32 0.0, %v9861
      %9863 = vmatprep.mubr.f32.mxu0 0.0
      %9864 = vmatmul.mubr.f32.gmra.mrb[0].mxu0 %v9791
      %v9865 = vpop.f32.mrb[0].mxu0
      %v9866 = vadd.f32 0.0, %v9865
      %v9867 = vpop.f32.mrb[0].mxu0
      %v9868 = vadd.f32 0.0, %v9867
      %9869 = vdwg.mxu0
      %v9870 = vadd.f32 %v9774, %v9860
      %v9871 = vadd.f32 %v9775, %v9862
      %v9872 = vadd.f32 %v9776, %v9866
      %v9873 = vadd.f32 %v9777, %v9868
      %s9874 = scalar_lea.vmem %s8, 512
      %v9875 = vld [vmem:[%s9874] sm:$0xff]
      %v9876 = vld [vmem:[%s9874 + $0x8] sm:$0xff]
      %v9877 = vld [vmem:[%s9874 + $0x10] sm:$0xff]
      %v9878 = vld [vmem:[%s9874 + $0x18] sm:$0xff]
      %v9879 = vld [vmem:[%s9874 + $0x20] sm:$0xff]
      %v9880 = vld [vmem:[%s9874 + $0x28] sm:$0xff]
      %v9881 = vld [vmem:[%s9874 + $0x30] sm:$0xff]
      %v9882 = vld [vmem:[%s9874 + $0x38] sm:$0xff]
      %v9884 = vsel %vm7685, %v9099, 0
      %v9887 = vsel %vm7685, %v9100, 0
      %9889 = vmatprep.subr.mxu0 %v9876
      %9890 = vmatpush1.msra.mxu0 %v9875
      %9891 = vmatprep.subr.mxu0 %v9878
      %9892 = vmatpush1.msra.mxu0 %v9877
      %9893 = vmatprep.subr.mxu0 %v9880
      %9894 = vmatpush1.msra.mxu0 %v9879
      %9895 = vmatprep.subr.mxu0 %v9882
      %9896 = vmatpush1.msra.mxu0 %v9881
      %9897 = vmatprep.subr.mxu0 0.0
      %9898 = vmatpush1.msra.mxu0 0.0
      %9899 = vmatprep.subr.mxu0 0.0
      %9900 = vmatpush1.msra.mxu0 0.0
      %9901 = vmatprep.subr.mxu0 0.0
      %9902 = vmatpush1.msra.mxu0 0.0
      %9903 = vmatprep.subr.mxu0 0.0
      %9904 = vmatpush1.msra.mxu0 0.0
      %9905 = vmatprep.subr.mxu0 0.0
      %9906 = vmatpush1.msra.mxu0 0.0
      %9907 = vmatprep.subr.mxu0 0.0
      %9908 = vmatpush1.msra.mxu0 0.0
      %9909 = vmatprep.subr.mxu0 0.0
      %9910 = vmatpush1.msra.mxu0 0.0
      %9911 = vmatprep.subr.mxu0 0.0
      %9912 = vmatpush1.msra.mxu0 0.0
      %9913 = vmatprep.subr.mxu0 0.0
      %9914 = vmatpush1.msra.mxu0 0.0
      %9915 = vmatprep.subr.mxu0 0.0
      %9916 = vmatpush1.msra.mxu0 0.0
      %9917 = vmatprep.subr.mxu0 0.0
      %9918 = vmatpush1.msra.mxu0 0.0
      %9919 = vmatprep.subr.mxu0 0.0
      %9920 = vmatpush1.msra.mxu0 0.0
      %9921 = vmatprep.subr.mxu0 0.0
      %9922 = vmatpush1.msra.mxu0 0.0
      %9923 = vmatprep.subr.mxu0 0.0
      %9924 = vmatpush1.msra.mxu0 0.0
      %9925 = vmatprep.subr.mxu0 0.0
      %9926 = vmatpush1.msra.mxu0 0.0
      %9927 = vmatprep.subr.mxu0 0.0
      %9928 = vmatpush1.msra.mxu0 0.0
      %9929 = vmatprep.subr.mxu0 0.0
      %9930 = vmatpush1.msra.mxu0 0.0
      %9931 = vmatprep.subr.mxu0 0.0
      %9932 = vmatpush1.msra.mxu0 0.0
      %9933 = vmatprep.subr.mxu0 0.0
      %9934 = vmatpush1.msra.mxu0 0.0
      %9935 = vmatprep.subr.mxu0 0.0
      %9936 = vmatpush1.msra.mxu0 0.0
      %9937 = vmatprep.subr.mxu0 0.0
      %9938 = vmatpush1.msra.mxu0 0.0
      %9939 = vmatprep.subr.mxu0 0.0
      %9940 = vmatpush1.msra.mxu0 0.0
      %9941 = vmatprep.subr.mxu0 0.0
      %9942 = vmatpush1.msra.mxu0 0.0
      %9943 = vmatprep.subr.mxu0 0.0
      %9944 = vmatpush1.msra.mxu0 0.0
      %9945 = vmatprep.subr.mxu0 0.0
      %9946 = vmatpush1.msra.mxu0 0.0
      %9947 = vmatprep.subr.mxu0 0.0
      %9948 = vmatpush1.msra.mxu0 0.0
      %9949 = vmatprep.subr.mxu0 0.0
      %9950 = vmatpush1.msra.mxu0 0.0
      %9951 = vmatprep.subr.mxu0 0.0
      %9952 = vmatpush1.msra.mxu0 0.0
      %9953 = vmatprep.mubr.f32.mxu0 0.0
      %9954 = vmatmul.mubr.f32.gmra.mrb[0].mxu0 %v9884
      %v9955 = vpop.f32.mrb[0].mxu0
      %v9956 = vadd.f32 0.0, %v9955
      %v9957 = vpop.f32.mrb[0].mxu0
      %v9958 = vadd.f32 0.0, %v9957
      %9959 = vmatprep.mubr.f32.mxu0 0.0
      %9960 = vmatmul.mubr.f32.gmra.mrb[0].mxu0 %v9887
      %v9961 = vpop.f32.mrb[0].mxu0
      %v9962 = vadd.f32 0.0, %v9961
      %v9963 = vpop.f32.mrb[0].mxu0
      %v9964 = vadd.f32 0.0, %v9963
      %9965 = vdwg.mxu0
      %v9966 = vadd.f32 %v9870, %v9956
      %v9967 = vadd.f32 %v9871, %v9958
      %v9968 = vadd.f32 %v9872, %v9962
      %v9969 = vadd.f32 %v9873, %v9964
      %s9970 = scalar_lea.vmem %s8, 576
      %v9971 = vld [vmem:[%s9970] sm:$0xff]
      %v9972 = vld [vmem:[%s9970 + $0x8] sm:$0xff]
      %v9973 = vld [vmem:[%s9970 + $0x10] sm:$0xff]
      %v9974 = vld [vmem:[%s9970 + $0x18] sm:$0xff]
      %v9975 = vld [vmem:[%s9970 + $0x20] sm:$0xff]
      %v9976 = vld [vmem:[%s9970 + $0x28] sm:$0xff]
      %v9977 = vld [vmem:[%s9970 + $0x30] sm:$0xff]
      %v9978 = vld [vmem:[%s9970 + $0x38] sm:$0xff]
      %v9980 = vsel %vm7685, %v9101, 0
      %v9983 = vsel %vm7685, %v9102, 0
      %9985 = vmatprep.subr.mxu0 %v9972
      %9986 = vmatpush1.msra.mxu0 %v9971
      %9987 = vmatprep.subr.mxu0 %v9974
      %9988 = vmatpush1.msra.mxu0 %v9973
      %9989 = vmatprep.subr.mxu0 %v9976
      %9990 = vmatpush1.msra.mxu0 %v9975
      %9991 = vmatprep.subr.mxu0 %v9978
      %9992 = vmatpush1.msra.mxu0 %v9977
      %9993 = vmatprep.subr.mxu0 0.0
      %9994 = vmatpush1.msra.mxu0 0.0
      %9995 = vmatprep.subr.mxu0 0.0
      %9996 = vmatpush1.msra.mxu0 0.0
      %9997 = vmatprep.subr.mxu0 0.0
      %9998 = vmatpush1.msra.mxu0 0.0
      %9999 = vmatprep.subr.mxu0 0.0
      %10000 = vmatpush1.msra.mxu0 0.0
      %10001 = vmatprep.subr.mxu0 0.0
      %10002 = vmatpush1.msra.mxu0 0.0
      %10003 = vmatprep.subr.mxu0 0.0
      %10004 = vmatpush1.msra.mxu0 0.0
      %10005 = vmatprep.subr.mxu0 0.0
      %10006 = vmatpush1.msra.mxu0 0.0
      %10007 = vmatprep.subr.mxu0 0.0
      %10008 = vmatpush1.msra.mxu0 0.0
      %10009 = vmatprep.subr.mxu0 0.0
      %10010 = vmatpush1.msra.mxu0 0.0
      %10011 = vmatprep.subr.mxu0 0.0
      %10012 = vmatpush1.msra.mxu0 0.0
      %10013 = vmatprep.subr.mxu0 0.0
      %10014 = vmatpush1.msra.mxu0 0.0
      %10015 = vmatprep.subr.mxu0 0.0
      %10016 = vmatpush1.msra.mxu0 0.0
      %10017 = vmatprep.subr.mxu0 0.0
      %10018 = vmatpush1.msra.mxu0 0.0
      %10019 = vmatprep.subr.mxu0 0.0
      %10020 = vmatpush1.msra.mxu0 0.0
      %10021 = vmatprep.subr.mxu0 0.0
      %10022 = vmatpush1.msra.mxu0 0.0
      %10023 = vmatprep.subr.mxu0 0.0
      %10024 = vmatpush1.msra.mxu0 0.0
      %10025 = vmatprep.subr.mxu0 0.0
      %10026 = vmatpush1.msra.mxu0 0.0
      %10027 = vmatprep.subr.mxu0 0.0
      %10028 = vmatpush1.msra.mxu0 0.0
      %10029 = vmatprep.subr.mxu0 0.0
      %10030 = vmatpush1.msra.mxu0 0.0
      %10031 = vmatprep.subr.mxu0 0.0
      %10032 = vmatpush1.msra.mxu0 0.0
      %10033 = vmatprep.subr.mxu0 0.0
      %10034 = vmatpush1.msra.mxu0 0.0
      %10035 = vmatprep.subr.mxu0 0.0
      %10036 = vmatpush1.msra.mxu0 0.0
      %10037 = vmatprep.subr.mxu0 0.0
      %10038 = vmatpush1.msra.mxu0 0.0
      %10039 = vmatprep.subr.mxu0 0.0
      %10040 = vmatpush1.msra.mxu0 0.0
      %10041 = vmatprep.subr.mxu0 0.0
      %10042 = vmatpush1.msra.mxu0 0.0
      %10043 = vmatprep.subr.mxu0 0.0
      %10044 = vmatpush1.msra.mxu0 0.0
      %10045 = vmatprep.subr.mxu0 0.0
      %10046 = vmatpush1.msra.mxu0 0.0
      %10047 = vmatprep.subr.mxu0 0.0
      %10048 = vmatpush1.msra.mxu0 0.0
      %10049 = vmatprep.mubr.f32.mxu0 0.0
      %10050 = vmatmul.mubr.f32.gmra.mrb[0].mxu0 %v9980
      %v10051 = vpop.f32.mrb[0].mxu0
      %v10052 = vadd.f32 0.0, %v10051
      %v10053 = vpop.f32.mrb[0].mxu0
      %v10054 = vadd.f32 0.0, %v10053
      %10055 = vmatprep.mubr.f32.mxu0 0.0
      %10056 = vmatmul.mubr.f32.gmra.mrb[0].mxu0 %v9983
      %v10057 = vpop.f32.mrb[0].mxu0
      %v10058 = vadd.f32 0.0, %v10057
      %v10059 = vpop.f32.mrb[0].mxu0
      %v10060 = vadd.f32 0.0, %v10059
      %10061 = vdwg.mxu0
      %v10062 = vadd.f32 %v9966, %v10052
      %v10063 = vadd.f32 %v9967, %v10054
      %v10064 = vadd.f32 %v9968, %v10058
      %v10065 = vadd.f32 %v9969, %v10060
      %s10066 = scalar_lea.vmem %s8, 640
      %v10067 = vld [vmem:[%s10066] sm:$0xff]
      %v10068 = vld [vmem:[%s10066 + $0x8] sm:$0xff]
      %v10069 = vld [vmem:[%s10066 + $0x10] sm:$0xff]
      %v10070 = vld [vmem:[%s10066 + $0x18] sm:$0xff]
      %v10071 = vld [vmem:[%s10066 + $0x20] sm:$0xff]
      %v10072 = vld [vmem:[%s10066 + $0x28] sm:$0xff]
      %v10073 = vld [vmem:[%s10066 + $0x30] sm:$0xff]
      %v10074 = vld [vmem:[%s10066 + $0x38] sm:$0xff]
      %v10076 = vsel %vm7685, %v9103, 0
      %v10079 = vsel %vm7685, %v9104, 0
      %10081 = vmatprep.subr.mxu0 %v10068
      %10082 = vmatpush1.msra.mxu0 %v10067
      %10083 = vmatprep.subr.mxu0 %v10070
      %10084 = vmatpush1.msra.mxu0 %v10069
      %10085 = vmatprep.subr.mxu0 %v10072
      %10086 = vmatpush1.msra.mxu0 %v10071
      %10087 = vmatprep.subr.mxu0 %v10074
      %10088 = vmatpush1.msra.mxu0 %v10073
      %10089 = vmatprep.subr.mxu0 0.0
      %10090 = vmatpush1.msra.mxu0 0.0
      %10091 = vmatprep.subr.mxu0 0.0
      %10092 = vmatpush1.msra.mxu0 0.0
      %10093 = vmatprep.subr.mxu0 0.0
      %10094 = vmatpush1.msra.mxu0 0.0
      %10095 = vmatprep.subr.mxu0 0.0
      %10096 = vmatpush1.msra.mxu0 0.0
      %10097 = vmatprep.subr.mxu0 0.0
      %10098 = vmatpush1.msra.mxu0 0.0
      %10099 = vmatprep.subr.mxu0 0.0
      %10100 = vmatpush1.msra.mxu0 0.0
      %10101 = vmatprep.subr.mxu0 0.0
      %10102 = vmatpush1.msra.mxu0 0.0
      %10103 = vmatprep.subr.mxu0 0.0
      %10104 = vmatpush1.msra.mxu0 0.0
      %10105 = vmatprep.subr.mxu0 0.0
      %10106 = vmatpush1.msra.mxu0 0.0
      %10107 = vmatprep.subr.mxu0 0.0
      %10108 = vmatpush1.msra.mxu0 0.0
      %10109 = vmatprep.subr.mxu0 0.0
      %10110 = vmatpush1.msra.mxu0 0.0
      %10111 = vmatprep.subr.mxu0 0.0
      %10112 = vmatpush1.msra.mxu0 0.0
      %10113 = vmatprep.subr.mxu0 0.0
      %10114 = vmatpush1.msra.mxu0 0.0
      %10115 = vmatprep.subr.mxu0 0.0
      %10116 = vmatpush1.msra.mxu0 0.0
      %10117 = vmatprep.subr.mxu0 0.0
      %10118 = vmatpush1.msra.mxu0 0.0
      %10119 = vmatprep.subr.mxu0 0.0
      %10120 = vmatpush1.msra.mxu0 0.0
      %10121 = vmatprep.subr.mxu0 0.0
      %10122 = vmatpush1.msra.mxu0 0.0
      %10123 = vmatprep.subr.mxu0 0.0
      %10124 = vmatpush1.msra.mxu0 0.0
      %10125 = vmatprep.subr.mxu0 0.0
      %10126 = vmatpush1.msra.mxu0 0.0
      %10127 = vmatprep.subr.mxu0 0.0
      %10128 = vmatpush1.msra.mxu0 0.0
      %10129 = vmatprep.subr.mxu0 0.0
      %10130 = vmatpush1.msra.mxu0 0.0
      %10131 = vmatprep.subr.mxu0 0.0
      %10132 = vmatpush1.msra.mxu0 0.0
      %10133 = vmatprep.subr.mxu0 0.0
      %10134 = vmatpush1.msra.mxu0 0.0
      %10135 = vmatprep.subr.mxu0 0.0
      %10136 = vmatpush1.msra.mxu0 0.0
      %10137 = vmatprep.subr.mxu0 0.0
      %10138 = vmatpush1.msra.mxu0 0.0
      %10139 = vmatprep.subr.mxu0 0.0
      %10140 = vmatpush1.msra.mxu0 0.0
      %10141 = vmatprep.subr.mxu0 0.0
      %10142 = vmatpush1.msra.mxu0 0.0
      %10143 = vmatprep.subr.mxu0 0.0
      %10144 = vmatpush1.msra.mxu0 0.0
      %10145 = vmatprep.mubr.f32.mxu0 0.0
      %10146 = vmatmul.mubr.f32.gmra.mrb[0].mxu0 %v10076
      %v10147 = vpop.f32.mrb[0].mxu0
      %v10148 = vadd.f32 0.0, %v10147
      %v10149 = vpop.f32.mrb[0].mxu0
      %v10150 = vadd.f32 0.0, %v10149
      %10151 = vmatprep.mubr.f32.mxu0 0.0
      %10152 = vmatmul.mubr.f32.gmra.mrb[0].mxu0 %v10079
      %v10153 = vpop.f32.mrb[0].mxu0
      %v10154 = vadd.f32 0.0, %v10153
      %v10155 = vpop.f32.mrb[0].mxu0
      %v10156 = vadd.f32 0.0, %v10155
      %10157 = vdwg.mxu0
      %v10158 = vadd.f32 %v10062, %v10148
      %v10159 = vadd.f32 %v10063, %v10150
      %v10160 = vadd.f32 %v10064, %v10154
      %v10161 = vadd.f32 %v10065, %v10156
      %s10162 = scalar_lea.vmem %s8, 704
      %v10163 = vld [vmem:[%s10162] sm:$0xff]
      %v10164 = vld [vmem:[%s10162 + $0x8] sm:$0xff]
      %v10165 = vld [vmem:[%s10162 + $0x10] sm:$0xff]
      %v10166 = vld [vmem:[%s10162 + $0x18] sm:$0xff]
      %v10167 = vld [vmem:[%s10162 + $0x20] sm:$0xff]
      %v10168 = vld [vmem:[%s10162 + $0x28] sm:$0xff]
      %v10169 = vld [vmem:[%s10162 + $0x30] sm:$0xff]
      %v10170 = vld [vmem:[%s10162 + $0x38] sm:$0xff]
      %v10172 = vsel %vm7685, %v9105, 0
      %v10175 = vsel %vm7685, %v9106, 0
      %10177 = vmatprep.subr.mxu0 %v10164
      %10178 = vmatpush1.msra.mxu0 %v10163
      %10179 = vmatprep.subr.mxu0 %v10166
      %10180 = vmatpush1.msra.mxu0 %v10165
      %10181 = vmatprep.subr.mxu0 %v10168
      %10182 = vmatpush1.msra.mxu0 %v10167
      %10183 = vmatprep.subr.mxu0 %v10170
      %10184 = vmatpush1.msra.mxu0 %v10169
      %10185 = vmatprep.subr.mxu0 0.0
      %10186 = vmatpush1.msra.mxu0 0.0
      %10187 = vmatprep.subr.mxu0 0.0
      %10188 = vmatpush1.msra.mxu0 0.0
      %10189 = vmatprep.subr.mxu0 0.0
      %10190 = vmatpush1.msra.mxu0 0.0
      %10191 = vmatprep.subr.mxu0 0.0
      %10192 = vmatpush1.msra.mxu0 0.0
      %10193 = vmatprep.subr.mxu0 0.0
      %10194 = vmatpush1.msra.mxu0 0.0
      %10195 = vmatprep.subr.mxu0 0.0
      %10196 = vmatpush1.msra.mxu0 0.0
      %10197 = vmatprep.subr.mxu0 0.0
      %10198 = vmatpush1.msra.mxu0 0.0
      %10199 = vmatprep.subr.mxu0 0.0
      %10200 = vmatpush1.msra.mxu0 0.0
      %10201 = vmatprep.subr.mxu0 0.0
      %10202 = vmatpush1.msra.mxu0 0.0
      %10203 = vmatprep.subr.mxu0 0.0
      %10204 = vmatpush1.msra.mxu0 0.0
      %10205 = vmatprep.subr.mxu0 0.0
      %10206 = vmatpush1.msra.mxu0 0.0
      %10207 = vmatprep.subr.mxu0 0.0
      %10208 = vmatpush1.msra.mxu0 0.0
      %10209 = vmatprep.subr.mxu0 0.0
      %10210 = vmatpush1.msra.mxu0 0.0
      %10211 = vmatprep.subr.mxu0 0.0
      %10212 = vmatpush1.msra.mxu0 0.0
      %10213 = vmatprep.subr.mxu0 0.0
      %10214 = vmatpush1.msra.mxu0 0.0
      %10215 = vmatprep.subr.mxu0 0.0
      %10216 = vmatpush1.msra.mxu0 0.0
      %10217 = vmatprep.subr.mxu0 0.0
      %10218 = vmatpush1.msra.mxu0 0.0
      %10219 = vmatprep.subr.mxu0 0.0
      %10220 = vmatpush1.msra.mxu0 0.0
      %10221 = vmatprep.subr.mxu0 0.0
      %10222 = vmatpush1.msra.mxu0 0.0
      %10223 = vmatprep.subr.mxu0 0.0
      %10224 = vmatpush1.msra.mxu0 0.0
      %10225 = vmatprep.subr.mxu0 0.0
      %10226 = vmatpush1.msra.mxu0 0.0
      %10227 = vmatprep.subr.mxu0 0.0
      %10228 = vmatpush1.msra.mxu0 0.0
      %10229 = vmatprep.subr.mxu0 0.0
      %10230 = vmatpush1.msra.mxu0 0.0
      %10231 = vmatprep.subr.mxu0 0.0
      %10232 = vmatpush1.msra.mxu0 0.0
      %10233 = vmatprep.subr.mxu0 0.0
      %10234 = vmatpush1.msra.mxu0 0.0
      %10235 = vmatprep.subr.mxu0 0.0
      %10236 = vmatpush1.msra.mxu0 0.0
      %10237 = vmatprep.subr.mxu0 0.0
      %10238 = vmatpush1.msra.mxu0 0.0
      %10239 = vmatprep.subr.mxu0 0.0
      %10240 = vmatpush1.msra.mxu0 0.0
      %10241 = vmatprep.mubr.f32.mxu0 0.0
      %10242 = vmatmul.mubr.f32.gmra.mrb[0].mxu0 %v10172
      %v10243 = vpop.f32.mrb[0].mxu0
      %v10244 = vadd.f32 0.0, %v10243
      %v10245 = vpop.f32.mrb[0].mxu0
      %v10246 = vadd.f32 0.0, %v10245
      %10247 = vmatprep.mubr.f32.mxu0 0.0
      %10248 = vmatmul.mubr.f32.gmra.mrb[0].mxu0 %v10175
      %v10249 = vpop.f32.mrb[0].mxu0
      %v10250 = vadd.f32 0.0, %v10249
      %v10251 = vpop.f32.mrb[0].mxu0
      %v10252 = vadd.f32 0.0, %v10251
      %10253 = vdwg.mxu0
      %v10254 = vadd.f32 %v10158, %v10244
      %v10255 = vadd.f32 %v10159, %v10246
      %v10256 = vadd.f32 %v10160, %v10250
      %v10257 = vadd.f32 %v10161, %v10252
      %s10258 = scalar_lea.vmem %s8, 768
      %v10259 = vld [vmem:[%s10258] sm:$0xff]
      %v10260 = vld [vmem:[%s10258 + $0x8] sm:$0xff]
      %v10261 = vld [vmem:[%s10258 + $0x10] sm:$0xff]
      %v10262 = vld [vmem:[%s10258 + $0x18] sm:$0xff]
      %v10263 = vld [vmem:[%s10258 + $0x20] sm:$0xff]
      %v10264 = vld [vmem:[%s10258 + $0x28] sm:$0xff]
      %v10265 = vld [vmem:[%s10258 + $0x30] sm:$0xff]
      %v10266 = vld [vmem:[%s10258 + $0x38] sm:$0xff]
      %v10268 = vsel %vm7685, %v9107, 0
      %v10271 = vsel %vm7685, %v9108, 0
      %10273 = vmatprep.subr.mxu0 %v10260
      %10274 = vmatpush1.msra.mxu0 %v10259
      %10275 = vmatprep.subr.mxu0 %v10262
      %10276 = vmatpush1.msra.mxu0 %v10261
      %10277 = vmatprep.subr.mxu0 %v10264
      %10278 = vmatpush1.msra.mxu0 %v10263
      %10279 = vmatprep.subr.mxu0 %v10266
      %10280 = vmatpush1.msra.mxu0 %v10265
      %10281 = vmatprep.subr.mxu0 0.0
      %10282 = vmatpush1.msra.mxu0 0.0
      %10283 = vmatprep.subr.mxu0 0.0
      %10284 = vmatpush1.msra.mxu0 0.0
      %10285 = vmatprep.subr.mxu0 0.0
      %10286 = vmatpush1.msra.mxu0 0.0
      %10287 = vmatprep.subr.mxu0 0.0
      %10288 = vmatpush1.msra.mxu0 0.0
      %10289 = vmatprep.subr.mxu0 0.0
      %10290 = vmatpush1.msra.mxu0 0.0
      %10291 = vmatprep.subr.mxu0 0.0
      %10292 = vmatpush1.msra.mxu0 0.0
      %10293 = vmatprep.subr.mxu0 0.0
      %10294 = vmatpush1.msra.mxu0 0.0
      %10295 = vmatprep.subr.mxu0 0.0
      %10296 = vmatpush1.msra.mxu0 0.0
      %10297 = vmatprep.subr.mxu0 0.0
      %10298 = vmatpush1.msra.mxu0 0.0
      %10299 = vmatprep.subr.mxu0 0.0
      %10300 = vmatpush1.msra.mxu0 0.0
      %10301 = vmatprep.subr.mxu0 0.0
      %10302 = vmatpush1.msra.mxu0 0.0
      %10303 = vmatprep.subr.mxu0 0.0
      %10304 = vmatpush1.msra.mxu0 0.0
      %10305 = vmatprep.subr.mxu0 0.0
      %10306 = vmatpush1.msra.mxu0 0.0
      %10307 = vmatprep.subr.mxu0 0.0
      %10308 = vmatpush1.msra.mxu0 0.0
      %10309 = vmatprep.subr.mxu0 0.0
      %10310 = vmatpush1.msra.mxu0 0.0
      %10311 = vmatprep.subr.mxu0 0.0
      %10312 = vmatpush1.msra.mxu0 0.0
      %10313 = vmatprep.subr.mxu0 0.0
      %10314 = vmatpush1.msra.mxu0 0.0
      %10315 = vmatprep.subr.mxu0 0.0
      %10316 = vmatpush1.msra.mxu0 0.0
      %10317 = vmatprep.subr.mxu0 0.0
      %10318 = vmatpush1.msra.mxu0 0.0
      %10319 = vmatprep.subr.mxu0 0.0
      %10320 = vmatpush1.msra.mxu0 0.0
      %10321 = vmatprep.subr.mxu0 0.0
      %10322 = vmatpush1.msra.mxu0 0.0
      %10323 = vmatprep.subr.mxu0 0.0
      %10324 = vmatpush1.msra.mxu0 0.0
      %10325 = vmatprep.subr.mxu0 0.0
      %10326 = vmatpush1.msra.mxu0 0.0
      %10327 = vmatprep.subr.mxu0 0.0
      %10328 = vmatpush1.msra.mxu0 0.0
      %10329 = vmatprep.subr.mxu0 0.0
      %10330 = vmatpush1.msra.mxu0 0.0
      %10331 = vmatprep.subr.mxu0 0.0
      %10332 = vmatpush1.msra.mxu0 0.0
      %10333 = vmatprep.subr.mxu0 0.0
      %10334 = vmatpush1.msra.mxu0 0.0
      %10335 = vmatprep.subr.mxu0 0.0
      %10336 = vmatpush1.msra.mxu0 0.0
      %10337 = vmatprep.mubr.f32.mxu0 0.0
      %10338 = vmatmul.mubr.f32.gmra.mrb[0].mxu0 %v10268
      %v10339 = vpop.f32.mrb[0].mxu0
      %v10340 = vadd.f32 0.0, %v10339
      %v10341 = vpop.f32.mrb[0].mxu0
      %v10342 = vadd.f32 0.0, %v10341
      %10343 = vmatprep.mubr.f32.mxu0 0.0
      %10344 = vmatmul.mubr.f32.gmra.mrb[0].mxu0 %v10271
      %v10345 = vpop.f32.mrb[0].mxu0
      %v10346 = vadd.f32 0.0, %v10345
      %v10347 = vpop.f32.mrb[0].mxu0
      %v10348 = vadd.f32 0.0, %v10347
      %10349 = vdwg.mxu0
      %v10350 = vadd.f32 %v10254, %v10340
      %v10351 = vadd.f32 %v10255, %v10342
      %v10352 = vadd.f32 %v10256, %v10346
      %v10353 = vadd.f32 %v10257, %v10348
      %s10354 = scalar_lea.vmem %s8, 832
      %v10355 = vld [vmem:[%s10354] sm:$0xff]
      %v10356 = vld [vmem:[%s10354 + $0x8] sm:$0xff]
      %v10357 = vld [vmem:[%s10354 + $0x10] sm:$0xff]
      %v10358 = vld [vmem:[%s10354 + $0x18] sm:$0xff]
      %v10359 = vld [vmem:[%s10354 + $0x20] sm:$0xff]
      %v10360 = vld [vmem:[%s10354 + $0x28] sm:$0xff]
      %v10361 = vld [vmem:[%s10354 + $0x30] sm:$0xff]
      %v10362 = vld [vmem:[%s10354 + $0x38] sm:$0xff]
      %v10364 = vsel %vm7685, %v9109, 0
      %v10367 = vsel %vm7685, %v9110, 0
      %10369 = vmatprep.subr.mxu0 %v10356
      %10370 = vmatpush1.msra.mxu0 %v10355
      %10371 = vmatprep.subr.mxu0 %v10358
      %10372 = vmatpush1.msra.mxu0 %v10357
      %10373 = vmatprep.subr.mxu0 %v10360
      %10374 = vmatpush1.msra.mxu0 %v10359
      %10375 = vmatprep.subr.mxu0 %v10362
      %10376 = vmatpush1.msra.mxu0 %v10361
      %10377 = vmatprep.subr.mxu0 0.0
      %10378 = vmatpush1.msra.mxu0 0.0
      %10379 = vmatprep.subr.mxu0 0.0
      %10380 = vmatpush1.msra.mxu0 0.0
      %10381 = vmatprep.subr.mxu0 0.0
      %10382 = vmatpush1.msra.mxu0 0.0
      %10383 = vmatprep.subr.mxu0 0.0
      %10384 = vmatpush1.msra.mxu0 0.0
      %10385 = vmatprep.subr.mxu0 0.0
      %10386 = vmatpush1.msra.mxu0 0.0
      %10387 = vmatprep.subr.mxu0 0.0
      %10388 = vmatpush1.msra.mxu0 0.0
      %10389 = vmatprep.subr.mxu0 0.0
      %10390 = vmatpush1.msra.mxu0 0.0
      %10391 = vmatprep.subr.mxu0 0.0
      %10392 = vmatpush1.msra.mxu0 0.0
      %10393 = vmatprep.subr.mxu0 0.0
      %10394 = vmatpush1.msra.mxu0 0.0
      %10395 = vmatprep.subr.mxu0 0.0
      %10396 = vmatpush1.msra.mxu0 0.0
      %10397 = vmatprep.subr.mxu0 0.0
      %10398 = vmatpush1.msra.mxu0 0.0
      %10399 = vmatprep.subr.mxu0 0.0
      %10400 = vmatpush1.msra.mxu0 0.0
      %10401 = vmatprep.subr.mxu0 0.0
      %10402 = vmatpush1.msra.mxu0 0.0
      %10403 = vmatprep.subr.mxu0 0.0
      %10404 = vmatpush1.msra.mxu0 0.0
      %10405 = vmatprep.subr.mxu0 0.0
      %10406 = vmatpush1.msra.mxu0 0.0
      %10407 = vmatprep.subr.mxu0 0.0
      %10408 = vmatpush1.msra.mxu0 0.0
      %10409 = vmatprep.subr.mxu0 0.0
      %10410 = vmatpush1.msra.mxu0 0.0
      %10411 = vmatprep.subr.mxu0 0.0
      %10412 = vmatpush1.msra.mxu0 0.0
      %10413 = vmatprep.subr.mxu0 0.0
      %10414 = vmatpush1.msra.mxu0 0.0
      %10415 = vmatprep.subr.mxu0 0.0
      %10416 = vmatpush1.msra.mxu0 0.0
      %10417 = vmatprep.subr.mxu0 0.0
      %10418 = vmatpush1.msra.mxu0 0.0
      %10419 = vmatprep.subr.mxu0 0.0
      %10420 = vmatpush1.msra.mxu0 0.0
      %10421 = vmatprep.subr.mxu0 0.0
      %10422 = vmatpush1.msra.mxu0 0.0
      %10423 = vmatprep.subr.mxu0 0.0
      %10424 = vmatpush1.msra.mxu0 0.0
      %10425 = vmatprep.subr.mxu0 0.0
      %10426 = vmatpush1.msra.mxu0 0.0
      %10427 = vmatprep.subr.mxu0 0.0
      %10428 = vmatpush1.msra.mxu0 0.0
      %10429 = vmatprep.subr.mxu0 0.0
      %10430 = vmatpush1.msra.mxu0 0.0
      %10431 = vmatprep.subr.mxu0 0.0
      %10432 = vmatpush1.msra.mxu0 0.0
      %10433 = vmatprep.mubr.f32.mxu0 0.0
      %10434 = vmatmul.mubr.f32.gmra.mrb[0].mxu0 %v10364
      %v10435 = vpop.f32.mrb[0].mxu0
      %v10436 = vadd.f32 0.0, %v10435
      %v10437 = vpop.f32.mrb[0].mxu0
      %v10438 = vadd.f32 0.0, %v10437
      %10439 = vmatprep.mubr.f32.mxu0 0.0
      %10440 = vmatmul.mubr.f32.gmra.mrb[0].mxu0 %v10367
      %v10441 = vpop.f32.mrb[0].mxu0
      %v10442 = vadd.f32 0.0, %v10441
      %v10443 = vpop.f32.mrb[0].mxu0
      %v10444 = vadd.f32 0.0, %v10443
      %10445 = vdwg.mxu0
      %v10446 = vadd.f32 %v10350, %v10436
      %v10447 = vadd.f32 %v10351, %v10438
      %v10448 = vadd.f32 %v10352, %v10442
      %v10449 = vadd.f32 %v10353, %v10444
      %s10450 = scalar_lea.vmem %s8, 896
      %v10451 = vld [vmem:[%s10450] sm:$0xff]
      %v10452 = vld [vmem:[%s10450 + $0x8] sm:$0xff]
      %v10453 = vld [vmem:[%s10450 + $0x10] sm:$0xff]
      %v10454 = vld [vmem:[%s10450 + $0x18] sm:$0xff]
      %v10455 = vld [vmem:[%s10450 + $0x20] sm:$0xff]
      %v10456 = vld [vmem:[%s10450 + $0x28] sm:$0xff]
      %v10457 = vld [vmem:[%s10450 + $0x30] sm:$0xff]
      %v10458 = vld [vmem:[%s10450 + $0x38] sm:$0xff]
      %v10460 = vsel %vm7685, %v9111, 0
      %v10463 = vsel %vm7685, %v9112, 0
      %10465 = vmatprep.subr.mxu0 %v10452
      %10466 = vmatpush1.msra.mxu0 %v10451
      %10467 = vmatprep.subr.mxu0 %v10454
      %10468 = vmatpush1.msra.mxu0 %v10453
      %10469 = vmatprep.subr.mxu0 %v10456
      %10470 = vmatpush1.msra.mxu0 %v10455
      %10471 = vmatprep.subr.mxu0 %v10458
      %10472 = vmatpush1.msra.mxu0 %v10457
      %10473 = vmatprep.subr.mxu0 0.0
      %10474 = vmatpush1.msra.mxu0 0.0
      %10475 = vmatprep.subr.mxu0 0.0
      %10476 = vmatpush1.msra.mxu0 0.0
      %10477 = vmatprep.subr.mxu0 0.0
      %10478 = vmatpush1.msra.mxu0 0.0
      %10479 = vmatprep.subr.mxu0 0.0
      %10480 = vmatpush1.msra.mxu0 0.0
      %10481 = vmatprep.subr.mxu0 0.0
      %10482 = vmatpush1.msra.mxu0 0.0
      %10483 = vmatprep.subr.mxu0 0.0
      %10484 = vmatpush1.msra.mxu0 0.0
      %10485 = vmatprep.subr.mxu0 0.0
      %10486 = vmatpush1.msra.mxu0 0.0
      %10487 = vmatprep.subr.mxu0 0.0
      %10488 = vmatpush1.msra.mxu0 0.0
      %10489 = vmatprep.subr.mxu0 0.0
      %10490 = vmatpush1.msra.mxu0 0.0
      %10491 = vmatprep.subr.mxu0 0.0
      %10492 = vmatpush1.msra.mxu0 0.0
      %10493 = vmatprep.subr.mxu0 0.0
      %10494 = vmatpush1.msra.mxu0 0.0
      %10495 = vmatprep.subr.mxu0 0.0
      %10496 = vmatpush1.msra.mxu0 0.0
      %10497 = vmatprep.subr.mxu0 0.0
      %10498 = vmatpush1.msra.mxu0 0.0
      %10499 = vmatprep.subr.mxu0 0.0
      %10500 = vmatpush1.msra.mxu0 0.0
      %10501 = vmatprep.subr.mxu0 0.0
      %10502 = vmatpush1.msra.mxu0 0.0
      %10503 = vmatprep.subr.mxu0 0.0
      %10504 = vmatpush1.msra.mxu0 0.0
      %10505 = vmatprep.subr.mxu0 0.0
      %10506 = vmatpush1.msra.mxu0 0.0
      %10507 = vmatprep.subr.mxu0 0.0
      %10508 = vmatpush1.msra.mxu0 0.0
      %10509 = vmatprep.subr.mxu0 0.0
      %10510 = vmatpush1.msra.mxu0 0.0
      %10511 = vmatprep.subr.mxu0 0.0
      %10512 = vmatpush1.msra.mxu0 0.0
      %10513 = vmatprep.subr.mxu0 0.0
      %10514 = vmatpush1.msra.mxu0 0.0
      %10515 = vmatprep.subr.mxu0 0.0
      %10516 = vmatpush1.msra.mxu0 0.0
      %10517 = vmatprep.subr.mxu0 0.0
      %10518 = vmatpush1.msra.mxu0 0.0
      %10519 = vmatprep.subr.mxu0 0.0
      %10520 = vmatpush1.msra.mxu0 0.0
      %10521 = vmatprep.subr.mxu0 0.0
      %10522 = vmatpush1.msra.mxu0 0.0
      %10523 = vmatprep.subr.mxu0 0.0
      %10524 = vmatpush1.msra.mxu0 0.0
      %10525 = vmatprep.subr.mxu0 0.0
      %10526 = vmatpush1.msra.mxu0 0.0
      %10527 = vmatprep.subr.mxu0 0.0
      %10528 = vmatpush1.msra.mxu0 0.0
      %10529 = vmatprep.mubr.f32.mxu0 0.0
      %10530 = vmatmul.mubr.f32.gmra.mrb[0].mxu0 %v10460
      %v10531 = vpop.f32.mrb[0].mxu0
      %v10532 = vadd.f32 0.0, %v10531
      %v10533 = vpop.f32.mrb[0].mxu0
      %v10534 = vadd.f32 0.0, %v10533
      %10535 = vmatprep.mubr.f32.mxu0 0.0
      %10536 = vmatmul.mubr.f32.gmra.mrb[0].mxu0 %v10463
      %v10537 = vpop.f32.mrb[0].mxu0
      %v10538 = vadd.f32 0.0, %v10537
      %v10539 = vpop.f32.mrb[0].mxu0
      %v10540 = vadd.f32 0.0, %v10539
      %10541 = vdwg.mxu0
      %v10542 = vadd.f32 %v10446, %v10532
      %v10543 = vadd.f32 %v10447, %v10534
      %v10544 = vadd.f32 %v10448, %v10538
      %v10545 = vadd.f32 %v10449, %v10540
      %s10546 = scalar_lea.vmem %s8, 960
      %v10547 = vld [vmem:[%s10546] sm:$0xff]
      %v10548 = vld [vmem:[%s10546 + $0x8] sm:$0xff]
      %v10549 = vld [vmem:[%s10546 + $0x10] sm:$0xff]
      %v10550 = vld [vmem:[%s10546 + $0x18] sm:$0xff]
      %v10551 = vld [vmem:[%s10546 + $0x20] sm:$0xff]
      %v10552 = vld [vmem:[%s10546 + $0x28] sm:$0xff]
      %v10553 = vld [vmem:[%s10546 + $0x30] sm:$0xff]
      %v10554 = vld [vmem:[%s10546 + $0x38] sm:$0xff]
      %v10556 = vsel %vm7685, %v9113, 0
      %v10559 = vsel %vm7685, %v9114, 0
      %10561 = vmatprep.subr.mxu0 %v10548
      %10562 = vmatpush1.msra.mxu0 %v10547
      %10563 = vmatprep.subr.mxu0 %v10550
      %10564 = vmatpush1.msra.mxu0 %v10549
      %10565 = vmatprep.subr.mxu0 %v10552
      %10566 = vmatpush1.msra.mxu0 %v10551
      %10567 = vmatprep.subr.mxu0 %v10554
      %10568 = vmatpush1.msra.mxu0 %v10553
      %10569 = vmatprep.subr.mxu0 0.0
      %10570 = vmatpush1.msra.mxu0 0.0
      %10571 = vmatprep.subr.mxu0 0.0
      %10572 = vmatpush1.msra.mxu0 0.0
      %10573 = vmatprep.subr.mxu0 0.0
      %10574 = vmatpush1.msra.mxu0 0.0
      %10575 = vmatprep.subr.mxu0 0.0
      %10576 = vmatpush1.msra.mxu0 0.0
      %10577 = vmatprep.subr.mxu0 0.0
      %10578 = vmatpush1.msra.mxu0 0.0
      %10579 = vmatprep.subr.mxu0 0.0
      %10580 = vmatpush1.msra.mxu0 0.0
      %10581 = vmatprep.subr.mxu0 0.0
      %10582 = vmatpush1.msra.mxu0 0.0
      %10583 = vmatprep.subr.mxu0 0.0
      %10584 = vmatpush1.msra.mxu0 0.0
      %10585 = vmatprep.subr.mxu0 0.0
      %10586 = vmatpush1.msra.mxu0 0.0
      %10587 = vmatprep.subr.mxu0 0.0
      %10588 = vmatpush1.msra.mxu0 0.0
      %10589 = vmatprep.subr.mxu0 0.0
      %10590 = vmatpush1.msra.mxu0 0.0
      %10591 = vmatprep.subr.mxu0 0.0
      %10592 = vmatpush1.msra.mxu0 0.0
      %10593 = vmatprep.subr.mxu0 0.0
      %10594 = vmatpush1.msra.mxu0 0.0
      %10595 = vmatprep.subr.mxu0 0.0
      %10596 = vmatpush1.msra.mxu0 0.0
      %10597 = vmatprep.subr.mxu0 0.0
      %10598 = vmatpush1.msra.mxu0 0.0
      %10599 = vmatprep.subr.mxu0 0.0
      %10600 = vmatpush1.msra.mxu0 0.0
      %10601 = vmatprep.subr.mxu0 0.0
      %10602 = vmatpush1.msra.mxu0 0.0
      %10603 = vmatprep.subr.mxu0 0.0
      %10604 = vmatpush1.msra.mxu0 0.0
      %10605 = vmatprep.subr.mxu0 0.0
      %10606 = vmatpush1.msra.mxu0 0.0
      %10607 = vmatprep.subr.mxu0 0.0
      %10608 = vmatpush1.msra.mxu0 0.0
      %10609 = vmatprep.subr.mxu0 0.0
      %10610 = vmatpush1.msra.mxu0 0.0
      %10611 = vmatprep.subr.mxu0 0.0
      %10612 = vmatpush1.msra.mxu0 0.0
      %10613 = vmatprep.subr.mxu0 0.0
      %10614 = vmatpush1.msra.mxu0 0.0
      %10615 = vmatprep.subr.mxu0 0.0
      %10616 = vmatpush1.msra.mxu0 0.0
      %10617 = vmatprep.subr.mxu0 0.0
      %10618 = vmatpush1.msra.mxu0 0.0
      %10619 = vmatprep.subr.mxu0 0.0
      %10620 = vmatpush1.msra.mxu0 0.0
      %10621 = vmatprep.subr.mxu0 0.0
      %10622 = vmatpush1.msra.mxu0 0.0
      %10623 = vmatprep.subr.mxu0 0.0
      %10624 = vmatpush1.msra.mxu0 0.0
      %10625 = vmatprep.mubr.f32.mxu0 0.0
      %10626 = vmatmul.mubr.f32.gmra.mrb[0].mxu0 %v10556
      %v10627 = vpop.f32.mrb[0].mxu0
      %v10628 = vadd.f32 0.0, %v10627
      %v10629 = vpop.f32.mrb[0].mxu0
      %v10630 = vadd.f32 0.0, %v10629
      %10631 = vmatprep.mubr.f32.mxu0 0.0
      %10632 = vmatmul.mubr.f32.gmra.mrb[0].mxu0 %v10559
      %v10633 = vpop.f32.mrb[0].mxu0
      %v10634 = vadd.f32 0.0, %v10633
      %v10635 = vpop.f32.mrb[0].mxu0
      %v10636 = vadd.f32 0.0, %v10635
      %10637 = vdwg.mxu0
      %v10638 = vadd.f32 %v10542, %v10628
      %v10639 = vadd.f32 %v10543, %v10630
      %v10640 = vadd.f32 %v10544, %v10634
      %v10641 = vadd.f32 %v10545, %v10636
      %v10642 = vld [vmem:[%s9] sm:$0x3]
      %v10644 = vlaneseq
      %v10645 = vshrl.u32 %v10644, 7
      %v10646 = vsub.s32 0, %v10645
      %v10647 = vrot.slane %v10642, %v10646
      %v10648 = vlaneseq
      %v10649 = vshrl.u32 %v10648, 7
      %v10650 = vsub.s32 1, %v10649
      %v10651 = vrot.slane %v10642, %v10650
      %v10654 = vadd.f32 %v10638, %v10647
      %v10655 = vadd.f32 %v10639, %v10651
      %v10656 = vadd.f32 %v10640, %v10647
      %v10657 = vadd.f32 %v10641, %v10651
      %v10658 = vmax.f32 %v10654, 0.0
      %v10659 = vmax.f32 %v10655, 0.0
      %v10660 = vmax.f32 %v10656, 0.0
      %v10661 = vmax.f32 %v10657, 0.0
      %v10662 = vld [vmem:[%s512] sm:$0xff]
      %v10663 = vld [vmem:[%s512 + $0x8] sm:$0xff]
      %v10664 = vld [vmem:[%s10] sm:$0xff]
      %v10665 = vld [vmem:[%s10 + $0x8] sm:$0xff]
      %v10666 = vld [vmem:[%s10 + $0x10] sm:$0xff]
      %v10667 = vld [vmem:[%s10 + $0x18] sm:$0xff]
      %v10668 = vld [vmem:[%s10 + $0x20] sm:$0xff]
      %v10669 = vld [vmem:[%s10 + $0x28] sm:$0xff]
      %v10670 = vld [vmem:[%s10 + $0x30] sm:$0xff]
      %v10671 = vld [vmem:[%s10 + $0x38] sm:$0xff]
      %v10672 = vld [vmem:[%s10 + $0x40] sm:$0xff]
      %v10673 = vld [vmem:[%s10 + $0x48] sm:$0xff]
      %v10674 = vld [vmem:[%s10 + $0x50] sm:$0xff]
      %v10675 = vld [vmem:[%s10 + $0x58] sm:$0xff]
      %v10676 = vld [vmem:[%s10 + $0x60] sm:$0xff]
      %v10677 = vld [vmem:[%s10 + $0x68] sm:$0xff]
      %v10678 = vld [vmem:[%s10 + $0x70] sm:$0xff]
      %v10679 = vld [vmem:[%s10 + $0x78] sm:$0xff]
      %v10680 = vld [vmem:[%s10 + $0x80] sm:$0xff]
      %v10681 = vld [vmem:[%s10 + $0x88] sm:$0xff]
      %v10682 = vld [vmem:[%s10 + $0x90] sm:$0xff]
      %v10683 = vld [vmem:[%s10 + $0x98] sm:$0xff]
      %v10684 = vld [vmem:[%s10 + $0xa0] sm:$0xff]
      %v10685 = vld [vmem:[%s10 + $0xa8] sm:$0xff]
      %v10686 = vld [vmem:[%s10 + $0xb0] sm:$0xff]
      %v10687 = vld [vmem:[%s10 + $0xb8] sm:$0xff]
      %v10688 = vld [vmem:[%s10 + $0xc0] sm:$0xff]
      %v10689 = vld [vmem:[%s10 + $0xc8] sm:$0xff]
      %v10690 = vld [vmem:[%s10 + $0xd0] sm:$0xff]
      %v10691 = vld [vmem:[%s10 + $0xd8] sm:$0xff]
      %v10692 = vld [vmem:[%s10 + $0xe0] sm:$0xff]
      %v10693 = vld [vmem:[%s10 + $0xe8] sm:$0xff]
      %v10694 = vld [vmem:[%s10 + $0xf0] sm:$0xff]
      %v10695 = vld [vmem:[%s10 + $0xf8] sm:$0xff]
      %v10696 = vld [vmem:[%s10 + $0x100] sm:$0xff]
      %v10697 = vld [vmem:[%s10 + $0x108] sm:$0xff]
      %v10698 = vld [vmem:[%s10 + $0x110] sm:$0xff]
      %v10699 = vld [vmem:[%s10 + $0x118] sm:$0xff]
      %v10700 = vld [vmem:[%s10 + $0x120] sm:$0xff]
      %v10701 = vld [vmem:[%s10 + $0x128] sm:$0xff]
      %v10702 = vld [vmem:[%s10 + $0x130] sm:$0xff]
      %v10703 = vld [vmem:[%s10 + $0x138] sm:$0xff]
      %v10704 = vld [vmem:[%s10 + $0x140] sm:$0xff]
      %v10705 = vld [vmem:[%s10 + $0x148] sm:$0xff]
      %v10706 = vld [vmem:[%s10 + $0x150] sm:$0xff]
      %v10707 = vld [vmem:[%s10 + $0x158] sm:$0xff]
      %v10708 = vld [vmem:[%s10 + $0x160] sm:$0xff]
      %v10709 = vld [vmem:[%s10 + $0x168] sm:$0xff]
      %v10710 = vld [vmem:[%s10 + $0x170] sm:$0xff]
      %v10711 = vld [vmem:[%s10 + $0x178] sm:$0xff]
      %v10712 = vld [vmem:[%s10 + $0x180] sm:$0xff]
      %v10713 = vld [vmem:[%s10 + $0x188] sm:$0xff]
      %v10714 = vld [vmem:[%s10 + $0x190] sm:$0xff]
      %v10715 = vld [vmem:[%s10 + $0x198] sm:$0xff]
      %v10716 = vld [vmem:[%s10 + $0x1a0] sm:$0xff]
      %v10717 = vld [vmem:[%s10 + $0x1a8] sm:$0xff]
      %v10718 = vld [vmem:[%s10 + $0x1b0] sm:$0xff]
      %v10719 = vld [vmem:[%s10 + $0x1b8] sm:$0xff]
      %v10720 = vld [vmem:[%s10 + $0x1c0] sm:$0xff]
      %v10721 = vld [vmem:[%s10 + $0x1c8] sm:$0xff]
      %v10722 = vld [vmem:[%s10 + $0x1d0] sm:$0xff]
      %v10723 = vld [vmem:[%s10 + $0x1d8] sm:$0xff]
      %v10724 = vld [vmem:[%s10 + $0x1e0] sm:$0xff]
      %v10725 = vld [vmem:[%s10 + $0x1e8] sm:$0xff]
      %v10726 = vld [vmem:[%s10 + $0x1f0] sm:$0xff]
      %v10727 = vld [vmem:[%s10 + $0x1f8] sm:$0xff]
      %v10728 = vld [vmem:[%s11] sm:$0xff]
      %v10729 = vld [vmem:[%s11 + $0x8] sm:$0xff]
      %v10730 = vld [vmem:[%s11 + $0x10] sm:$0xff]
      %v10731 = vld [vmem:[%s11 + $0x18] sm:$0xff]
      %v10732 = vld [vmem:[%s11 + $0x20] sm:$0xff]
      %v10733 = vld [vmem:[%s11 + $0x28] sm:$0xff]
      %v10734 = vld [vmem:[%s11 + $0x30] sm:$0xff]
      %v10735 = vld [vmem:[%s11 + $0x38] sm:$0xff]
      %v10737 = vsel %vm7685, %v10662, 0
      %v10740 = vsel %vm7685, %v10663, 0
      %10742 = vmatprep.subr.mxu0 %v10729
      %10743 = vmatpush1.msra.mxu0 %v10728
      %10744 = vmatprep.subr.mxu0 %v10731
      %10745 = vmatpush1.msra.mxu0 %v10730
      %10746 = vmatprep.subr.mxu0 %v10733
      %10747 = vmatpush1.msra.mxu0 %v10732
      %10748 = vmatprep.subr.mxu0 %v10735
      %10749 = vmatpush1.msra.mxu0 %v10734
      %10750 = vmatprep.subr.mxu0 0.0
      %10751 = vmatpush1.msra.mxu0 0.0
      %10752 = vmatprep.subr.mxu0 0.0
      %10753 = vmatpush1.msra.mxu0 0.0
      %10754 = vmatprep.subr.mxu0 0.0
      %10755 = vmatpush1.msra.mxu0 0.0
      %10756 = vmatprep.subr.mxu0 0.0
      %10757 = vmatpush1.msra.mxu0 0.0
      %10758 = vmatprep.subr.mxu0 0.0
      %10759 = vmatpush1.msra.mxu0 0.0
      %10760 = vmatprep.subr.mxu0 0.0
      %10761 = vmatpush1.msra.mxu0 0.0
      %10762 = vmatprep.subr.mxu0 0.0
      %10763 = vmatpush1.msra.mxu0 0.0
      %10764 = vmatprep.subr.mxu0 0.0
      %10765 = vmatpush1.msra.mxu0 0.0
      %10766 = vmatprep.subr.mxu0 0.0
      %10767 = vmatpush1.msra.mxu0 0.0
      %10768 = vmatprep.subr.mxu0 0.0
      %10769 = vmatpush1.msra.mxu0 0.0
      %10770 = vmatprep.subr.mxu0 0.0
      %10771 = vmatpush1.msra.mxu0 0.0
      %10772 = vmatprep.subr.mxu0 0.0
      %10773 = vmatpush1.msra.mxu0 0.0
      %10774 = vmatprep.subr.mxu0 0.0
      %10775 = vmatpush1.msra.mxu0 0.0
      %10776 = vmatprep.subr.mxu0 0.0
      %10777 = vmatpush1.msra.mxu0 0.0
      %10778 = vmatprep.subr.mxu0 0.0
      %10779 = vmatpush1.msra.mxu0 0.0
      %10780 = vmatprep.subr.mxu0 0.0
      %10781 = vmatpush1.msra.mxu0 0.0
      %10782 = vmatprep.subr.mxu0 0.0
      %10783 = vmatpush1.msra.mxu0 0.0
      %10784 = vmatprep.subr.mxu0 0.0
      %10785 = vmatpush1.msra.mxu0 0.0
      %10786 = vmatprep.subr.mxu0 0.0
      %10787 = vmatpush1.msra.mxu0 0.0
      %10788 = vmatprep.subr.mxu0 0.0
      %10789 = vmatpush1.msra.mxu0 0.0
      %10790 = vmatprep.subr.mxu0 0.0
      %10791 = vmatpush1.msra.mxu0 0.0
      %10792 = vmatprep.subr.mxu0 0.0
      %10793 = vmatpush1.msra.mxu0 0.0
      %10794 = vmatprep.subr.mxu0 0.0
      %10795 = vmatpush1.msra.mxu0 0.0
      %10796 = vmatprep.subr.mxu0 0.0
      %10797 = vmatpush1.msra.mxu0 0.0
      %10798 = vmatprep.subr.mxu0 0.0
      %10799 = vmatpush1.msra.mxu0 0.0
      %10800 = vmatprep.subr.mxu0 0.0
      %10801 = vmatpush1.msra.mxu0 0.0
      %10802 = vmatprep.subr.mxu0 0.0
      %10803 = vmatpush1.msra.mxu0 0.0
      %10804 = vmatprep.subr.mxu0 0.0
      %10805 = vmatpush1.msra.mxu0 0.0
      %10806 = vmatprep.mubr.f32.mxu0 0.0
      %10807 = vmatmul.mubr.f32.gmra.mrb[0].mxu0 %v10737
      %v10808 = vpop.f32.mrb[0].mxu0
      %v10809 = vadd.f32 0.0, %v10808
      %v10810 = vpop.f32.mrb[0].mxu0
      %v10811 = vadd.f32 0.0, %v10810
      %10812 = vmatprep.mubr.f32.mxu0 0.0
      %10813 = vmatmul.mubr.f32.gmra.mrb[0].mxu0 %v10740
      %v10814 = vpop.f32.mrb[0].mxu0
      %v10815 = vadd.f32 0.0, %v10814
      %v10816 = vpop.f32.mrb[0].mxu0
      %v10817 = vadd.f32 0.0, %v10816
      %10818 = vdwg.mxu0
      %10819 = vmatprep.subr.mxu0 %v10665
      %10820 = vmatpush1.msra.mxu0 %v10664
      %10821 = vmatprep.subr.mxu0 %v10667
      %10822 = vmatpush1.msra.mxu0 %v10666
      %10823 = vmatprep.subr.mxu0 %v10669
      %10824 = vmatpush1.msra.mxu0 %v10668
      %10825 = vmatprep.subr.mxu0 %v10671
      %10826 = vmatpush1.msra.mxu0 %v10670
      %10827 = vmatprep.subr.mxu0 %v10673
      %10828 = vmatpush1.msra.mxu0 %v10672
      %10829 = vmatprep.subr.mxu0 %v10675
      %10830 = vmatpush1.msra.mxu0 %v10674
      %10831 = vmatprep.subr.mxu0 %v10677
      %10832 = vmatpush1.msra.mxu0 %v10676
      %10833 = vmatprep.subr.mxu0 %v10679
      %10834 = vmatpush1.msra.mxu0 %v10678
      %10835 = vmatprep.subr.mxu0 %v10681
      %10836 = vmatpush1.msra.mxu0 %v10680
      %10837 = vmatprep.subr.mxu0 %v10683
      %10838 = vmatpush1.msra.mxu0 %v10682
      %10839 = vmatprep.subr.mxu0 %v10685
      %10840 = vmatpush1.msra.mxu0 %v10684
      %10841 = vmatprep.subr.mxu0 %v10687
      %10842 = vmatpush1.msra.mxu0 %v10686
      %10843 = vmatprep.subr.mxu0 %v10689
      %10844 = vmatpush1.msra.mxu0 %v10688
      %10845 = vmatprep.subr.mxu0 %v10691
      %10846 = vmatpush1.msra.mxu0 %v10690
      %10847 = vmatprep.subr.mxu0 %v10693
      %10848 = vmatpush1.msra.mxu0 %v10692
      %10849 = vmatprep.subr.mxu0 %v10695
      %10850 = vmatpush1.msra.mxu0 %v10694
      %10851 = vmatprep.subr.mxu0 %v10697
      %10852 = vmatpush1.msra.mxu0 %v10696
      %10853 = vmatprep.subr.mxu0 %v10699
      %10854 = vmatpush1.msra.mxu0 %v10698
      %10855 = vmatprep.subr.mxu0 %v10701
      %10856 = vmatpush1.msra.mxu0 %v10700
      %10857 = vmatprep.subr.mxu0 %v10703
      %10858 = vmatpush1.msra.mxu0 %v10702
      %10859 = vmatprep.subr.mxu0 %v10705
      %10860 = vmatpush1.msra.mxu0 %v10704
      %10861 = vmatprep.subr.mxu0 %v10707
      %10862 = vmatpush1.msra.mxu0 %v10706
      %10863 = vmatprep.subr.mxu0 %v10709
      %10864 = vmatpush1.msra.mxu0 %v10708
      %10865 = vmatprep.subr.mxu0 %v10711
      %10866 = vmatpush1.msra.mxu0 %v10710
      %10867 = vmatprep.subr.mxu0 %v10713
      %10868 = vmatpush1.msra.mxu0 %v10712
      %10869 = vmatprep.subr.mxu0 %v10715
      %10870 = vmatpush1.msra.mxu0 %v10714
      %10871 = vmatprep.subr.mxu0 %v10717
      %10872 = vmatpush1.msra.mxu0 %v10716
      %10873 = vmatprep.subr.mxu0 %v10719
      %10874 = vmatpush1.msra.mxu0 %v10718
      %10875 = vmatprep.subr.mxu0 %v10721
      %10876 = vmatpush1.msra.mxu0 %v10720
      %10877 = vmatprep.subr.mxu0 %v10723
      %10878 = vmatpush1.msra.mxu0 %v10722
      %10879 = vmatprep.subr.mxu0 %v10725
      %10880 = vmatpush1.msra.mxu0 %v10724
      %10881 = vmatprep.subr.mxu0 %v10727
      %10882 = vmatpush1.msra.mxu0 %v10726
      %10883 = vmatprep.mubr.f32.mxu0 %v10659
      %10884 = vmatmul.mubr.f32.gmra.mrb[0].mxu0 %v10658
      %v10885 = vpop.f32.mrb[0].mxu0
      %v10886 = vadd.f32 %v10809, %v10885
      %v10887 = vpop.f32.mrb[0].mxu0
      %v10888 = vadd.f32 %v10811, %v10887
      %10889 = vmatprep.mubr.f32.mxu0 %v10661
      %10890 = vmatmul.mubr.f32.gmra.mrb[0].mxu0 %v10660
      %v10891 = vpop.f32.mrb[0].mxu0
      %v10892 = vadd.f32 %v10815, %v10891
      %v10893 = vpop.f32.mrb[0].mxu0
      %v10894 = vadd.f32 %v10817, %v10893
      %10895 = vdwg.mxu0
      %v10896 = vld [vmem:[%s12] sm:$0x3]
      %v10898 = vlaneseq
      %v10899 = vshrl.u32 %v10898, 7
      %v10900 = vsub.s32 0, %v10899
      %v10901 = vrot.slane %v10896, %v10900
      %v10902 = vlaneseq
      %v10903 = vshrl.u32 %v10902, 7
      %v10904 = vsub.s32 1, %v10903
      %v10905 = vrot.slane %v10896, %v10904
      %v10908 = vadd.f32 %v10886, %v10901
      %v10909 = vadd.f32 %v10888, %v10905
      %v10910 = vadd.f32 %v10892, %v10901
      %v10911 = vadd.f32 %v10894, %v10905
      %v10912 = vmax.f32 %v10908, 0.0
      %v10913 = vmax.f32 %v10909, 0.0
      %v10914 = vmax.f32 %v10910, 0.0
      %v10915 = vmax.f32 %v10911, 0.0
      %v10916 = vld [vmem:[%s13] sm:$0x3]
      %v10918 = vlaneseq
      %v10919 = vshrl.u32 %v10918, 7
      %v10920 = vsub.s32 0, %v10919
      %v10921 = vrot.slane %v10916, %v10920
      %v10922 = vlaneseq
      %v10923 = vshrl.u32 %v10922, 7
      %v10924 = vsub.s32 1, %v10923
      %v10925 = vrot.slane %v10916, %v10924
      %v10928 = vmul.f32 %v10912, %v10921
      %v10929 = vmul.f32 %v10913, %v10925
      %v10930 = vmul.f32 %v10914, %v10921
      %v10931 = vmul.f32 %v10915, %v10925
      %v10932 = vadd.f32 %v10928, %v10929
      %10933 = vadd.xlane.f32.xlu0 %v10932
      %v10934 = vpop.xlane.xlu0 %10933
      %v10935 = vadd.f32 %v10930, %v10931
      %10936 = vadd.xlane.f32.xlu0 %v10935
      %v10937 = vpop.xlane.xlu0 %10936
      %v10938 = vld [vmem:[#allocation3] sm:$0x1]
      %v10940 = vlaneseq
      %v10941 = vshrl.u32 %v10940, 7
      %v10942 = vsub.s32 0, %v10941
      %v10943 = vrot.slane %v10938, %v10942
      %v10945 = vadd.f32 %v10934, %v10943
      %v10946 = vadd.f32 %v10937, %v10943
      %vm10947 = vcmask 7168
      %10948 = vst.msk [vmem:[%s518] sm:$0xff] %vm10947, %v10945
      %10949 = vst.msk [vmem:[%s518 + $0x8] sm:$0xff] %vm10947, %v10946
      %s10950 = smul.u32 2, %s28
      %p10951 = scmp.lt.s32.totalorder %s10950, 3
      %s10952 = scalar_select %p10951, %s10950, 3
      %s10953 = smul.addr %s10952, 8
      %s10954 = scalar_lea.vmem %s15, %s10953
      // Predicated region
      $region81: #{critic_forward.1} parent=79 // pred_check
        %p10955 = pneg %p371
      $region82: #{critic_forward.1} parent=79 // pred_check_branch
        %10957 = sbr.rel (%p10955) target = $region84
      $region83: #{critic_forward.1} parent=79 // pred_region
        %s10958 = smul.u32 2, %s28
      $region84: #{critic_forward.1} parent=79 // pred_fallthru
        _
    $region80: #{critic_forward.1} parent=5 // pred_fallthru
      _
    %p10959 = scmp.le.s32.totalorder 2, %s23
    // Predicated region
    $region85: #{critic_forward.1} parent=5 // pred_check
      %p10960 = pneg %p10959
    $region86: #{critic_forward.1} parent=5 // pred_check_branch
      %10962 = sbr.rel (%p10960) target = $region88
    $region87: #{critic_forward.1} parent=5 // pred_region
      %s10963 = ssub.s32 %s23, 2
      // Predicated region
      $region89: #{critic_forward.1} parent=87 // pred_check
        %p10964 = pneg %p377
      $region90: #{critic_forward.1} parent=87 // pred_check_branch
        %10966 = sbr.rel (%p10964) target = $region92
      $region91: #{critic_forward.1} parent=87 // pred_region
        %s10967 = smul.u32 2, %s29
        %p10968 = scmp.lt.s32.totalorder %s10967, 3
        %s10969 = scalar_select %p10968, %s10967, 3
        %s10970 = smul.addr %s10969, 8
        %s10971 = scalar_lea.vmem %s15, %s10970
      $region92: #{critic_forward.1} parent=87 // pred_fallthru
        _
    $region88: #{critic_forward.1} parent=5 // pred_fallthru
      _
  $region6: #{critic_forward.1} parent=0 // loop_footer
    %s27 = sadd.s32 1, %s23
  $region7: #{critic_forward.1} parent=0 // loop_footer_branch
    %22 = sbr.rel target = $region3
  $region8: #{critic_forward.1} parent=0 // loop_exit
    _

</llo_original>
